<compile_context>
chip_gen: v7x
topology: tpu7x:2x2x1
jax: 0.10.0
libtpu: 0.0.40
codegen_flags: <defaults>
</compile_context>

<pallas_src>
import jax
import jax.numpy as jnp
from jax.experimental import pallas as pl
from jax.experimental.pallas import tpu as pltpu


_VMEM_LIMIT = 32 * 1024 * 1024


def _round_up(x, m):
    return (x + m - 1) // m * m


# ----------------------------------------------------------------------------
# Kernel 1: conv1 (1->32, 3x3, valid) + bias + ReLU as 9 shifted VPU MACs.
# ----------------------------------------------------------------------------

def _conv1_kernel(x_ref, w_ref, b_ref, o_ref):
    # x_ref: (1, 28, 28) f32   w_ref: (9, 32) f32   b_ref: (1, 32) f32
    # o_ref: (1, 26, 26, 32) bf16  (NHWC)
    x = x_ref[0]                                            # (28, 28)
    acc = jnp.zeros((26, 26, 32), jnp.float32)
    for idx in range(9):
        i, j = idx // 3, idx % 3
        xs = x[i:i + 26, j:j + 26]                          # (26, 26), static slice
        acc = acc + xs[:, :, None] * w_ref[idx, :]          # broadcast over cout lanes
    acc = jnp.maximum(acc + b_ref[0, :], 0.0)
    o_ref[0] = acc.astype(o_ref.dtype)


def conv1_relu(x2d, w, b):
    n = x2d.shape[0]
    return pl.pallas_call(
        _conv1_kernel,
        out_shape=jax.ShapeDtypeStruct((n, 26, 26, 32), jnp.bfloat16),
        grid=(n,),
        in_specs=[
            pl.BlockSpec((1, 28, 28), lambda i: (i, 0, 0)),
            pl.BlockSpec((9, 32), lambda i: (0, 0)),
            pl.BlockSpec((1, 32), lambda i: (0, 0)),
        ],
        out_specs=pl.BlockSpec((1, 26, 26, 32), lambda i: (i, 0, 0, 0)),
        compiler_params=pltpu.CompilerParams(
            dimension_semantics=("parallel",),
            vmem_limit_bytes=_VMEM_LIMIT,
        ),
    )(x2d, w, b)


# ----------------------------------------------------------------------------
# Kernel 2: conv2 (32->64, 3x3) as MXU matmul + bias + 2x2 maxpool + ReLU fused.
# Patch rows per sample are ordered (qh, qw, ph, pw): the four 144-row chunks
# are the four pool quadrants, so the pool is an elementwise max of aligned
# sublane slices of the accumulator.
# ----------------------------------------------------------------------------

def _conv2_pool_kernel(p_ref, w_ref, b_ref, o_ref):
    # p_ref: (576, 288) bf16   w_ref: (288, 64) bf16   b_ref: (1, 64) f32
    # o_ref: (144, 64) bf16  -> pooled NHWC activation for one sample
    acc = jnp.dot(p_ref[...], w_ref[...], preferred_element_type=jnp.float32)
    acc = acc + b_ref[...]                                   # (576, 64) f32
    pooled = jnp.maximum(
        jnp.maximum(acc[0:144], acc[144:288]),
        jnp.maximum(acc[288:432], acc[432:576]),
    )                                                        # max over 2x2 window
    pooled = jnp.maximum(pooled, 0.0)                        # ReLU (commutes with max)
    o_ref[...] = pooled.astype(o_ref.dtype)


def conv2_pool_relu(a1, w2, b2):
    # a1: (N, 26, 26, 32) bf16 NHWC
    n = a1.shape[0]
    cols = [a1[:, i:i + 24, j:j + 24, :] for i in range(3) for j in range(3)]
    p = jnp.concatenate(cols, axis=3)                        # (N,24,24,288)  K=(kh,kw,cin)
    p = p.reshape(n, 12, 2, 12, 2, 288)                      # (N, ph, qh, pw, qw, K)
    p = p.transpose(0, 2, 4, 1, 3, 5)                        # (N, qh, qw, ph, pw, K)
    p = p.reshape(n * 576, 288)
    return pl.pallas_call(
        _conv2_pool_kernel,
        out_shape=jax.ShapeDtypeStruct((n * 144, 64), jnp.bfloat16),
        grid=(n,),
        in_specs=[
            pl.BlockSpec((576, 288), lambda i: (i, 0)),
            pl.BlockSpec((288, 64), lambda i: (0, 0)),
            pl.BlockSpec((1, 64), lambda i: (0, 0)),
        ],
        out_specs=pl.BlockSpec((144, 64), lambda i: (i, 0)),
        compiler_params=pltpu.CompilerParams(
            dimension_semantics=("parallel",),
            vmem_limit_bytes=_VMEM_LIMIT,
        ),
    )(p, w2, b2)


# ----------------------------------------------------------------------------
# Kernel 3: fc1(9216->128) + ReLU + fc2(128->10, padded to 128) fused, tiled
# over (M, K) with a f32 VMEM accumulator.
# ----------------------------------------------------------------------------

def _fc_fused_kernel(x_ref, w1_ref, b1_ref, w2_ref, b2_ref, o_ref, acc_ref):
    k = pl.program_id(1)

    @pl.when(k == 0)
    def _init():
        acc_ref[...] = jnp.zeros_like(acc_ref)

    acc_ref[...] += jnp.dot(x_ref[...], w1_ref[...],
                            preferred_element_type=jnp.float32)

    @pl.when(k == pl.num_programs(1) - 1)
    def _finalize():
        h = jnp.maximum(acc_ref[...] + b1_ref[...], 0.0)     # fc1 + ReLU, f32
        y = jnp.dot(h.astype(w2_ref.dtype), w2_ref[...],
                    preferred_element_type=jnp.float32)       # fc2 (VMEM-resident W)
        o_ref[...] = (y + b2_ref[...]).astype(o_ref.dtype)


def fc_fused(feats, w1, b1, w2p, b2p):
    # feats: (N, 9216) bf16
    n, k_total = feats.shape
    if n <= 256:
        m_pad = _round_up(n, 8)
        tm = m_pad
    else:
        m_pad = _round_up(n, 256)
        tm = 256
    tk = 2304                                                # 9216 / 4, multiple of 128
    x = feats
    if m_pad != n:
        x = jnp.pad(feats, ((0, m_pad - n), (0, 0)))
    x = x.astype(jnp.bfloat16)

    out = pl.pallas_call(
        _fc_fused_kernel,
        out_shape=jax.ShapeDtypeStruct((m_pad, 128), jnp.float32),
        grid=(m_pad // tm, k_total // tk),
        in_specs=[
            pl.BlockSpec((tm, tk), lambda i, k: (i, k)),
            pl.BlockSpec((tk, 128), lambda i, k: (k, 0)),
            pl.BlockSpec((1, 128), lambda i, k: (0, 0)),
            pl.BlockSpec((128, 128), lambda i, k: (0, 0)),
            pl.BlockSpec((1, 128), lambda i, k: (0, 0)),
        ],
        out_specs=pl.BlockSpec((tm, 128), lambda i, k: (i, 0)),
        scratch_shapes=[pltpu.VMEM((tm, 128), jnp.float32)],
        compiler_params=pltpu.CompilerParams(
            dimension_semantics=("parallel", "arbitrary"),
            vmem_limit_bytes=_VMEM_LIMIT,
        ),
    )(x, w1, b1, w2p, b2p)
    return out


# ----------------------------------------------------------------------------
# Parameters (PyTorch layout) + one-time layout preparation + forward pass.
# ----------------------------------------------------------------------------

def init_params(key):
    ks = jax.random.split(key, 8)

    def u(k, shape, fan_in):
        bound = 1.0 / jnp.sqrt(jnp.float32(fan_in))
        return jax.random.uniform(k, shape, jnp.float32, -bound, bound)

    return {
        "conv1_w": u(ks[0], (32, 1, 3, 3), 1 * 9),
        "conv1_b": u(ks[1], (32,), 1 * 9),
        "conv2_w": u(ks[2], (64, 32, 3, 3), 32 * 9),
        "conv2_b": u(ks[3], (64,), 32 * 9),
        "fc1_w": u(ks[4], (128, 9216), 9216),    # PyTorch Linear: (out, in), NCHW flatten
        "fc1_b": u(ks[5], (128,), 9216),
        "fc2_w": u(ks[6], (10, 128), 128),
        "fc2_b": u(ks[7], (10,), 128),
    }


def prepare_params(params):
    """One-time host-side re-layout of PyTorch-format weights (outside jit)."""
    w1 = params["conv1_w"].reshape(32, 9).T.astype(jnp.float32)          # (9, 32)
    b1 = params["conv1_b"].reshape(1, 32).astype(jnp.float32)
    w2 = params["conv2_w"].transpose(2, 3, 1, 0).reshape(288, 64)        # (kh,kw,cin,cout)
    b2 = params["conv2_b"].reshape(1, 64).astype(jnp.float32)
    # fc1: permute columns from NCHW flatten (c,h,w) to NHWC flatten (h,w,c),
    # and pre-transpose to (in, out).
    wf1 = params["fc1_w"].reshape(128, 64, 12, 12).transpose(2, 3, 1, 0).reshape(9216, 128)
    bf1 = params["fc1_b"].reshape(1, 128).astype(jnp.float32)
    # fc2: (in, out) padded to 128 output lanes (zeros), sliced back outside.
    wf2 = jnp.zeros((128, 128), jnp.float32).at[:, :10].set(params["fc2_w"].T)
    bf2 = jnp.zeros((1, 128), jnp.float32).at[0, :10].set(params["fc2_b"])
    return {
        "w1": w1, "b1": b1,
        "w2": w2.astype(jnp.bfloat16), "b2": b2,
        "w_fc1": wf1.astype(jnp.bfloat16), "b_fc1": bf1,
        "w_fc2p": wf2.astype(jnp.bfloat16), "b_fc2p": bf2,
    }


@jax.jit
def net_forward(prep, x):
    # x: (N, 1, 28, 28) float32, NCHW (cin=1)
    n = x.shape[0]
    assert x.shape[1:] == (1, 28, 28)
    x2d = x.reshape(n, 28, 28).astype(jnp.float32)
    a1 = conv1_relu(x2d, prep["w1"], prep["b1"])                 # (N,26,26,32) bf16 NHWC
    pooled = conv2_pool_relu(a1, prep["w2"], prep["b2"])         # (N*144, 64) bf16
    # TODO(synk): dropout1/dropout2 are identity in eval mode; training-mode RNG masks not implemented.
    feats = pooled.reshape(n, 9216)                              # NHWC flatten (matches prepared fc1)
    logits = fc_fused(feats, prep["w_fc1"], prep["b_fc1"],
                      prep["w_fc2p"], prep["b_fc2p"])            # (M_pad, 128) f32
    return logits[:n, :10]


if __name__ == "__main__":
    key = jax.random.PRNGKey(0)
    pkey, xkey = jax.random.split(key)
    params = init_params(pkey)
    prep = prepare_params(params)
    # Small batch; spatial size is fixed at 28x28 by the fc1 input dim (9216).
    x = jax.random.normal(xkey, (2, 1, 28, 28), jnp.float32)

    out = net_forward(prep, x)
    out = jax.block_until_ready(out)
    assert out.shape == (2, 10) and out.dtype == jnp.float32
    print("KERNEL_OK")
</pallas_src>

<mosaic_0001>
module attributes {stable_mosaic.version = 11 : i64} {
  func.func @_conv1_kernel(%arg0: i32, %arg1: memref<1x28x28xf32, #tpu.memory_space<vmem>>, %arg2: memref<9x32xf32, #tpu.memory_space<vmem>>, %arg3: memref<1x32xf32, #tpu.memory_space<vmem>>, %arg4: memref<1x26x26x32xbf16, #tpu.memory_space<vmem>>) attributes {dimension_semantics = [#tpu.dimension_semantics<parallel>], iteration_bounds = array<i64: 2>, scalar_prefetch = 0 : i64, scratch_operands = 0 : i64, tpu.core_type = #tpu.core_type<tc>, window_params = [{transform_indices = @transform_0, window_bounds = array<i64: 1, 28, 28>}, {pipeline_mode = #tpu.pipeline_mode<synchronous>, transform_indices = @transform_1, window_bounds = array<i64: 9, 32>}, {pipeline_mode = #tpu.pipeline_mode<synchronous>, transform_indices = @transform_2, window_bounds = array<i64: 1, 32>}, {transform_indices = @transform_3, window_bounds = array<i64: 1, 26, 26, 32>}]} {
    %c0 = arith.constant 0 : index
    %c0_0 = arith.constant 0 : index
    %c0_1 = arith.constant 0 : index
    %0 = vector.load %arg1[%c0, %c0_0, %c0_1] : memref<1x28x28xf32, #tpu.memory_space<vmem>>, vector<1x28x28xf32>
    %1 = vector.shape_cast %0 : vector<1x28x28xf32> to vector<28x28xf32>
    %cst = arith.constant 0.000000e+00 : f32
    %2 = vector.broadcast %cst : f32 to vector<26x26x32xf32>
    %3 = vector.extract_strided_slice %1 {offsets = [0, 0], sizes = [26, 26], strides = [1, 1]} : vector<28x28xf32> to vector<26x26xf32>
    %4 = vector.shape_cast %3 : vector<26x26xf32> to vector<26x26x1xf32>
    %c0_2 = arith.constant 0 : index
    %c0_3 = arith.constant 0 : index
    %5 = vector.load %arg2[%c0_2, %c0_3] : memref<9x32xf32, #tpu.memory_space<vmem>>, vector<1x32xf32>
    %6 = vector.shape_cast %5 : vector<1x32xf32> to vector<32xf32>
    %7 = vector.shape_cast %6 : vector<32xf32> to vector<1x1x32xf32>
    %8 = vector.broadcast %4 : vector<26x26x1xf32> to vector<26x26x32xf32>
    %9 = vector.broadcast %7 : vector<1x1x32xf32> to vector<26x26x32xf32>
    %10 = arith.mulf %8, %9 : vector<26x26x32xf32>
    %11 = arith.addf %2, %10 : vector<26x26x32xf32>
    %12 = vector.extract_strided_slice %1 {offsets = [0, 1], sizes = [26, 26], strides = [1, 1]} : vector<28x28xf32> to vector<26x26xf32>
    %13 = vector.shape_cast %12 : vector<26x26xf32> to vector<26x26x1xf32>
    %c1 = arith.constant 1 : index
    %c0_4 = arith.constant 0 : index
    %14 = vector.load %arg2[%c1, %c0_4] : memref<9x32xf32, #tpu.memory_space<vmem>>, vector<1x32xf32>
    %15 = vector.shape_cast %14 : vector<1x32xf32> to vector<32xf32>
    %16 = vector.shape_cast %15 : vector<32xf32> to vector<1x1x32xf32>
    %17 = vector.broadcast %13 : vector<26x26x1xf32> to vector<26x26x32xf32>
    %18 = vector.broadcast %16 : vector<1x1x32xf32> to vector<26x26x32xf32>
    %19 = arith.mulf %17, %18 : vector<26x26x32xf32>
    %20 = arith.addf %11, %19 : vector<26x26x32xf32>
    %21 = vector.extract_strided_slice %1 {offsets = [0, 2], sizes = [26, 26], strides = [1, 1]} : vector<28x28xf32> to vector<26x26xf32>
    %22 = vector.shape_cast %21 : vector<26x26xf32> to vector<26x26x1xf32>
    %c2 = arith.constant 2 : index
    %c0_5 = arith.constant 0 : index
    %23 = vector.load %arg2[%c2, %c0_5] : memref<9x32xf32, #tpu.memory_space<vmem>>, vector<1x32xf32>
    %24 = vector.shape_cast %23 : vector<1x32xf32> to vector<32xf32>
    %25 = vector.shape_cast %24 : vector<32xf32> to vector<1x1x32xf32>
    %26 = vector.broadcast %22 : vector<26x26x1xf32> to vector<26x26x32xf32>
    %27 = vector.broadcast %25 : vector<1x1x32xf32> to vector<26x26x32xf32>
    %28 = arith.mulf %26, %27 : vector<26x26x32xf32>
    %29 = arith.addf %20, %28 : vector<26x26x32xf32>
    %30 = vector.extract_strided_slice %1 {offsets = [1, 0], sizes = [26, 26], strides = [1, 1]} : vector<28x28xf32> to vector<26x26xf32>
    %31 = vector.shape_cast %30 : vector<26x26xf32> to vector<26x26x1xf32>
    %c3 = arith.constant 3 : index
    %c0_6 = arith.constant 0 : index
    %32 = vector.load %arg2[%c3, %c0_6] : memref<9x32xf32, #tpu.memory_space<vmem>>, vector<1x32xf32>
    %33 = vector.shape_cast %32 : vector<1x32xf32> to vector<32xf32>
    %34 = vector.shape_cast %33 : vector<32xf32> to vector<1x1x32xf32>
    %35 = vector.broadcast %31 : vector<26x26x1xf32> to vector<26x26x32xf32>
    %36 = vector.broadcast %34 : vector<1x1x32xf32> to vector<26x26x32xf32>
    %37 = arith.mulf %35, %36 : vector<26x26x32xf32>
    %38 = arith.addf %29, %37 : vector<26x26x32xf32>
    %39 = vector.extract_strided_slice %1 {offsets = [1, 1], sizes = [26, 26], strides = [1, 1]} : vector<28x28xf32> to vector<26x26xf32>
    %40 = vector.shape_cast %39 : vector<26x26xf32> to vector<26x26x1xf32>
    %c4 = arith.constant 4 : index
    %c0_7 = arith.constant 0 : index
    %41 = vector.load %arg2[%c4, %c0_7] : memref<9x32xf32, #tpu.memory_space<vmem>>, vector<1x32xf32>
    %42 = vector.shape_cast %41 : vector<1x32xf32> to vector<32xf32>
    %43 = vector.shape_cast %42 : vector<32xf32> to vector<1x1x32xf32>
    %44 = vector.broadcast %40 : vector<26x26x1xf32> to vector<26x26x32xf32>
    %45 = vector.broadcast %43 : vector<1x1x32xf32> to vector<26x26x32xf32>
    %46 = arith.mulf %44, %45 : vector<26x26x32xf32>
    %47 = arith.addf %38, %46 : vector<26x26x32xf32>
    %48 = vector.extract_strided_slice %1 {offsets = [1, 2], sizes = [26, 26], strides = [1, 1]} : vector<28x28xf32> to vector<26x26xf32>
    %49 = vector.shape_cast %48 : vector<26x26xf32> to vector<26x26x1xf32>
    %c5 = arith.constant 5 : index
    %c0_8 = arith.constant 0 : index
    %50 = vector.load %arg2[%c5, %c0_8] : memref<9x32xf32, #tpu.memory_space<vmem>>, vector<1x32xf32>
    %51 = vector.shape_cast %50 : vector<1x32xf32> to vector<32xf32>
    %52 = vector.shape_cast %51 : vector<32xf32> to vector<1x1x32xf32>
    %53 = vector.broadcast %49 : vector<26x26x1xf32> to vector<26x26x32xf32>
    %54 = vector.broadcast %52 : vector<1x1x32xf32> to vector<26x26x32xf32>
    %55 = arith.mulf %53, %54 : vector<26x26x32xf32>
    %56 = arith.addf %47, %55 : vector<26x26x32xf32>
    %57 = vector.extract_strided_slice %1 {offsets = [2, 0], sizes = [26, 26], strides = [1, 1]} : vector<28x28xf32> to vector<26x26xf32>
    %58 = vector.shape_cast %57 : vector<26x26xf32> to vector<26x26x1xf32>
    %c6 = arith.constant 6 : index
    %c0_9 = arith.constant 0 : index
    %59 = vector.load %arg2[%c6, %c0_9] : memref<9x32xf32, #tpu.memory_space<vmem>>, vector<1x32xf32>
    %60 = vector.shape_cast %59 : vector<1x32xf32> to vector<32xf32>
    %61 = vector.shape_cast %60 : vector<32xf32> to vector<1x1x32xf32>
    %62 = vector.broadcast %58 : vector<26x26x1xf32> to vector<26x26x32xf32>
    %63 = vector.broadcast %61 : vector<1x1x32xf32> to vector<26x26x32xf32>
    %64 = arith.mulf %62, %63 : vector<26x26x32xf32>
    %65 = arith.addf %56, %64 : vector<26x26x32xf32>
    %66 = vector.extract_strided_slice %1 {offsets = [2, 1], sizes = [26, 26], strides = [1, 1]} : vector<28x28xf32> to vector<26x26xf32>
    %67 = vector.shape_cast %66 : vector<26x26xf32> to vector<26x26x1xf32>
    %c7 = arith.constant 7 : index
    %c0_10 = arith.constant 0 : index
    %68 = vector.load %arg2[%c7, %c0_10] : memref<9x32xf32, #tpu.memory_space<vmem>>, vector<1x32xf32>
    %69 = vector.shape_cast %68 : vector<1x32xf32> to vector<32xf32>
    %70 = vector.shape_cast %69 : vector<32xf32> to vector<1x1x32xf32>
    %71 = vector.broadcast %67 : vector<26x26x1xf32> to vector<26x26x32xf32>
    %72 = vector.broadcast %70 : vector<1x1x32xf32> to vector<26x26x32xf32>
    %73 = arith.mulf %71, %72 : vector<26x26x32xf32>
    %74 = arith.addf %65, %73 : vector<26x26x32xf32>
    %75 = vector.extract_strided_slice %1 {offsets = [2, 2], sizes = [26, 26], strides = [1, 1]} : vector<28x28xf32> to vector<26x26xf32>
    %76 = vector.shape_cast %75 : vector<26x26xf32> to vector<26x26x1xf32>
    %c8 = arith.constant 8 : index
    %c0_11 = arith.constant 0 : index
    %77 = vector.load %arg2[%c8, %c0_11] : memref<9x32xf32, #tpu.memory_space<vmem>>, vector<1x32xf32>
    %78 = vector.shape_cast %77 : vector<1x32xf32> to vector<32xf32>
    %79 = vector.shape_cast %78 : vector<32xf32> to vector<1x1x32xf32>
    %80 = vector.broadcast %76 : vector<26x26x1xf32> to vector<26x26x32xf32>
    %81 = vector.broadcast %79 : vector<1x1x32xf32> to vector<26x26x32xf32>
    %82 = arith.mulf %80, %81 : vector<26x26x32xf32>
    %83 = arith.addf %74, %82 : vector<26x26x32xf32>
    %c0_12 = arith.constant 0 : index
    %c0_13 = arith.constant 0 : index
    %84 = vector.load %arg3[%c0_12, %c0_13] : memref<1x32xf32, #tpu.memory_space<vmem>>, vector<1x32xf32>
    %85 = vector.shape_cast %84 : vector<1x32xf32> to vector<32xf32>
    %86 = vector.shape_cast %85 : vector<32xf32> to vector<1x1x32xf32>
    %87 = vector.broadcast %86 : vector<1x1x32xf32> to vector<26x26x32xf32>
    %88 = arith.addf %83, %87 : vector<26x26x32xf32>
    %cst_14 = arith.constant 0.000000e+00 : f32
    %89 = vector.broadcast %cst_14 : f32 to vector<26x26x32xf32>
    %90 = arith.maximumf %88, %89 : vector<26x26x32xf32>
    %91 = arith.truncf %90 : vector<26x26x32xf32> to vector<26x26x32xbf16>
    %c0_15 = arith.constant 0 : index
    %c0_16 = arith.constant 0 : index
    %c0_17 = arith.constant 0 : index
    %c0_18 = arith.constant 0 : index
    %92 = vector.load %arg4[%c0_15, %c0_16, %c0_17, %c0_18] : memref<1x26x26x32xbf16, #tpu.memory_space<vmem>>, vector<1x26x26x32xbf16>
    %93 = vector.shape_cast %92 : vector<1x26x26x32xbf16> to vector<26x26x32xbf16>
    %94 = vector.shape_cast %91 : vector<26x26x32xbf16> to vector<1x26x26x32xbf16>
    tpu.vector_store %arg4[%c0_15, %c0_16, %c0_17, %c0_18], %94 {strides = array<i32>} : memref<1x26x26x32xbf16, #tpu.memory_space<vmem>>, vector<1x26x26x32xbf16>,
    return
  }
  func.func @transform_0(%arg0: i32) -> (i32, i32, i32) {
    %c0_i32 = arith.constant 0 : i32
    %c0_i32_0 = arith.constant 0 : i32
    %c0_i32_1 = arith.constant 0 : i32
    return %arg0, %c0_i32, %c0_i32_0 : i32, i32, i32
  }
  func.func @transform_1(%arg0: i32) -> (i32, i32) {
    %c0_i32 = arith.constant 0 : i32
    %c0_i32_0 = arith.constant 0 : i32
    %c0_i32_1 = arith.constant 0 : i32
    return %c0_i32, %c0_i32_0 : i32, i32
  }
  func.func @transform_2(%arg0: i32) -> (i32, i32) {
    %c0_i32 = arith.constant 0 : i32
    %c0_i32_0 = arith.constant 0 : i32
    %c0_i32_1 = arith.constant 0 : i32
    return %c0_i32, %c0_i32_0 : i32, i32
  }
  func.func @transform_3(%arg0: i32) -> (i32, i32, i32, i32) {
    %c0_i32 = arith.constant 0 : i32
    %c0_i32_0 = arith.constant 0 : i32
    %c0_i32_1 = arith.constant 0 : i32
    %c0_i32_2 = arith.constant 0 : i32
    return %arg0, %c0_i32, %c0_i32_0, %c0_i32_1 : i32, i32, i32, i32
  }
}

module attributes {stable_mosaic.version = 11 : i64} {
  func.func @_conv2_pool_kernel(%arg0: i32, %arg1: memref<576x288xbf16, #tpu.memory_space<vmem>>, %arg2: memref<288x64xbf16, #tpu.memory_space<vmem>>, %arg3: memref<1x64xf32, #tpu.memory_space<vmem>>, %arg4: memref<144x64xbf16, #tpu.memory_space<vmem>>) attributes {dimension_semantics = [#tpu.dimension_semantics<parallel>], iteration_bounds = array<i64: 2>, scalar_prefetch = 0 : i64, scratch_operands = 0 : i64, tpu.core_type = #tpu.core_type<tc>, window_params = [{transform_indices = @transform_0, window_bounds = array<i64: 576, 288>}, {pipeline_mode = #tpu.pipeline_mode<synchronous>, transform_indices = @transform_1, window_bounds = array<i64: 288, 64>}, {pipeline_mode = #tpu.pipeline_mode<synchronous>, transform_indices = @transform_2, window_bounds = array<i64: 1, 64>}, {transform_indices = @transform_3, window_bounds = array<i64: 144, 64>}]} {
    %c0 = arith.constant 0 : index
    %c0_0 = arith.constant 0 : index
    %0 = vector.load %arg1[%c0, %c0_0] : memref<576x288xbf16, #tpu.memory_space<vmem>>, vector<576x288xbf16>
    %c0_1 = arith.constant 0 : index
    %c0_2 = arith.constant 0 : index
    %1 = vector.load %arg2[%c0_1, %c0_2] : memref<288x64xbf16, #tpu.memory_space<vmem>>, vector<288x64xbf16>
    %cst = arith.constant dense<0.000000e+00> : vector<576x64xf32>
    %2 = tpu.matmul %0, %1, %cst {dimension_numbers = #tpu.dot_dimension_numbers<[1], [0], [0], [1], [0, 0, 1, 1], [], []>} : vector<576x288xbf16>, vector<288x64xbf16>, vector<576x64xf32> -> vector<576x64xf32>
    %c0_3 = arith.constant 0 : index
    %c0_4 = arith.constant 0 : index
    %3 = vector.load %arg3[%c0_3, %c0_4] : memref<1x64xf32, #tpu.memory_space<vmem>>, vector<1x64xf32>
    %4 = vector.broadcast %3 : vector<1x64xf32> to vector<576x64xf32>
    %5 = arith.addf %2, %4 : vector<576x64xf32>
    %6 = vector.extract_strided_slice %5 {offsets = [0, 0], sizes = [144, 64], strides = [1, 1]} : vector<576x64xf32> to vector<144x64xf32>
    %7 = vector.extract_strided_slice %5 {offsets = [144, 0], sizes = [144, 64], strides = [1, 1]} : vector<576x64xf32> to vector<144x64xf32>
    %8 = arith.maximumf %6, %7 : vector<144x64xf32>
    %9 = vector.extract_strided_slice %5 {offsets = [288, 0], sizes = [144, 64], strides = [1, 1]} : vector<576x64xf32> to vector<144x64xf32>
    %10 = vector.extract_strided_slice %5 {offsets = [432, 0], sizes = [144, 64], strides = [1, 1]} : vector<576x64xf32> to vector<144x64xf32>
    %11 = arith.maximumf %9, %10 : vector<144x64xf32>
    %12 = arith.maximumf %8, %11 : vector<144x64xf32>
    %cst_5 = arith.constant 0.000000e+00 : f32
    %13 = vector.broadcast %cst_5 : f32 to vector<144x64xf32>
    %14 = arith.maximumf %12, %13 : vector<144x64xf32>
    %15 = arith.truncf %14 : vector<144x64xf32> to vector<144x64xbf16>
    %c0_6 = arith.constant 0 : index
    %c0_7 = arith.constant 0 : index
    %16 = vector.load %arg4[%c0_6, %c0_7] : memref<144x64xbf16, #tpu.memory_space<vmem>>, vector<144x64xbf16>
    tpu.vector_store %arg4[%c0_6, %c0_7], %15 {strides = array<i32>} : memref<144x64xbf16, #tpu.memory_space<vmem>>, vector<144x64xbf16>,
    return
  }
  func.func @transform_0(%arg0: i32) -> (i32, i32) {
    %c0_i32 = arith.constant 0 : i32
    %c0_i32_0 = arith.constant 0 : i32
    return %arg0, %c0_i32 : i32, i32
  }
  func.func @transform_1(%arg0: i32) -> (i32, i32) {
    %c0_i32 = arith.constant 0 : i32
    %c0_i32_0 = arith.constant 0 : i32
    %c0_i32_1 = arith.constant 0 : i32
    return %c0_i32, %c0_i32_0 : i32, i32
  }
  func.func @transform_2(%arg0: i32) -> (i32, i32) {
    %c0_i32 = arith.constant 0 : i32
    %c0_i32_0 = arith.constant 0 : i32
    %c0_i32_1 = arith.constant 0 : i32
    return %c0_i32, %c0_i32_0 : i32, i32
  }
  func.func @transform_3(%arg0: i32) -> (i32, i32) {
    %c0_i32 = arith.constant 0 : i32
    %c0_i32_0 = arith.constant 0 : i32
    return %arg0, %c0_i32 : i32, i32
  }
}

module attributes {stable_mosaic.version = 11 : i64} {
  func.func @_fc_fused_kernel(%arg0: i32, %arg1: i32, %arg2: memref<8x2304xbf16, #tpu.memory_space<vmem>>, %arg3: memref<2304x128xbf16, #tpu.memory_space<vmem>>, %arg4: memref<1x128xf32, #tpu.memory_space<vmem>>, %arg5: memref<128x128xbf16, #tpu.memory_space<vmem>>, %arg6: memref<1x128xf32, #tpu.memory_space<vmem>>, %arg7: memref<8x128xf32, #tpu.memory_space<vmem>>, %arg8: memref<8x128xf32, #tpu.memory_space<vmem>>) attributes {dimension_semantics = [#tpu.dimension_semantics<parallel>, #tpu.dimension_semantics<arbitrary>], iteration_bounds = array<i64: 1, 4>, scalar_prefetch = 0 : i64, scratch_operands = 1 : i64, tpu.core_type = #tpu.core_type<tc>, window_params = [{transform_indices = @transform_0, window_bounds = array<i64: 8, 2304>}, {transform_indices = @transform_1, window_bounds = array<i64: 2304, 128>}, {pipeline_mode = #tpu.pipeline_mode<synchronous>, transform_indices = @transform_2, window_bounds = array<i64: 1, 128>}, {pipeline_mode = #tpu.pipeline_mode<synchronous>, transform_indices = @transform_3, window_bounds = array<i64: 128, 128>}, {pipeline_mode = #tpu.pipeline_mode<synchronous>, transform_indices = @transform_4, window_bounds = array<i64: 1, 128>}, {transform_indices = @transform_5, window_bounds = array<i64: 8, 128>}]} {
    %c0_i32 = arith.constant 0 : i32
    %0 = arith.cmpi eq, %arg1, %c0_i32 : i32
    %1 = arith.extui %0 : i1 to i32
    %c0_i32_0 = arith.constant 0 : i32
    %2 = arith.cmpi ne, %1, %c0_i32_0 : i32
    scf.if %2 {
      %cst_9 = arith.constant 0.000000e+00 : f32
      %12 = vector.broadcast %cst_9 : f32 to vector<8x128xf32>
      %c0_10 = arith.constant 0 : index
      %c0_11 = arith.constant 0 : index
      %13 = vector.load %arg8[%c0_10, %c0_11] : memref<8x128xf32, #tpu.memory_space<vmem>>, vector<8x128xf32>
      tpu.vector_store %arg8[%c0_10, %c0_11], %12 {strides = array<i32>} : memref<8x128xf32, #tpu.memory_space<vmem>>, vector<8x128xf32>,
    } else {
    }
    %c0 = arith.constant 0 : index
    %c0_1 = arith.constant 0 : index
    %3 = vector.load %arg8[%c0, %c0_1] : memref<8x128xf32, #tpu.memory_space<vmem>>, vector<8x128xf32>
    %c0_2 = arith.constant 0 : index
    %c0_3 = arith.constant 0 : index
    %4 = vector.load %arg2[%c0_2, %c0_3] : memref<8x2304xbf16, #tpu.memory_space<vmem>>, vector<8x2304xbf16>
    %c0_4 = arith.constant 0 : index
    %c0_5 = arith.constant 0 : index
    %5 = vector.load %arg3[%c0_4, %c0_5] : memref<2304x128xbf16, #tpu.memory_space<vmem>>, vector<2304x128xbf16>
    %cst = arith.constant dense<0.000000e+00> : vector<8x128xf32>
    %6 = tpu.matmul %4, %5, %cst {dimension_numbers = #tpu.dot_dimension_numbers<[1], [0], [0], [1], [0, 0, 1, 1], [], []>} : vector<8x2304xbf16>, vector<2304x128xbf16>, vector<8x128xf32> -> vector<8x128xf32>
    %7 = arith.addf %3, %6 : vector<8x128xf32>
    %c0_6 = arith.constant 0 : index
    %c0_7 = arith.constant 0 : index
    %8 = vector.load %arg8[%c0_6, %c0_7] : memref<8x128xf32, #tpu.memory_space<vmem>>, vector<8x128xf32>
    tpu.vector_store %arg8[%c0_6, %c0_7], %7 {strides = array<i32>} : memref<8x128xf32, #tpu.memory_space<vmem>>, vector<8x128xf32>,
    %c3_i32 = arith.constant 3 : i32
    %9 = arith.cmpi eq, %arg1, %c3_i32 : i32
    %10 = arith.extui %9 : i1 to i32
    %c0_i32_8 = arith.constant 0 : i32
    %11 = arith.cmpi ne, %10, %c0_i32_8 : i32
    scf.if %11 {
      %c0_9 = arith.constant 0 : index
      %c0_10 = arith.constant 0 : index
      %12 = vector.load %arg8[%c0_9, %c0_10] : memref<8x128xf32, #tpu.memory_space<vmem>>, vector<8x128xf32>
      %c0_11 = arith.constant 0 : index
      %c0_12 = arith.constant 0 : index
      %13 = vector.load %arg4[%c0_11, %c0_12] : memref<1x128xf32, #tpu.memory_space<vmem>>, vector<1x128xf32>
      %14 = vector.broadcast %13 : vector<1x128xf32> to vector<8x128xf32>
      %15 = arith.addf %12, %14 : vector<8x128xf32>
      %cst_13 = arith.constant 0.000000e+00 : f32
      %16 = vector.broadcast %cst_13 : f32 to vector<8x128xf32>
      %17 = arith.maximumf %15, %16 : vector<8x128xf32>
      %18 = arith.truncf %17 : vector<8x128xf32> to vector<8x128xbf16>
      %c0_14 = arith.constant 0 : index
      %c0_15 = arith.constant 0 : index
      %19 = vector.load %arg5[%c0_14, %c0_15] : memref<128x128xbf16, #tpu.memory_space<vmem>>, vector<128x128xbf16>
      %cst_16 = arith.constant dense<0.000000e+00> : vector<8x128xf32>
      %20 = tpu.matmul %18, %19, %cst_16 {dimension_numbers = #tpu.dot_dimension_numbers<[1], [0], [0], [1], [0, 0, 1, 1], [], []>} : vector<8x128xbf16>, vector<128x128xbf16>, vector<8x128xf32> -> vector<8x128xf32>
      %c0_17 = arith.constant 0 : index
      %c0_18 = arith.constant 0 : index
      %21 = vector.load %arg6[%c0_17, %c0_18] : memref<1x128xf32, #tpu.memory_space<vmem>>, vector<1x128xf32>
      %22 = vector.broadcast %21 : vector<1x128xf32> to vector<8x128xf32>
      %23 = arith.addf %20, %22 : vector<8x128xf32>
      %c0_19 = arith.constant 0 : index
      %c0_20 = arith.constant 0 : index
      %24 = vector.load %arg7[%c0_19, %c0_20] : memref<8x128xf32, #tpu.memory_space<vmem>>, vector<8x128xf32>
      tpu.vector_store %arg7[%c0_19, %c0_20], %23 {strides = array<i32>} : memref<8x128xf32, #tpu.memory_space<vmem>>, vector<8x128xf32>,
    } else {
    }
    return
  }
  func.func @transform_0(%arg0: i32, %arg1: i32) -> (i32, i32) {
    %c0_i32 = arith.constant 0 : i32
    return %arg0, %arg1 : i32, i32
  }
  func.func @transform_1(%arg0: i32, %arg1: i32) -> (i32, i32) {
    %c0_i32 = arith.constant 0 : i32
    %c0_i32_0 = arith.constant 0 : i32
    return %arg1, %c0_i32 : i32, i32
  }
  func.func @transform_2(%arg0: i32, %arg1: i32) -> (i32, i32) {
    %c0_i32 = arith.constant 0 : i32
    %c0_i32_0 = arith.constant 0 : i32
    %c0_i32_1 = arith.constant 0 : i32
    return %c0_i32, %c0_i32_0 : i32, i32
  }
  func.func @transform_3(%arg0: i32, %arg1: i32) -> (i32, i32) {
    %c0_i32 = arith.constant 0 : i32
    %c0_i32_0 = arith.constant 0 : i32
    %c0_i32_1 = arith.constant 0 : i32
    return %c0_i32, %c0_i32_0 : i32, i32
  }
  func.func @transform_4(%arg0: i32, %arg1: i32) -> (i32, i32) {
    %c0_i32 = arith.constant 0 : i32
    %c0_i32_0 = arith.constant 0 : i32
    %c0_i32_1 = arith.constant 0 : i32
    return %c0_i32, %c0_i32_0 : i32, i32
  }
  func.func @transform_5(%arg0: i32, %arg1: i32) -> (i32, i32) {
    %c0_i32 = arith.constant 0 : i32
    %c0_i32_0 = arith.constant 0 : i32
    return %arg0, %c0_i32 : i32, i32
  }
}

</mosaic_0001>

<llo_original>
// kernel: net_forward.3
$region0: #{net_forward.3}
  #allocation0 [shape = 'u32[]', space=smem, size = 0x4, offset = 0x4, fixed_abs, tag = 'smem constant byte address 0x4 - core index']
  #allocation1 [shape = 'u32[144,128]{1,0:T(1,128)}', space=vmem, size = 0x12000, scoped, tag = 'internal scratch']
  %s0 = inlined_call_operand.vmem [shape: f32[2,28,28], index: 0, kind: input, shape index: {}]
  %s1 = inlined_call_operand.hbm [shape: f32[9,32], index: 1, kind: input, shape index: {}]
  %s2 = inlined_call_operand.hbm [shape: f32[1,32], index: 2, kind: input, shape index: {}]
  %s3 = inlined_call_operand.vmem [shape: bf16[2,26,26,32], index: 3, kind: output, shape index: {}]
  %s4 = sld [smem:[#allocation0]]
  $region53: #{net_forward.3} parent=0
    _
  %s6 = ssub.s32 1, %s4
  %s7 = scalar_select 0, %s6, %s4
  $region1: #{net_forward.3} parent=0
    #allocation2 [shape = 'u8[8192]{0}', space=vmem, size = 0x2000, scoped, tag = 'input window, operand 1, single buffered']
    #allocation3 [shape = 's32[2]{0}', space=sflag, size = 0x8, scoped, tag = 'scoped memory for net_forward.3']
    #allocation4 [shape = 'u8[512]{0}', space=vmem, size = 0x400, scoped, tag = 'input window, operand 2, single buffered']
    #allocation5 [shape = 's32[1]{0}', space=sflag, size = 0x4, scoped, tag = 'scoped memory for net_forward.3']
    %8 = vsyncpa [#allocation3], 0
    %9 = vsyncpa [#allocation5], 0
    loop: start=0, step=1, limit=4
    $region2: #{net_forward.3} parent=1 // loop_pre_header
      _
    $region3: #{net_forward.3} parent=1 // loop_header
      %s11 = sphi 0, %s15
      %p12 = scmp.ge.s32.totalorder %s11, 4
      %s21 = sphi 0, %s23
      %s24 = sphi 0, %s21
      %s25 = sphi 0, %s24
      %s41 = sphi 0, %s25
      %s45 = sphi 0, %s45
      %s47 = sphi 0, %s45
      %s48 = sphi 0, %s47
      %s62 = sphi 0, %s48
      %s66 = sphi 0, %s66
      %s68 = sphi 0, %s66
      %s69 = sphi 0, %s68
      %s83 = sphi 0, %s69
      %s89 = sphi 0, %s91
      %s92 = sphi 0, %s89
      %s93 = sphi 0, %s92
      %s109 = sphi 0, %s93
    $region4: #{net_forward.3} parent=1 // loop_header_branch
      %14 = sbr.rel (%p12) target = $region8
    $region5: #{net_forward.3} parent=1 // loop_body
      %s16 = ssub.s32 %s11, 1
      %s17 = ssub.s32 %s11, 2
      %s18 = sadd.s32 %s11, 1
      %s19 = ssub.s32 %s11, %s18
      %p20 = scmp.eq.s32.totalorder %s19, 0
      %s22 = sadd.s32 %s21, 1
      %s23 = scalar_select %p20, %s21, %s22
      %p26 = pneg %p20
      %p27 = scmp.eq.s32.totalorder %s11, 1
      %p28 = por %p26, %p27
      %p29 = scmp.ne.s32.totalorder %s21, %s24
      %p30 = scmp.eq.s32.totalorder %s11, 0
      %p31 = por %p29, %p30
      %p32 = scmp.ne.s32.totalorder %s21, %s24
      %p33 = scmp.eq.s32.totalorder %s16, 1
      %p34 = por %p32, %p33
      %p35 = scmp.ne.s32.totalorder %s24, %s25
      %p36 = scmp.eq.s32.totalorder %s16, 0
      %p37 = por %p35, %p36
      %p38 = scmp.ne.s32.totalorder %s24, %s25
      %p39 = scmp.eq.s32.totalorder %s17, 1
      %p40 = por %p38, %p39
      %p42 = scmp.ne.s32.totalorder %s25, %s41
      %p43 = scmp.eq.s32.totalorder %s17, 0
      %p44 = por %p42, %p43
      %s46 = sadd.s32 %s45, 1
      %p49 = scmp.eq.s32.totalorder %s11, 1
      %p50 = scmp.ne.s32.totalorder %s45, %s47
      %p51 = scmp.eq.s32.totalorder %s11, 0
      %p52 = por %p50, %p51
      %p53 = scmp.ne.s32.totalorder %s45, %s47
      %p54 = scmp.eq.s32.totalorder %s16, 1
      %p55 = por %p53, %p54
      %p56 = scmp.ne.s32.totalorder %s47, %s48
      %p57 = scmp.eq.s32.totalorder %s16, 0
      %p58 = por %p56, %p57
      %p59 = scmp.ne.s32.totalorder %s47, %s48
      %p60 = scmp.eq.s32.totalorder %s17, 1
      %p61 = por %p59, %p60
      %p63 = scmp.ne.s32.totalorder %s48, %s62
      %p64 = scmp.eq.s32.totalorder %s17, 0
      %p65 = por %p63, %p64
      %s67 = sadd.s32 %s66, 1
      %p70 = scmp.eq.s32.totalorder %s11, 1
      %p71 = scmp.ne.s32.totalorder %s66, %s68
      %p72 = scmp.eq.s32.totalorder %s11, 0
      %p73 = por %p71, %p72
      %p74 = scmp.ne.s32.totalorder %s66, %s68
      %p75 = scmp.eq.s32.totalorder %s16, 1
      %p76 = por %p74, %p75
      %p77 = scmp.ne.s32.totalorder %s68, %s69
      %p78 = scmp.eq.s32.totalorder %s16, 0
      %p79 = por %p77, %p78
      %p80 = scmp.ne.s32.totalorder %s68, %s69
      %p81 = scmp.eq.s32.totalorder %s17, 1
      %p82 = por %p80, %p81
      %p84 = scmp.ne.s32.totalorder %s69, %s83
      %p85 = scmp.eq.s32.totalorder %s17, 0
      %p86 = por %p84, %p85
      %s87 = ssub.s32 %s11, %s18
      %p88 = scmp.eq.s32.totalorder %s87, 0
      %s90 = sadd.s32 %s89, 1
      %s91 = scalar_select %p88, %s89, %s90
      %p94 = pneg %p88
      %p95 = scmp.eq.s32.totalorder %s11, 1
      %p96 = por %p94, %p95
      %p97 = scmp.ne.s32.totalorder %s89, %s92
      %p98 = scmp.eq.s32.totalorder %s11, 0
      %p99 = por %p97, %p98
      %p100 = scmp.ne.s32.totalorder %s89, %s92
      %p101 = scmp.eq.s32.totalorder %s16, 1
      %p102 = por %p100, %p101
      %p103 = scmp.ne.s32.totalorder %s92, %s93
      %p104 = scmp.eq.s32.totalorder %s16, 0
      %p105 = por %p103, %p104
      %p106 = scmp.ne.s32.totalorder %s92, %s93
      %p107 = scmp.eq.s32.totalorder %s17, 1
      %p108 = por %p106, %p107
      %p110 = scmp.ne.s32.totalorder %s93, %s109
      %p111 = scmp.eq.s32.totalorder %s17, 0
      %p112 = por %p110, %p111
      %p113 = scmp.le.s32.totalorder 1, %s11
      %p114 = scmp.lt.s32.totalorder %s11, 3
      %p115 = pnand %p113, %p114
      %p116 = pneg %p115
      // Predicated region
      $region9: #{net_forward.3} parent=5 // pred_check
        _
      $region10: #{net_forward.3} parent=5 // pred_check_branch
        %118 = sbr.rel (%p115) target = $region12
      $region11: #{net_forward.3} parent=5 // pred_region
        %s119 = ssub.s32 %s11, 1
        // Predicated region
        $region13: #{net_forward.3} parent=11 // pred_check
          %p120 = pneg %p58
        $region14: #{net_forward.3} parent=11 // pred_check_branch
          %122 = sbr.rel (%p120) target = $region16
        $region15: #{net_forward.3} parent=11 // pred_region
          %s124 = ssub.s32 256, 256
          %125 = vsyncadd [#allocation3], %s124
          %s126 = sshll.u32 [#allocation2], 4
          %s127 = int_to_ptr.vmem [resolvable:$true] %s126
          %132 = dma.hbm_to_vmem [thread:$0]  %s1, 256, %s127, [#allocation3], 128, 128, 8
        $region16: #{net_forward.3} parent=11 // pred_fallthru
          _
        // Predicated region
        $region17: #{net_forward.3} parent=11 // pred_check
          %p133 = pneg %p79
        $region18: #{net_forward.3} parent=11 // pred_check_branch
          %135 = sbr.rel (%p133) target = $region20
        $region19: #{net_forward.3} parent=11 // pred_region
          %s137 = ssub.s32 16, 16
          %138 = vsyncadd [#allocation5], %s137
          %s140 = sshll.u32 [#allocation4], 4
          %s141 = int_to_ptr.vmem [resolvable:$true] %s140
          %143 = dma.hbm_to_vmem [thread:$0]  %s2, 16, %s141, [#allocation5]
        $region20: #{net_forward.3} parent=11 // pred_fallthru
          _
      $region12: #{net_forward.3} parent=5 // pred_fallthru
        _
      %p144 = scmp.lt.s32.totalorder %s11, 2
      // Predicated region
      $region21: #{net_forward.3} parent=5 // pred_check
        %p145 = pneg %p144
      $region22: #{net_forward.3} parent=5 // pred_check_branch
        %147 = sbr.rel (%p145) target = $region24
      $region23: #{net_forward.3} parent=5 // pred_region
        // Predicated region
        $region25: #{net_forward.3} parent=23 // pred_check
          %p148 = pneg %p31
        $region26: #{net_forward.3} parent=23 // pred_check_branch
          %150 = sbr.rel (%p148) target = $region28
        $region27: #{net_forward.3} parent=23 // pred_region
          %p151 = scmp.lt.s32.totalorder %s11, 1
          %s152 = scalar_select %p151, %s11, 1
          %s153 = smul.addr %s152, 4
          %s154 = smul.addr %s153, 8
          %s155 = scalar_lea.vmem %s0, %s154
        $region28: #{net_forward.3} parent=23 // pred_fallthru
          _
      $region24: #{net_forward.3} parent=5 // pred_fallthru
        _
      %p156 = scmp.le.s32.totalorder 1, %s11
      %p157 = scmp.lt.s32.totalorder %s11, 3
      %p158 = pnand %p156, %p157
      %p159 = pneg %p158
      // Predicated region
      $region29: #{net_forward.3} parent=5 // pred_check
        _
      $region30: #{net_forward.3} parent=5 // pred_check_branch
        %161 = sbr.rel (%p158) target = $region32
      $region31: #{net_forward.3} parent=5 // pred_region
        %s162 = ssub.s32 %s11, 1
        // Predicated region
        $region33: #{net_forward.3} parent=31 // pred_check
          %p163 = pneg %p58
        $region34: #{net_forward.3} parent=31 // pred_check_branch
          %165 = sbr.rel (%p163) target = $region36
        $region35: #{net_forward.3} parent=31 // pred_region
          %166 = dma.done [#allocation3], 256
        $region36: #{net_forward.3} parent=31 // pred_fallthru
          _
        // Predicated region
        $region37: #{net_forward.3} parent=31 // pred_check
          %p167 = pneg %p79
        $region38: #{net_forward.3} parent=31 // pred_check_branch
          %169 = sbr.rel (%p167) target = $region40
        $region39: #{net_forward.3} parent=31 // pred_region
          %170 = dma.done [#allocation5], 16
        $region40: #{net_forward.3} parent=31 // pred_fallthru
          _
        %p171 = scmp.lt.s32.totalorder %s16, 1
        %s172 = scalar_select %p171, %s16, 1
        %s173 = smul.addr %s172, 4
        %s174 = smul.addr %s173, 8
        %s175 = scalar_lea.vmem %s0, %s174
        %p176 = pneg %p37
        %p177 = pneg %p34
        %p178 = pneg %p58
        %p179 = pneg %p55
        %p180 = pneg %p79
        %p181 = pneg %p76
        %p182 = pneg %p105
        %p183 = pneg %p102
        %p184 = scmp.lt.s32.totalorder %s16, 1
        %s185 = scalar_select %p184, %s16, 1
        %s186 = smul.addr %s185, 104
        %s187 = smul.addr %s186, 4
        %s188 = scalar_lea.vmem %s3, %s187
        %p189 = scmp.lt.s32.totalorder %s16, 1
        %s190 = scalar_select %p189, %s16, 1
        %s191 = smul.addr %s190, 4
        %s192 = smul.addr %s191, 8
        %s193 = scalar_lea.vmem %s0, %s192
        %p194 = scmp.lt.s32.totalorder %s16, 1
        %s195 = scalar_select %p194, %s16, 1
        %s196 = smul.addr %s195, 104
        %s197 = smul.addr %s196, 4
        %s198 = scalar_lea.vmem %s3, %s197
        %v199 = vld [vmem:[%s193] sm:$0xff]
        %v200 = vld [vmem:[%s193 + $0x8] sm:$0xff]
        %v201 = vld [vmem:[%s193 + $0x10] sm:$0xff]
        %v202 = vld [vmem:[%s193 + $0x18] sm:$0xf]
        %v203 = vlaneseq
        %v204 = vshrl.u32 %v203, 7
        %v205 = vsub.s32 0, %v204
        %v206 = vrot.slane %v199, %v205
        %208 = vbcast.lane.b32.xlu0 %v206, 256
        %v209 = vpop.permute.xlu0 %208
        %s211 = sor.u32 256, 8
        %212 = vbcast.lane.b32.xlu0 %v206, %s211
        %v213 = vpop.permute.xlu0 %212
        %s215 = sor.u32 256, 16
        %216 = vbcast.lane.b32.xlu0 %v206, %s215
        %v217 = vpop.permute.xlu0 %216
        %s219 = sor.u32 256, 24
        %220 = vbcast.lane.b32.xlu0 %v206, %s219
        %v221 = vpop.permute.xlu0 %220
        %v222 = vlaneseq
        %v223 = vshrl.u32 %v222, 7
        %v224 = vsub.s32 1, %v223
        %v225 = vrot.slane %v199, %v224
        %227 = vbcast.lane.b32.xlu0 %v225, 256
        %v228 = vpop.permute.xlu0 %227
        %s230 = sor.u32 256, 8
        %231 = vbcast.lane.b32.xlu0 %v225, %s230
        %v232 = vpop.permute.xlu0 %231
        %s234 = sor.u32 256, 16
        %235 = vbcast.lane.b32.xlu0 %v225, %s234
        %v236 = vpop.permute.xlu0 %235
        %s238 = sor.u32 256, 24
        %239 = vbcast.lane.b32.xlu0 %v225, %s238
        %v240 = vpop.permute.xlu0 %239
        %v241 = vlaneseq
        %v242 = vshrl.u32 %v241, 7
        %v243 = vsub.s32 2, %v242
        %v244 = vrot.slane %v199, %v243
        %246 = vbcast.lane.b32.xlu0 %v244, 256
        %v247 = vpop.permute.xlu0 %246
        %s249 = sor.u32 256, 8
        %250 = vbcast.lane.b32.xlu0 %v244, %s249
        %v251 = vpop.permute.xlu0 %250
        %s253 = sor.u32 256, 16
        %254 = vbcast.lane.b32.xlu0 %v244, %s253
        %v255 = vpop.permute.xlu0 %254
        %s257 = sor.u32 256, 24
        %258 = vbcast.lane.b32.xlu0 %v244, %s257
        %v259 = vpop.permute.xlu0 %258
        %v260 = vlaneseq
        %v261 = vshrl.u32 %v260, 7
        %v262 = vsub.s32 3, %v261
        %v263 = vrot.slane %v199, %v262
        %265 = vbcast.lane.b32.xlu0 %v263, 256
        %v266 = vpop.permute.xlu0 %265
        %s268 = sor.u32 256, 8
        %269 = vbcast.lane.b32.xlu0 %v263, %s268
        %v270 = vpop.permute.xlu0 %269
        %s272 = sor.u32 256, 16
        %273 = vbcast.lane.b32.xlu0 %v263, %s272
        %v274 = vpop.permute.xlu0 %273
        %s276 = sor.u32 256, 24
        %277 = vbcast.lane.b32.xlu0 %v263, %s276
        %v278 = vpop.permute.xlu0 %277
        %v279 = vlaneseq
        %v280 = vshrl.u32 %v279, 7
        %v281 = vsub.s32 4, %v280
        %v282 = vrot.slane %v199, %v281
        %284 = vbcast.lane.b32.xlu0 %v282, 256
        %v285 = vpop.permute.xlu0 %284
        %s287 = sor.u32 256, 8
        %288 = vbcast.lane.b32.xlu0 %v282, %s287
        %v289 = vpop.permute.xlu0 %288
        %s291 = sor.u32 256, 16
        %292 = vbcast.lane.b32.xlu0 %v282, %s291
        %v293 = vpop.permute.xlu0 %292
        %s295 = sor.u32 256, 24
        %296 = vbcast.lane.b32.xlu0 %v282, %s295
        %v297 = vpop.permute.xlu0 %296
        %v298 = vlaneseq
        %v299 = vshrl.u32 %v298, 7
        %v300 = vsub.s32 5, %v299
        %v301 = vrot.slane %v199, %v300
        %303 = vbcast.lane.b32.xlu0 %v301, 256
        %v304 = vpop.permute.xlu0 %303
        %s306 = sor.u32 256, 8
        %307 = vbcast.lane.b32.xlu0 %v301, %s306
        %v308 = vpop.permute.xlu0 %307
        %s310 = sor.u32 256, 16
        %311 = vbcast.lane.b32.xlu0 %v301, %s310
        %v312 = vpop.permute.xlu0 %311
        %s314 = sor.u32 256, 24
        %315 = vbcast.lane.b32.xlu0 %v301, %s314
        %v316 = vpop.permute.xlu0 %315
        %v317 = vlaneseq
        %v318 = vshrl.u32 %v317, 7
        %v319 = vsub.s32 6, %v318
        %v320 = vrot.slane %v199, %v319
        %322 = vbcast.lane.b32.xlu0 %v320, 256
        %v323 = vpop.permute.xlu0 %322
        %s325 = sor.u32 256, 8
        %326 = vbcast.lane.b32.xlu0 %v320, %s325
        %v327 = vpop.permute.xlu0 %326
        %s329 = sor.u32 256, 16
        %330 = vbcast.lane.b32.xlu0 %v320, %s329
        %v331 = vpop.permute.xlu0 %330
        %s333 = sor.u32 256, 24
        %334 = vbcast.lane.b32.xlu0 %v320, %s333
        %v335 = vpop.permute.xlu0 %334
        %v336 = vlaneseq
        %v337 = vshrl.u32 %v336, 7
        %v338 = vsub.s32 7, %v337
        %v339 = vrot.slane %v199, %v338
        %341 = vbcast.lane.b32.xlu0 %v339, 256
        %v342 = vpop.permute.xlu0 %341
        %s344 = sor.u32 256, 8
        %345 = vbcast.lane.b32.xlu0 %v339, %s344
        %v346 = vpop.permute.xlu0 %345
        %s348 = sor.u32 256, 16
        %349 = vbcast.lane.b32.xlu0 %v339, %s348
        %v350 = vpop.permute.xlu0 %349
        %s352 = sor.u32 256, 24
        %353 = vbcast.lane.b32.xlu0 %v339, %s352
        %v354 = vpop.permute.xlu0 %353
        %v355 = vlaneseq
        %v356 = vshrl.u32 %v355, 7
        %v357 = vsub.s32 0, %v356
        %v358 = vrot.slane %v200, %v357
        %360 = vbcast.lane.b32.xlu0 %v358, 256
        %v361 = vpop.permute.xlu0 %360
        %s363 = sor.u32 256, 8
        %364 = vbcast.lane.b32.xlu0 %v358, %s363
        %v365 = vpop.permute.xlu0 %364
        %s367 = sor.u32 256, 16
        %368 = vbcast.lane.b32.xlu0 %v358, %s367
        %v369 = vpop.permute.xlu0 %368
        %s371 = sor.u32 256, 24
        %372 = vbcast.lane.b32.xlu0 %v358, %s371
        %v373 = vpop.permute.xlu0 %372
        %v374 = vlaneseq
        %v375 = vshrl.u32 %v374, 7
        %v376 = vsub.s32 1, %v375
        %v377 = vrot.slane %v200, %v376
        %379 = vbcast.lane.b32.xlu0 %v377, 256
        %v380 = vpop.permute.xlu0 %379
        %s382 = sor.u32 256, 8
        %383 = vbcast.lane.b32.xlu0 %v377, %s382
        %v384 = vpop.permute.xlu0 %383
        %s386 = sor.u32 256, 16
        %387 = vbcast.lane.b32.xlu0 %v377, %s386
        %v388 = vpop.permute.xlu0 %387
        %s390 = sor.u32 256, 24
        %391 = vbcast.lane.b32.xlu0 %v377, %s390
        %v392 = vpop.permute.xlu0 %391
        %v393 = vlaneseq
        %v394 = vshrl.u32 %v393, 7
        %v395 = vsub.s32 2, %v394
        %v396 = vrot.slane %v200, %v395
        %398 = vbcast.lane.b32.xlu0 %v396, 256
        %v399 = vpop.permute.xlu0 %398
        %s401 = sor.u32 256, 8
        %402 = vbcast.lane.b32.xlu0 %v396, %s401
        %v403 = vpop.permute.xlu0 %402
        %s405 = sor.u32 256, 16
        %406 = vbcast.lane.b32.xlu0 %v396, %s405
        %v407 = vpop.permute.xlu0 %406
        %s409 = sor.u32 256, 24
        %410 = vbcast.lane.b32.xlu0 %v396, %s409
        %v411 = vpop.permute.xlu0 %410
        %v412 = vlaneseq
        %v413 = vshrl.u32 %v412, 7
        %v414 = vsub.s32 3, %v413
        %v415 = vrot.slane %v200, %v414
        %417 = vbcast.lane.b32.xlu0 %v415, 256
        %v418 = vpop.permute.xlu0 %417
        %s420 = sor.u32 256, 8
        %421 = vbcast.lane.b32.xlu0 %v415, %s420
        %v422 = vpop.permute.xlu0 %421
        %s424 = sor.u32 256, 16
        %425 = vbcast.lane.b32.xlu0 %v415, %s424
        %v426 = vpop.permute.xlu0 %425
        %s428 = sor.u32 256, 24
        %429 = vbcast.lane.b32.xlu0 %v415, %s428
        %v430 = vpop.permute.xlu0 %429
        %v431 = vlaneseq
        %v432 = vshrl.u32 %v431, 7
        %v433 = vsub.s32 4, %v432
        %v434 = vrot.slane %v200, %v433
        %436 = vbcast.lane.b32.xlu0 %v434, 256
        %v437 = vpop.permute.xlu0 %436
        %s439 = sor.u32 256, 8
        %440 = vbcast.lane.b32.xlu0 %v434, %s439
        %v441 = vpop.permute.xlu0 %440
        %s443 = sor.u32 256, 16
        %444 = vbcast.lane.b32.xlu0 %v434, %s443
        %v445 = vpop.permute.xlu0 %444
        %s447 = sor.u32 256, 24
        %448 = vbcast.lane.b32.xlu0 %v434, %s447
        %v449 = vpop.permute.xlu0 %448
        %v450 = vlaneseq
        %v451 = vshrl.u32 %v450, 7
        %v452 = vsub.s32 5, %v451
        %v453 = vrot.slane %v200, %v452
        %455 = vbcast.lane.b32.xlu0 %v453, 256
        %v456 = vpop.permute.xlu0 %455
        %s458 = sor.u32 256, 8
        %459 = vbcast.lane.b32.xlu0 %v453, %s458
        %v460 = vpop.permute.xlu0 %459
        %s462 = sor.u32 256, 16
        %463 = vbcast.lane.b32.xlu0 %v453, %s462
        %v464 = vpop.permute.xlu0 %463
        %s466 = sor.u32 256, 24
        %467 = vbcast.lane.b32.xlu0 %v453, %s466
        %v468 = vpop.permute.xlu0 %467
        %v469 = vlaneseq
        %v470 = vshrl.u32 %v469, 7
        %v471 = vsub.s32 6, %v470
        %v472 = vrot.slane %v200, %v471
        %474 = vbcast.lane.b32.xlu0 %v472, 256
        %v475 = vpop.permute.xlu0 %474
        %s477 = sor.u32 256, 8
        %478 = vbcast.lane.b32.xlu0 %v472, %s477
        %v479 = vpop.permute.xlu0 %478
        %s481 = sor.u32 256, 16
        %482 = vbcast.lane.b32.xlu0 %v472, %s481
        %v483 = vpop.permute.xlu0 %482
        %s485 = sor.u32 256, 24
        %486 = vbcast.lane.b32.xlu0 %v472, %s485
        %v487 = vpop.permute.xlu0 %486
        %v488 = vlaneseq
        %v489 = vshrl.u32 %v488, 7
        %v490 = vsub.s32 7, %v489
        %v491 = vrot.slane %v200, %v490
        %493 = vbcast.lane.b32.xlu0 %v491, 256
        %v494 = vpop.permute.xlu0 %493
        %s496 = sor.u32 256, 8
        %497 = vbcast.lane.b32.xlu0 %v491, %s496
        %v498 = vpop.permute.xlu0 %497
        %s500 = sor.u32 256, 16
        %501 = vbcast.lane.b32.xlu0 %v491, %s500
        %v502 = vpop.permute.xlu0 %501
        %s504 = sor.u32 256, 24
        %505 = vbcast.lane.b32.xlu0 %v491, %s504
        %v506 = vpop.permute.xlu0 %505
        %v507 = vlaneseq
        %v508 = vshrl.u32 %v507, 7
        %v509 = vsub.s32 0, %v508
        %v510 = vrot.slane %v201, %v509
        %512 = vbcast.lane.b32.xlu0 %v510, 256
        %v513 = vpop.permute.xlu0 %512
        %s515 = sor.u32 256, 8
        %516 = vbcast.lane.b32.xlu0 %v510, %s515
        %v517 = vpop.permute.xlu0 %516
        %s519 = sor.u32 256, 16
        %520 = vbcast.lane.b32.xlu0 %v510, %s519
        %v521 = vpop.permute.xlu0 %520
        %s523 = sor.u32 256, 24
        %524 = vbcast.lane.b32.xlu0 %v510, %s523
        %v525 = vpop.permute.xlu0 %524
        %v526 = vlaneseq
        %v527 = vshrl.u32 %v526, 7
        %v528 = vsub.s32 1, %v527
        %v529 = vrot.slane %v201, %v528
        %531 = vbcast.lane.b32.xlu0 %v529, 256
        %v532 = vpop.permute.xlu0 %531
        %s534 = sor.u32 256, 8
        %535 = vbcast.lane.b32.xlu0 %v529, %s534
        %v536 = vpop.permute.xlu0 %535
        %s538 = sor.u32 256, 16
        %539 = vbcast.lane.b32.xlu0 %v529, %s538
        %v540 = vpop.permute.xlu0 %539
        %s542 = sor.u32 256, 24
        %543 = vbcast.lane.b32.xlu0 %v529, %s542
        %v544 = vpop.permute.xlu0 %543
        %v545 = vlaneseq
        %v546 = vshrl.u32 %v545, 7
        %v547 = vsub.s32 2, %v546
        %v548 = vrot.slane %v201, %v547
        %550 = vbcast.lane.b32.xlu0 %v548, 256
        %v551 = vpop.permute.xlu0 %550
        %s553 = sor.u32 256, 8
        %554 = vbcast.lane.b32.xlu0 %v548, %s553
        %v555 = vpop.permute.xlu0 %554
        %s557 = sor.u32 256, 16
        %558 = vbcast.lane.b32.xlu0 %v548, %s557
        %v559 = vpop.permute.xlu0 %558
        %s561 = sor.u32 256, 24
        %562 = vbcast.lane.b32.xlu0 %v548, %s561
        %v563 = vpop.permute.xlu0 %562
        %v564 = vlaneseq
        %v565 = vshrl.u32 %v564, 7
        %v566 = vsub.s32 3, %v565
        %v567 = vrot.slane %v201, %v566
        %569 = vbcast.lane.b32.xlu0 %v567, 256
        %v570 = vpop.permute.xlu0 %569
        %s572 = sor.u32 256, 8
        %573 = vbcast.lane.b32.xlu0 %v567, %s572
        %v574 = vpop.permute.xlu0 %573
        %s576 = sor.u32 256, 16
        %577 = vbcast.lane.b32.xlu0 %v567, %s576
        %v578 = vpop.permute.xlu0 %577
        %s580 = sor.u32 256, 24
        %581 = vbcast.lane.b32.xlu0 %v567, %s580
        %v582 = vpop.permute.xlu0 %581
        %v583 = vlaneseq
        %v584 = vshrl.u32 %v583, 7
        %v585 = vsub.s32 4, %v584
        %v586 = vrot.slane %v201, %v585
        %588 = vbcast.lane.b32.xlu0 %v586, 256
        %v589 = vpop.permute.xlu0 %588
        %s591 = sor.u32 256, 8
        %592 = vbcast.lane.b32.xlu0 %v586, %s591
        %v593 = vpop.permute.xlu0 %592
        %s595 = sor.u32 256, 16
        %596 = vbcast.lane.b32.xlu0 %v586, %s595
        %v597 = vpop.permute.xlu0 %596
        %s599 = sor.u32 256, 24
        %600 = vbcast.lane.b32.xlu0 %v586, %s599
        %v601 = vpop.permute.xlu0 %600
        %v602 = vlaneseq
        %v603 = vshrl.u32 %v602, 7
        %v604 = vsub.s32 5, %v603
        %v605 = vrot.slane %v201, %v604
        %607 = vbcast.lane.b32.xlu0 %v605, 256
        %v608 = vpop.permute.xlu0 %607
        %s610 = sor.u32 256, 8
        %611 = vbcast.lane.b32.xlu0 %v605, %s610
        %v612 = vpop.permute.xlu0 %611
        %s614 = sor.u32 256, 16
        %615 = vbcast.lane.b32.xlu0 %v605, %s614
        %v616 = vpop.permute.xlu0 %615
        %s618 = sor.u32 256, 24
        %619 = vbcast.lane.b32.xlu0 %v605, %s618
        %v620 = vpop.permute.xlu0 %619
        %v621 = vlaneseq
        %v622 = vshrl.u32 %v621, 7
        %v623 = vsub.s32 6, %v622
        %v624 = vrot.slane %v201, %v623
        %626 = vbcast.lane.b32.xlu0 %v624, 256
        %v627 = vpop.permute.xlu0 %626
        %s629 = sor.u32 256, 8
        %630 = vbcast.lane.b32.xlu0 %v624, %s629
        %v631 = vpop.permute.xlu0 %630
        %s633 = sor.u32 256, 16
        %634 = vbcast.lane.b32.xlu0 %v624, %s633
        %v635 = vpop.permute.xlu0 %634
        %s637 = sor.u32 256, 24
        %638 = vbcast.lane.b32.xlu0 %v624, %s637
        %v639 = vpop.permute.xlu0 %638
        %v640 = vlaneseq
        %v641 = vshrl.u32 %v640, 7
        %v642 = vsub.s32 7, %v641
        %v643 = vrot.slane %v201, %v642
        %645 = vbcast.lane.b32.xlu0 %v643, 256
        %v646 = vpop.permute.xlu0 %645
        %s648 = sor.u32 256, 8
        %649 = vbcast.lane.b32.xlu0 %v643, %s648
        %v650 = vpop.permute.xlu0 %649
        %s652 = sor.u32 256, 16
        %653 = vbcast.lane.b32.xlu0 %v643, %s652
        %v654 = vpop.permute.xlu0 %653
        %s656 = sor.u32 256, 24
        %657 = vbcast.lane.b32.xlu0 %v643, %s656
        %v658 = vpop.permute.xlu0 %657
        %v659 = vlaneseq
        %v660 = vshrl.u32 %v659, 7
        %v661 = vsub.s32 0, %v660
        %v662 = vrot.slane %v202, %v661
        %664 = vbcast.lane.b32.xlu0 %v662, 256
        %v665 = vpop.permute.xlu0 %664
        %s667 = sor.u32 256, 8
        %668 = vbcast.lane.b32.xlu0 %v662, %s667
        %v669 = vpop.permute.xlu0 %668
        %s671 = sor.u32 256, 16
        %672 = vbcast.lane.b32.xlu0 %v662, %s671
        %v673 = vpop.permute.xlu0 %672
        %s675 = sor.u32 256, 24
        %676 = vbcast.lane.b32.xlu0 %v662, %s675
        %v677 = vpop.permute.xlu0 %676
        %v678 = vlaneseq
        %v679 = vshrl.u32 %v678, 7
        %v680 = vsub.s32 1, %v679
        %v681 = vrot.slane %v202, %v680
        %683 = vbcast.lane.b32.xlu0 %v681, 256
        %v684 = vpop.permute.xlu0 %683
        %s686 = sor.u32 256, 8
        %687 = vbcast.lane.b32.xlu0 %v681, %s686
        %v688 = vpop.permute.xlu0 %687
        %s690 = sor.u32 256, 16
        %691 = vbcast.lane.b32.xlu0 %v681, %s690
        %v692 = vpop.permute.xlu0 %691
        %s694 = sor.u32 256, 24
        %695 = vbcast.lane.b32.xlu0 %v681, %s694
        %v696 = vpop.permute.xlu0 %695
        %v697 = vld [vmem:[#allocation2] sm:$0x1]
        %v698 = vlaneseq
        %v699 = vshrl.u32 %v698, 7
        %v700 = vsub.s32 0, %v699
        %v701 = vrot.slane %v697, %v700
        %v702 = vmul.f32 %v209, %v701
        %v703 = vmul.f32 %v213, %v701
        %v704 = vmul.f32 %v217, %v701
        %v705 = vmul.f32 %v221, %v701
        %v706 = vmul.f32 %v228, %v701
        %v707 = vmul.f32 %v232, %v701
        %v708 = vmul.f32 %v236, %v701
        %v709 = vmul.f32 %v240, %v701
        %v710 = vmul.f32 %v247, %v701
        %v711 = vmul.f32 %v251, %v701
        %v712 = vmul.f32 %v255, %v701
        %v713 = vmul.f32 %v259, %v701
        %v714 = vmul.f32 %v266, %v701
        %v715 = vmul.f32 %v270, %v701
        %v716 = vmul.f32 %v274, %v701
        %v717 = vmul.f32 %v278, %v701
        %v718 = vmul.f32 %v285, %v701
        %v719 = vmul.f32 %v289, %v701
        %v720 = vmul.f32 %v293, %v701
        %v721 = vmul.f32 %v297, %v701
        %v722 = vmul.f32 %v304, %v701
        %v723 = vmul.f32 %v308, %v701
        %v724 = vmul.f32 %v312, %v701
        %v725 = vmul.f32 %v316, %v701
        %v726 = vmul.f32 %v323, %v701
        %v727 = vmul.f32 %v327, %v701
        %v728 = vmul.f32 %v331, %v701
        %v729 = vmul.f32 %v335, %v701
        %v730 = vmul.f32 %v342, %v701
        %v731 = vmul.f32 %v346, %v701
        %v732 = vmul.f32 %v350, %v701
        %v733 = vmul.f32 %v354, %v701
        %v734 = vmul.f32 %v361, %v701
        %v735 = vmul.f32 %v365, %v701
        %v736 = vmul.f32 %v369, %v701
        %v737 = vmul.f32 %v373, %v701
        %v738 = vmul.f32 %v380, %v701
        %v739 = vmul.f32 %v384, %v701
        %v740 = vmul.f32 %v388, %v701
        %v741 = vmul.f32 %v392, %v701
        %v742 = vmul.f32 %v399, %v701
        %v743 = vmul.f32 %v403, %v701
        %v744 = vmul.f32 %v407, %v701
        %v745 = vmul.f32 %v411, %v701
        %v746 = vmul.f32 %v418, %v701
        %v747 = vmul.f32 %v422, %v701
        %v748 = vmul.f32 %v426, %v701
        %v749 = vmul.f32 %v430, %v701
        %v750 = vmul.f32 %v437, %v701
        %v751 = vmul.f32 %v441, %v701
        %v752 = vmul.f32 %v445, %v701
        %v753 = vmul.f32 %v449, %v701
        %v754 = vmul.f32 %v456, %v701
        %v755 = vmul.f32 %v460, %v701
        %v756 = vmul.f32 %v464, %v701
        %v757 = vmul.f32 %v468, %v701
        %v758 = vmul.f32 %v475, %v701
        %v759 = vmul.f32 %v479, %v701
        %v760 = vmul.f32 %v483, %v701
        %v761 = vmul.f32 %v487, %v701
        %v762 = vmul.f32 %v494, %v701
        %v763 = vmul.f32 %v498, %v701
        %v764 = vmul.f32 %v502, %v701
        %v765 = vmul.f32 %v506, %v701
        %v766 = vmul.f32 %v513, %v701
        %v767 = vmul.f32 %v517, %v701
        %v768 = vmul.f32 %v521, %v701
        %v769 = vmul.f32 %v525, %v701
        %v770 = vmul.f32 %v532, %v701
        %v771 = vmul.f32 %v536, %v701
        %v772 = vmul.f32 %v540, %v701
        %v773 = vmul.f32 %v544, %v701
        %v774 = vmul.f32 %v551, %v701
        %v775 = vmul.f32 %v555, %v701
        %v776 = vmul.f32 %v559, %v701
        %v777 = vmul.f32 %v563, %v701
        %v778 = vmul.f32 %v570, %v701
        %v779 = vmul.f32 %v574, %v701
        %v780 = vmul.f32 %v578, %v701
        %v781 = vmul.f32 %v582, %v701
        %v782 = vmul.f32 %v589, %v701
        %v783 = vmul.f32 %v593, %v701
        %v784 = vmul.f32 %v597, %v701
        %v785 = vmul.f32 %v601, %v701
        %v786 = vmul.f32 %v608, %v701
        %v787 = vmul.f32 %v612, %v701
        %v788 = vmul.f32 %v616, %v701
        %v789 = vmul.f32 %v620, %v701
        %v790 = vmul.f32 %v627, %v701
        %v791 = vmul.f32 %v631, %v701
        %v792 = vmul.f32 %v635, %v701
        %v793 = vmul.f32 %v639, %v701
        %v794 = vmul.f32 %v646, %v701
        %v795 = vmul.f32 %v650, %v701
        %v796 = vmul.f32 %v654, %v701
        %v797 = vmul.f32 %v658, %v701
        %v798 = vmul.f32 %v665, %v701
        %v799 = vmul.f32 %v669, %v701
        %v800 = vmul.f32 %v673, %v701
        %v801 = vmul.f32 %v677, %v701
        %v802 = vmul.f32 %v684, %v701
        %v803 = vmul.f32 %v688, %v701
        %v804 = vmul.f32 %v692, %v701
        %v805 = vmul.f32 %v696, %v701
        %v806 = vadd.f32 %v702, 0.0
        %v807 = vadd.f32 %v703, 0.0
        %v808 = vadd.f32 %v704, 0.0
        %v809 = vadd.f32 %v705, 0.0
        %v810 = vadd.f32 %v706, 0.0
        %v811 = vadd.f32 %v707, 0.0
        %v812 = vadd.f32 %v708, 0.0
        %v813 = vadd.f32 %v709, 0.0
        %v814 = vadd.f32 %v710, 0.0
        %v815 = vadd.f32 %v711, 0.0
        %v816 = vadd.f32 %v712, 0.0
        %v817 = vadd.f32 %v713, 0.0
        %v818 = vadd.f32 %v714, 0.0
        %v819 = vadd.f32 %v715, 0.0
        %v820 = vadd.f32 %v716, 0.0
        %v821 = vadd.f32 %v717, 0.0
        %v822 = vadd.f32 %v718, 0.0
        %v823 = vadd.f32 %v719, 0.0
        %v824 = vadd.f32 %v720, 0.0
        %v825 = vadd.f32 %v721, 0.0
        %v826 = vadd.f32 %v722, 0.0
        %v827 = vadd.f32 %v723, 0.0
        %v828 = vadd.f32 %v724, 0.0
        %v829 = vadd.f32 %v725, 0.0
        %v830 = vadd.f32 %v726, 0.0
        %v831 = vadd.f32 %v727, 0.0
        %v832 = vadd.f32 %v728, 0.0
        %v833 = vadd.f32 %v729, 0.0
        %v834 = vadd.f32 %v730, 0.0
        %v835 = vadd.f32 %v731, 0.0
        %v836 = vadd.f32 %v732, 0.0
        %v837 = vadd.f32 %v733, 0.0
        %v838 = vadd.f32 %v734, 0.0
        %v839 = vadd.f32 %v735, 0.0
        %v840 = vadd.f32 %v736, 0.0
        %v841 = vadd.f32 %v737, 0.0
        %v842 = vadd.f32 %v738, 0.0
        %v843 = vadd.f32 %v739, 0.0
        %v844 = vadd.f32 %v740, 0.0
        %v845 = vadd.f32 %v741, 0.0
        %v846 = vadd.f32 %v742, 0.0
        %v847 = vadd.f32 %v743, 0.0
        %v848 = vadd.f32 %v744, 0.0
        %v849 = vadd.f32 %v745, 0.0
        %v850 = vadd.f32 %v746, 0.0
        %v851 = vadd.f32 %v747, 0.0
        %v852 = vadd.f32 %v748, 0.0
        %v853 = vadd.f32 %v749, 0.0
        %v854 = vadd.f32 %v750, 0.0
        %v855 = vadd.f32 %v751, 0.0
        %v856 = vadd.f32 %v752, 0.0
        %v857 = vadd.f32 %v753, 0.0
        %v858 = vadd.f32 %v754, 0.0
        %v859 = vadd.f32 %v755, 0.0
        %v860 = vadd.f32 %v756, 0.0
        %v861 = vadd.f32 %v757, 0.0
        %v862 = vadd.f32 %v758, 0.0
        %v863 = vadd.f32 %v759, 0.0
        %v864 = vadd.f32 %v760, 0.0
        %v865 = vadd.f32 %v761, 0.0
        %v866 = vadd.f32 %v762, 0.0
        %v867 = vadd.f32 %v763, 0.0
        %v868 = vadd.f32 %v764, 0.0
        %v869 = vadd.f32 %v765, 0.0
        %v870 = vadd.f32 %v766, 0.0
        %v871 = vadd.f32 %v767, 0.0
        %v872 = vadd.f32 %v768, 0.0
        %v873 = vadd.f32 %v769, 0.0
        %v874 = vadd.f32 %v770, 0.0
        %v875 = vadd.f32 %v771, 0.0
        %v876 = vadd.f32 %v772, 0.0
        %v877 = vadd.f32 %v773, 0.0
        %v878 = vadd.f32 %v774, 0.0
        %v879 = vadd.f32 %v775, 0.0
        %v880 = vadd.f32 %v776, 0.0
        %v881 = vadd.f32 %v777, 0.0
        %v882 = vadd.f32 %v778, 0.0
        %v883 = vadd.f32 %v779, 0.0
        %v884 = vadd.f32 %v780, 0.0
        %v885 = vadd.f32 %v781, 0.0
        %v886 = vadd.f32 %v782, 0.0
        %v887 = vadd.f32 %v783, 0.0
        %v888 = vadd.f32 %v784, 0.0
        %v889 = vadd.f32 %v785, 0.0
        %v890 = vadd.f32 %v786, 0.0
        %v891 = vadd.f32 %v787, 0.0
        %v892 = vadd.f32 %v788, 0.0
        %v893 = vadd.f32 %v789, 0.0
        %v894 = vadd.f32 %v790, 0.0
        %v895 = vadd.f32 %v791, 0.0
        %v896 = vadd.f32 %v792, 0.0
        %v897 = vadd.f32 %v793, 0.0
        %v898 = vadd.f32 %v794, 0.0
        %v899 = vadd.f32 %v795, 0.0
        %v900 = vadd.f32 %v796, 0.0
        %v901 = vadd.f32 %v797, 0.0
        %v902 = vadd.f32 %v798, 0.0
        %v903 = vadd.f32 %v799, 0.0
        %v904 = vadd.f32 %v800, 0.0
        %v905 = vadd.f32 %v801, 0.0
        %v906 = vadd.f32 %v802, 0.0
        %v907 = vadd.f32 %v803, 0.0
        %v908 = vadd.f32 %v804, 0.0
        %v909 = vadd.f32 %v805, 0.0
        %s911 = sor.u32 256, 1
        %912 = vbcast.lane.b32.xlu0 %v206, %s911
        %v913 = vpop.permute.xlu0 %912
        %s915 = sor.u32 256, 9
        %916 = vbcast.lane.b32.xlu0 %v206, %s915
        %v917 = vpop.permute.xlu0 %916
        %s919 = sor.u32 256, 17
        %920 = vbcast.lane.b32.xlu0 %v206, %s919
        %v921 = vpop.permute.xlu0 %920
        %s923 = sor.u32 256, 25
        %924 = vbcast.lane.b32.xlu0 %v206, %s923
        %v925 = vpop.permute.xlu0 %924
        %s927 = sor.u32 256, 1
        %928 = vbcast.lane.b32.xlu0 %v225, %s927
        %v929 = vpop.permute.xlu0 %928
        %s931 = sor.u32 256, 9
        %932 = vbcast.lane.b32.xlu0 %v225, %s931
        %v933 = vpop.permute.xlu0 %932
        %s935 = sor.u32 256, 17
        %936 = vbcast.lane.b32.xlu0 %v225, %s935
        %v937 = vpop.permute.xlu0 %936
        %s939 = sor.u32 256, 25
        %940 = vbcast.lane.b32.xlu0 %v225, %s939
        %v941 = vpop.permute.xlu0 %940
        %s943 = sor.u32 256, 1
        %944 = vbcast.lane.b32.xlu0 %v244, %s943
        %v945 = vpop.permute.xlu0 %944
        %s947 = sor.u32 256, 9
        %948 = vbcast.lane.b32.xlu0 %v244, %s947
        %v949 = vpop.permute.xlu0 %948
        %s951 = sor.u32 256, 17
        %952 = vbcast.lane.b32.xlu0 %v244, %s951
        %v953 = vpop.permute.xlu0 %952
        %s955 = sor.u32 256, 25
        %956 = vbcast.lane.b32.xlu0 %v244, %s955
        %v957 = vpop.permute.xlu0 %956
        %s959 = sor.u32 256, 1
        %960 = vbcast.lane.b32.xlu0 %v263, %s959
        %v961 = vpop.permute.xlu0 %960
        %s963 = sor.u32 256, 9
        %964 = vbcast.lane.b32.xlu0 %v263, %s963
        %v965 = vpop.permute.xlu0 %964
        %s967 = sor.u32 256, 17
        %968 = vbcast.lane.b32.xlu0 %v263, %s967
        %v969 = vpop.permute.xlu0 %968
        %s971 = sor.u32 256, 25
        %972 = vbcast.lane.b32.xlu0 %v263, %s971
        %v973 = vpop.permute.xlu0 %972
        %s975 = sor.u32 256, 1
        %976 = vbcast.lane.b32.xlu0 %v282, %s975
        %v977 = vpop.permute.xlu0 %976
        %s979 = sor.u32 256, 9
        %980 = vbcast.lane.b32.xlu0 %v282, %s979
        %v981 = vpop.permute.xlu0 %980
        %s983 = sor.u32 256, 17
        %984 = vbcast.lane.b32.xlu0 %v282, %s983
        %v985 = vpop.permute.xlu0 %984
        %s987 = sor.u32 256, 25
        %988 = vbcast.lane.b32.xlu0 %v282, %s987
        %v989 = vpop.permute.xlu0 %988
        %s991 = sor.u32 256, 1
        %992 = vbcast.lane.b32.xlu0 %v301, %s991
        %v993 = vpop.permute.xlu0 %992
        %s995 = sor.u32 256, 9
        %996 = vbcast.lane.b32.xlu0 %v301, %s995
        %v997 = vpop.permute.xlu0 %996
        %s999 = sor.u32 256, 17
        %1000 = vbcast.lane.b32.xlu0 %v301, %s999
        %v1001 = vpop.permute.xlu0 %1000
        %s1003 = sor.u32 256, 25
        %1004 = vbcast.lane.b32.xlu0 %v301, %s1003
        %v1005 = vpop.permute.xlu0 %1004
        %s1007 = sor.u32 256, 1
        %1008 = vbcast.lane.b32.xlu0 %v320, %s1007
        %v1009 = vpop.permute.xlu0 %1008
        %s1011 = sor.u32 256, 9
        %1012 = vbcast.lane.b32.xlu0 %v320, %s1011
        %v1013 = vpop.permute.xlu0 %1012
        %s1015 = sor.u32 256, 17
        %1016 = vbcast.lane.b32.xlu0 %v320, %s1015
        %v1017 = vpop.permute.xlu0 %1016
        %s1019 = sor.u32 256, 25
        %1020 = vbcast.lane.b32.xlu0 %v320, %s1019
        %v1021 = vpop.permute.xlu0 %1020
        %s1023 = sor.u32 256, 1
        %1024 = vbcast.lane.b32.xlu0 %v339, %s1023
        %v1025 = vpop.permute.xlu0 %1024
        %s1027 = sor.u32 256, 9
        %1028 = vbcast.lane.b32.xlu0 %v339, %s1027
        %v1029 = vpop.permute.xlu0 %1028
        %s1031 = sor.u32 256, 17
        %1032 = vbcast.lane.b32.xlu0 %v339, %s1031
        %v1033 = vpop.permute.xlu0 %1032
        %s1035 = sor.u32 256, 25
        %1036 = vbcast.lane.b32.xlu0 %v339, %s1035
        %v1037 = vpop.permute.xlu0 %1036
        %s1039 = sor.u32 256, 1
        %1040 = vbcast.lane.b32.xlu0 %v358, %s1039
        %v1041 = vpop.permute.xlu0 %1040
        %s1043 = sor.u32 256, 9
        %1044 = vbcast.lane.b32.xlu0 %v358, %s1043
        %v1045 = vpop.permute.xlu0 %1044
        %s1047 = sor.u32 256, 17
        %1048 = vbcast.lane.b32.xlu0 %v358, %s1047
        %v1049 = vpop.permute.xlu0 %1048
        %s1051 = sor.u32 256, 25
        %1052 = vbcast.lane.b32.xlu0 %v358, %s1051
        %v1053 = vpop.permute.xlu0 %1052
        %s1055 = sor.u32 256, 1
        %1056 = vbcast.lane.b32.xlu0 %v377, %s1055
        %v1057 = vpop.permute.xlu0 %1056
        %s1059 = sor.u32 256, 9
        %1060 = vbcast.lane.b32.xlu0 %v377, %s1059
        %v1061 = vpop.permute.xlu0 %1060
        %s1063 = sor.u32 256, 17
        %1064 = vbcast.lane.b32.xlu0 %v377, %s1063
        %v1065 = vpop.permute.xlu0 %1064
        %s1067 = sor.u32 256, 25
        %1068 = vbcast.lane.b32.xlu0 %v377, %s1067
        %v1069 = vpop.permute.xlu0 %1068
        %s1071 = sor.u32 256, 1
        %1072 = vbcast.lane.b32.xlu0 %v396, %s1071
        %v1073 = vpop.permute.xlu0 %1072
        %s1075 = sor.u32 256, 9
        %1076 = vbcast.lane.b32.xlu0 %v396, %s1075
        %v1077 = vpop.permute.xlu0 %1076
        %s1079 = sor.u32 256, 17
        %1080 = vbcast.lane.b32.xlu0 %v396, %s1079
        %v1081 = vpop.permute.xlu0 %1080
        %s1083 = sor.u32 256, 25
        %1084 = vbcast.lane.b32.xlu0 %v396, %s1083
        %v1085 = vpop.permute.xlu0 %1084
        %s1087 = sor.u32 256, 1
        %1088 = vbcast.lane.b32.xlu0 %v415, %s1087
        %v1089 = vpop.permute.xlu0 %1088
        %s1091 = sor.u32 256, 9
        %1092 = vbcast.lane.b32.xlu0 %v415, %s1091
        %v1093 = vpop.permute.xlu0 %1092
        %s1095 = sor.u32 256, 17
        %1096 = vbcast.lane.b32.xlu0 %v415, %s1095
        %v1097 = vpop.permute.xlu0 %1096
        %s1099 = sor.u32 256, 25
        %1100 = vbcast.lane.b32.xlu0 %v415, %s1099
        %v1101 = vpop.permute.xlu0 %1100
        %s1103 = sor.u32 256, 1
        %1104 = vbcast.lane.b32.xlu0 %v434, %s1103
        %v1105 = vpop.permute.xlu0 %1104
        %s1107 = sor.u32 256, 9
        %1108 = vbcast.lane.b32.xlu0 %v434, %s1107
        %v1109 = vpop.permute.xlu0 %1108
        %s1111 = sor.u32 256, 17
        %1112 = vbcast.lane.b32.xlu0 %v434, %s1111
        %v1113 = vpop.permute.xlu0 %1112
        %s1115 = sor.u32 256, 25
        %1116 = vbcast.lane.b32.xlu0 %v434, %s1115
        %v1117 = vpop.permute.xlu0 %1116
        %s1119 = sor.u32 256, 1
        %1120 = vbcast.lane.b32.xlu0 %v453, %s1119
        %v1121 = vpop.permute.xlu0 %1120
        %s1123 = sor.u32 256, 9
        %1124 = vbcast.lane.b32.xlu0 %v453, %s1123
        %v1125 = vpop.permute.xlu0 %1124
        %s1127 = sor.u32 256, 17
        %1128 = vbcast.lane.b32.xlu0 %v453, %s1127
        %v1129 = vpop.permute.xlu0 %1128
        %s1131 = sor.u32 256, 25
        %1132 = vbcast.lane.b32.xlu0 %v453, %s1131
        %v1133 = vpop.permute.xlu0 %1132
        %s1135 = sor.u32 256, 1
        %1136 = vbcast.lane.b32.xlu0 %v472, %s1135
        %v1137 = vpop.permute.xlu0 %1136
        %s1139 = sor.u32 256, 9
        %1140 = vbcast.lane.b32.xlu0 %v472, %s1139
        %v1141 = vpop.permute.xlu0 %1140
        %s1143 = sor.u32 256, 17
        %1144 = vbcast.lane.b32.xlu0 %v472, %s1143
        %v1145 = vpop.permute.xlu0 %1144
        %s1147 = sor.u32 256, 25
        %1148 = vbcast.lane.b32.xlu0 %v472, %s1147
        %v1149 = vpop.permute.xlu0 %1148
        %s1151 = sor.u32 256, 1
        %1152 = vbcast.lane.b32.xlu0 %v491, %s1151
        %v1153 = vpop.permute.xlu0 %1152
        %s1155 = sor.u32 256, 9
        %1156 = vbcast.lane.b32.xlu0 %v491, %s1155
        %v1157 = vpop.permute.xlu0 %1156
        %s1159 = sor.u32 256, 17
        %1160 = vbcast.lane.b32.xlu0 %v491, %s1159
        %v1161 = vpop.permute.xlu0 %1160
        %s1163 = sor.u32 256, 25
        %1164 = vbcast.lane.b32.xlu0 %v491, %s1163
        %v1165 = vpop.permute.xlu0 %1164
        %s1167 = sor.u32 256, 1
        %1168 = vbcast.lane.b32.xlu0 %v510, %s1167
        %v1169 = vpop.permute.xlu0 %1168
        %s1171 = sor.u32 256, 9
        %1172 = vbcast.lane.b32.xlu0 %v510, %s1171
        %v1173 = vpop.permute.xlu0 %1172
        %s1175 = sor.u32 256, 17
        %1176 = vbcast.lane.b32.xlu0 %v510, %s1175
        %v1177 = vpop.permute.xlu0 %1176
        %s1179 = sor.u32 256, 25
        %1180 = vbcast.lane.b32.xlu0 %v510, %s1179
        %v1181 = vpop.permute.xlu0 %1180
        %s1183 = sor.u32 256, 1
        %1184 = vbcast.lane.b32.xlu0 %v529, %s1183
        %v1185 = vpop.permute.xlu0 %1184
        %s1187 = sor.u32 256, 9
        %1188 = vbcast.lane.b32.xlu0 %v529, %s1187
        %v1189 = vpop.permute.xlu0 %1188
        %s1191 = sor.u32 256, 17
        %1192 = vbcast.lane.b32.xlu0 %v529, %s1191
        %v1193 = vpop.permute.xlu0 %1192
        %s1195 = sor.u32 256, 25
        %1196 = vbcast.lane.b32.xlu0 %v529, %s1195
        %v1197 = vpop.permute.xlu0 %1196
        %s1199 = sor.u32 256, 1
        %1200 = vbcast.lane.b32.xlu0 %v548, %s1199
        %v1201 = vpop.permute.xlu0 %1200
        %s1203 = sor.u32 256, 9
        %1204 = vbcast.lane.b32.xlu0 %v548, %s1203
        %v1205 = vpop.permute.xlu0 %1204
        %s1207 = sor.u32 256, 17
        %1208 = vbcast.lane.b32.xlu0 %v548, %s1207
        %v1209 = vpop.permute.xlu0 %1208
        %s1211 = sor.u32 256, 25
        %1212 = vbcast.lane.b32.xlu0 %v548, %s1211
        %v1213 = vpop.permute.xlu0 %1212
        %s1215 = sor.u32 256, 1
        %1216 = vbcast.lane.b32.xlu0 %v567, %s1215
        %v1217 = vpop.permute.xlu0 %1216
        %s1219 = sor.u32 256, 9
        %1220 = vbcast.lane.b32.xlu0 %v567, %s1219
        %v1221 = vpop.permute.xlu0 %1220
        %s1223 = sor.u32 256, 17
        %1224 = vbcast.lane.b32.xlu0 %v567, %s1223
        %v1225 = vpop.permute.xlu0 %1224
        %s1227 = sor.u32 256, 25
        %1228 = vbcast.lane.b32.xlu0 %v567, %s1227
        %v1229 = vpop.permute.xlu0 %1228
        %s1231 = sor.u32 256, 1
        %1232 = vbcast.lane.b32.xlu0 %v586, %s1231
        %v1233 = vpop.permute.xlu0 %1232
        %s1235 = sor.u32 256, 9
        %1236 = vbcast.lane.b32.xlu0 %v586, %s1235
        %v1237 = vpop.permute.xlu0 %1236
        %s1239 = sor.u32 256, 17
        %1240 = vbcast.lane.b32.xlu0 %v586, %s1239
        %v1241 = vpop.permute.xlu0 %1240
        %s1243 = sor.u32 256, 25
        %1244 = vbcast.lane.b32.xlu0 %v586, %s1243
        %v1245 = vpop.permute.xlu0 %1244
        %s1247 = sor.u32 256, 1
        %1248 = vbcast.lane.b32.xlu0 %v605, %s1247
        %v1249 = vpop.permute.xlu0 %1248
        %s1251 = sor.u32 256, 9
        %1252 = vbcast.lane.b32.xlu0 %v605, %s1251
        %v1253 = vpop.permute.xlu0 %1252
        %s1255 = sor.u32 256, 17
        %1256 = vbcast.lane.b32.xlu0 %v605, %s1255
        %v1257 = vpop.permute.xlu0 %1256
        %s1259 = sor.u32 256, 25
        %1260 = vbcast.lane.b32.xlu0 %v605, %s1259
        %v1261 = vpop.permute.xlu0 %1260
        %s1263 = sor.u32 256, 1
        %1264 = vbcast.lane.b32.xlu0 %v624, %s1263
        %v1265 = vpop.permute.xlu0 %1264
        %s1267 = sor.u32 256, 9
        %1268 = vbcast.lane.b32.xlu0 %v624, %s1267
        %v1269 = vpop.permute.xlu0 %1268
        %s1271 = sor.u32 256, 17
        %1272 = vbcast.lane.b32.xlu0 %v624, %s1271
        %v1273 = vpop.permute.xlu0 %1272
        %s1275 = sor.u32 256, 25
        %1276 = vbcast.lane.b32.xlu0 %v624, %s1275
        %v1277 = vpop.permute.xlu0 %1276
        %s1279 = sor.u32 256, 1
        %1280 = vbcast.lane.b32.xlu0 %v643, %s1279
        %v1281 = vpop.permute.xlu0 %1280
        %s1283 = sor.u32 256, 9
        %1284 = vbcast.lane.b32.xlu0 %v643, %s1283
        %v1285 = vpop.permute.xlu0 %1284
        %s1287 = sor.u32 256, 17
        %1288 = vbcast.lane.b32.xlu0 %v643, %s1287
        %v1289 = vpop.permute.xlu0 %1288
        %s1291 = sor.u32 256, 25
        %1292 = vbcast.lane.b32.xlu0 %v643, %s1291
        %v1293 = vpop.permute.xlu0 %1292
        %s1295 = sor.u32 256, 1
        %1296 = vbcast.lane.b32.xlu0 %v662, %s1295
        %v1297 = vpop.permute.xlu0 %1296
        %s1299 = sor.u32 256, 9
        %1300 = vbcast.lane.b32.xlu0 %v662, %s1299
        %v1301 = vpop.permute.xlu0 %1300
        %s1303 = sor.u32 256, 17
        %1304 = vbcast.lane.b32.xlu0 %v662, %s1303
        %v1305 = vpop.permute.xlu0 %1304
        %s1307 = sor.u32 256, 25
        %1308 = vbcast.lane.b32.xlu0 %v662, %s1307
        %v1309 = vpop.permute.xlu0 %1308
        %s1311 = sor.u32 256, 1
        %1312 = vbcast.lane.b32.xlu0 %v681, %s1311
        %v1313 = vpop.permute.xlu0 %1312
        %s1315 = sor.u32 256, 9
        %1316 = vbcast.lane.b32.xlu0 %v681, %s1315
        %v1317 = vpop.permute.xlu0 %1316
        %s1319 = sor.u32 256, 17
        %1320 = vbcast.lane.b32.xlu0 %v681, %s1319
        %v1321 = vpop.permute.xlu0 %1320
        %s1323 = sor.u32 256, 25
        %1324 = vbcast.lane.b32.xlu0 %v681, %s1323
        %v1325 = vpop.permute.xlu0 %1324
        %v1326 = vld [vmem:[#allocation2 + $0x1] sm:$0x1]
        %v1327 = vlaneseq
        %v1328 = vshrl.u32 %v1327, 7
        %v1329 = vsub.s32 0, %v1328
        %v1330 = vrot.slane %v1326, %v1329
        %v1331 = vmul.f32 %v913, %v1330
        %v1332 = vmul.f32 %v917, %v1330
        %v1333 = vmul.f32 %v921, %v1330
        %v1334 = vmul.f32 %v925, %v1330
        %v1335 = vmul.f32 %v929, %v1330
        %v1336 = vmul.f32 %v933, %v1330
        %v1337 = vmul.f32 %v937, %v1330
        %v1338 = vmul.f32 %v941, %v1330
        %v1339 = vmul.f32 %v945, %v1330
        %v1340 = vmul.f32 %v949, %v1330
        %v1341 = vmul.f32 %v953, %v1330
        %v1342 = vmul.f32 %v957, %v1330
        %v1343 = vmul.f32 %v961, %v1330
        %v1344 = vmul.f32 %v965, %v1330
        %v1345 = vmul.f32 %v969, %v1330
        %v1346 = vmul.f32 %v973, %v1330
        %v1347 = vmul.f32 %v977, %v1330
        %v1348 = vmul.f32 %v981, %v1330
        %v1349 = vmul.f32 %v985, %v1330
        %v1350 = vmul.f32 %v989, %v1330
        %v1351 = vmul.f32 %v993, %v1330
        %v1352 = vmul.f32 %v997, %v1330
        %v1353 = vmul.f32 %v1001, %v1330
        %v1354 = vmul.f32 %v1005, %v1330
        %v1355 = vmul.f32 %v1009, %v1330
        %v1356 = vmul.f32 %v1013, %v1330
        %v1357 = vmul.f32 %v1017, %v1330
        %v1358 = vmul.f32 %v1021, %v1330
        %v1359 = vmul.f32 %v1025, %v1330
        %v1360 = vmul.f32 %v1029, %v1330
        %v1361 = vmul.f32 %v1033, %v1330
        %v1362 = vmul.f32 %v1037, %v1330
        %v1363 = vmul.f32 %v1041, %v1330
        %v1364 = vmul.f32 %v1045, %v1330
        %v1365 = vmul.f32 %v1049, %v1330
        %v1366 = vmul.f32 %v1053, %v1330
        %v1367 = vmul.f32 %v1057, %v1330
        %v1368 = vmul.f32 %v1061, %v1330
        %v1369 = vmul.f32 %v1065, %v1330
        %v1370 = vmul.f32 %v1069, %v1330
        %v1371 = vmul.f32 %v1073, %v1330
        %v1372 = vmul.f32 %v1077, %v1330
        %v1373 = vmul.f32 %v1081, %v1330
        %v1374 = vmul.f32 %v1085, %v1330
        %v1375 = vmul.f32 %v1089, %v1330
        %v1376 = vmul.f32 %v1093, %v1330
        %v1377 = vmul.f32 %v1097, %v1330
        %v1378 = vmul.f32 %v1101, %v1330
        %v1379 = vmul.f32 %v1105, %v1330
        %v1380 = vmul.f32 %v1109, %v1330
        %v1381 = vmul.f32 %v1113, %v1330
        %v1382 = vmul.f32 %v1117, %v1330
        %v1383 = vmul.f32 %v1121, %v1330
        %v1384 = vmul.f32 %v1125, %v1330
        %v1385 = vmul.f32 %v1129, %v1330
        %v1386 = vmul.f32 %v1133, %v1330
        %v1387 = vmul.f32 %v1137, %v1330
        %v1388 = vmul.f32 %v1141, %v1330
        %v1389 = vmul.f32 %v1145, %v1330
        %v1390 = vmul.f32 %v1149, %v1330
        %v1391 = vmul.f32 %v1153, %v1330
        %v1392 = vmul.f32 %v1157, %v1330
        %v1393 = vmul.f32 %v1161, %v1330
        %v1394 = vmul.f32 %v1165, %v1330
        %v1395 = vmul.f32 %v1169, %v1330
        %v1396 = vmul.f32 %v1173, %v1330
        %v1397 = vmul.f32 %v1177, %v1330
        %v1398 = vmul.f32 %v1181, %v1330
        %v1399 = vmul.f32 %v1185, %v1330
        %v1400 = vmul.f32 %v1189, %v1330
        %v1401 = vmul.f32 %v1193, %v1330
        %v1402 = vmul.f32 %v1197, %v1330
        %v1403 = vmul.f32 %v1201, %v1330
        %v1404 = vmul.f32 %v1205, %v1330
        %v1405 = vmul.f32 %v1209, %v1330
        %v1406 = vmul.f32 %v1213, %v1330
        %v1407 = vmul.f32 %v1217, %v1330
        %v1408 = vmul.f32 %v1221, %v1330
        %v1409 = vmul.f32 %v1225, %v1330
        %v1410 = vmul.f32 %v1229, %v1330
        %v1411 = vmul.f32 %v1233, %v1330
        %v1412 = vmul.f32 %v1237, %v1330
        %v1413 = vmul.f32 %v1241, %v1330
        %v1414 = vmul.f32 %v1245, %v1330
        %v1415 = vmul.f32 %v1249, %v1330
        %v1416 = vmul.f32 %v1253, %v1330
        %v1417 = vmul.f32 %v1257, %v1330
        %v1418 = vmul.f32 %v1261, %v1330
        %v1419 = vmul.f32 %v1265, %v1330
        %v1420 = vmul.f32 %v1269, %v1330
        %v1421 = vmul.f32 %v1273, %v1330
        %v1422 = vmul.f32 %v1277, %v1330
        %v1423 = vmul.f32 %v1281, %v1330
        %v1424 = vmul.f32 %v1285, %v1330
        %v1425 = vmul.f32 %v1289, %v1330
        %v1426 = vmul.f32 %v1293, %v1330
        %v1427 = vmul.f32 %v1297, %v1330
        %v1428 = vmul.f32 %v1301, %v1330
        %v1429 = vmul.f32 %v1305, %v1330
        %v1430 = vmul.f32 %v1309, %v1330
        %v1431 = vmul.f32 %v1313, %v1330
        %v1432 = vmul.f32 %v1317, %v1330
        %v1433 = vmul.f32 %v1321, %v1330
        %v1434 = vmul.f32 %v1325, %v1330
        %v1435 = vadd.f32 %v806, %v1331
        %v1436 = vadd.f32 %v807, %v1332
        %v1437 = vadd.f32 %v808, %v1333
        %v1438 = vadd.f32 %v809, %v1334
        %v1439 = vadd.f32 %v810, %v1335
        %v1440 = vadd.f32 %v811, %v1336
        %v1441 = vadd.f32 %v812, %v1337
        %v1442 = vadd.f32 %v813, %v1338
        %v1443 = vadd.f32 %v814, %v1339
        %v1444 = vadd.f32 %v815, %v1340
        %v1445 = vadd.f32 %v816, %v1341
        %v1446 = vadd.f32 %v817, %v1342
        %v1447 = vadd.f32 %v818, %v1343
        %v1448 = vadd.f32 %v819, %v1344
        %v1449 = vadd.f32 %v820, %v1345
        %v1450 = vadd.f32 %v821, %v1346
        %v1451 = vadd.f32 %v822, %v1347
        %v1452 = vadd.f32 %v823, %v1348
        %v1453 = vadd.f32 %v824, %v1349
        %v1454 = vadd.f32 %v825, %v1350
        %v1455 = vadd.f32 %v826, %v1351
        %v1456 = vadd.f32 %v827, %v1352
        %v1457 = vadd.f32 %v828, %v1353
        %v1458 = vadd.f32 %v829, %v1354
        %v1459 = vadd.f32 %v830, %v1355
        %v1460 = vadd.f32 %v831, %v1356
        %v1461 = vadd.f32 %v832, %v1357
        %v1462 = vadd.f32 %v833, %v1358
        %v1463 = vadd.f32 %v834, %v1359
        %v1464 = vadd.f32 %v835, %v1360
        %v1465 = vadd.f32 %v836, %v1361
        %v1466 = vadd.f32 %v837, %v1362
        %v1467 = vadd.f32 %v838, %v1363
        %v1468 = vadd.f32 %v839, %v1364
        %v1469 = vadd.f32 %v840, %v1365
        %v1470 = vadd.f32 %v841, %v1366
        %v1471 = vadd.f32 %v842, %v1367
        %v1472 = vadd.f32 %v843, %v1368
        %v1473 = vadd.f32 %v844, %v1369
        %v1474 = vadd.f32 %v845, %v1370
        %v1475 = vadd.f32 %v846, %v1371
        %v1476 = vadd.f32 %v847, %v1372
        %v1477 = vadd.f32 %v848, %v1373
        %v1478 = vadd.f32 %v849, %v1374
        %v1479 = vadd.f32 %v850, %v1375
        %v1480 = vadd.f32 %v851, %v1376
        %v1481 = vadd.f32 %v852, %v1377
        %v1482 = vadd.f32 %v853, %v1378
        %v1483 = vadd.f32 %v854, %v1379
        %v1484 = vadd.f32 %v855, %v1380
        %v1485 = vadd.f32 %v856, %v1381
        %v1486 = vadd.f32 %v857, %v1382
        %v1487 = vadd.f32 %v858, %v1383
        %v1488 = vadd.f32 %v859, %v1384
        %v1489 = vadd.f32 %v860, %v1385
        %v1490 = vadd.f32 %v861, %v1386
        %v1491 = vadd.f32 %v862, %v1387
        %v1492 = vadd.f32 %v863, %v1388
        %v1493 = vadd.f32 %v864, %v1389
        %v1494 = vadd.f32 %v865, %v1390
        %v1495 = vadd.f32 %v866, %v1391
        %v1496 = vadd.f32 %v867, %v1392
        %v1497 = vadd.f32 %v868, %v1393
        %v1498 = vadd.f32 %v869, %v1394
        %v1499 = vadd.f32 %v870, %v1395
        %v1500 = vadd.f32 %v871, %v1396
        %v1501 = vadd.f32 %v872, %v1397
        %v1502 = vadd.f32 %v873, %v1398
        %v1503 = vadd.f32 %v874, %v1399
        %v1504 = vadd.f32 %v875, %v1400
        %v1505 = vadd.f32 %v876, %v1401
        %v1506 = vadd.f32 %v877, %v1402
        %v1507 = vadd.f32 %v878, %v1403
        %v1508 = vadd.f32 %v879, %v1404
        %v1509 = vadd.f32 %v880, %v1405
        %v1510 = vadd.f32 %v881, %v1406
        %v1511 = vadd.f32 %v882, %v1407
        %v1512 = vadd.f32 %v883, %v1408
        %v1513 = vadd.f32 %v884, %v1409
        %v1514 = vadd.f32 %v885, %v1410
        %v1515 = vadd.f32 %v886, %v1411
        %v1516 = vadd.f32 %v887, %v1412
        %v1517 = vadd.f32 %v888, %v1413
        %v1518 = vadd.f32 %v889, %v1414
        %v1519 = vadd.f32 %v890, %v1415
        %v1520 = vadd.f32 %v891, %v1416
        %v1521 = vadd.f32 %v892, %v1417
        %v1522 = vadd.f32 %v893, %v1418
        %v1523 = vadd.f32 %v894, %v1419
        %v1524 = vadd.f32 %v895, %v1420
        %v1525 = vadd.f32 %v896, %v1421
        %v1526 = vadd.f32 %v897, %v1422
        %v1527 = vadd.f32 %v898, %v1423
        %v1528 = vadd.f32 %v899, %v1424
        %v1529 = vadd.f32 %v900, %v1425
        %v1530 = vadd.f32 %v901, %v1426
        %v1531 = vadd.f32 %v902, %v1427
        %v1532 = vadd.f32 %v903, %v1428
        %v1533 = vadd.f32 %v904, %v1429
        %v1534 = vadd.f32 %v905, %v1430
        %v1535 = vadd.f32 %v906, %v1431
        %v1536 = vadd.f32 %v907, %v1432
        %v1537 = vadd.f32 %v908, %v1433
        %v1538 = vadd.f32 %v909, %v1434
        %s1540 = sor.u32 256, 2
        %1541 = vbcast.lane.b32.xlu0 %v206, %s1540
        %v1542 = vpop.permute.xlu0 %1541
        %s1544 = sor.u32 256, 10
        %1545 = vbcast.lane.b32.xlu0 %v206, %s1544
        %v1546 = vpop.permute.xlu0 %1545
        %s1548 = sor.u32 256, 18
        %1549 = vbcast.lane.b32.xlu0 %v206, %s1548
        %v1550 = vpop.permute.xlu0 %1549
        %s1552 = sor.u32 256, 26
        %1553 = vbcast.lane.b32.xlu0 %v206, %s1552
        %v1554 = vpop.permute.xlu0 %1553
        %s1556 = sor.u32 256, 2
        %1557 = vbcast.lane.b32.xlu0 %v225, %s1556
        %v1558 = vpop.permute.xlu0 %1557
        %s1560 = sor.u32 256, 10
        %1561 = vbcast.lane.b32.xlu0 %v225, %s1560
        %v1562 = vpop.permute.xlu0 %1561
        %s1564 = sor.u32 256, 18
        %1565 = vbcast.lane.b32.xlu0 %v225, %s1564
        %v1566 = vpop.permute.xlu0 %1565
        %s1568 = sor.u32 256, 26
        %1569 = vbcast.lane.b32.xlu0 %v225, %s1568
        %v1570 = vpop.permute.xlu0 %1569
        %s1572 = sor.u32 256, 2
        %1573 = vbcast.lane.b32.xlu0 %v244, %s1572
        %v1574 = vpop.permute.xlu0 %1573
        %s1576 = sor.u32 256, 10
        %1577 = vbcast.lane.b32.xlu0 %v244, %s1576
        %v1578 = vpop.permute.xlu0 %1577
        %s1580 = sor.u32 256, 18
        %1581 = vbcast.lane.b32.xlu0 %v244, %s1580
        %v1582 = vpop.permute.xlu0 %1581
        %s1584 = sor.u32 256, 26
        %1585 = vbcast.lane.b32.xlu0 %v244, %s1584
        %v1586 = vpop.permute.xlu0 %1585
        %s1588 = sor.u32 256, 2
        %1589 = vbcast.lane.b32.xlu0 %v263, %s1588
        %v1590 = vpop.permute.xlu0 %1589
        %s1592 = sor.u32 256, 10
        %1593 = vbcast.lane.b32.xlu0 %v263, %s1592
        %v1594 = vpop.permute.xlu0 %1593
        %s1596 = sor.u32 256, 18
        %1597 = vbcast.lane.b32.xlu0 %v263, %s1596
        %v1598 = vpop.permute.xlu0 %1597
        %s1600 = sor.u32 256, 26
        %1601 = vbcast.lane.b32.xlu0 %v263, %s1600
        %v1602 = vpop.permute.xlu0 %1601
        %s1604 = sor.u32 256, 2
        %1605 = vbcast.lane.b32.xlu0 %v282, %s1604
        %v1606 = vpop.permute.xlu0 %1605
        %s1608 = sor.u32 256, 10
        %1609 = vbcast.lane.b32.xlu0 %v282, %s1608
        %v1610 = vpop.permute.xlu0 %1609
        %s1612 = sor.u32 256, 18
        %1613 = vbcast.lane.b32.xlu0 %v282, %s1612
        %v1614 = vpop.permute.xlu0 %1613
        %s1616 = sor.u32 256, 26
        %1617 = vbcast.lane.b32.xlu0 %v282, %s1616
        %v1618 = vpop.permute.xlu0 %1617
        %s1620 = sor.u32 256, 2
        %1621 = vbcast.lane.b32.xlu0 %v301, %s1620
        %v1622 = vpop.permute.xlu0 %1621
        %s1624 = sor.u32 256, 10
        %1625 = vbcast.lane.b32.xlu0 %v301, %s1624
        %v1626 = vpop.permute.xlu0 %1625
        %s1628 = sor.u32 256, 18
        %1629 = vbcast.lane.b32.xlu0 %v301, %s1628
        %v1630 = vpop.permute.xlu0 %1629
        %s1632 = sor.u32 256, 26
        %1633 = vbcast.lane.b32.xlu0 %v301, %s1632
        %v1634 = vpop.permute.xlu0 %1633
        %s1636 = sor.u32 256, 2
        %1637 = vbcast.lane.b32.xlu0 %v320, %s1636
        %v1638 = vpop.permute.xlu0 %1637
        %s1640 = sor.u32 256, 10
        %1641 = vbcast.lane.b32.xlu0 %v320, %s1640
        %v1642 = vpop.permute.xlu0 %1641
        %s1644 = sor.u32 256, 18
        %1645 = vbcast.lane.b32.xlu0 %v320, %s1644
        %v1646 = vpop.permute.xlu0 %1645
        %s1648 = sor.u32 256, 26
        %1649 = vbcast.lane.b32.xlu0 %v320, %s1648
        %v1650 = vpop.permute.xlu0 %1649
        %s1652 = sor.u32 256, 2
        %1653 = vbcast.lane.b32.xlu0 %v339, %s1652
        %v1654 = vpop.permute.xlu0 %1653
        %s1656 = sor.u32 256, 10
        %1657 = vbcast.lane.b32.xlu0 %v339, %s1656
        %v1658 = vpop.permute.xlu0 %1657
        %s1660 = sor.u32 256, 18
        %1661 = vbcast.lane.b32.xlu0 %v339, %s1660
        %v1662 = vpop.permute.xlu0 %1661
        %s1664 = sor.u32 256, 26
        %1665 = vbcast.lane.b32.xlu0 %v339, %s1664
        %v1666 = vpop.permute.xlu0 %1665
        %s1668 = sor.u32 256, 2
        %1669 = vbcast.lane.b32.xlu0 %v358, %s1668
        %v1670 = vpop.permute.xlu0 %1669
        %s1672 = sor.u32 256, 10
        %1673 = vbcast.lane.b32.xlu0 %v358, %s1672
        %v1674 = vpop.permute.xlu0 %1673
        %s1676 = sor.u32 256, 18
        %1677 = vbcast.lane.b32.xlu0 %v358, %s1676
        %v1678 = vpop.permute.xlu0 %1677
        %s1680 = sor.u32 256, 26
        %1681 = vbcast.lane.b32.xlu0 %v358, %s1680
        %v1682 = vpop.permute.xlu0 %1681
        %s1684 = sor.u32 256, 2
        %1685 = vbcast.lane.b32.xlu0 %v377, %s1684
        %v1686 = vpop.permute.xlu0 %1685
        %s1688 = sor.u32 256, 10
        %1689 = vbcast.lane.b32.xlu0 %v377, %s1688
        %v1690 = vpop.permute.xlu0 %1689
        %s1692 = sor.u32 256, 18
        %1693 = vbcast.lane.b32.xlu0 %v377, %s1692
        %v1694 = vpop.permute.xlu0 %1693
        %s1696 = sor.u32 256, 26
        %1697 = vbcast.lane.b32.xlu0 %v377, %s1696
        %v1698 = vpop.permute.xlu0 %1697
        %s1700 = sor.u32 256, 2
        %1701 = vbcast.lane.b32.xlu0 %v396, %s1700
        %v1702 = vpop.permute.xlu0 %1701
        %s1704 = sor.u32 256, 10
        %1705 = vbcast.lane.b32.xlu0 %v396, %s1704
        %v1706 = vpop.permute.xlu0 %1705
        %s1708 = sor.u32 256, 18
        %1709 = vbcast.lane.b32.xlu0 %v396, %s1708
        %v1710 = vpop.permute.xlu0 %1709
        %s1712 = sor.u32 256, 26
        %1713 = vbcast.lane.b32.xlu0 %v396, %s1712
        %v1714 = vpop.permute.xlu0 %1713
        %s1716 = sor.u32 256, 2
        %1717 = vbcast.lane.b32.xlu0 %v415, %s1716
        %v1718 = vpop.permute.xlu0 %1717
        %s1720 = sor.u32 256, 10
        %1721 = vbcast.lane.b32.xlu0 %v415, %s1720
        %v1722 = vpop.permute.xlu0 %1721
        %s1724 = sor.u32 256, 18
        %1725 = vbcast.lane.b32.xlu0 %v415, %s1724
        %v1726 = vpop.permute.xlu0 %1725
        %s1728 = sor.u32 256, 26
        %1729 = vbcast.lane.b32.xlu0 %v415, %s1728
        %v1730 = vpop.permute.xlu0 %1729
        %s1732 = sor.u32 256, 2
        %1733 = vbcast.lane.b32.xlu0 %v434, %s1732
        %v1734 = vpop.permute.xlu0 %1733
        %s1736 = sor.u32 256, 10
        %1737 = vbcast.lane.b32.xlu0 %v434, %s1736
        %v1738 = vpop.permute.xlu0 %1737
        %s1740 = sor.u32 256, 18
        %1741 = vbcast.lane.b32.xlu0 %v434, %s1740
        %v1742 = vpop.permute.xlu0 %1741
        %s1744 = sor.u32 256, 26
        %1745 = vbcast.lane.b32.xlu0 %v434, %s1744
        %v1746 = vpop.permute.xlu0 %1745
        %s1748 = sor.u32 256, 2
        %1749 = vbcast.lane.b32.xlu0 %v453, %s1748
        %v1750 = vpop.permute.xlu0 %1749
        %s1752 = sor.u32 256, 10
        %1753 = vbcast.lane.b32.xlu0 %v453, %s1752
        %v1754 = vpop.permute.xlu0 %1753
        %s1756 = sor.u32 256, 18
        %1757 = vbcast.lane.b32.xlu0 %v453, %s1756
        %v1758 = vpop.permute.xlu0 %1757
        %s1760 = sor.u32 256, 26
        %1761 = vbcast.lane.b32.xlu0 %v453, %s1760
        %v1762 = vpop.permute.xlu0 %1761
        %s1764 = sor.u32 256, 2
        %1765 = vbcast.lane.b32.xlu0 %v472, %s1764
        %v1766 = vpop.permute.xlu0 %1765
        %s1768 = sor.u32 256, 10
        %1769 = vbcast.lane.b32.xlu0 %v472, %s1768
        %v1770 = vpop.permute.xlu0 %1769
        %s1772 = sor.u32 256, 18
        %1773 = vbcast.lane.b32.xlu0 %v472, %s1772
        %v1774 = vpop.permute.xlu0 %1773
        %s1776 = sor.u32 256, 26
        %1777 = vbcast.lane.b32.xlu0 %v472, %s1776
        %v1778 = vpop.permute.xlu0 %1777
        %s1780 = sor.u32 256, 2
        %1781 = vbcast.lane.b32.xlu0 %v491, %s1780
        %v1782 = vpop.permute.xlu0 %1781
        %s1784 = sor.u32 256, 10
        %1785 = vbcast.lane.b32.xlu0 %v491, %s1784
        %v1786 = vpop.permute.xlu0 %1785
        %s1788 = sor.u32 256, 18
        %1789 = vbcast.lane.b32.xlu0 %v491, %s1788
        %v1790 = vpop.permute.xlu0 %1789
        %s1792 = sor.u32 256, 26
        %1793 = vbcast.lane.b32.xlu0 %v491, %s1792
        %v1794 = vpop.permute.xlu0 %1793
        %s1796 = sor.u32 256, 2
        %1797 = vbcast.lane.b32.xlu0 %v510, %s1796
        %v1798 = vpop.permute.xlu0 %1797
        %s1800 = sor.u32 256, 10
        %1801 = vbcast.lane.b32.xlu0 %v510, %s1800
        %v1802 = vpop.permute.xlu0 %1801
        %s1804 = sor.u32 256, 18
        %1805 = vbcast.lane.b32.xlu0 %v510, %s1804
        %v1806 = vpop.permute.xlu0 %1805
        %s1808 = sor.u32 256, 26
        %1809 = vbcast.lane.b32.xlu0 %v510, %s1808
        %v1810 = vpop.permute.xlu0 %1809
        %s1812 = sor.u32 256, 2
        %1813 = vbcast.lane.b32.xlu0 %v529, %s1812
        %v1814 = vpop.permute.xlu0 %1813
        %s1816 = sor.u32 256, 10
        %1817 = vbcast.lane.b32.xlu0 %v529, %s1816
        %v1818 = vpop.permute.xlu0 %1817
        %s1820 = sor.u32 256, 18
        %1821 = vbcast.lane.b32.xlu0 %v529, %s1820
        %v1822 = vpop.permute.xlu0 %1821
        %s1824 = sor.u32 256, 26
        %1825 = vbcast.lane.b32.xlu0 %v529, %s1824
        %v1826 = vpop.permute.xlu0 %1825
        %s1828 = sor.u32 256, 2
        %1829 = vbcast.lane.b32.xlu0 %v548, %s1828
        %v1830 = vpop.permute.xlu0 %1829
        %s1832 = sor.u32 256, 10
        %1833 = vbcast.lane.b32.xlu0 %v548, %s1832
        %v1834 = vpop.permute.xlu0 %1833
        %s1836 = sor.u32 256, 18
        %1837 = vbcast.lane.b32.xlu0 %v548, %s1836
        %v1838 = vpop.permute.xlu0 %1837
        %s1840 = sor.u32 256, 26
        %1841 = vbcast.lane.b32.xlu0 %v548, %s1840
        %v1842 = vpop.permute.xlu0 %1841
        %s1844 = sor.u32 256, 2
        %1845 = vbcast.lane.b32.xlu0 %v567, %s1844
        %v1846 = vpop.permute.xlu0 %1845
        %s1848 = sor.u32 256, 10
        %1849 = vbcast.lane.b32.xlu0 %v567, %s1848
        %v1850 = vpop.permute.xlu0 %1849
        %s1852 = sor.u32 256, 18
        %1853 = vbcast.lane.b32.xlu0 %v567, %s1852
        %v1854 = vpop.permute.xlu0 %1853
        %s1856 = sor.u32 256, 26
        %1857 = vbcast.lane.b32.xlu0 %v567, %s1856
        %v1858 = vpop.permute.xlu0 %1857
        %s1860 = sor.u32 256, 2
        %1861 = vbcast.lane.b32.xlu0 %v586, %s1860
        %v1862 = vpop.permute.xlu0 %1861
        %s1864 = sor.u32 256, 10
        %1865 = vbcast.lane.b32.xlu0 %v586, %s1864
        %v1866 = vpop.permute.xlu0 %1865
        %s1868 = sor.u32 256, 18
        %1869 = vbcast.lane.b32.xlu0 %v586, %s1868
        %v1870 = vpop.permute.xlu0 %1869
        %s1872 = sor.u32 256, 26
        %1873 = vbcast.lane.b32.xlu0 %v586, %s1872
        %v1874 = vpop.permute.xlu0 %1873
        %s1876 = sor.u32 256, 2
        %1877 = vbcast.lane.b32.xlu0 %v605, %s1876
        %v1878 = vpop.permute.xlu0 %1877
        %s1880 = sor.u32 256, 10
        %1881 = vbcast.lane.b32.xlu0 %v605, %s1880
        %v1882 = vpop.permute.xlu0 %1881
        %s1884 = sor.u32 256, 18
        %1885 = vbcast.lane.b32.xlu0 %v605, %s1884
        %v1886 = vpop.permute.xlu0 %1885
        %s1888 = sor.u32 256, 26
        %1889 = vbcast.lane.b32.xlu0 %v605, %s1888
        %v1890 = vpop.permute.xlu0 %1889
        %s1892 = sor.u32 256, 2
        %1893 = vbcast.lane.b32.xlu0 %v624, %s1892
        %v1894 = vpop.permute.xlu0 %1893
        %s1896 = sor.u32 256, 10
        %1897 = vbcast.lane.b32.xlu0 %v624, %s1896
        %v1898 = vpop.permute.xlu0 %1897
        %s1900 = sor.u32 256, 18
        %1901 = vbcast.lane.b32.xlu0 %v624, %s1900
        %v1902 = vpop.permute.xlu0 %1901
        %s1904 = sor.u32 256, 26
        %1905 = vbcast.lane.b32.xlu0 %v624, %s1904
        %v1906 = vpop.permute.xlu0 %1905
        %s1908 = sor.u32 256, 2
        %1909 = vbcast.lane.b32.xlu0 %v643, %s1908
        %v1910 = vpop.permute.xlu0 %1909
        %s1912 = sor.u32 256, 10
        %1913 = vbcast.lane.b32.xlu0 %v643, %s1912
        %v1914 = vpop.permute.xlu0 %1913
        %s1916 = sor.u32 256, 18
        %1917 = vbcast.lane.b32.xlu0 %v643, %s1916
        %v1918 = vpop.permute.xlu0 %1917
        %s1920 = sor.u32 256, 26
        %1921 = vbcast.lane.b32.xlu0 %v643, %s1920
        %v1922 = vpop.permute.xlu0 %1921
        %s1924 = sor.u32 256, 2
        %1925 = vbcast.lane.b32.xlu0 %v662, %s1924
        %v1926 = vpop.permute.xlu0 %1925
        %s1928 = sor.u32 256, 10
        %1929 = vbcast.lane.b32.xlu0 %v662, %s1928
        %v1930 = vpop.permute.xlu0 %1929
        %s1932 = sor.u32 256, 18
        %1933 = vbcast.lane.b32.xlu0 %v662, %s1932
        %v1934 = vpop.permute.xlu0 %1933
        %s1936 = sor.u32 256, 26
        %1937 = vbcast.lane.b32.xlu0 %v662, %s1936
        %v1938 = vpop.permute.xlu0 %1937
        %s1940 = sor.u32 256, 2
        %1941 = vbcast.lane.b32.xlu0 %v681, %s1940
        %v1942 = vpop.permute.xlu0 %1941
        %s1944 = sor.u32 256, 10
        %1945 = vbcast.lane.b32.xlu0 %v681, %s1944
        %v1946 = vpop.permute.xlu0 %1945
        %s1948 = sor.u32 256, 18
        %1949 = vbcast.lane.b32.xlu0 %v681, %s1948
        %v1950 = vpop.permute.xlu0 %1949
        %s1952 = sor.u32 256, 26
        %1953 = vbcast.lane.b32.xlu0 %v681, %s1952
        %v1954 = vpop.permute.xlu0 %1953
        %v1955 = vld [vmem:[#allocation2 + $0x2] sm:$0x1]
        %v1956 = vlaneseq
        %v1957 = vshrl.u32 %v1956, 7
        %v1958 = vsub.s32 0, %v1957
        %v1959 = vrot.slane %v1955, %v1958
        %v1960 = vmul.f32 %v1542, %v1959
        %v1961 = vmul.f32 %v1546, %v1959
        %v1962 = vmul.f32 %v1550, %v1959
        %v1963 = vmul.f32 %v1554, %v1959
        %v1964 = vmul.f32 %v1558, %v1959
        %v1965 = vmul.f32 %v1562, %v1959
        %v1966 = vmul.f32 %v1566, %v1959
        %v1967 = vmul.f32 %v1570, %v1959
        %v1968 = vmul.f32 %v1574, %v1959
        %v1969 = vmul.f32 %v1578, %v1959
        %v1970 = vmul.f32 %v1582, %v1959
        %v1971 = vmul.f32 %v1586, %v1959
        %v1972 = vmul.f32 %v1590, %v1959
        %v1973 = vmul.f32 %v1594, %v1959
        %v1974 = vmul.f32 %v1598, %v1959
        %v1975 = vmul.f32 %v1602, %v1959
        %v1976 = vmul.f32 %v1606, %v1959
        %v1977 = vmul.f32 %v1610, %v1959
        %v1978 = vmul.f32 %v1614, %v1959
        %v1979 = vmul.f32 %v1618, %v1959
        %v1980 = vmul.f32 %v1622, %v1959
        %v1981 = vmul.f32 %v1626, %v1959
        %v1982 = vmul.f32 %v1630, %v1959
        %v1983 = vmul.f32 %v1634, %v1959
        %v1984 = vmul.f32 %v1638, %v1959
        %v1985 = vmul.f32 %v1642, %v1959
        %v1986 = vmul.f32 %v1646, %v1959
        %v1987 = vmul.f32 %v1650, %v1959
        %v1988 = vmul.f32 %v1654, %v1959
        %v1989 = vmul.f32 %v1658, %v1959
        %v1990 = vmul.f32 %v1662, %v1959
        %v1991 = vmul.f32 %v1666, %v1959
        %v1992 = vmul.f32 %v1670, %v1959
        %v1993 = vmul.f32 %v1674, %v1959
        %v1994 = vmul.f32 %v1678, %v1959
        %v1995 = vmul.f32 %v1682, %v1959
        %v1996 = vmul.f32 %v1686, %v1959
        %v1997 = vmul.f32 %v1690, %v1959
        %v1998 = vmul.f32 %v1694, %v1959
        %v1999 = vmul.f32 %v1698, %v1959
        %v2000 = vmul.f32 %v1702, %v1959
        %v2001 = vmul.f32 %v1706, %v1959
        %v2002 = vmul.f32 %v1710, %v1959
        %v2003 = vmul.f32 %v1714, %v1959
        %v2004 = vmul.f32 %v1718, %v1959
        %v2005 = vmul.f32 %v1722, %v1959
        %v2006 = vmul.f32 %v1726, %v1959
        %v2007 = vmul.f32 %v1730, %v1959
        %v2008 = vmul.f32 %v1734, %v1959
        %v2009 = vmul.f32 %v1738, %v1959
        %v2010 = vmul.f32 %v1742, %v1959
        %v2011 = vmul.f32 %v1746, %v1959
        %v2012 = vmul.f32 %v1750, %v1959
        %v2013 = vmul.f32 %v1754, %v1959
        %v2014 = vmul.f32 %v1758, %v1959
        %v2015 = vmul.f32 %v1762, %v1959
        %v2016 = vmul.f32 %v1766, %v1959
        %v2017 = vmul.f32 %v1770, %v1959
        %v2018 = vmul.f32 %v1774, %v1959
        %v2019 = vmul.f32 %v1778, %v1959
        %v2020 = vmul.f32 %v1782, %v1959
        %v2021 = vmul.f32 %v1786, %v1959
        %v2022 = vmul.f32 %v1790, %v1959
        %v2023 = vmul.f32 %v1794, %v1959
        %v2024 = vmul.f32 %v1798, %v1959
        %v2025 = vmul.f32 %v1802, %v1959
        %v2026 = vmul.f32 %v1806, %v1959
        %v2027 = vmul.f32 %v1810, %v1959
        %v2028 = vmul.f32 %v1814, %v1959
        %v2029 = vmul.f32 %v1818, %v1959
        %v2030 = vmul.f32 %v1822, %v1959
        %v2031 = vmul.f32 %v1826, %v1959
        %v2032 = vmul.f32 %v1830, %v1959
        %v2033 = vmul.f32 %v1834, %v1959
        %v2034 = vmul.f32 %v1838, %v1959
        %v2035 = vmul.f32 %v1842, %v1959
        %v2036 = vmul.f32 %v1846, %v1959
        %v2037 = vmul.f32 %v1850, %v1959
        %v2038 = vmul.f32 %v1854, %v1959
        %v2039 = vmul.f32 %v1858, %v1959
        %v2040 = vmul.f32 %v1862, %v1959
        %v2041 = vmul.f32 %v1866, %v1959
        %v2042 = vmul.f32 %v1870, %v1959
        %v2043 = vmul.f32 %v1874, %v1959
        %v2044 = vmul.f32 %v1878, %v1959
        %v2045 = vmul.f32 %v1882, %v1959
        %v2046 = vmul.f32 %v1886, %v1959
        %v2047 = vmul.f32 %v1890, %v1959
        %v2048 = vmul.f32 %v1894, %v1959
        %v2049 = vmul.f32 %v1898, %v1959
        %v2050 = vmul.f32 %v1902, %v1959
        %v2051 = vmul.f32 %v1906, %v1959
        %v2052 = vmul.f32 %v1910, %v1959
        %v2053 = vmul.f32 %v1914, %v1959
        %v2054 = vmul.f32 %v1918, %v1959
        %v2055 = vmul.f32 %v1922, %v1959
        %v2056 = vmul.f32 %v1926, %v1959
        %v2057 = vmul.f32 %v1930, %v1959
        %v2058 = vmul.f32 %v1934, %v1959
        %v2059 = vmul.f32 %v1938, %v1959
        %v2060 = vmul.f32 %v1942, %v1959
        %v2061 = vmul.f32 %v1946, %v1959
        %v2062 = vmul.f32 %v1950, %v1959
        %v2063 = vmul.f32 %v1954, %v1959
        %v2064 = vadd.f32 %v1435, %v1960
        %v2065 = vadd.f32 %v1436, %v1961
        %v2066 = vadd.f32 %v1437, %v1962
        %v2067 = vadd.f32 %v1438, %v1963
        %v2068 = vadd.f32 %v1439, %v1964
        %v2069 = vadd.f32 %v1440, %v1965
        %v2070 = vadd.f32 %v1441, %v1966
        %v2071 = vadd.f32 %v1442, %v1967
        %v2072 = vadd.f32 %v1443, %v1968
        %v2073 = vadd.f32 %v1444, %v1969
        %v2074 = vadd.f32 %v1445, %v1970
        %v2075 = vadd.f32 %v1446, %v1971
        %v2076 = vadd.f32 %v1447, %v1972
        %v2077 = vadd.f32 %v1448, %v1973
        %v2078 = vadd.f32 %v1449, %v1974
        %v2079 = vadd.f32 %v1450, %v1975
        %v2080 = vadd.f32 %v1451, %v1976
        %v2081 = vadd.f32 %v1452, %v1977
        %v2082 = vadd.f32 %v1453, %v1978
        %v2083 = vadd.f32 %v1454, %v1979
        %v2084 = vadd.f32 %v1455, %v1980
        %v2085 = vadd.f32 %v1456, %v1981
        %v2086 = vadd.f32 %v1457, %v1982
        %v2087 = vadd.f32 %v1458, %v1983
        %v2088 = vadd.f32 %v1459, %v1984
        %v2089 = vadd.f32 %v1460, %v1985
        %v2090 = vadd.f32 %v1461, %v1986
        %v2091 = vadd.f32 %v1462, %v1987
        %v2092 = vadd.f32 %v1463, %v1988
        %v2093 = vadd.f32 %v1464, %v1989
        %v2094 = vadd.f32 %v1465, %v1990
        %v2095 = vadd.f32 %v1466, %v1991
        %v2096 = vadd.f32 %v1467, %v1992
        %v2097 = vadd.f32 %v1468, %v1993
        %v2098 = vadd.f32 %v1469, %v1994
        %v2099 = vadd.f32 %v1470, %v1995
        %v2100 = vadd.f32 %v1471, %v1996
        %v2101 = vadd.f32 %v1472, %v1997
        %v2102 = vadd.f32 %v1473, %v1998
        %v2103 = vadd.f32 %v1474, %v1999
        %v2104 = vadd.f32 %v1475, %v2000
        %v2105 = vadd.f32 %v1476, %v2001
        %v2106 = vadd.f32 %v1477, %v2002
        %v2107 = vadd.f32 %v1478, %v2003
        %v2108 = vadd.f32 %v1479, %v2004
        %v2109 = vadd.f32 %v1480, %v2005
        %v2110 = vadd.f32 %v1481, %v2006
        %v2111 = vadd.f32 %v1482, %v2007
        %v2112 = vadd.f32 %v1483, %v2008
        %v2113 = vadd.f32 %v1484, %v2009
        %v2114 = vadd.f32 %v1485, %v2010
        %v2115 = vadd.f32 %v1486, %v2011
        %v2116 = vadd.f32 %v1487, %v2012
        %v2117 = vadd.f32 %v1488, %v2013
        %v2118 = vadd.f32 %v1489, %v2014
        %v2119 = vadd.f32 %v1490, %v2015
        %v2120 = vadd.f32 %v1491, %v2016
        %v2121 = vadd.f32 %v1492, %v2017
        %v2122 = vadd.f32 %v1493, %v2018
        %v2123 = vadd.f32 %v1494, %v2019
        %v2124 = vadd.f32 %v1495, %v2020
        %v2125 = vadd.f32 %v1496, %v2021
        %v2126 = vadd.f32 %v1497, %v2022
        %v2127 = vadd.f32 %v1498, %v2023
        %v2128 = vadd.f32 %v1499, %v2024
        %v2129 = vadd.f32 %v1500, %v2025
        %v2130 = vadd.f32 %v1501, %v2026
        %v2131 = vadd.f32 %v1502, %v2027
        %v2132 = vadd.f32 %v1503, %v2028
        %v2133 = vadd.f32 %v1504, %v2029
        %v2134 = vadd.f32 %v1505, %v2030
        %v2135 = vadd.f32 %v1506, %v2031
        %v2136 = vadd.f32 %v1507, %v2032
        %v2137 = vadd.f32 %v1508, %v2033
        %v2138 = vadd.f32 %v1509, %v2034
        %v2139 = vadd.f32 %v1510, %v2035
        %v2140 = vadd.f32 %v1511, %v2036
        %v2141 = vadd.f32 %v1512, %v2037
        %v2142 = vadd.f32 %v1513, %v2038
        %v2143 = vadd.f32 %v1514, %v2039
        %v2144 = vadd.f32 %v1515, %v2040
        %v2145 = vadd.f32 %v1516, %v2041
        %v2146 = vadd.f32 %v1517, %v2042
        %v2147 = vadd.f32 %v1518, %v2043
        %v2148 = vadd.f32 %v1519, %v2044
        %v2149 = vadd.f32 %v1520, %v2045
        %v2150 = vadd.f32 %v1521, %v2046
        %v2151 = vadd.f32 %v1522, %v2047
        %v2152 = vadd.f32 %v1523, %v2048
        %v2153 = vadd.f32 %v1524, %v2049
        %v2154 = vadd.f32 %v1525, %v2050
        %v2155 = vadd.f32 %v1526, %v2051
        %v2156 = vadd.f32 %v1527, %v2052
        %v2157 = vadd.f32 %v1528, %v2053
        %v2158 = vadd.f32 %v1529, %v2054
        %v2159 = vadd.f32 %v1530, %v2055
        %v2160 = vadd.f32 %v1531, %v2056
        %v2161 = vadd.f32 %v1532, %v2057
        %v2162 = vadd.f32 %v1533, %v2058
        %v2163 = vadd.f32 %v1534, %v2059
        %v2164 = vadd.f32 %v1535, %v2060
        %v2165 = vadd.f32 %v1536, %v2061
        %v2166 = vadd.f32 %v1537, %v2062
        %v2167 = vadd.f32 %v1538, %v2063
        %v2168 = vlaneseq
        %v2169 = vshrl.u32 %v2168, 7
        %v2170 = vsub.s32 2, %v2169
        %v2171 = vrot.slane %v202, %v2170
        %2173 = vbcast.lane.b32.xlu0 %v2171, 256
        %v2174 = vpop.permute.xlu0 %2173
        %s2176 = sor.u32 256, 8
        %2177 = vbcast.lane.b32.xlu0 %v2171, %s2176
        %v2178 = vpop.permute.xlu0 %2177
        %s2180 = sor.u32 256, 16
        %2181 = vbcast.lane.b32.xlu0 %v2171, %s2180
        %v2182 = vpop.permute.xlu0 %2181
        %s2184 = sor.u32 256, 24
        %2185 = vbcast.lane.b32.xlu0 %v2171, %s2184
        %v2186 = vpop.permute.xlu0 %2185
        %v2187 = vld [vmem:[#allocation2 + $0x3] sm:$0x1]
        %v2188 = vlaneseq
        %v2189 = vshrl.u32 %v2188, 7
        %v2190 = vsub.s32 0, %v2189
        %v2191 = vrot.slane %v2187, %v2190
        %v2192 = vmul.f32 %v228, %v2191
        %v2193 = vmul.f32 %v232, %v2191
        %v2194 = vmul.f32 %v236, %v2191
        %v2195 = vmul.f32 %v240, %v2191
        %v2196 = vmul.f32 %v247, %v2191
        %v2197 = vmul.f32 %v251, %v2191
        %v2198 = vmul.f32 %v255, %v2191
        %v2199 = vmul.f32 %v259, %v2191
        %v2200 = vmul.f32 %v266, %v2191
        %v2201 = vmul.f32 %v270, %v2191
        %v2202 = vmul.f32 %v274, %v2191
        %v2203 = vmul.f32 %v278, %v2191
        %v2204 = vmul.f32 %v285, %v2191
        %v2205 = vmul.f32 %v289, %v2191
        %v2206 = vmul.f32 %v293, %v2191
        %v2207 = vmul.f32 %v297, %v2191
        %v2208 = vmul.f32 %v304, %v2191
        %v2209 = vmul.f32 %v308, %v2191
        %v2210 = vmul.f32 %v312, %v2191
        %v2211 = vmul.f32 %v316, %v2191
        %v2212 = vmul.f32 %v323, %v2191
        %v2213 = vmul.f32 %v327, %v2191
        %v2214 = vmul.f32 %v331, %v2191
        %v2215 = vmul.f32 %v335, %v2191
        %v2216 = vmul.f32 %v342, %v2191
        %v2217 = vmul.f32 %v346, %v2191
        %v2218 = vmul.f32 %v350, %v2191
        %v2219 = vmul.f32 %v354, %v2191
        %v2220 = vmul.f32 %v361, %v2191
        %v2221 = vmul.f32 %v365, %v2191
        %v2222 = vmul.f32 %v369, %v2191
        %v2223 = vmul.f32 %v373, %v2191
        %v2224 = vmul.f32 %v380, %v2191
        %v2225 = vmul.f32 %v384, %v2191
        %v2226 = vmul.f32 %v388, %v2191
        %v2227 = vmul.f32 %v392, %v2191
        %v2228 = vmul.f32 %v399, %v2191
        %v2229 = vmul.f32 %v403, %v2191
        %v2230 = vmul.f32 %v407, %v2191
        %v2231 = vmul.f32 %v411, %v2191
        %v2232 = vmul.f32 %v418, %v2191
        %v2233 = vmul.f32 %v422, %v2191
        %v2234 = vmul.f32 %v426, %v2191
        %v2235 = vmul.f32 %v430, %v2191
        %v2236 = vmul.f32 %v437, %v2191
        %v2237 = vmul.f32 %v441, %v2191
        %v2238 = vmul.f32 %v445, %v2191
        %v2239 = vmul.f32 %v449, %v2191
        %v2240 = vmul.f32 %v456, %v2191
        %v2241 = vmul.f32 %v460, %v2191
        %v2242 = vmul.f32 %v464, %v2191
        %v2243 = vmul.f32 %v468, %v2191
        %v2244 = vmul.f32 %v475, %v2191
        %v2245 = vmul.f32 %v479, %v2191
        %v2246 = vmul.f32 %v483, %v2191
        %v2247 = vmul.f32 %v487, %v2191
        %v2248 = vmul.f32 %v494, %v2191
        %v2249 = vmul.f32 %v498, %v2191
        %v2250 = vmul.f32 %v502, %v2191
        %v2251 = vmul.f32 %v506, %v2191
        %v2252 = vmul.f32 %v513, %v2191
        %v2253 = vmul.f32 %v517, %v2191
        %v2254 = vmul.f32 %v521, %v2191
        %v2255 = vmul.f32 %v525, %v2191
        %v2256 = vmul.f32 %v532, %v2191
        %v2257 = vmul.f32 %v536, %v2191
        %v2258 = vmul.f32 %v540, %v2191
        %v2259 = vmul.f32 %v544, %v2191
        %v2260 = vmul.f32 %v551, %v2191
        %v2261 = vmul.f32 %v555, %v2191
        %v2262 = vmul.f32 %v559, %v2191
        %v2263 = vmul.f32 %v563, %v2191
        %v2264 = vmul.f32 %v570, %v2191
        %v2265 = vmul.f32 %v574, %v2191
        %v2266 = vmul.f32 %v578, %v2191
        %v2267 = vmul.f32 %v582, %v2191
        %v2268 = vmul.f32 %v589, %v2191
        %v2269 = vmul.f32 %v593, %v2191
        %v2270 = vmul.f32 %v597, %v2191
        %v2271 = vmul.f32 %v601, %v2191
        %v2272 = vmul.f32 %v608, %v2191
        %v2273 = vmul.f32 %v612, %v2191
        %v2274 = vmul.f32 %v616, %v2191
        %v2275 = vmul.f32 %v620, %v2191
        %v2276 = vmul.f32 %v627, %v2191
        %v2277 = vmul.f32 %v631, %v2191
        %v2278 = vmul.f32 %v635, %v2191
        %v2279 = vmul.f32 %v639, %v2191
        %v2280 = vmul.f32 %v646, %v2191
        %v2281 = vmul.f32 %v650, %v2191
        %v2282 = vmul.f32 %v654, %v2191
        %v2283 = vmul.f32 %v658, %v2191
        %v2284 = vmul.f32 %v665, %v2191
        %v2285 = vmul.f32 %v669, %v2191
        %v2286 = vmul.f32 %v673, %v2191
        %v2287 = vmul.f32 %v677, %v2191
        %v2288 = vmul.f32 %v684, %v2191
        %v2289 = vmul.f32 %v688, %v2191
        %v2290 = vmul.f32 %v692, %v2191
        %v2291 = vmul.f32 %v696, %v2191
        %v2292 = vmul.f32 %v2174, %v2191
        %v2293 = vmul.f32 %v2178, %v2191
        %v2294 = vmul.f32 %v2182, %v2191
        %v2295 = vmul.f32 %v2186, %v2191
        %v2296 = vadd.f32 %v2064, %v2192
        %v2297 = vadd.f32 %v2065, %v2193
        %v2298 = vadd.f32 %v2066, %v2194
        %v2299 = vadd.f32 %v2067, %v2195
        %v2300 = vadd.f32 %v2068, %v2196
        %v2301 = vadd.f32 %v2069, %v2197
        %v2302 = vadd.f32 %v2070, %v2198
        %v2303 = vadd.f32 %v2071, %v2199
        %v2304 = vadd.f32 %v2072, %v2200
        %v2305 = vadd.f32 %v2073, %v2201
        %v2306 = vadd.f32 %v2074, %v2202
        %v2307 = vadd.f32 %v2075, %v2203
        %v2308 = vadd.f32 %v2076, %v2204
        %v2309 = vadd.f32 %v2077, %v2205
        %v2310 = vadd.f32 %v2078, %v2206
        %v2311 = vadd.f32 %v2079, %v2207
        %v2312 = vadd.f32 %v2080, %v2208
        %v2313 = vadd.f32 %v2081, %v2209
        %v2314 = vadd.f32 %v2082, %v2210
        %v2315 = vadd.f32 %v2083, %v2211
        %v2316 = vadd.f32 %v2084, %v2212
        %v2317 = vadd.f32 %v2085, %v2213
        %v2318 = vadd.f32 %v2086, %v2214
        %v2319 = vadd.f32 %v2087, %v2215
        %v2320 = vadd.f32 %v2088, %v2216
        %v2321 = vadd.f32 %v2089, %v2217
        %v2322 = vadd.f32 %v2090, %v2218
        %v2323 = vadd.f32 %v2091, %v2219
        %v2324 = vadd.f32 %v2092, %v2220
        %v2325 = vadd.f32 %v2093, %v2221
        %v2326 = vadd.f32 %v2094, %v2222
        %v2327 = vadd.f32 %v2095, %v2223
        %v2328 = vadd.f32 %v2096, %v2224
        %v2329 = vadd.f32 %v2097, %v2225
        %v2330 = vadd.f32 %v2098, %v2226
        %v2331 = vadd.f32 %v2099, %v2227
        %v2332 = vadd.f32 %v2100, %v2228
        %v2333 = vadd.f32 %v2101, %v2229
        %v2334 = vadd.f32 %v2102, %v2230
        %v2335 = vadd.f32 %v2103, %v2231
        %v2336 = vadd.f32 %v2104, %v2232
        %v2337 = vadd.f32 %v2105, %v2233
        %v2338 = vadd.f32 %v2106, %v2234
        %v2339 = vadd.f32 %v2107, %v2235
        %v2340 = vadd.f32 %v2108, %v2236
        %v2341 = vadd.f32 %v2109, %v2237
        %v2342 = vadd.f32 %v2110, %v2238
        %v2343 = vadd.f32 %v2111, %v2239
        %v2344 = vadd.f32 %v2112, %v2240
        %v2345 = vadd.f32 %v2113, %v2241
        %v2346 = vadd.f32 %v2114, %v2242
        %v2347 = vadd.f32 %v2115, %v2243
        %v2348 = vadd.f32 %v2116, %v2244
        %v2349 = vadd.f32 %v2117, %v2245
        %v2350 = vadd.f32 %v2118, %v2246
        %v2351 = vadd.f32 %v2119, %v2247
        %v2352 = vadd.f32 %v2120, %v2248
        %v2353 = vadd.f32 %v2121, %v2249
        %v2354 = vadd.f32 %v2122, %v2250
        %v2355 = vadd.f32 %v2123, %v2251
        %v2356 = vadd.f32 %v2124, %v2252
        %v2357 = vadd.f32 %v2125, %v2253
        %v2358 = vadd.f32 %v2126, %v2254
        %v2359 = vadd.f32 %v2127, %v2255
        %v2360 = vadd.f32 %v2128, %v2256
        %v2361 = vadd.f32 %v2129, %v2257
        %v2362 = vadd.f32 %v2130, %v2258
        %v2363 = vadd.f32 %v2131, %v2259
        %v2364 = vadd.f32 %v2132, %v2260
        %v2365 = vadd.f32 %v2133, %v2261
        %v2366 = vadd.f32 %v2134, %v2262
        %v2367 = vadd.f32 %v2135, %v2263
        %v2368 = vadd.f32 %v2136, %v2264
        %v2369 = vadd.f32 %v2137, %v2265
        %v2370 = vadd.f32 %v2138, %v2266
        %v2371 = vadd.f32 %v2139, %v2267
        %v2372 = vadd.f32 %v2140, %v2268
        %v2373 = vadd.f32 %v2141, %v2269
        %v2374 = vadd.f32 %v2142, %v2270
        %v2375 = vadd.f32 %v2143, %v2271
        %v2376 = vadd.f32 %v2144, %v2272
        %v2377 = vadd.f32 %v2145, %v2273
        %v2378 = vadd.f32 %v2146, %v2274
        %v2379 = vadd.f32 %v2147, %v2275
        %v2380 = vadd.f32 %v2148, %v2276
        %v2381 = vadd.f32 %v2149, %v2277
        %v2382 = vadd.f32 %v2150, %v2278
        %v2383 = vadd.f32 %v2151, %v2279
        %v2384 = vadd.f32 %v2152, %v2280
        %v2385 = vadd.f32 %v2153, %v2281
        %v2386 = vadd.f32 %v2154, %v2282
        %v2387 = vadd.f32 %v2155, %v2283
        %v2388 = vadd.f32 %v2156, %v2284
        %v2389 = vadd.f32 %v2157, %v2285
        %v2390 = vadd.f32 %v2158, %v2286
        %v2391 = vadd.f32 %v2159, %v2287
        %v2392 = vadd.f32 %v2160, %v2288
        %v2393 = vadd.f32 %v2161, %v2289
        %v2394 = vadd.f32 %v2162, %v2290
        %v2395 = vadd.f32 %v2163, %v2291
        %v2396 = vadd.f32 %v2164, %v2292
        %v2397 = vadd.f32 %v2165, %v2293
        %v2398 = vadd.f32 %v2166, %v2294
        %v2399 = vadd.f32 %v2167, %v2295
        %s2401 = sor.u32 256, 1
        %2402 = vbcast.lane.b32.xlu0 %v2171, %s2401
        %v2403 = vpop.permute.xlu0 %2402
        %s2405 = sor.u32 256, 9
        %2406 = vbcast.lane.b32.xlu0 %v2171, %s2405
        %v2407 = vpop.permute.xlu0 %2406
        %s2409 = sor.u32 256, 17
        %2410 = vbcast.lane.b32.xlu0 %v2171, %s2409
        %v2411 = vpop.permute.xlu0 %2410
        %s2413 = sor.u32 256, 25
        %2414 = vbcast.lane.b32.xlu0 %v2171, %s2413
        %v2415 = vpop.permute.xlu0 %2414
        %v2416 = vld [vmem:[#allocation2 + $0x4] sm:$0x1]
        %v2417 = vlaneseq
        %v2418 = vshrl.u32 %v2417, 7
        %v2419 = vsub.s32 0, %v2418
        %v2420 = vrot.slane %v2416, %v2419
        %v2421 = vmul.f32 %v929, %v2420
        %v2422 = vmul.f32 %v933, %v2420
        %v2423 = vmul.f32 %v937, %v2420
        %v2424 = vmul.f32 %v941, %v2420
        %v2425 = vmul.f32 %v945, %v2420
        %v2426 = vmul.f32 %v949, %v2420
        %v2427 = vmul.f32 %v953, %v2420
        %v2428 = vmul.f32 %v957, %v2420
        %v2429 = vmul.f32 %v961, %v2420
        %v2430 = vmul.f32 %v965, %v2420
        %v2431 = vmul.f32 %v969, %v2420
        %v2432 = vmul.f32 %v973, %v2420
        %v2433 = vmul.f32 %v977, %v2420
        %v2434 = vmul.f32 %v981, %v2420
        %v2435 = vmul.f32 %v985, %v2420
        %v2436 = vmul.f32 %v989, %v2420
        %v2437 = vmul.f32 %v993, %v2420
        %v2438 = vmul.f32 %v997, %v2420
        %v2439 = vmul.f32 %v1001, %v2420
        %v2440 = vmul.f32 %v1005, %v2420
        %v2441 = vmul.f32 %v1009, %v2420
        %v2442 = vmul.f32 %v1013, %v2420
        %v2443 = vmul.f32 %v1017, %v2420
        %v2444 = vmul.f32 %v1021, %v2420
        %v2445 = vmul.f32 %v1025, %v2420
        %v2446 = vmul.f32 %v1029, %v2420
        %v2447 = vmul.f32 %v1033, %v2420
        %v2448 = vmul.f32 %v1037, %v2420
        %v2449 = vmul.f32 %v1041, %v2420
        %v2450 = vmul.f32 %v1045, %v2420
        %v2451 = vmul.f32 %v1049, %v2420
        %v2452 = vmul.f32 %v1053, %v2420
        %v2453 = vmul.f32 %v1057, %v2420
        %v2454 = vmul.f32 %v1061, %v2420
        %v2455 = vmul.f32 %v1065, %v2420
        %v2456 = vmul.f32 %v1069, %v2420
        %v2457 = vmul.f32 %v1073, %v2420
        %v2458 = vmul.f32 %v1077, %v2420
        %v2459 = vmul.f32 %v1081, %v2420
        %v2460 = vmul.f32 %v1085, %v2420
        %v2461 = vmul.f32 %v1089, %v2420
        %v2462 = vmul.f32 %v1093, %v2420
        %v2463 = vmul.f32 %v1097, %v2420
        %v2464 = vmul.f32 %v1101, %v2420
        %v2465 = vmul.f32 %v1105, %v2420
        %v2466 = vmul.f32 %v1109, %v2420
        %v2467 = vmul.f32 %v1113, %v2420
        %v2468 = vmul.f32 %v1117, %v2420
        %v2469 = vmul.f32 %v1121, %v2420
        %v2470 = vmul.f32 %v1125, %v2420
        %v2471 = vmul.f32 %v1129, %v2420
        %v2472 = vmul.f32 %v1133, %v2420
        %v2473 = vmul.f32 %v1137, %v2420
        %v2474 = vmul.f32 %v1141, %v2420
        %v2475 = vmul.f32 %v1145, %v2420
        %v2476 = vmul.f32 %v1149, %v2420
        %v2477 = vmul.f32 %v1153, %v2420
        %v2478 = vmul.f32 %v1157, %v2420
        %v2479 = vmul.f32 %v1161, %v2420
        %v2480 = vmul.f32 %v1165, %v2420
        %v2481 = vmul.f32 %v1169, %v2420
        %v2482 = vmul.f32 %v1173, %v2420
        %v2483 = vmul.f32 %v1177, %v2420
        %v2484 = vmul.f32 %v1181, %v2420
        %v2485 = vmul.f32 %v1185, %v2420
        %v2486 = vmul.f32 %v1189, %v2420
        %v2487 = vmul.f32 %v1193, %v2420
        %v2488 = vmul.f32 %v1197, %v2420
        %v2489 = vmul.f32 %v1201, %v2420
        %v2490 = vmul.f32 %v1205, %v2420
        %v2491 = vmul.f32 %v1209, %v2420
        %v2492 = vmul.f32 %v1213, %v2420
        %v2493 = vmul.f32 %v1217, %v2420
        %v2494 = vmul.f32 %v1221, %v2420
        %v2495 = vmul.f32 %v1225, %v2420
        %v2496 = vmul.f32 %v1229, %v2420
        %v2497 = vmul.f32 %v1233, %v2420
        %v2498 = vmul.f32 %v1237, %v2420
        %v2499 = vmul.f32 %v1241, %v2420
        %v2500 = vmul.f32 %v1245, %v2420
        %v2501 = vmul.f32 %v1249, %v2420
        %v2502 = vmul.f32 %v1253, %v2420
        %v2503 = vmul.f32 %v1257, %v2420
        %v2504 = vmul.f32 %v1261, %v2420
        %v2505 = vmul.f32 %v1265, %v2420
        %v2506 = vmul.f32 %v1269, %v2420
        %v2507 = vmul.f32 %v1273, %v2420
        %v2508 = vmul.f32 %v1277, %v2420
        %v2509 = vmul.f32 %v1281, %v2420
        %v2510 = vmul.f32 %v1285, %v2420
        %v2511 = vmul.f32 %v1289, %v2420
        %v2512 = vmul.f32 %v1293, %v2420
        %v2513 = vmul.f32 %v1297, %v2420
        %v2514 = vmul.f32 %v1301, %v2420
        %v2515 = vmul.f32 %v1305, %v2420
        %v2516 = vmul.f32 %v1309, %v2420
        %v2517 = vmul.f32 %v1313, %v2420
        %v2518 = vmul.f32 %v1317, %v2420
        %v2519 = vmul.f32 %v1321, %v2420
        %v2520 = vmul.f32 %v1325, %v2420
        %v2521 = vmul.f32 %v2403, %v2420
        %v2522 = vmul.f32 %v2407, %v2420
        %v2523 = vmul.f32 %v2411, %v2420
        %v2524 = vmul.f32 %v2415, %v2420
        %v2525 = vadd.f32 %v2296, %v2421
        %v2526 = vadd.f32 %v2297, %v2422
        %v2527 = vadd.f32 %v2298, %v2423
        %v2528 = vadd.f32 %v2299, %v2424
        %v2529 = vadd.f32 %v2300, %v2425
        %v2530 = vadd.f32 %v2301, %v2426
        %v2531 = vadd.f32 %v2302, %v2427
        %v2532 = vadd.f32 %v2303, %v2428
        %v2533 = vadd.f32 %v2304, %v2429
        %v2534 = vadd.f32 %v2305, %v2430
        %v2535 = vadd.f32 %v2306, %v2431
        %v2536 = vadd.f32 %v2307, %v2432
        %v2537 = vadd.f32 %v2308, %v2433
        %v2538 = vadd.f32 %v2309, %v2434
        %v2539 = vadd.f32 %v2310, %v2435
        %v2540 = vadd.f32 %v2311, %v2436
        %v2541 = vadd.f32 %v2312, %v2437
        %v2542 = vadd.f32 %v2313, %v2438
        %v2543 = vadd.f32 %v2314, %v2439
        %v2544 = vadd.f32 %v2315, %v2440
        %v2545 = vadd.f32 %v2316, %v2441
        %v2546 = vadd.f32 %v2317, %v2442
        %v2547 = vadd.f32 %v2318, %v2443
        %v2548 = vadd.f32 %v2319, %v2444
        %v2549 = vadd.f32 %v2320, %v2445
        %v2550 = vadd.f32 %v2321, %v2446
        %v2551 = vadd.f32 %v2322, %v2447
        %v2552 = vadd.f32 %v2323, %v2448
        %v2553 = vadd.f32 %v2324, %v2449
        %v2554 = vadd.f32 %v2325, %v2450
        %v2555 = vadd.f32 %v2326, %v2451
        %v2556 = vadd.f32 %v2327, %v2452
        %v2557 = vadd.f32 %v2328, %v2453
        %v2558 = vadd.f32 %v2329, %v2454
        %v2559 = vadd.f32 %v2330, %v2455
        %v2560 = vadd.f32 %v2331, %v2456
        %v2561 = vadd.f32 %v2332, %v2457
        %v2562 = vadd.f32 %v2333, %v2458
        %v2563 = vadd.f32 %v2334, %v2459
        %v2564 = vadd.f32 %v2335, %v2460
        %v2565 = vadd.f32 %v2336, %v2461
        %v2566 = vadd.f32 %v2337, %v2462
        %v2567 = vadd.f32 %v2338, %v2463
        %v2568 = vadd.f32 %v2339, %v2464
        %v2569 = vadd.f32 %v2340, %v2465
        %v2570 = vadd.f32 %v2341, %v2466
        %v2571 = vadd.f32 %v2342, %v2467
        %v2572 = vadd.f32 %v2343, %v2468
        %v2573 = vadd.f32 %v2344, %v2469
        %v2574 = vadd.f32 %v2345, %v2470
        %v2575 = vadd.f32 %v2346, %v2471
        %v2576 = vadd.f32 %v2347, %v2472
        %v2577 = vadd.f32 %v2348, %v2473
        %v2578 = vadd.f32 %v2349, %v2474
        %v2579 = vadd.f32 %v2350, %v2475
        %v2580 = vadd.f32 %v2351, %v2476
        %v2581 = vadd.f32 %v2352, %v2477
        %v2582 = vadd.f32 %v2353, %v2478
        %v2583 = vadd.f32 %v2354, %v2479
        %v2584 = vadd.f32 %v2355, %v2480
        %v2585 = vadd.f32 %v2356, %v2481
        %v2586 = vadd.f32 %v2357, %v2482
        %v2587 = vadd.f32 %v2358, %v2483
        %v2588 = vadd.f32 %v2359, %v2484
        %v2589 = vadd.f32 %v2360, %v2485
        %v2590 = vadd.f32 %v2361, %v2486
        %v2591 = vadd.f32 %v2362, %v2487
        %v2592 = vadd.f32 %v2363, %v2488
        %v2593 = vadd.f32 %v2364, %v2489
        %v2594 = vadd.f32 %v2365, %v2490
        %v2595 = vadd.f32 %v2366, %v2491
        %v2596 = vadd.f32 %v2367, %v2492
        %v2597 = vadd.f32 %v2368, %v2493
        %v2598 = vadd.f32 %v2369, %v2494
        %v2599 = vadd.f32 %v2370, %v2495
        %v2600 = vadd.f32 %v2371, %v2496
        %v2601 = vadd.f32 %v2372, %v2497
        %v2602 = vadd.f32 %v2373, %v2498
        %v2603 = vadd.f32 %v2374, %v2499
        %v2604 = vadd.f32 %v2375, %v2500
        %v2605 = vadd.f32 %v2376, %v2501
        %v2606 = vadd.f32 %v2377, %v2502
        %v2607 = vadd.f32 %v2378, %v2503
        %v2608 = vadd.f32 %v2379, %v2504
        %v2609 = vadd.f32 %v2380, %v2505
        %v2610 = vadd.f32 %v2381, %v2506
        %v2611 = vadd.f32 %v2382, %v2507
        %v2612 = vadd.f32 %v2383, %v2508
        %v2613 = vadd.f32 %v2384, %v2509
        %v2614 = vadd.f32 %v2385, %v2510
        %v2615 = vadd.f32 %v2386, %v2511
        %v2616 = vadd.f32 %v2387, %v2512
        %v2617 = vadd.f32 %v2388, %v2513
        %v2618 = vadd.f32 %v2389, %v2514
        %v2619 = vadd.f32 %v2390, %v2515
        %v2620 = vadd.f32 %v2391, %v2516
        %v2621 = vadd.f32 %v2392, %v2517
        %v2622 = vadd.f32 %v2393, %v2518
        %v2623 = vadd.f32 %v2394, %v2519
        %v2624 = vadd.f32 %v2395, %v2520
        %v2625 = vadd.f32 %v2396, %v2521
        %v2626 = vadd.f32 %v2397, %v2522
        %v2627 = vadd.f32 %v2398, %v2523
        %v2628 = vadd.f32 %v2399, %v2524
        %s2630 = sor.u32 256, 2
        %2631 = vbcast.lane.b32.xlu0 %v2171, %s2630
        %v2632 = vpop.permute.xlu0 %2631
        %s2634 = sor.u32 256, 10
        %2635 = vbcast.lane.b32.xlu0 %v2171, %s2634
        %v2636 = vpop.permute.xlu0 %2635
        %s2638 = sor.u32 256, 18
        %2639 = vbcast.lane.b32.xlu0 %v2171, %s2638
        %v2640 = vpop.permute.xlu0 %2639
        %s2642 = sor.u32 256, 26
        %2643 = vbcast.lane.b32.xlu0 %v2171, %s2642
        %v2644 = vpop.permute.xlu0 %2643
        %v2645 = vld [vmem:[#allocation2 + $0x5] sm:$0x1]
        %v2646 = vlaneseq
        %v2647 = vshrl.u32 %v2646, 7
        %v2648 = vsub.s32 0, %v2647
        %v2649 = vrot.slane %v2645, %v2648
        %v2650 = vmul.f32 %v1558, %v2649
        %v2651 = vmul.f32 %v1562, %v2649
        %v2652 = vmul.f32 %v1566, %v2649
        %v2653 = vmul.f32 %v1570, %v2649
        %v2654 = vmul.f32 %v1574, %v2649
        %v2655 = vmul.f32 %v1578, %v2649
        %v2656 = vmul.f32 %v1582, %v2649
        %v2657 = vmul.f32 %v1586, %v2649
        %v2658 = vmul.f32 %v1590, %v2649
        %v2659 = vmul.f32 %v1594, %v2649
        %v2660 = vmul.f32 %v1598, %v2649
        %v2661 = vmul.f32 %v1602, %v2649
        %v2662 = vmul.f32 %v1606, %v2649
        %v2663 = vmul.f32 %v1610, %v2649
        %v2664 = vmul.f32 %v1614, %v2649
        %v2665 = vmul.f32 %v1618, %v2649
        %v2666 = vmul.f32 %v1622, %v2649
        %v2667 = vmul.f32 %v1626, %v2649
        %v2668 = vmul.f32 %v1630, %v2649
        %v2669 = vmul.f32 %v1634, %v2649
        %v2670 = vmul.f32 %v1638, %v2649
        %v2671 = vmul.f32 %v1642, %v2649
        %v2672 = vmul.f32 %v1646, %v2649
        %v2673 = vmul.f32 %v1650, %v2649
        %v2674 = vmul.f32 %v1654, %v2649
        %v2675 = vmul.f32 %v1658, %v2649
        %v2676 = vmul.f32 %v1662, %v2649
        %v2677 = vmul.f32 %v1666, %v2649
        %v2678 = vmul.f32 %v1670, %v2649
        %v2679 = vmul.f32 %v1674, %v2649
        %v2680 = vmul.f32 %v1678, %v2649
        %v2681 = vmul.f32 %v1682, %v2649
        %v2682 = vmul.f32 %v1686, %v2649
        %v2683 = vmul.f32 %v1690, %v2649
        %v2684 = vmul.f32 %v1694, %v2649
        %v2685 = vmul.f32 %v1698, %v2649
        %v2686 = vmul.f32 %v1702, %v2649
        %v2687 = vmul.f32 %v1706, %v2649
        %v2688 = vmul.f32 %v1710, %v2649
        %v2689 = vmul.f32 %v1714, %v2649
        %v2690 = vmul.f32 %v1718, %v2649
        %v2691 = vmul.f32 %v1722, %v2649
        %v2692 = vmul.f32 %v1726, %v2649
        %v2693 = vmul.f32 %v1730, %v2649
        %v2694 = vmul.f32 %v1734, %v2649
        %v2695 = vmul.f32 %v1738, %v2649
        %v2696 = vmul.f32 %v1742, %v2649
        %v2697 = vmul.f32 %v1746, %v2649
        %v2698 = vmul.f32 %v1750, %v2649
        %v2699 = vmul.f32 %v1754, %v2649
        %v2700 = vmul.f32 %v1758, %v2649
        %v2701 = vmul.f32 %v1762, %v2649
        %v2702 = vmul.f32 %v1766, %v2649
        %v2703 = vmul.f32 %v1770, %v2649
        %v2704 = vmul.f32 %v1774, %v2649
        %v2705 = vmul.f32 %v1778, %v2649
        %v2706 = vmul.f32 %v1782, %v2649
        %v2707 = vmul.f32 %v1786, %v2649
        %v2708 = vmul.f32 %v1790, %v2649
        %v2709 = vmul.f32 %v1794, %v2649
        %v2710 = vmul.f32 %v1798, %v2649
        %v2711 = vmul.f32 %v1802, %v2649
        %v2712 = vmul.f32 %v1806, %v2649
        %v2713 = vmul.f32 %v1810, %v2649
        %v2714 = vmul.f32 %v1814, %v2649
        %v2715 = vmul.f32 %v1818, %v2649
        %v2716 = vmul.f32 %v1822, %v2649
        %v2717 = vmul.f32 %v1826, %v2649
        %v2718 = vmul.f32 %v1830, %v2649
        %v2719 = vmul.f32 %v1834, %v2649
        %v2720 = vmul.f32 %v1838, %v2649
        %v2721 = vmul.f32 %v1842, %v2649
        %v2722 = vmul.f32 %v1846, %v2649
        %v2723 = vmul.f32 %v1850, %v2649
        %v2724 = vmul.f32 %v1854, %v2649
        %v2725 = vmul.f32 %v1858, %v2649
        %v2726 = vmul.f32 %v1862, %v2649
        %v2727 = vmul.f32 %v1866, %v2649
        %v2728 = vmul.f32 %v1870, %v2649
        %v2729 = vmul.f32 %v1874, %v2649
        %v2730 = vmul.f32 %v1878, %v2649
        %v2731 = vmul.f32 %v1882, %v2649
        %v2732 = vmul.f32 %v1886, %v2649
        %v2733 = vmul.f32 %v1890, %v2649
        %v2734 = vmul.f32 %v1894, %v2649
        %v2735 = vmul.f32 %v1898, %v2649
        %v2736 = vmul.f32 %v1902, %v2649
        %v2737 = vmul.f32 %v1906, %v2649
        %v2738 = vmul.f32 %v1910, %v2649
        %v2739 = vmul.f32 %v1914, %v2649
        %v2740 = vmul.f32 %v1918, %v2649
        %v2741 = vmul.f32 %v1922, %v2649
        %v2742 = vmul.f32 %v1926, %v2649
        %v2743 = vmul.f32 %v1930, %v2649
        %v2744 = vmul.f32 %v1934, %v2649
        %v2745 = vmul.f32 %v1938, %v2649
        %v2746 = vmul.f32 %v1942, %v2649
        %v2747 = vmul.f32 %v1946, %v2649
        %v2748 = vmul.f32 %v1950, %v2649
        %v2749 = vmul.f32 %v1954, %v2649
        %v2750 = vmul.f32 %v2632, %v2649
        %v2751 = vmul.f32 %v2636, %v2649
        %v2752 = vmul.f32 %v2640, %v2649
        %v2753 = vmul.f32 %v2644, %v2649
        %v2754 = vadd.f32 %v2525, %v2650
        %v2755 = vadd.f32 %v2526, %v2651
        %v2756 = vadd.f32 %v2527, %v2652
        %v2757 = vadd.f32 %v2528, %v2653
        %v2758 = vadd.f32 %v2529, %v2654
        %v2759 = vadd.f32 %v2530, %v2655
        %v2760 = vadd.f32 %v2531, %v2656
        %v2761 = vadd.f32 %v2532, %v2657
        %v2762 = vadd.f32 %v2533, %v2658
        %v2763 = vadd.f32 %v2534, %v2659
        %v2764 = vadd.f32 %v2535, %v2660
        %v2765 = vadd.f32 %v2536, %v2661
        %v2766 = vadd.f32 %v2537, %v2662
        %v2767 = vadd.f32 %v2538, %v2663
        %v2768 = vadd.f32 %v2539, %v2664
        %v2769 = vadd.f32 %v2540, %v2665
        %v2770 = vadd.f32 %v2541, %v2666
        %v2771 = vadd.f32 %v2542, %v2667
        %v2772 = vadd.f32 %v2543, %v2668
        %v2773 = vadd.f32 %v2544, %v2669
        %v2774 = vadd.f32 %v2545, %v2670
        %v2775 = vadd.f32 %v2546, %v2671
        %v2776 = vadd.f32 %v2547, %v2672
        %v2777 = vadd.f32 %v2548, %v2673
        %v2778 = vadd.f32 %v2549, %v2674
        %v2779 = vadd.f32 %v2550, %v2675
        %v2780 = vadd.f32 %v2551, %v2676
        %v2781 = vadd.f32 %v2552, %v2677
        %v2782 = vadd.f32 %v2553, %v2678
        %v2783 = vadd.f32 %v2554, %v2679
        %v2784 = vadd.f32 %v2555, %v2680
        %v2785 = vadd.f32 %v2556, %v2681
        %v2786 = vadd.f32 %v2557, %v2682
        %v2787 = vadd.f32 %v2558, %v2683
        %v2788 = vadd.f32 %v2559, %v2684
        %v2789 = vadd.f32 %v2560, %v2685
        %v2790 = vadd.f32 %v2561, %v2686
        %v2791 = vadd.f32 %v2562, %v2687
        %v2792 = vadd.f32 %v2563, %v2688
        %v2793 = vadd.f32 %v2564, %v2689
        %v2794 = vadd.f32 %v2565, %v2690
        %v2795 = vadd.f32 %v2566, %v2691
        %v2796 = vadd.f32 %v2567, %v2692
        %v2797 = vadd.f32 %v2568, %v2693
        %v2798 = vadd.f32 %v2569, %v2694
        %v2799 = vadd.f32 %v2570, %v2695
        %v2800 = vadd.f32 %v2571, %v2696
        %v2801 = vadd.f32 %v2572, %v2697
        %v2802 = vadd.f32 %v2573, %v2698
        %v2803 = vadd.f32 %v2574, %v2699
        %v2804 = vadd.f32 %v2575, %v2700
        %v2805 = vadd.f32 %v2576, %v2701
        %v2806 = vadd.f32 %v2577, %v2702
        %v2807 = vadd.f32 %v2578, %v2703
        %v2808 = vadd.f32 %v2579, %v2704
        %v2809 = vadd.f32 %v2580, %v2705
        %v2810 = vadd.f32 %v2581, %v2706
        %v2811 = vadd.f32 %v2582, %v2707
        %v2812 = vadd.f32 %v2583, %v2708
        %v2813 = vadd.f32 %v2584, %v2709
        %v2814 = vadd.f32 %v2585, %v2710
        %v2815 = vadd.f32 %v2586, %v2711
        %v2816 = vadd.f32 %v2587, %v2712
        %v2817 = vadd.f32 %v2588, %v2713
        %v2818 = vadd.f32 %v2589, %v2714
        %v2819 = vadd.f32 %v2590, %v2715
        %v2820 = vadd.f32 %v2591, %v2716
        %v2821 = vadd.f32 %v2592, %v2717
        %v2822 = vadd.f32 %v2593, %v2718
        %v2823 = vadd.f32 %v2594, %v2719
        %v2824 = vadd.f32 %v2595, %v2720
        %v2825 = vadd.f32 %v2596, %v2721
        %v2826 = vadd.f32 %v2597, %v2722
        %v2827 = vadd.f32 %v2598, %v2723
        %v2828 = vadd.f32 %v2599, %v2724
        %v2829 = vadd.f32 %v2600, %v2725
        %v2830 = vadd.f32 %v2601, %v2726
        %v2831 = vadd.f32 %v2602, %v2727
        %v2832 = vadd.f32 %v2603, %v2728
        %v2833 = vadd.f32 %v2604, %v2729
        %v2834 = vadd.f32 %v2605, %v2730
        %v2835 = vadd.f32 %v2606, %v2731
        %v2836 = vadd.f32 %v2607, %v2732
        %v2837 = vadd.f32 %v2608, %v2733
        %v2838 = vadd.f32 %v2609, %v2734
        %v2839 = vadd.f32 %v2610, %v2735
        %v2840 = vadd.f32 %v2611, %v2736
        %v2841 = vadd.f32 %v2612, %v2737
        %v2842 = vadd.f32 %v2613, %v2738
        %v2843 = vadd.f32 %v2614, %v2739
        %v2844 = vadd.f32 %v2615, %v2740
        %v2845 = vadd.f32 %v2616, %v2741
        %v2846 = vadd.f32 %v2617, %v2742
        %v2847 = vadd.f32 %v2618, %v2743
        %v2848 = vadd.f32 %v2619, %v2744
        %v2849 = vadd.f32 %v2620, %v2745
        %v2850 = vadd.f32 %v2621, %v2746
        %v2851 = vadd.f32 %v2622, %v2747
        %v2852 = vadd.f32 %v2623, %v2748
        %v2853 = vadd.f32 %v2624, %v2749
        %v2854 = vadd.f32 %v2625, %v2750
        %v2855 = vadd.f32 %v2626, %v2751
        %v2856 = vadd.f32 %v2627, %v2752
        %v2857 = vadd.f32 %v2628, %v2753
        %v2858 = vlaneseq
        %v2859 = vshrl.u32 %v2858, 7
        %v2860 = vsub.s32 3, %v2859
        %v2861 = vrot.slane %v202, %v2860
        %2863 = vbcast.lane.b32.xlu0 %v2861, 256
        %v2864 = vpop.permute.xlu0 %2863
        %s2866 = sor.u32 256, 8
        %2867 = vbcast.lane.b32.xlu0 %v2861, %s2866
        %v2868 = vpop.permute.xlu0 %2867
        %s2870 = sor.u32 256, 16
        %2871 = vbcast.lane.b32.xlu0 %v2861, %s2870
        %v2872 = vpop.permute.xlu0 %2871
        %s2874 = sor.u32 256, 24
        %2875 = vbcast.lane.b32.xlu0 %v2861, %s2874
        %v2876 = vpop.permute.xlu0 %2875
        %v2877 = vld [vmem:[#allocation2 + $0x6] sm:$0x1]
        %v2878 = vlaneseq
        %v2879 = vshrl.u32 %v2878, 7
        %v2880 = vsub.s32 0, %v2879
        %v2881 = vrot.slane %v2877, %v2880
        %v2882 = vmul.f32 %v247, %v2881
        %v2883 = vmul.f32 %v251, %v2881
        %v2884 = vmul.f32 %v255, %v2881
        %v2885 = vmul.f32 %v259, %v2881
        %v2886 = vmul.f32 %v266, %v2881
        %v2887 = vmul.f32 %v270, %v2881
        %v2888 = vmul.f32 %v274, %v2881
        %v2889 = vmul.f32 %v278, %v2881
        %v2890 = vmul.f32 %v285, %v2881
        %v2891 = vmul.f32 %v289, %v2881
        %v2892 = vmul.f32 %v293, %v2881
        %v2893 = vmul.f32 %v297, %v2881
        %v2894 = vmul.f32 %v304, %v2881
        %v2895 = vmul.f32 %v308, %v2881
        %v2896 = vmul.f32 %v312, %v2881
        %v2897 = vmul.f32 %v316, %v2881
        %v2898 = vmul.f32 %v323, %v2881
        %v2899 = vmul.f32 %v327, %v2881
        %v2900 = vmul.f32 %v331, %v2881
        %v2901 = vmul.f32 %v335, %v2881
        %v2902 = vmul.f32 %v342, %v2881
        %v2903 = vmul.f32 %v346, %v2881
        %v2904 = vmul.f32 %v350, %v2881
        %v2905 = vmul.f32 %v354, %v2881
        %v2906 = vmul.f32 %v361, %v2881
        %v2907 = vmul.f32 %v365, %v2881
        %v2908 = vmul.f32 %v369, %v2881
        %v2909 = vmul.f32 %v373, %v2881
        %v2910 = vmul.f32 %v380, %v2881
        %v2911 = vmul.f32 %v384, %v2881
        %v2912 = vmul.f32 %v388, %v2881
        %v2913 = vmul.f32 %v392, %v2881
        %v2914 = vmul.f32 %v399, %v2881
        %v2915 = vmul.f32 %v403, %v2881
        %v2916 = vmul.f32 %v407, %v2881
        %v2917 = vmul.f32 %v411, %v2881
        %v2918 = vmul.f32 %v418, %v2881
        %v2919 = vmul.f32 %v422, %v2881
        %v2920 = vmul.f32 %v426, %v2881
        %v2921 = vmul.f32 %v430, %v2881
        %v2922 = vmul.f32 %v437, %v2881
        %v2923 = vmul.f32 %v441, %v2881
        %v2924 = vmul.f32 %v445, %v2881
        %v2925 = vmul.f32 %v449, %v2881
        %v2926 = vmul.f32 %v456, %v2881
        %v2927 = vmul.f32 %v460, %v2881
        %v2928 = vmul.f32 %v464, %v2881
        %v2929 = vmul.f32 %v468, %v2881
        %v2930 = vmul.f32 %v475, %v2881
        %v2931 = vmul.f32 %v479, %v2881
        %v2932 = vmul.f32 %v483, %v2881
        %v2933 = vmul.f32 %v487, %v2881
        %v2934 = vmul.f32 %v494, %v2881
        %v2935 = vmul.f32 %v498, %v2881
        %v2936 = vmul.f32 %v502, %v2881
        %v2937 = vmul.f32 %v506, %v2881
        %v2938 = vmul.f32 %v513, %v2881
        %v2939 = vmul.f32 %v517, %v2881
        %v2940 = vmul.f32 %v521, %v2881
        %v2941 = vmul.f32 %v525, %v2881
        %v2942 = vmul.f32 %v532, %v2881
        %v2943 = vmul.f32 %v536, %v2881
        %v2944 = vmul.f32 %v540, %v2881
        %v2945 = vmul.f32 %v544, %v2881
        %v2946 = vmul.f32 %v551, %v2881
        %v2947 = vmul.f32 %v555, %v2881
        %v2948 = vmul.f32 %v559, %v2881
        %v2949 = vmul.f32 %v563, %v2881
        %v2950 = vmul.f32 %v570, %v2881
        %v2951 = vmul.f32 %v574, %v2881
        %v2952 = vmul.f32 %v578, %v2881
        %v2953 = vmul.f32 %v582, %v2881
        %v2954 = vmul.f32 %v589, %v2881
        %v2955 = vmul.f32 %v593, %v2881
        %v2956 = vmul.f32 %v597, %v2881
        %v2957 = vmul.f32 %v601, %v2881
        %v2958 = vmul.f32 %v608, %v2881
        %v2959 = vmul.f32 %v612, %v2881
        %v2960 = vmul.f32 %v616, %v2881
        %v2961 = vmul.f32 %v620, %v2881
        %v2962 = vmul.f32 %v627, %v2881
        %v2963 = vmul.f32 %v631, %v2881
        %v2964 = vmul.f32 %v635, %v2881
        %v2965 = vmul.f32 %v639, %v2881
        %v2966 = vmul.f32 %v646, %v2881
        %v2967 = vmul.f32 %v650, %v2881
        %v2968 = vmul.f32 %v654, %v2881
        %v2969 = vmul.f32 %v658, %v2881
        %v2970 = vmul.f32 %v665, %v2881
        %v2971 = vmul.f32 %v669, %v2881
        %v2972 = vmul.f32 %v673, %v2881
        %v2973 = vmul.f32 %v677, %v2881
        %v2974 = vmul.f32 %v684, %v2881
        %v2975 = vmul.f32 %v688, %v2881
        %v2976 = vmul.f32 %v692, %v2881
        %v2977 = vmul.f32 %v696, %v2881
        %v2978 = vmul.f32 %v2174, %v2881
        %v2979 = vmul.f32 %v2178, %v2881
        %v2980 = vmul.f32 %v2182, %v2881
        %v2981 = vmul.f32 %v2186, %v2881
        %v2982 = vmul.f32 %v2864, %v2881
        %v2983 = vmul.f32 %v2868, %v2881
        %v2984 = vmul.f32 %v2872, %v2881
        %v2985 = vmul.f32 %v2876, %v2881
        %v2986 = vadd.f32 %v2754, %v2882
        %v2987 = vadd.f32 %v2755, %v2883
        %v2988 = vadd.f32 %v2756, %v2884
        %v2989 = vadd.f32 %v2757, %v2885
        %v2990 = vadd.f32 %v2758, %v2886
        %v2991 = vadd.f32 %v2759, %v2887
        %v2992 = vadd.f32 %v2760, %v2888
        %v2993 = vadd.f32 %v2761, %v2889
        %v2994 = vadd.f32 %v2762, %v2890
        %v2995 = vadd.f32 %v2763, %v2891
        %v2996 = vadd.f32 %v2764, %v2892
        %v2997 = vadd.f32 %v2765, %v2893
        %v2998 = vadd.f32 %v2766, %v2894
        %v2999 = vadd.f32 %v2767, %v2895
        %v3000 = vadd.f32 %v2768, %v2896
        %v3001 = vadd.f32 %v2769, %v2897
        %v3002 = vadd.f32 %v2770, %v2898
        %v3003 = vadd.f32 %v2771, %v2899
        %v3004 = vadd.f32 %v2772, %v2900
        %v3005 = vadd.f32 %v2773, %v2901
        %v3006 = vadd.f32 %v2774, %v2902
        %v3007 = vadd.f32 %v2775, %v2903
        %v3008 = vadd.f32 %v2776, %v2904
        %v3009 = vadd.f32 %v2777, %v2905
        %v3010 = vadd.f32 %v2778, %v2906
        %v3011 = vadd.f32 %v2779, %v2907
        %v3012 = vadd.f32 %v2780, %v2908
        %v3013 = vadd.f32 %v2781, %v2909
        %v3014 = vadd.f32 %v2782, %v2910
        %v3015 = vadd.f32 %v2783, %v2911
        %v3016 = vadd.f32 %v2784, %v2912
        %v3017 = vadd.f32 %v2785, %v2913
        %v3018 = vadd.f32 %v2786, %v2914
        %v3019 = vadd.f32 %v2787, %v2915
        %v3020 = vadd.f32 %v2788, %v2916
        %v3021 = vadd.f32 %v2789, %v2917
        %v3022 = vadd.f32 %v2790, %v2918
        %v3023 = vadd.f32 %v2791, %v2919
        %v3024 = vadd.f32 %v2792, %v2920
        %v3025 = vadd.f32 %v2793, %v2921
        %v3026 = vadd.f32 %v2794, %v2922
        %v3027 = vadd.f32 %v2795, %v2923
        %v3028 = vadd.f32 %v2796, %v2924
        %v3029 = vadd.f32 %v2797, %v2925
        %v3030 = vadd.f32 %v2798, %v2926
        %v3031 = vadd.f32 %v2799, %v2927
        %v3032 = vadd.f32 %v2800, %v2928
        %v3033 = vadd.f32 %v2801, %v2929
        %v3034 = vadd.f32 %v2802, %v2930
        %v3035 = vadd.f32 %v2803, %v2931
        %v3036 = vadd.f32 %v2804, %v2932
        %v3037 = vadd.f32 %v2805, %v2933
        %v3038 = vadd.f32 %v2806, %v2934
        %v3039 = vadd.f32 %v2807, %v2935
        %v3040 = vadd.f32 %v2808, %v2936
        %v3041 = vadd.f32 %v2809, %v2937
        %v3042 = vadd.f32 %v2810, %v2938
        %v3043 = vadd.f32 %v2811, %v2939
        %v3044 = vadd.f32 %v2812, %v2940
        %v3045 = vadd.f32 %v2813, %v2941
        %v3046 = vadd.f32 %v2814, %v2942
        %v3047 = vadd.f32 %v2815, %v2943
        %v3048 = vadd.f32 %v2816, %v2944
        %v3049 = vadd.f32 %v2817, %v2945
        %v3050 = vadd.f32 %v2818, %v2946
        %v3051 = vadd.f32 %v2819, %v2947
        %v3052 = vadd.f32 %v2820, %v2948
        %v3053 = vadd.f32 %v2821, %v2949
        %v3054 = vadd.f32 %v2822, %v2950
        %v3055 = vadd.f32 %v2823, %v2951
        %v3056 = vadd.f32 %v2824, %v2952
        %v3057 = vadd.f32 %v2825, %v2953
        %v3058 = vadd.f32 %v2826, %v2954
        %v3059 = vadd.f32 %v2827, %v2955
        %v3060 = vadd.f32 %v2828, %v2956
        %v3061 = vadd.f32 %v2829, %v2957
        %v3062 = vadd.f32 %v2830, %v2958
        %v3063 = vadd.f32 %v2831, %v2959
        %v3064 = vadd.f32 %v2832, %v2960
        %v3065 = vadd.f32 %v2833, %v2961
        %v3066 = vadd.f32 %v2834, %v2962
        %v3067 = vadd.f32 %v2835, %v2963
        %v3068 = vadd.f32 %v2836, %v2964
        %v3069 = vadd.f32 %v2837, %v2965
        %v3070 = vadd.f32 %v2838, %v2966
        %v3071 = vadd.f32 %v2839, %v2967
        %v3072 = vadd.f32 %v2840, %v2968
        %v3073 = vadd.f32 %v2841, %v2969
        %v3074 = vadd.f32 %v2842, %v2970
        %v3075 = vadd.f32 %v2843, %v2971
        %v3076 = vadd.f32 %v2844, %v2972
        %v3077 = vadd.f32 %v2845, %v2973
        %v3078 = vadd.f32 %v2846, %v2974
        %v3079 = vadd.f32 %v2847, %v2975
        %v3080 = vadd.f32 %v2848, %v2976
        %v3081 = vadd.f32 %v2849, %v2977
        %v3082 = vadd.f32 %v2850, %v2978
        %v3083 = vadd.f32 %v2851, %v2979
        %v3084 = vadd.f32 %v2852, %v2980
        %v3085 = vadd.f32 %v2853, %v2981
        %v3086 = vadd.f32 %v2854, %v2982
        %v3087 = vadd.f32 %v2855, %v2983
        %v3088 = vadd.f32 %v2856, %v2984
        %v3089 = vadd.f32 %v2857, %v2985
        %s3091 = sor.u32 256, 1
        %3092 = vbcast.lane.b32.xlu0 %v2861, %s3091
        %v3093 = vpop.permute.xlu0 %3092
        %s3095 = sor.u32 256, 9
        %3096 = vbcast.lane.b32.xlu0 %v2861, %s3095
        %v3097 = vpop.permute.xlu0 %3096
        %s3099 = sor.u32 256, 17
        %3100 = vbcast.lane.b32.xlu0 %v2861, %s3099
        %v3101 = vpop.permute.xlu0 %3100
        %s3103 = sor.u32 256, 25
        %3104 = vbcast.lane.b32.xlu0 %v2861, %s3103
        %v3105 = vpop.permute.xlu0 %3104
        %v3106 = vld [vmem:[#allocation2 + $0x7] sm:$0x1]
        %v3107 = vlaneseq
        %v3108 = vshrl.u32 %v3107, 7
        %v3109 = vsub.s32 0, %v3108
        %v3110 = vrot.slane %v3106, %v3109
        %v3111 = vmul.f32 %v945, %v3110
        %v3112 = vmul.f32 %v949, %v3110
        %v3113 = vmul.f32 %v953, %v3110
        %v3114 = vmul.f32 %v957, %v3110
        %v3115 = vmul.f32 %v961, %v3110
        %v3116 = vmul.f32 %v965, %v3110
        %v3117 = vmul.f32 %v969, %v3110
        %v3118 = vmul.f32 %v973, %v3110
        %v3119 = vmul.f32 %v977, %v3110
        %v3120 = vmul.f32 %v981, %v3110
        %v3121 = vmul.f32 %v985, %v3110
        %v3122 = vmul.f32 %v989, %v3110
        %v3123 = vmul.f32 %v993, %v3110
        %v3124 = vmul.f32 %v997, %v3110
        %v3125 = vmul.f32 %v1001, %v3110
        %v3126 = vmul.f32 %v1005, %v3110
        %v3127 = vmul.f32 %v1009, %v3110
        %v3128 = vmul.f32 %v1013, %v3110
        %v3129 = vmul.f32 %v1017, %v3110
        %v3130 = vmul.f32 %v1021, %v3110
        %v3131 = vmul.f32 %v1025, %v3110
        %v3132 = vmul.f32 %v1029, %v3110
        %v3133 = vmul.f32 %v1033, %v3110
        %v3134 = vmul.f32 %v1037, %v3110
        %v3135 = vmul.f32 %v1041, %v3110
        %v3136 = vmul.f32 %v1045, %v3110
        %v3137 = vmul.f32 %v1049, %v3110
        %v3138 = vmul.f32 %v1053, %v3110
        %v3139 = vmul.f32 %v1057, %v3110
        %v3140 = vmul.f32 %v1061, %v3110
        %v3141 = vmul.f32 %v1065, %v3110
        %v3142 = vmul.f32 %v1069, %v3110
        %v3143 = vmul.f32 %v1073, %v3110
        %v3144 = vmul.f32 %v1077, %v3110
        %v3145 = vmul.f32 %v1081, %v3110
        %v3146 = vmul.f32 %v1085, %v3110
        %v3147 = vmul.f32 %v1089, %v3110
        %v3148 = vmul.f32 %v1093, %v3110
        %v3149 = vmul.f32 %v1097, %v3110
        %v3150 = vmul.f32 %v1101, %v3110
        %v3151 = vmul.f32 %v1105, %v3110
        %v3152 = vmul.f32 %v1109, %v3110
        %v3153 = vmul.f32 %v1113, %v3110
        %v3154 = vmul.f32 %v1117, %v3110
        %v3155 = vmul.f32 %v1121, %v3110
        %v3156 = vmul.f32 %v1125, %v3110
        %v3157 = vmul.f32 %v1129, %v3110
        %v3158 = vmul.f32 %v1133, %v3110
        %v3159 = vmul.f32 %v1137, %v3110
        %v3160 = vmul.f32 %v1141, %v3110
        %v3161 = vmul.f32 %v1145, %v3110
        %v3162 = vmul.f32 %v1149, %v3110
        %v3163 = vmul.f32 %v1153, %v3110
        %v3164 = vmul.f32 %v1157, %v3110
        %v3165 = vmul.f32 %v1161, %v3110
        %v3166 = vmul.f32 %v1165, %v3110
        %v3167 = vmul.f32 %v1169, %v3110
        %v3168 = vmul.f32 %v1173, %v3110
        %v3169 = vmul.f32 %v1177, %v3110
        %v3170 = vmul.f32 %v1181, %v3110
        %v3171 = vmul.f32 %v1185, %v3110
        %v3172 = vmul.f32 %v1189, %v3110
        %v3173 = vmul.f32 %v1193, %v3110
        %v3174 = vmul.f32 %v1197, %v3110
        %v3175 = vmul.f32 %v1201, %v3110
        %v3176 = vmul.f32 %v1205, %v3110
        %v3177 = vmul.f32 %v1209, %v3110
        %v3178 = vmul.f32 %v1213, %v3110
        %v3179 = vmul.f32 %v1217, %v3110
        %v3180 = vmul.f32 %v1221, %v3110
        %v3181 = vmul.f32 %v1225, %v3110
        %v3182 = vmul.f32 %v1229, %v3110
        %v3183 = vmul.f32 %v1233, %v3110
        %v3184 = vmul.f32 %v1237, %v3110
        %v3185 = vmul.f32 %v1241, %v3110
        %v3186 = vmul.f32 %v1245, %v3110
        %v3187 = vmul.f32 %v1249, %v3110
        %v3188 = vmul.f32 %v1253, %v3110
        %v3189 = vmul.f32 %v1257, %v3110
        %v3190 = vmul.f32 %v1261, %v3110
        %v3191 = vmul.f32 %v1265, %v3110
        %v3192 = vmul.f32 %v1269, %v3110
        %v3193 = vmul.f32 %v1273, %v3110
        %v3194 = vmul.f32 %v1277, %v3110
        %v3195 = vmul.f32 %v1281, %v3110
        %v3196 = vmul.f32 %v1285, %v3110
        %v3197 = vmul.f32 %v1289, %v3110
        %v3198 = vmul.f32 %v1293, %v3110
        %v3199 = vmul.f32 %v1297, %v3110
        %v3200 = vmul.f32 %v1301, %v3110
        %v3201 = vmul.f32 %v1305, %v3110
        %v3202 = vmul.f32 %v1309, %v3110
        %v3203 = vmul.f32 %v1313, %v3110
        %v3204 = vmul.f32 %v1317, %v3110
        %v3205 = vmul.f32 %v1321, %v3110
        %v3206 = vmul.f32 %v1325, %v3110
        %v3207 = vmul.f32 %v2403, %v3110
        %v3208 = vmul.f32 %v2407, %v3110
        %v3209 = vmul.f32 %v2411, %v3110
        %v3210 = vmul.f32 %v2415, %v3110
        %v3211 = vmul.f32 %v3093, %v3110
        %v3212 = vmul.f32 %v3097, %v3110
        %v3213 = vmul.f32 %v3101, %v3110
        %v3214 = vmul.f32 %v3105, %v3110
        %v3215 = vadd.f32 %v2986, %v3111
        %v3216 = vadd.f32 %v2987, %v3112
        %v3217 = vadd.f32 %v2988, %v3113
        %v3218 = vadd.f32 %v2989, %v3114
        %v3219 = vadd.f32 %v2990, %v3115
        %v3220 = vadd.f32 %v2991, %v3116
        %v3221 = vadd.f32 %v2992, %v3117
        %v3222 = vadd.f32 %v2993, %v3118
        %v3223 = vadd.f32 %v2994, %v3119
        %v3224 = vadd.f32 %v2995, %v3120
        %v3225 = vadd.f32 %v2996, %v3121
        %v3226 = vadd.f32 %v2997, %v3122
        %v3227 = vadd.f32 %v2998, %v3123
        %v3228 = vadd.f32 %v2999, %v3124
        %v3229 = vadd.f32 %v3000, %v3125
        %v3230 = vadd.f32 %v3001, %v3126
        %v3231 = vadd.f32 %v3002, %v3127
        %v3232 = vadd.f32 %v3003, %v3128
        %v3233 = vadd.f32 %v3004, %v3129
        %v3234 = vadd.f32 %v3005, %v3130
        %v3235 = vadd.f32 %v3006, %v3131
        %v3236 = vadd.f32 %v3007, %v3132
        %v3237 = vadd.f32 %v3008, %v3133
        %v3238 = vadd.f32 %v3009, %v3134
        %v3239 = vadd.f32 %v3010, %v3135
        %v3240 = vadd.f32 %v3011, %v3136
        %v3241 = vadd.f32 %v3012, %v3137
        %v3242 = vadd.f32 %v3013, %v3138
        %v3243 = vadd.f32 %v3014, %v3139
        %v3244 = vadd.f32 %v3015, %v3140
        %v3245 = vadd.f32 %v3016, %v3141
        %v3246 = vadd.f32 %v3017, %v3142
        %v3247 = vadd.f32 %v3018, %v3143
        %v3248 = vadd.f32 %v3019, %v3144
        %v3249 = vadd.f32 %v3020, %v3145
        %v3250 = vadd.f32 %v3021, %v3146
        %v3251 = vadd.f32 %v3022, %v3147
        %v3252 = vadd.f32 %v3023, %v3148
        %v3253 = vadd.f32 %v3024, %v3149
        %v3254 = vadd.f32 %v3025, %v3150
        %v3255 = vadd.f32 %v3026, %v3151
        %v3256 = vadd.f32 %v3027, %v3152
        %v3257 = vadd.f32 %v3028, %v3153
        %v3258 = vadd.f32 %v3029, %v3154
        %v3259 = vadd.f32 %v3030, %v3155
        %v3260 = vadd.f32 %v3031, %v3156
        %v3261 = vadd.f32 %v3032, %v3157
        %v3262 = vadd.f32 %v3033, %v3158
        %v3263 = vadd.f32 %v3034, %v3159
        %v3264 = vadd.f32 %v3035, %v3160
        %v3265 = vadd.f32 %v3036, %v3161
        %v3266 = vadd.f32 %v3037, %v3162
        %v3267 = vadd.f32 %v3038, %v3163
        %v3268 = vadd.f32 %v3039, %v3164
        %v3269 = vadd.f32 %v3040, %v3165
        %v3270 = vadd.f32 %v3041, %v3166
        %v3271 = vadd.f32 %v3042, %v3167
        %v3272 = vadd.f32 %v3043, %v3168
        %v3273 = vadd.f32 %v3044, %v3169
        %v3274 = vadd.f32 %v3045, %v3170
        %v3275 = vadd.f32 %v3046, %v3171
        %v3276 = vadd.f32 %v3047, %v3172
        %v3277 = vadd.f32 %v3048, %v3173
        %v3278 = vadd.f32 %v3049, %v3174
        %v3279 = vadd.f32 %v3050, %v3175
        %v3280 = vadd.f32 %v3051, %v3176
        %v3281 = vadd.f32 %v3052, %v3177
        %v3282 = vadd.f32 %v3053, %v3178
        %v3283 = vadd.f32 %v3054, %v3179
        %v3284 = vadd.f32 %v3055, %v3180
        %v3285 = vadd.f32 %v3056, %v3181
        %v3286 = vadd.f32 %v3057, %v3182
        %v3287 = vadd.f32 %v3058, %v3183
        %v3288 = vadd.f32 %v3059, %v3184
        %v3289 = vadd.f32 %v3060, %v3185
        %v3290 = vadd.f32 %v3061, %v3186
        %v3291 = vadd.f32 %v3062, %v3187
        %v3292 = vadd.f32 %v3063, %v3188
        %v3293 = vadd.f32 %v3064, %v3189
        %v3294 = vadd.f32 %v3065, %v3190
        %v3295 = vadd.f32 %v3066, %v3191
        %v3296 = vadd.f32 %v3067, %v3192
        %v3297 = vadd.f32 %v3068, %v3193
        %v3298 = vadd.f32 %v3069, %v3194
        %v3299 = vadd.f32 %v3070, %v3195
        %v3300 = vadd.f32 %v3071, %v3196
        %v3301 = vadd.f32 %v3072, %v3197
        %v3302 = vadd.f32 %v3073, %v3198
        %v3303 = vadd.f32 %v3074, %v3199
        %v3304 = vadd.f32 %v3075, %v3200
        %v3305 = vadd.f32 %v3076, %v3201
        %v3306 = vadd.f32 %v3077, %v3202
        %v3307 = vadd.f32 %v3078, %v3203
        %v3308 = vadd.f32 %v3079, %v3204
        %v3309 = vadd.f32 %v3080, %v3205
        %v3310 = vadd.f32 %v3081, %v3206
        %v3311 = vadd.f32 %v3082, %v3207
        %v3312 = vadd.f32 %v3083, %v3208
        %v3313 = vadd.f32 %v3084, %v3209
        %v3314 = vadd.f32 %v3085, %v3210
        %v3315 = vadd.f32 %v3086, %v3211
        %v3316 = vadd.f32 %v3087, %v3212
        %v3317 = vadd.f32 %v3088, %v3213
        %v3318 = vadd.f32 %v3089, %v3214
        %s3320 = sor.u32 256, 2
        %3321 = vbcast.lane.b32.xlu0 %v2861, %s3320
        %v3322 = vpop.permute.xlu0 %3321
        %s3324 = sor.u32 256, 10
        %3325 = vbcast.lane.b32.xlu0 %v2861, %s3324
        %v3326 = vpop.permute.xlu0 %3325
        %s3328 = sor.u32 256, 18
        %3329 = vbcast.lane.b32.xlu0 %v2861, %s3328
        %v3330 = vpop.permute.xlu0 %3329
        %s3332 = sor.u32 256, 26
        %3333 = vbcast.lane.b32.xlu0 %v2861, %s3332
        %v3334 = vpop.permute.xlu0 %3333
        %v3335 = vld [vmem:[#allocation2 + $0x8] sm:$0x1]
        %v3336 = vlaneseq
        %v3337 = vshrl.u32 %v3336, 7
        %v3338 = vsub.s32 0, %v3337
        %v3339 = vrot.slane %v3335, %v3338
        %v3340 = vmul.f32 %v1574, %v3339
        %v3341 = vmul.f32 %v1578, %v3339
        %v3342 = vmul.f32 %v1582, %v3339
        %v3343 = vmul.f32 %v1586, %v3339
        %v3344 = vmul.f32 %v1590, %v3339
        %v3345 = vmul.f32 %v1594, %v3339
        %v3346 = vmul.f32 %v1598, %v3339
        %v3347 = vmul.f32 %v1602, %v3339
        %v3348 = vmul.f32 %v1606, %v3339
        %v3349 = vmul.f32 %v1610, %v3339
        %v3350 = vmul.f32 %v1614, %v3339
        %v3351 = vmul.f32 %v1618, %v3339
        %v3352 = vmul.f32 %v1622, %v3339
        %v3353 = vmul.f32 %v1626, %v3339
        %v3354 = vmul.f32 %v1630, %v3339
        %v3355 = vmul.f32 %v1634, %v3339
        %v3356 = vmul.f32 %v1638, %v3339
        %v3357 = vmul.f32 %v1642, %v3339
        %v3358 = vmul.f32 %v1646, %v3339
        %v3359 = vmul.f32 %v1650, %v3339
        %v3360 = vmul.f32 %v1654, %v3339
        %v3361 = vmul.f32 %v1658, %v3339
        %v3362 = vmul.f32 %v1662, %v3339
        %v3363 = vmul.f32 %v1666, %v3339
        %v3364 = vmul.f32 %v1670, %v3339
        %v3365 = vmul.f32 %v1674, %v3339
        %v3366 = vmul.f32 %v1678, %v3339
        %v3367 = vmul.f32 %v1682, %v3339
        %v3368 = vmul.f32 %v1686, %v3339
        %v3369 = vmul.f32 %v1690, %v3339
        %v3370 = vmul.f32 %v1694, %v3339
        %v3371 = vmul.f32 %v1698, %v3339
        %v3372 = vmul.f32 %v1702, %v3339
        %v3373 = vmul.f32 %v1706, %v3339
        %v3374 = vmul.f32 %v1710, %v3339
        %v3375 = vmul.f32 %v1714, %v3339
        %v3376 = vmul.f32 %v1718, %v3339
        %v3377 = vmul.f32 %v1722, %v3339
        %v3378 = vmul.f32 %v1726, %v3339
        %v3379 = vmul.f32 %v1730, %v3339
        %v3380 = vmul.f32 %v1734, %v3339
        %v3381 = vmul.f32 %v1738, %v3339
        %v3382 = vmul.f32 %v1742, %v3339
        %v3383 = vmul.f32 %v1746, %v3339
        %v3384 = vmul.f32 %v1750, %v3339
        %v3385 = vmul.f32 %v1754, %v3339
        %v3386 = vmul.f32 %v1758, %v3339
        %v3387 = vmul.f32 %v1762, %v3339
        %v3388 = vmul.f32 %v1766, %v3339
        %v3389 = vmul.f32 %v1770, %v3339
        %v3390 = vmul.f32 %v1774, %v3339
        %v3391 = vmul.f32 %v1778, %v3339
        %v3392 = vmul.f32 %v1782, %v3339
        %v3393 = vmul.f32 %v1786, %v3339
        %v3394 = vmul.f32 %v1790, %v3339
        %v3395 = vmul.f32 %v1794, %v3339
        %v3396 = vmul.f32 %v1798, %v3339
        %v3397 = vmul.f32 %v1802, %v3339
        %v3398 = vmul.f32 %v1806, %v3339
        %v3399 = vmul.f32 %v1810, %v3339
        %v3400 = vmul.f32 %v1814, %v3339
        %v3401 = vmul.f32 %v1818, %v3339
        %v3402 = vmul.f32 %v1822, %v3339
        %v3403 = vmul.f32 %v1826, %v3339
        %v3404 = vmul.f32 %v1830, %v3339
        %v3405 = vmul.f32 %v1834, %v3339
        %v3406 = vmul.f32 %v1838, %v3339
        %v3407 = vmul.f32 %v1842, %v3339
        %v3408 = vmul.f32 %v1846, %v3339
        %v3409 = vmul.f32 %v1850, %v3339
        %v3410 = vmul.f32 %v1854, %v3339
        %v3411 = vmul.f32 %v1858, %v3339
        %v3412 = vmul.f32 %v1862, %v3339
        %v3413 = vmul.f32 %v1866, %v3339
        %v3414 = vmul.f32 %v1870, %v3339
        %v3415 = vmul.f32 %v1874, %v3339
        %v3416 = vmul.f32 %v1878, %v3339
        %v3417 = vmul.f32 %v1882, %v3339
        %v3418 = vmul.f32 %v1886, %v3339
        %v3419 = vmul.f32 %v1890, %v3339
        %v3420 = vmul.f32 %v1894, %v3339
        %v3421 = vmul.f32 %v1898, %v3339
        %v3422 = vmul.f32 %v1902, %v3339
        %v3423 = vmul.f32 %v1906, %v3339
        %v3424 = vmul.f32 %v1910, %v3339
        %v3425 = vmul.f32 %v1914, %v3339
        %v3426 = vmul.f32 %v1918, %v3339
        %v3427 = vmul.f32 %v1922, %v3339
        %v3428 = vmul.f32 %v1926, %v3339
        %v3429 = vmul.f32 %v1930, %v3339
        %v3430 = vmul.f32 %v1934, %v3339
        %v3431 = vmul.f32 %v1938, %v3339
        %v3432 = vmul.f32 %v1942, %v3339
        %v3433 = vmul.f32 %v1946, %v3339
        %v3434 = vmul.f32 %v1950, %v3339
        %v3435 = vmul.f32 %v1954, %v3339
        %v3436 = vmul.f32 %v2632, %v3339
        %v3437 = vmul.f32 %v2636, %v3339
        %v3438 = vmul.f32 %v2640, %v3339
        %v3439 = vmul.f32 %v2644, %v3339
        %v3440 = vmul.f32 %v3322, %v3339
        %v3441 = vmul.f32 %v3326, %v3339
        %v3442 = vmul.f32 %v3330, %v3339
        %v3443 = vmul.f32 %v3334, %v3339
        %v3444 = vadd.f32 %v3215, %v3340
        %v3445 = vadd.f32 %v3216, %v3341
        %v3446 = vadd.f32 %v3217, %v3342
        %v3447 = vadd.f32 %v3218, %v3343
        %v3448 = vadd.f32 %v3219, %v3344
        %v3449 = vadd.f32 %v3220, %v3345
        %v3450 = vadd.f32 %v3221, %v3346
        %v3451 = vadd.f32 %v3222, %v3347
        %v3452 = vadd.f32 %v3223, %v3348
        %v3453 = vadd.f32 %v3224, %v3349
        %v3454 = vadd.f32 %v3225, %v3350
        %v3455 = vadd.f32 %v3226, %v3351
        %v3456 = vadd.f32 %v3227, %v3352
        %v3457 = vadd.f32 %v3228, %v3353
        %v3458 = vadd.f32 %v3229, %v3354
        %v3459 = vadd.f32 %v3230, %v3355
        %v3460 = vadd.f32 %v3231, %v3356
        %v3461 = vadd.f32 %v3232, %v3357
        %v3462 = vadd.f32 %v3233, %v3358
        %v3463 = vadd.f32 %v3234, %v3359
        %v3464 = vadd.f32 %v3235, %v3360
        %v3465 = vadd.f32 %v3236, %v3361
        %v3466 = vadd.f32 %v3237, %v3362
        %v3467 = vadd.f32 %v3238, %v3363
        %v3468 = vadd.f32 %v3239, %v3364
        %v3469 = vadd.f32 %v3240, %v3365
        %v3470 = vadd.f32 %v3241, %v3366
        %v3471 = vadd.f32 %v3242, %v3367
        %v3472 = vadd.f32 %v3243, %v3368
        %v3473 = vadd.f32 %v3244, %v3369
        %v3474 = vadd.f32 %v3245, %v3370
        %v3475 = vadd.f32 %v3246, %v3371
        %v3476 = vadd.f32 %v3247, %v3372
        %v3477 = vadd.f32 %v3248, %v3373
        %v3478 = vadd.f32 %v3249, %v3374
        %v3479 = vadd.f32 %v3250, %v3375
        %v3480 = vadd.f32 %v3251, %v3376
        %v3481 = vadd.f32 %v3252, %v3377
        %v3482 = vadd.f32 %v3253, %v3378
        %v3483 = vadd.f32 %v3254, %v3379
        %v3484 = vadd.f32 %v3255, %v3380
        %v3485 = vadd.f32 %v3256, %v3381
        %v3486 = vadd.f32 %v3257, %v3382
        %v3487 = vadd.f32 %v3258, %v3383
        %v3488 = vadd.f32 %v3259, %v3384
        %v3489 = vadd.f32 %v3260, %v3385
        %v3490 = vadd.f32 %v3261, %v3386
        %v3491 = vadd.f32 %v3262, %v3387
        %v3492 = vadd.f32 %v3263, %v3388
        %v3493 = vadd.f32 %v3264, %v3389
        %v3494 = vadd.f32 %v3265, %v3390
        %v3495 = vadd.f32 %v3266, %v3391
        %v3496 = vadd.f32 %v3267, %v3392
        %v3497 = vadd.f32 %v3268, %v3393
        %v3498 = vadd.f32 %v3269, %v3394
        %v3499 = vadd.f32 %v3270, %v3395
        %v3500 = vadd.f32 %v3271, %v3396
        %v3501 = vadd.f32 %v3272, %v3397
        %v3502 = vadd.f32 %v3273, %v3398
        %v3503 = vadd.f32 %v3274, %v3399
        %v3504 = vadd.f32 %v3275, %v3400
        %v3505 = vadd.f32 %v3276, %v3401
        %v3506 = vadd.f32 %v3277, %v3402
        %v3507 = vadd.f32 %v3278, %v3403
        %v3508 = vadd.f32 %v3279, %v3404
        %v3509 = vadd.f32 %v3280, %v3405
        %v3510 = vadd.f32 %v3281, %v3406
        %v3511 = vadd.f32 %v3282, %v3407
        %v3512 = vadd.f32 %v3283, %v3408
        %v3513 = vadd.f32 %v3284, %v3409
        %v3514 = vadd.f32 %v3285, %v3410
        %v3515 = vadd.f32 %v3286, %v3411
        %v3516 = vadd.f32 %v3287, %v3412
        %v3517 = vadd.f32 %v3288, %v3413
        %v3518 = vadd.f32 %v3289, %v3414
        %v3519 = vadd.f32 %v3290, %v3415
        %v3520 = vadd.f32 %v3291, %v3416
        %v3521 = vadd.f32 %v3292, %v3417
        %v3522 = vadd.f32 %v3293, %v3418
        %v3523 = vadd.f32 %v3294, %v3419
        %v3524 = vadd.f32 %v3295, %v3420
        %v3525 = vadd.f32 %v3296, %v3421
        %v3526 = vadd.f32 %v3297, %v3422
        %v3527 = vadd.f32 %v3298, %v3423
        %v3528 = vadd.f32 %v3299, %v3424
        %v3529 = vadd.f32 %v3300, %v3425
        %v3530 = vadd.f32 %v3301, %v3426
        %v3531 = vadd.f32 %v3302, %v3427
        %v3532 = vadd.f32 %v3303, %v3428
        %v3533 = vadd.f32 %v3304, %v3429
        %v3534 = vadd.f32 %v3305, %v3430
        %v3535 = vadd.f32 %v3306, %v3431
        %v3536 = vadd.f32 %v3307, %v3432
        %v3537 = vadd.f32 %v3308, %v3433
        %v3538 = vadd.f32 %v3309, %v3434
        %v3539 = vadd.f32 %v3310, %v3435
        %v3540 = vadd.f32 %v3311, %v3436
        %v3541 = vadd.f32 %v3312, %v3437
        %v3542 = vadd.f32 %v3313, %v3438
        %v3543 = vadd.f32 %v3314, %v3439
        %v3544 = vadd.f32 %v3315, %v3440
        %v3545 = vadd.f32 %v3316, %v3441
        %v3546 = vadd.f32 %v3317, %v3442
        %v3547 = vadd.f32 %v3318, %v3443
        %v3548 = vld [vmem:[#allocation4] sm:$0x1]
        %v3550 = vlaneseq
        %v3551 = vshrl.u32 %v3550, 7
        %v3552 = vsub.s32 0, %v3551
        %v3553 = vrot.slane %v3548, %v3552
        %v3555 = vadd.f32 %v3444, %v3553
        %v3556 = vadd.f32 %v3445, %v3553
        %v3557 = vadd.f32 %v3446, %v3553
        %v3558 = vadd.f32 %v3447, %v3553
        %v3559 = vadd.f32 %v3448, %v3553
        %v3560 = vadd.f32 %v3449, %v3553
        %v3561 = vadd.f32 %v3450, %v3553
        %v3562 = vadd.f32 %v3451, %v3553
        %v3563 = vadd.f32 %v3452, %v3553
        %v3564 = vadd.f32 %v3453, %v3553
        %v3565 = vadd.f32 %v3454, %v3553
        %v3566 = vadd.f32 %v3455, %v3553
        %v3567 = vadd.f32 %v3456, %v3553
        %v3568 = vadd.f32 %v3457, %v3553
        %v3569 = vadd.f32 %v3458, %v3553
        %v3570 = vadd.f32 %v3459, %v3553
        %v3571 = vadd.f32 %v3460, %v3553
        %v3572 = vadd.f32 %v3461, %v3553
        %v3573 = vadd.f32 %v3462, %v3553
        %v3574 = vadd.f32 %v3463, %v3553
        %v3575 = vadd.f32 %v3464, %v3553
        %v3576 = vadd.f32 %v3465, %v3553
        %v3577 = vadd.f32 %v3466, %v3553
        %v3578 = vadd.f32 %v3467, %v3553
        %v3579 = vadd.f32 %v3468, %v3553
        %v3580 = vadd.f32 %v3469, %v3553
        %v3581 = vadd.f32 %v3470, %v3553
        %v3582 = vadd.f32 %v3471, %v3553
        %v3583 = vadd.f32 %v3472, %v3553
        %v3584 = vadd.f32 %v3473, %v3553
        %v3585 = vadd.f32 %v3474, %v3553
        %v3586 = vadd.f32 %v3475, %v3553
        %v3587 = vadd.f32 %v3476, %v3553
        %v3588 = vadd.f32 %v3477, %v3553
        %v3589 = vadd.f32 %v3478, %v3553
        %v3590 = vadd.f32 %v3479, %v3553
        %v3591 = vadd.f32 %v3480, %v3553
        %v3592 = vadd.f32 %v3481, %v3553
        %v3593 = vadd.f32 %v3482, %v3553
        %v3594 = vadd.f32 %v3483, %v3553
        %v3595 = vadd.f32 %v3484, %v3553
        %v3596 = vadd.f32 %v3485, %v3553
        %v3597 = vadd.f32 %v3486, %v3553
        %v3598 = vadd.f32 %v3487, %v3553
        %v3599 = vadd.f32 %v3488, %v3553
        %v3600 = vadd.f32 %v3489, %v3553
        %v3601 = vadd.f32 %v3490, %v3553
        %v3602 = vadd.f32 %v3491, %v3553
        %v3603 = vadd.f32 %v3492, %v3553
        %v3604 = vadd.f32 %v3493, %v3553
        %v3605 = vadd.f32 %v3494, %v3553
        %v3606 = vadd.f32 %v3495, %v3553
        %v3607 = vadd.f32 %v3496, %v3553
        %v3608 = vadd.f32 %v3497, %v3553
        %v3609 = vadd.f32 %v3498, %v3553
        %v3610 = vadd.f32 %v3499, %v3553
        %v3611 = vadd.f32 %v3500, %v3553
        %v3612 = vadd.f32 %v3501, %v3553
        %v3613 = vadd.f32 %v3502, %v3553
        %v3614 = vadd.f32 %v3503, %v3553
        %v3615 = vadd.f32 %v3504, %v3553
        %v3616 = vadd.f32 %v3505, %v3553
        %v3617 = vadd.f32 %v3506, %v3553
        %v3618 = vadd.f32 %v3507, %v3553
        %v3619 = vadd.f32 %v3508, %v3553
        %v3620 = vadd.f32 %v3509, %v3553
        %v3621 = vadd.f32 %v3510, %v3553
        %v3622 = vadd.f32 %v3511, %v3553
        %v3623 = vadd.f32 %v3512, %v3553
        %v3624 = vadd.f32 %v3513, %v3553
        %v3625 = vadd.f32 %v3514, %v3553
        %v3626 = vadd.f32 %v3515, %v3553
        %v3627 = vadd.f32 %v3516, %v3553
        %v3628 = vadd.f32 %v3517, %v3553
        %v3629 = vadd.f32 %v3518, %v3553
        %v3630 = vadd.f32 %v3519, %v3553
        %v3631 = vadd.f32 %v3520, %v3553
        %v3632 = vadd.f32 %v3521, %v3553
        %v3633 = vadd.f32 %v3522, %v3553
        %v3634 = vadd.f32 %v3523, %v3553
        %v3635 = vadd.f32 %v3524, %v3553
        %v3636 = vadd.f32 %v3525, %v3553
        %v3637 = vadd.f32 %v3526, %v3553
        %v3638 = vadd.f32 %v3527, %v3553
        %v3639 = vadd.f32 %v3528, %v3553
        %v3640 = vadd.f32 %v3529, %v3553
        %v3641 = vadd.f32 %v3530, %v3553
        %v3642 = vadd.f32 %v3531, %v3553
        %v3643 = vadd.f32 %v3532, %v3553
        %v3644 = vadd.f32 %v3533, %v3553
        %v3645 = vadd.f32 %v3534, %v3553
        %v3646 = vadd.f32 %v3535, %v3553
        %v3647 = vadd.f32 %v3536, %v3553
        %v3648 = vadd.f32 %v3537, %v3553
        %v3649 = vadd.f32 %v3538, %v3553
        %v3650 = vadd.f32 %v3539, %v3553
        %v3651 = vadd.f32 %v3540, %v3553
        %v3652 = vadd.f32 %v3541, %v3553
        %v3653 = vadd.f32 %v3542, %v3553
        %v3654 = vadd.f32 %v3543, %v3553
        %v3655 = vadd.f32 %v3544, %v3553
        %v3656 = vadd.f32 %v3545, %v3553
        %v3657 = vadd.f32 %v3546, %v3553
        %v3658 = vadd.f32 %v3547, %v3553
        %v3659 = vmax.f32 %v3555, 0.0
        %v3660 = vmax.f32 %v3556, 0.0
        %v3661 = vmax.f32 %v3557, 0.0
        %v3662 = vmax.f32 %v3558, 0.0
        %v3663 = vmax.f32 %v3559, 0.0
        %v3664 = vmax.f32 %v3560, 0.0
        %v3665 = vmax.f32 %v3561, 0.0
        %v3666 = vmax.f32 %v3562, 0.0
        %v3667 = vmax.f32 %v3563, 0.0
        %v3668 = vmax.f32 %v3564, 0.0
        %v3669 = vmax.f32 %v3565, 0.0
        %v3670 = vmax.f32 %v3566, 0.0
        %v3671 = vmax.f32 %v3567, 0.0
        %v3672 = vmax.f32 %v3568, 0.0
        %v3673 = vmax.f32 %v3569, 0.0
        %v3674 = vmax.f32 %v3570, 0.0
        %v3675 = vmax.f32 %v3571, 0.0
        %v3676 = vmax.f32 %v3572, 0.0
        %v3677 = vmax.f32 %v3573, 0.0
        %v3678 = vmax.f32 %v3574, 0.0
        %v3679 = vmax.f32 %v3575, 0.0
        %v3680 = vmax.f32 %v3576, 0.0
        %v3681 = vmax.f32 %v3577, 0.0
        %v3682 = vmax.f32 %v3578, 0.0
        %v3683 = vmax.f32 %v3579, 0.0
        %v3684 = vmax.f32 %v3580, 0.0
        %v3685 = vmax.f32 %v3581, 0.0
        %v3686 = vmax.f32 %v3582, 0.0
        %v3687 = vmax.f32 %v3583, 0.0
        %v3688 = vmax.f32 %v3584, 0.0
        %v3689 = vmax.f32 %v3585, 0.0
        %v3690 = vmax.f32 %v3586, 0.0
        %v3691 = vmax.f32 %v3587, 0.0
        %v3692 = vmax.f32 %v3588, 0.0
        %v3693 = vmax.f32 %v3589, 0.0
        %v3694 = vmax.f32 %v3590, 0.0
        %v3695 = vmax.f32 %v3591, 0.0
        %v3696 = vmax.f32 %v3592, 0.0
        %v3697 = vmax.f32 %v3593, 0.0
        %v3698 = vmax.f32 %v3594, 0.0
        %v3699 = vmax.f32 %v3595, 0.0
        %v3700 = vmax.f32 %v3596, 0.0
        %v3701 = vmax.f32 %v3597, 0.0
        %v3702 = vmax.f32 %v3598, 0.0
        %v3703 = vmax.f32 %v3599, 0.0
        %v3704 = vmax.f32 %v3600, 0.0
        %v3705 = vmax.f32 %v3601, 0.0
        %v3706 = vmax.f32 %v3602, 0.0
        %v3707 = vmax.f32 %v3603, 0.0
        %v3708 = vmax.f32 %v3604, 0.0
        %v3709 = vmax.f32 %v3605, 0.0
        %v3710 = vmax.f32 %v3606, 0.0
        %v3711 = vmax.f32 %v3607, 0.0
        %v3712 = vmax.f32 %v3608, 0.0
        %v3713 = vmax.f32 %v3609, 0.0
        %v3714 = vmax.f32 %v3610, 0.0
        %v3715 = vmax.f32 %v3611, 0.0
        %v3716 = vmax.f32 %v3612, 0.0
        %v3717 = vmax.f32 %v3613, 0.0
        %v3718 = vmax.f32 %v3614, 0.0
        %v3719 = vmax.f32 %v3615, 0.0
        %v3720 = vmax.f32 %v3616, 0.0
        %v3721 = vmax.f32 %v3617, 0.0
        %v3722 = vmax.f32 %v3618, 0.0
        %v3723 = vmax.f32 %v3619, 0.0
        %v3724 = vmax.f32 %v3620, 0.0
        %v3725 = vmax.f32 %v3621, 0.0
        %v3726 = vmax.f32 %v3622, 0.0
        %v3727 = vmax.f32 %v3623, 0.0
        %v3728 = vmax.f32 %v3624, 0.0
        %v3729 = vmax.f32 %v3625, 0.0
        %v3730 = vmax.f32 %v3626, 0.0
        %v3731 = vmax.f32 %v3627, 0.0
        %v3732 = vmax.f32 %v3628, 0.0
        %v3733 = vmax.f32 %v3629, 0.0
        %v3734 = vmax.f32 %v3630, 0.0
        %v3735 = vmax.f32 %v3631, 0.0
        %v3736 = vmax.f32 %v3632, 0.0
        %v3737 = vmax.f32 %v3633, 0.0
        %v3738 = vmax.f32 %v3634, 0.0
        %v3739 = vmax.f32 %v3635, 0.0
        %v3740 = vmax.f32 %v3636, 0.0
        %v3741 = vmax.f32 %v3637, 0.0
        %v3742 = vmax.f32 %v3638, 0.0
        %v3743 = vmax.f32 %v3639, 0.0
        %v3744 = vmax.f32 %v3640, 0.0
        %v3745 = vmax.f32 %v3641, 0.0
        %v3746 = vmax.f32 %v3642, 0.0
        %v3747 = vmax.f32 %v3643, 0.0
        %v3748 = vmax.f32 %v3644, 0.0
        %v3749 = vmax.f32 %v3645, 0.0
        %v3750 = vmax.f32 %v3646, 0.0
        %v3751 = vmax.f32 %v3647, 0.0
        %v3752 = vmax.f32 %v3648, 0.0
        %v3753 = vmax.f32 %v3649, 0.0
        %v3754 = vmax.f32 %v3650, 0.0
        %v3755 = vmax.f32 %v3651, 0.0
        %v3756 = vmax.f32 %v3652, 0.0
        %v3757 = vmax.f32 %v3653, 0.0
        %v3758 = vmax.f32 %v3654, 0.0
        %v3759 = vmax.f32 %v3655, 0.0
        %v3760 = vmax.f32 %v3656, 0.0
        %v3761 = vmax.f32 %v3657, 0.0
        %v3762 = vmax.f32 %v3658, 0.0
        %v3763 = vpack.c.bf16 %v3660, %v3659
        %v3764 = vpack.c.bf16 %v3662, %v3661
        %v3765 = vpack.c.bf16 %v3664, %v3663
        %v3766 = vpack.c.bf16 %v3666, %v3665
        %v3767 = vpack.c.bf16 %v3668, %v3667
        %v3768 = vpack.c.bf16 %v3670, %v3669
        %v3769 = vpack.c.bf16 %v3672, %v3671
        %v3770 = vpack.c.bf16 %v3674, %v3673
        %v3771 = vpack.c.bf16 %v3676, %v3675
        %v3772 = vpack.c.bf16 %v3678, %v3677
        %v3773 = vpack.c.bf16 %v3680, %v3679
        %v3774 = vpack.c.bf16 %v3682, %v3681
        %v3775 = vpack.c.bf16 %v3684, %v3683
        %v3776 = vpack.c.bf16 %v3686, %v3685
        %v3777 = vpack.c.bf16 %v3688, %v3687
        %v3778 = vpack.c.bf16 %v3690, %v3689
        %v3779 = vpack.c.bf16 %v3692, %v3691
        %v3780 = vpack.c.bf16 %v3694, %v3693
        %v3781 = vpack.c.bf16 %v3696, %v3695
        %v3782 = vpack.c.bf16 %v3698, %v3697
        %v3783 = vpack.c.bf16 %v3700, %v3699
        %v3784 = vpack.c.bf16 %v3702, %v3701
        %v3785 = vpack.c.bf16 %v3704, %v3703
        %v3786 = vpack.c.bf16 %v3706, %v3705
        %v3787 = vpack.c.bf16 %v3708, %v3707
        %v3788 = vpack.c.bf16 %v3710, %v3709
        %v3789 = vpack.c.bf16 %v3712, %v3711
        %v3790 = vpack.c.bf16 %v3714, %v3713
        %v3791 = vpack.c.bf16 %v3716, %v3715
        %v3792 = vpack.c.bf16 %v3718, %v3717
        %v3793 = vpack.c.bf16 %v3720, %v3719
        %v3794 = vpack.c.bf16 %v3722, %v3721
        %v3795 = vpack.c.bf16 %v3724, %v3723
        %v3796 = vpack.c.bf16 %v3726, %v3725
        %v3797 = vpack.c.bf16 %v3728, %v3727
        %v3798 = vpack.c.bf16 %v3730, %v3729
        %v3799 = vpack.c.bf16 %v3732, %v3731
        %v3800 = vpack.c.bf16 %v3734, %v3733
        %v3801 = vpack.c.bf16 %v3736, %v3735
        %v3802 = vpack.c.bf16 %v3738, %v3737
        %v3803 = vpack.c.bf16 %v3740, %v3739
        %v3804 = vpack.c.bf16 %v3742, %v3741
        %v3805 = vpack.c.bf16 %v3744, %v3743
        %v3806 = vpack.c.bf16 %v3746, %v3745
        %v3807 = vpack.c.bf16 %v3748, %v3747
        %v3808 = vpack.c.bf16 %v3750, %v3749
        %v3809 = vpack.c.bf16 %v3752, %v3751
        %v3810 = vpack.c.bf16 %v3754, %v3753
        %v3811 = vpack.c.bf16 %v3756, %v3755
        %v3812 = vpack.c.bf16 %v3758, %v3757
        %v3813 = vpack.c.bf16 %v3760, %v3759
        %v3814 = vpack.c.bf16 %v3762, %v3761
        %v3867 = vunpack.c.l.b16 %v3763
        %v3868 = vunpack.c.h.b16 %v3763
        %v3869 = vunpack.c.l.b16 %v3764
        %v3870 = vunpack.c.h.b16 %v3764
        %v3871 = vunpack.c.l.b16 %v3765
        %v3872 = vunpack.c.h.b16 %v3765
        %v3873 = vunpack.c.l.b16 %v3766
        %v3874 = vunpack.c.h.b16 %v3766
        %v3875 = vunpack.c.l.b16 %v3767
        %v3876 = vunpack.c.h.b16 %v3767
        %v3877 = vunpack.c.l.b16 %v3768
        %v3878 = vunpack.c.h.b16 %v3768
        %v3879 = vunpack.c.l.b16 %v3769
        %v3880 = vunpack.c.h.b16 %v3769
        %v3881 = vunpack.c.l.b16 %v3770
        %v3882 = vunpack.c.h.b16 %v3770
        %v3883 = vunpack.c.l.b16 %v3771
        %v3884 = vunpack.c.h.b16 %v3771
        %v3885 = vunpack.c.l.b16 %v3772
        %v3886 = vunpack.c.h.b16 %v3772
        %v3887 = vunpack.c.l.b16 %v3773
        %v3888 = vunpack.c.h.b16 %v3773
        %v3889 = vunpack.c.l.b16 %v3774
        %v3890 = vunpack.c.h.b16 %v3774
        %v3891 = vunpack.c.l.b16 %v3775
        %v3892 = vunpack.c.h.b16 %v3775
        %v3893 = vunpack.c.l.b16 %v3776
        %v3894 = vunpack.c.h.b16 %v3776
        %v3895 = vunpack.c.l.b16 %v3777
        %v3896 = vunpack.c.h.b16 %v3777
        %v3897 = vunpack.c.l.b16 %v3778
        %v3898 = vunpack.c.h.b16 %v3778
        %v3899 = vunpack.c.l.b16 %v3779
        %v3900 = vunpack.c.h.b16 %v3779
        %v3901 = vunpack.c.l.b16 %v3780
        %v3902 = vunpack.c.h.b16 %v3780
        %v3903 = vunpack.c.l.b16 %v3781
        %v3904 = vunpack.c.h.b16 %v3781
        %v3905 = vunpack.c.l.b16 %v3782
        %v3906 = vunpack.c.h.b16 %v3782
        %v3907 = vunpack.c.l.b16 %v3783
        %v3908 = vunpack.c.h.b16 %v3783
        %v3909 = vunpack.c.l.b16 %v3784
        %v3910 = vunpack.c.h.b16 %v3784
        %v3911 = vunpack.c.l.b16 %v3785
        %v3912 = vunpack.c.h.b16 %v3785
        %v3913 = vunpack.c.l.b16 %v3786
        %v3914 = vunpack.c.h.b16 %v3786
        %v3915 = vunpack.c.l.b16 %v3787
        %v3916 = vunpack.c.h.b16 %v3787
        %v3917 = vunpack.c.l.b16 %v3788
        %v3918 = vunpack.c.h.b16 %v3788
        %v3919 = vunpack.c.l.b16 %v3789
        %v3920 = vunpack.c.h.b16 %v3789
        %v3921 = vunpack.c.l.b16 %v3790
        %v3922 = vunpack.c.h.b16 %v3790
        %v3923 = vunpack.c.l.b16 %v3791
        %v3924 = vunpack.c.h.b16 %v3791
        %v3925 = vunpack.c.l.b16 %v3792
        %v3926 = vunpack.c.h.b16 %v3792
        %v3927 = vunpack.c.l.b16 %v3793
        %v3928 = vunpack.c.h.b16 %v3793
        %v3929 = vunpack.c.l.b16 %v3794
        %v3930 = vunpack.c.h.b16 %v3794
        %v3931 = vunpack.c.l.b16 %v3795
        %v3932 = vunpack.c.h.b16 %v3795
        %v3933 = vunpack.c.l.b16 %v3796
        %v3934 = vunpack.c.h.b16 %v3796
        %v3935 = vunpack.c.l.b16 %v3797
        %v3936 = vunpack.c.h.b16 %v3797
        %v3937 = vunpack.c.l.b16 %v3798
        %v3938 = vunpack.c.h.b16 %v3798
        %v3939 = vunpack.c.l.b16 %v3799
        %v3940 = vunpack.c.h.b16 %v3799
        %v3941 = vunpack.c.l.b16 %v3800
        %v3942 = vunpack.c.h.b16 %v3800
        %v3943 = vunpack.c.l.b16 %v3801
        %v3944 = vunpack.c.h.b16 %v3801
        %v3945 = vunpack.c.l.b16 %v3802
        %v3946 = vunpack.c.h.b16 %v3802
        %v3947 = vunpack.c.l.b16 %v3803
        %v3948 = vunpack.c.h.b16 %v3803
        %v3949 = vunpack.c.l.b16 %v3804
        %v3950 = vunpack.c.h.b16 %v3804
        %v3951 = vunpack.c.l.b16 %v3805
        %v3952 = vunpack.c.h.b16 %v3805
        %v3953 = vunpack.c.l.b16 %v3806
        %v3954 = vunpack.c.h.b16 %v3806
        %v3955 = vunpack.c.l.b16 %v3807
        %v3956 = vunpack.c.h.b16 %v3807
        %v3957 = vunpack.c.l.b16 %v3808
        %v3958 = vunpack.c.h.b16 %v3808
        %v3959 = vunpack.c.l.b16 %v3809
        %v3960 = vunpack.c.h.b16 %v3809
        %v3961 = vunpack.c.l.b16 %v3810
        %v3962 = vunpack.c.h.b16 %v3810
        %v3963 = vunpack.c.l.b16 %v3811
        %v3964 = vunpack.c.h.b16 %v3811
        %v3965 = vunpack.c.l.b16 %v3812
        %v3966 = vunpack.c.h.b16 %v3812
        %v3967 = vunpack.c.l.b16 %v3813
        %v3968 = vunpack.c.h.b16 %v3813
        %v3969 = vunpack.c.l.b16 %v3814
        %v3970 = vunpack.c.h.b16 %v3814
        %v3971 = vpack.c.b16 %v3867, %v3867
        %v3972 = vpack.c.b16 %v3868, %v3868
        %v3973 = vpack.c.b16 %v3869, %v3869
        %v3974 = vpack.c.b16 %v3870, %v3870
        %v3975 = vpack.c.b16 %v3871, %v3871
        %v3976 = vpack.c.b16 %v3872, %v3872
        %v3977 = vpack.c.b16 %v3873, %v3873
        %v3978 = vpack.c.b16 %v3874, %v3874
        %v3979 = vpack.c.b16 %v3875, %v3875
        %v3980 = vpack.c.b16 %v3876, %v3876
        %v3981 = vpack.c.b16 %v3877, %v3877
        %v3982 = vpack.c.b16 %v3878, %v3878
        %v3983 = vpack.c.b16 %v3879, %v3879
        %v3984 = vpack.c.b16 %v3880, %v3880
        %v3985 = vpack.c.b16 %v3881, %v3881
        %v3986 = vpack.c.b16 %v3882, %v3882
        %v3987 = vpack.c.b16 %v3883, %v3883
        %v3988 = vpack.c.b16 %v3884, %v3884
        %v3989 = vpack.c.b16 %v3885, %v3885
        %v3990 = vpack.c.b16 %v3886, %v3886
        %v3991 = vpack.c.b16 %v3887, %v3887
        %v3992 = vpack.c.b16 %v3888, %v3888
        %v3993 = vpack.c.b16 %v3889, %v3889
        %v3994 = vpack.c.b16 %v3890, %v3890
        %v3995 = vpack.c.b16 %v3891, %v3891
        %v3996 = vpack.c.b16 %v3892, %v3892
        %v3997 = vpack.c.b16 %v3893, %v3893
        %v3998 = vpack.c.b16 %v3894, %v3894
        %v3999 = vpack.c.b16 %v3895, %v3895
        %v4000 = vpack.c.b16 %v3896, %v3896
        %v4001 = vpack.c.b16 %v3897, %v3897
        %v4002 = vpack.c.b16 %v3898, %v3898
        %v4003 = vpack.c.b16 %v3899, %v3899
        %v4004 = vpack.c.b16 %v3900, %v3900
        %v4005 = vpack.c.b16 %v3901, %v3901
        %v4006 = vpack.c.b16 %v3902, %v3902
        %v4007 = vpack.c.b16 %v3903, %v3903
        %v4008 = vpack.c.b16 %v3904, %v3904
        %v4009 = vpack.c.b16 %v3905, %v3905
        %v4010 = vpack.c.b16 %v3906, %v3906
        %v4011 = vpack.c.b16 %v3907, %v3907
        %v4012 = vpack.c.b16 %v3908, %v3908
        %v4013 = vpack.c.b16 %v3909, %v3909
        %v4014 = vpack.c.b16 %v3910, %v3910
        %v4015 = vpack.c.b16 %v3911, %v3911
        %v4016 = vpack.c.b16 %v3912, %v3912
        %v4017 = vpack.c.b16 %v3913, %v3913
        %v4018 = vpack.c.b16 %v3914, %v3914
        %v4019 = vpack.c.b16 %v3915, %v3915
        %v4020 = vpack.c.b16 %v3916, %v3916
        %v4021 = vpack.c.b16 %v3917, %v3917
        %v4022 = vpack.c.b16 %v3918, %v3918
        %v4023 = vpack.c.b16 %v3919, %v3919
        %v4024 = vpack.c.b16 %v3920, %v3920
        %v4025 = vpack.c.b16 %v3921, %v3921
        %v4026 = vpack.c.b16 %v3922, %v3922
        %v4027 = vpack.c.b16 %v3923, %v3923
        %v4028 = vpack.c.b16 %v3924, %v3924
        %v4029 = vpack.c.b16 %v3925, %v3925
        %v4030 = vpack.c.b16 %v3926, %v3926
        %v4031 = vpack.c.b16 %v3927, %v3927
        %v4032 = vpack.c.b16 %v3928, %v3928
        %v4033 = vpack.c.b16 %v3929, %v3929
        %v4034 = vpack.c.b16 %v3930, %v3930
        %v4035 = vpack.c.b16 %v3931, %v3931
        %v4036 = vpack.c.b16 %v3932, %v3932
        %v4037 = vpack.c.b16 %v3933, %v3933
        %v4038 = vpack.c.b16 %v3934, %v3934
        %v4039 = vpack.c.b16 %v3935, %v3935
        %v4040 = vpack.c.b16 %v3936, %v3936
        %v4041 = vpack.c.b16 %v3937, %v3937
        %v4042 = vpack.c.b16 %v3938, %v3938
        %v4043 = vpack.c.b16 %v3939, %v3939
        %v4044 = vpack.c.b16 %v3940, %v3940
        %v4045 = vpack.c.b16 %v3941, %v3941
        %v4046 = vpack.c.b16 %v3942, %v3942
        %v4047 = vpack.c.b16 %v3943, %v3943
        %v4048 = vpack.c.b16 %v3944, %v3944
        %v4049 = vpack.c.b16 %v3945, %v3945
        %v4050 = vpack.c.b16 %v3946, %v3946
        %v4051 = vpack.c.b16 %v3947, %v3947
        %v4052 = vpack.c.b16 %v3948, %v3948
        %v4053 = vpack.c.b16 %v3949, %v3949
        %v4054 = vpack.c.b16 %v3950, %v3950
        %v4055 = vpack.c.b16 %v3951, %v3951
        %v4056 = vpack.c.b16 %v3952, %v3952
        %v4057 = vpack.c.b16 %v3953, %v3953
        %v4058 = vpack.c.b16 %v3954, %v3954
        %v4059 = vpack.c.b16 %v3955, %v3955
        %v4060 = vpack.c.b16 %v3956, %v3956
        %v4061 = vpack.c.b16 %v3957, %v3957
        %v4062 = vpack.c.b16 %v3958, %v3958
        %v4063 = vpack.c.b16 %v3959, %v3959
        %v4064 = vpack.c.b16 %v3960, %v3960
        %v4065 = vpack.c.b16 %v3961, %v3961
        %v4066 = vpack.c.b16 %v3962, %v3962
        %v4067 = vpack.c.b16 %v3963, %v3963
        %v4068 = vpack.c.b16 %v3964, %v3964
        %v4069 = vpack.c.b16 %v3965, %v3965
        %v4070 = vpack.c.b16 %v3966, %v3966
        %v4071 = vpack.c.b16 %v3967, %v3967
        %v4072 = vpack.c.b16 %v3968, %v3968
        %v4073 = vpack.c.b16 %v3969, %v3969
        %v4074 = vpack.c.b16 %v3970, %v3970
        %vm4179 = vcmask 257024
        %4180 = vst.msk [vmem:[%s198] sm:$0xf] %vm4179, %v3971
        %4181 = vst.msk [vmem:[%s198 + $0x4] sm:$0xf] %vm4179, %v3972
        %4182 = vst.msk [vmem:[%s198 + $0x8] sm:$0xf] %vm4179, %v3973
        %vm4183 = vcmask 253952
        %4184 = vst.msk [vmem:[%s198 + $0xc] sm:$0x1] %vm4183, %v3974
        %4185 = vst.msk [vmem:[%s198 + $0x10] sm:$0xf] %vm4179, %v3975
        %4186 = vst.msk [vmem:[%s198 + $0x14] sm:$0xf] %vm4179, %v3976
        %4187 = vst.msk [vmem:[%s198 + $0x18] sm:$0xf] %vm4179, %v3977
        %4188 = vst.msk [vmem:[%s198 + $0x1c] sm:$0x1] %vm4183, %v3978
        %4189 = vst.msk [vmem:[%s198 + $0x20] sm:$0xf] %vm4179, %v3979
        %4190 = vst.msk [vmem:[%s198 + $0x24] sm:$0xf] %vm4179, %v3980
        %4191 = vst.msk [vmem:[%s198 + $0x28] sm:$0xf] %vm4179, %v3981
        %4192 = vst.msk [vmem:[%s198 + $0x2c] sm:$0x1] %vm4183, %v3982
        %4193 = vst.msk [vmem:[%s198 + $0x30] sm:$0xf] %vm4179, %v3983
        %4194 = vst.msk [vmem:[%s198 + $0x34] sm:$0xf] %vm4179, %v3984
        %4195 = vst.msk [vmem:[%s198 + $0x38] sm:$0xf] %vm4179, %v3985
        %4196 = vst.msk [vmem:[%s198 + $0x3c] sm:$0x1] %vm4183, %v3986
        %4197 = vst.msk [vmem:[%s198 + $0x40] sm:$0xf] %vm4179, %v3987
        %4198 = vst.msk [vmem:[%s198 + $0x44] sm:$0xf] %vm4179, %v3988
        %4199 = vst.msk [vmem:[%s198 + $0x48] sm:$0xf] %vm4179, %v3989
        %4200 = vst.msk [vmem:[%s198 + $0x4c] sm:$0x1] %vm4183, %v3990
        %4201 = vst.msk [vmem:[%s198 + $0x50] sm:$0xf] %vm4179, %v3991
        %4202 = vst.msk [vmem:[%s198 + $0x54] sm:$0xf] %vm4179, %v3992
        %4203 = vst.msk [vmem:[%s198 + $0x58] sm:$0xf] %vm4179, %v3993
        %4204 = vst.msk [vmem:[%s198 + $0x5c] sm:$0x1] %vm4183, %v3994
        %4205 = vst.msk [vmem:[%s198 + $0x60] sm:$0xf] %vm4179, %v3995
        %4206 = vst.msk [vmem:[%s198 + $0x64] sm:$0xf] %vm4179, %v3996
        %4207 = vst.msk [vmem:[%s198 + $0x68] sm:$0xf] %vm4179, %v3997
        %4208 = vst.msk [vmem:[%s198 + $0x6c] sm:$0x1] %vm4183, %v3998
        %4209 = vst.msk [vmem:[%s198 + $0x70] sm:$0xf] %vm4179, %v3999
        %4210 = vst.msk [vmem:[%s198 + $0x74] sm:$0xf] %vm4179, %v4000
        %4211 = vst.msk [vmem:[%s198 + $0x78] sm:$0xf] %vm4179, %v4001
        %4212 = vst.msk [vmem:[%s198 + $0x7c] sm:$0x1] %vm4183, %v4002
        %4213 = vst.msk [vmem:[%s198 + $0x80] sm:$0xf] %vm4179, %v4003
        %4214 = vst.msk [vmem:[%s198 + $0x84] sm:$0xf] %vm4179, %v4004
        %4215 = vst.msk [vmem:[%s198 + $0x88] sm:$0xf] %vm4179, %v4005
        %4216 = vst.msk [vmem:[%s198 + $0x8c] sm:$0x1] %vm4183, %v4006
        %4217 = vst.msk [vmem:[%s198 + $0x90] sm:$0xf] %vm4179, %v4007
        %4218 = vst.msk [vmem:[%s198 + $0x94] sm:$0xf] %vm4179, %v4008
        %4219 = vst.msk [vmem:[%s198 + $0x98] sm:$0xf] %vm4179, %v4009
        %4220 = vst.msk [vmem:[%s198 + $0x9c] sm:$0x1] %vm4183, %v4010
        %4221 = vst.msk [vmem:[%s198 + $0xa0] sm:$0xf] %vm4179, %v4011
        %4222 = vst.msk [vmem:[%s198 + $0xa4] sm:$0xf] %vm4179, %v4012
        %4223 = vst.msk [vmem:[%s198 + $0xa8] sm:$0xf] %vm4179, %v4013
        %4224 = vst.msk [vmem:[%s198 + $0xac] sm:$0x1] %vm4183, %v4014
        %4225 = vst.msk [vmem:[%s198 + $0xb0] sm:$0xf] %vm4179, %v4015
        %4226 = vst.msk [vmem:[%s198 + $0xb4] sm:$0xf] %vm4179, %v4016
        %4227 = vst.msk [vmem:[%s198 + $0xb8] sm:$0xf] %vm4179, %v4017
        %4228 = vst.msk [vmem:[%s198 + $0xbc] sm:$0x1] %vm4183, %v4018
        %4229 = vst.msk [vmem:[%s198 + $0xc0] sm:$0xf] %vm4179, %v4019
        %4230 = vst.msk [vmem:[%s198 + $0xc4] sm:$0xf] %vm4179, %v4020
        %4231 = vst.msk [vmem:[%s198 + $0xc8] sm:$0xf] %vm4179, %v4021
        %4232 = vst.msk [vmem:[%s198 + $0xcc] sm:$0x1] %vm4183, %v4022
        %4233 = vst.msk [vmem:[%s198 + $0xd0] sm:$0xf] %vm4179, %v4023
        %4234 = vst.msk [vmem:[%s198 + $0xd4] sm:$0xf] %vm4179, %v4024
        %4235 = vst.msk [vmem:[%s198 + $0xd8] sm:$0xf] %vm4179, %v4025
        %4236 = vst.msk [vmem:[%s198 + $0xdc] sm:$0x1] %vm4183, %v4026
        %4237 = vst.msk [vmem:[%s198 + $0xe0] sm:$0xf] %vm4179, %v4027
        %4238 = vst.msk [vmem:[%s198 + $0xe4] sm:$0xf] %vm4179, %v4028
        %4239 = vst.msk [vmem:[%s198 + $0xe8] sm:$0xf] %vm4179, %v4029
        %4240 = vst.msk [vmem:[%s198 + $0xec] sm:$0x1] %vm4183, %v4030
        %4241 = vst.msk [vmem:[%s198 + $0xf0] sm:$0xf] %vm4179, %v4031
        %4242 = vst.msk [vmem:[%s198 + $0xf4] sm:$0xf] %vm4179, %v4032
        %4243 = vst.msk [vmem:[%s198 + $0xf8] sm:$0xf] %vm4179, %v4033
        %4244 = vst.msk [vmem:[%s198 + $0xfc] sm:$0x1] %vm4183, %v4034
        %4245 = vst.msk [vmem:[%s198 + $0x100] sm:$0xf] %vm4179, %v4035
        %4246 = vst.msk [vmem:[%s198 + $0x104] sm:$0xf] %vm4179, %v4036
        %4247 = vst.msk [vmem:[%s198 + $0x108] sm:$0xf] %vm4179, %v4037
        %4248 = vst.msk [vmem:[%s198 + $0x10c] sm:$0x1] %vm4183, %v4038
        %4249 = vst.msk [vmem:[%s198 + $0x110] sm:$0xf] %vm4179, %v4039
        %4250 = vst.msk [vmem:[%s198 + $0x114] sm:$0xf] %vm4179, %v4040
        %4251 = vst.msk [vmem:[%s198 + $0x118] sm:$0xf] %vm4179, %v4041
        %4252 = vst.msk [vmem:[%s198 + $0x11c] sm:$0x1] %vm4183, %v4042
        %4253 = vst.msk [vmem:[%s198 + $0x120] sm:$0xf] %vm4179, %v4043
        %4254 = vst.msk [vmem:[%s198 + $0x124] sm:$0xf] %vm4179, %v4044
        %4255 = vst.msk [vmem:[%s198 + $0x128] sm:$0xf] %vm4179, %v4045
        %4256 = vst.msk [vmem:[%s198 + $0x12c] sm:$0x1] %vm4183, %v4046
        %4257 = vst.msk [vmem:[%s198 + $0x130] sm:$0xf] %vm4179, %v4047
        %4258 = vst.msk [vmem:[%s198 + $0x134] sm:$0xf] %vm4179, %v4048
        %4259 = vst.msk [vmem:[%s198 + $0x138] sm:$0xf] %vm4179, %v4049
        %4260 = vst.msk [vmem:[%s198 + $0x13c] sm:$0x1] %vm4183, %v4050
        %4261 = vst.msk [vmem:[%s198 + $0x140] sm:$0xf] %vm4179, %v4051
        %4262 = vst.msk [vmem:[%s198 + $0x144] sm:$0xf] %vm4179, %v4052
        %4263 = vst.msk [vmem:[%s198 + $0x148] sm:$0xf] %vm4179, %v4053
        %4264 = vst.msk [vmem:[%s198 + $0x14c] sm:$0x1] %vm4183, %v4054
        %4265 = vst.msk [vmem:[%s198 + $0x150] sm:$0xf] %vm4179, %v4055
        %4266 = vst.msk [vmem:[%s198 + $0x154] sm:$0xf] %vm4179, %v4056
        %4267 = vst.msk [vmem:[%s198 + $0x158] sm:$0xf] %vm4179, %v4057
        %4268 = vst.msk [vmem:[%s198 + $0x15c] sm:$0x1] %vm4183, %v4058
        %4269 = vst.msk [vmem:[%s198 + $0x160] sm:$0xf] %vm4179, %v4059
        %4270 = vst.msk [vmem:[%s198 + $0x164] sm:$0xf] %vm4179, %v4060
        %4271 = vst.msk [vmem:[%s198 + $0x168] sm:$0xf] %vm4179, %v4061
        %4272 = vst.msk [vmem:[%s198 + $0x16c] sm:$0x1] %vm4183, %v4062
        %4273 = vst.msk [vmem:[%s198 + $0x170] sm:$0xf] %vm4179, %v4063
        %4274 = vst.msk [vmem:[%s198 + $0x174] sm:$0xf] %vm4179, %v4064
        %4275 = vst.msk [vmem:[%s198 + $0x178] sm:$0xf] %vm4179, %v4065
        %4276 = vst.msk [vmem:[%s198 + $0x17c] sm:$0x1] %vm4183, %v4066
        %4277 = vst.msk [vmem:[%s198 + $0x180] sm:$0xf] %vm4179, %v4067
        %4278 = vst.msk [vmem:[%s198 + $0x184] sm:$0xf] %vm4179, %v4068
        %4279 = vst.msk [vmem:[%s198 + $0x188] sm:$0xf] %vm4179, %v4069
        %4280 = vst.msk [vmem:[%s198 + $0x18c] sm:$0x1] %vm4183, %v4070
        %4281 = vst.msk [vmem:[%s198 + $0x190] sm:$0xf] %vm4179, %v4071
        %4282 = vst.msk [vmem:[%s198 + $0x194] sm:$0xf] %vm4179, %v4072
        %4283 = vst.msk [vmem:[%s198 + $0x198] sm:$0xf] %vm4179, %v4073
        %4284 = vst.msk [vmem:[%s198 + $0x19c] sm:$0x1] %vm4183, %v4074
        %p4285 = scmp.lt.s32.totalorder %s16, 1
        %s4286 = scalar_select %p4285, %s16, 1
        %s4287 = smul.addr %s4286, 104
        %s4288 = smul.addr %s4287, 4
        %s4289 = scalar_lea.vmem %s3, %s4288
        // Predicated region
        $region41: #{net_forward.3} parent=31 // pred_check
          %p4290 = pneg %p102
        $region42: #{net_forward.3} parent=31 // pred_check_branch
          %4292 = sbr.rel (%p4290) target = $region44
        $region43: #{net_forward.3} parent=31 // pred_region
          _
        $region44: #{net_forward.3} parent=31 // pred_fallthru
          _
      $region32: #{net_forward.3} parent=5 // pred_fallthru
        _
      %p4293 = scmp.le.s32.totalorder 2, %s11
      // Predicated region
      $region45: #{net_forward.3} parent=5 // pred_check
        %p4294 = pneg %p4293
      $region46: #{net_forward.3} parent=5 // pred_check_branch
        %4296 = sbr.rel (%p4294) target = $region48
      $region47: #{net_forward.3} parent=5 // pred_region
        %s4297 = ssub.s32 %s11, 2
        // Predicated region
        $region49: #{net_forward.3} parent=47 // pred_check
          %p4298 = pneg %p108
        $region50: #{net_forward.3} parent=47 // pred_check_branch
          %4300 = sbr.rel (%p4298) target = $region52
        $region51: #{net_forward.3} parent=47 // pred_region
          %p4301 = scmp.lt.s32.totalorder %s17, 1
          %s4302 = scalar_select %p4301, %s17, 1
          %s4303 = smul.addr %s4302, 104
          %s4304 = smul.addr %s4303, 4
          %s4305 = scalar_lea.vmem %s3, %s4304
        $region52: #{net_forward.3} parent=47 // pred_fallthru
          _
      $region48: #{net_forward.3} parent=5 // pred_fallthru
        _
    $region6: #{net_forward.3} parent=1 // loop_footer
      %s15 = sadd.s32 1, %s11
    $region7: #{net_forward.3} parent=1 // loop_footer_branch
      %10 = sbr.rel target = $region3
    $region8: #{net_forward.3} parent=1 // loop_exit
      _
    %4306 = vsyncpa [#allocation3], 1
    %s4307 = scalar_lea.sflag [#allocation3], 1
    %4308 = vsyncpa %s4307, 1
    %4309 = vsyncpa [#allocation5], 1

// kernel: net_forward.4
$region0: #{net_forward.4}
  #allocation0 [shape = 'u32[]', space=smem, size = 0x4, offset = 0x4, fixed_abs, tag = 'smem constant byte address 0x4 - core index']
  #allocation1 [shape = 'u32[144,128]{1,0:T(1,128)}', space=vmem, size = 0x12000, scoped, tag = 'internal scratch']
  %s0 = inlined_call_operand.vmem [shape: bf16[1152,288], index: 0, kind: input, shape index: {}]
  %s1 = inlined_call_operand.vmem [shape: bf16[288,64], index: 1, kind: input, shape index: {}]
  %s2 = inlined_call_operand.vmem [shape: f32[1,64], index: 2, kind: input, shape index: {}]
  %s3 = inlined_call_operand.vmem [shape: bf16[288,64], index: 3, kind: output, shape index: {}]
  %s4 = sld [smem:[#allocation0]]
  $region45: #{net_forward.4} parent=0
    _
  %s6 = ssub.s32 1, %s4
  %s7 = scalar_select 0, %s6, %s4
  loop: start=0, step=1, limit=4
  $region2: #{net_forward.4} parent=0 // loop_pre_header
    _
  $region3: #{net_forward.4} parent=0 // loop_header
    %s9 = sphi 0, %s13
    %p10 = scmp.ge.s32.totalorder %s9, 4
    %s19 = sphi 0, %s21
    %s22 = sphi 0, %s19
    %s23 = sphi 0, %s22
    %s39 = sphi 0, %s23
    %s43 = sphi 0, %s43
    %s45 = sphi 0, %s43
    %s46 = sphi 0, %s45
    %s60 = sphi 0, %s46
    %s64 = sphi 0, %s64
    %s66 = sphi 0, %s64
    %s67 = sphi 0, %s66
    %s81 = sphi 0, %s67
    %s87 = sphi 0, %s89
    %s90 = sphi 0, %s87
    %s91 = sphi 0, %s90
    %s107 = sphi 0, %s91
  $region4: #{net_forward.4} parent=0 // loop_header_branch
    %12 = sbr.rel (%p10) target = $region8
  $region5: #{net_forward.4} parent=0 // loop_body
    %s14 = ssub.s32 %s9, 1
    %s15 = ssub.s32 %s9, 2
    %s16 = sadd.s32 %s9, 1
    %s17 = ssub.s32 %s9, %s16
    %p18 = scmp.eq.s32.totalorder %s17, 0
    %s20 = sadd.s32 %s19, 1
    %s21 = scalar_select %p18, %s19, %s20
    %p24 = pneg %p18
    %p25 = scmp.eq.s32.totalorder %s9, 1
    %p26 = por %p24, %p25
    %p27 = scmp.ne.s32.totalorder %s19, %s22
    %p28 = scmp.eq.s32.totalorder %s9, 0
    %p29 = por %p27, %p28
    %p30 = scmp.ne.s32.totalorder %s19, %s22
    %p31 = scmp.eq.s32.totalorder %s14, 1
    %p32 = por %p30, %p31
    %p33 = scmp.ne.s32.totalorder %s22, %s23
    %p34 = scmp.eq.s32.totalorder %s14, 0
    %p35 = por %p33, %p34
    %p36 = scmp.ne.s32.totalorder %s22, %s23
    %p37 = scmp.eq.s32.totalorder %s15, 1
    %p38 = por %p36, %p37
    %p40 = scmp.ne.s32.totalorder %s23, %s39
    %p41 = scmp.eq.s32.totalorder %s15, 0
    %p42 = por %p40, %p41
    %s44 = sadd.s32 %s43, 1
    %p47 = scmp.eq.s32.totalorder %s9, 1
    %p48 = scmp.ne.s32.totalorder %s43, %s45
    %p49 = scmp.eq.s32.totalorder %s9, 0
    %p50 = por %p48, %p49
    %p51 = scmp.ne.s32.totalorder %s43, %s45
    %p52 = scmp.eq.s32.totalorder %s14, 1
    %p53 = por %p51, %p52
    %p54 = scmp.ne.s32.totalorder %s45, %s46
    %p55 = scmp.eq.s32.totalorder %s14, 0
    %p56 = por %p54, %p55
    %p57 = scmp.ne.s32.totalorder %s45, %s46
    %p58 = scmp.eq.s32.totalorder %s15, 1
    %p59 = por %p57, %p58
    %p61 = scmp.ne.s32.totalorder %s46, %s60
    %p62 = scmp.eq.s32.totalorder %s15, 0
    %p63 = por %p61, %p62
    %s65 = sadd.s32 %s64, 1
    %p68 = scmp.eq.s32.totalorder %s9, 1
    %p69 = scmp.ne.s32.totalorder %s64, %s66
    %p70 = scmp.eq.s32.totalorder %s9, 0
    %p71 = por %p69, %p70
    %p72 = scmp.ne.s32.totalorder %s64, %s66
    %p73 = scmp.eq.s32.totalorder %s14, 1
    %p74 = por %p72, %p73
    %p75 = scmp.ne.s32.totalorder %s66, %s67
    %p76 = scmp.eq.s32.totalorder %s14, 0
    %p77 = por %p75, %p76
    %p78 = scmp.ne.s32.totalorder %s66, %s67
    %p79 = scmp.eq.s32.totalorder %s15, 1
    %p80 = por %p78, %p79
    %p82 = scmp.ne.s32.totalorder %s67, %s81
    %p83 = scmp.eq.s32.totalorder %s15, 0
    %p84 = por %p82, %p83
    %s85 = ssub.s32 %s9, %s16
    %p86 = scmp.eq.s32.totalorder %s85, 0
    %s88 = sadd.s32 %s87, 1
    %s89 = scalar_select %p86, %s87, %s88
    %p92 = pneg %p86
    %p93 = scmp.eq.s32.totalorder %s9, 1
    %p94 = por %p92, %p93
    %p95 = scmp.ne.s32.totalorder %s87, %s90
    %p96 = scmp.eq.s32.totalorder %s9, 0
    %p97 = por %p95, %p96
    %p98 = scmp.ne.s32.totalorder %s87, %s90
    %p99 = scmp.eq.s32.totalorder %s14, 1
    %p100 = por %p98, %p99
    %p101 = scmp.ne.s32.totalorder %s90, %s91
    %p102 = scmp.eq.s32.totalorder %s14, 0
    %p103 = por %p101, %p102
    %p104 = scmp.ne.s32.totalorder %s90, %s91
    %p105 = scmp.eq.s32.totalorder %s15, 1
    %p106 = por %p104, %p105
    %p108 = scmp.ne.s32.totalorder %s91, %s107
    %p109 = scmp.eq.s32.totalorder %s15, 0
    %p110 = por %p108, %p109
    %p111 = scmp.le.s32.totalorder 1, %s9
    %p112 = scmp.lt.s32.totalorder %s9, 3
    %p113 = pnand %p111, %p112
    %p114 = pneg %p113
    // Predicated region
    $region9: #{net_forward.4} parent=5 // pred_check
      _
    $region10: #{net_forward.4} parent=5 // pred_check_branch
      %116 = sbr.rel (%p113) target = $region12
    $region11: #{net_forward.4} parent=5 // pred_region
      %s117 = ssub.s32 %s9, 1
      // Predicated region
      $region13: #{net_forward.4} parent=11 // pred_check
        %p118 = pneg %p56
      $region14: #{net_forward.4} parent=11 // pred_check_branch
        %120 = sbr.rel (%p118) target = $region16
      $region15: #{net_forward.4} parent=11 // pred_region
        _
      $region16: #{net_forward.4} parent=11 // pred_fallthru
        _
      // Predicated region
      $region17: #{net_forward.4} parent=11 // pred_check
        %p121 = pneg %p77
      $region18: #{net_forward.4} parent=11 // pred_check_branch
        %123 = sbr.rel (%p121) target = $region20
      $region19: #{net_forward.4} parent=11 // pred_region
        _
      $region20: #{net_forward.4} parent=11 // pred_fallthru
        _
    $region12: #{net_forward.4} parent=5 // pred_fallthru
      _
    %p124 = scmp.lt.s32.totalorder %s9, 2
    // Predicated region
    $region21: #{net_forward.4} parent=5 // pred_check
      %p125 = pneg %p124
    $region22: #{net_forward.4} parent=5 // pred_check_branch
      %127 = sbr.rel (%p125) target = $region24
    $region23: #{net_forward.4} parent=5 // pred_region
      // Predicated region
      $region25: #{net_forward.4} parent=23 // pred_check
        %p128 = pneg %p29
      $region26: #{net_forward.4} parent=23 // pred_check_branch
        %130 = sbr.rel (%p128) target = $region28
      $region27: #{net_forward.4} parent=23 // pred_region
        %s131 = smul.u32 72, %s9
        %p132 = scmp.lt.s32.totalorder %s131, 143
        %s133 = scalar_select %p132, %s131, 143
        %s134 = smul.addr %s133, 3
        %s135 = smul.addr %s134, 4
        %s136 = scalar_lea.vmem %s0, %s135
        %s137 = smul.u32 72, %s9
      $region28: #{net_forward.4} parent=23 // pred_fallthru
        _
    $region24: #{net_forward.4} parent=5 // pred_fallthru
      _
    %p138 = scmp.le.s32.totalorder 1, %s9
    %p139 = scmp.lt.s32.totalorder %s9, 3
    %p140 = pnand %p138, %p139
    %p141 = pneg %p140
    // Predicated region
    $region29: #{net_forward.4} parent=5 // pred_check
      _
    $region30: #{net_forward.4} parent=5 // pred_check_branch
      %143 = sbr.rel (%p140) target = $region32
    $region31: #{net_forward.4} parent=5 // pred_region
      %s144 = ssub.s32 %s9, 1
      %s145 = smul.u32 72, %s14
      %p146 = scmp.lt.s32.totalorder %s145, 143
      %s147 = scalar_select %p146, %s145, 143
      %s148 = smul.addr %s147, 3
      %s149 = smul.addr %s148, 4
      %s150 = scalar_lea.vmem %s0, %s149
      %p151 = pneg %p35
      %p152 = pneg %p32
      %p153 = pneg %p56
      %p154 = pneg %p53
      %p155 = pneg %p77
      %p156 = pneg %p74
      %p157 = pneg %p103
      %p158 = pneg %p100
      %s159 = smul.u32 18, %s14
      %p160 = scmp.lt.s32.totalorder %s159, 35
      %s161 = scalar_select %p160, %s159, 35
      %s162 = smul.addr %s161, 4
      %s163 = scalar_lea.vmem %s3, %s162
      %s164 = smul.u32 72, %s14
      %p165 = scmp.lt.s32.totalorder %s164, 143
      %s166 = scalar_select %p165, %s164, 143
      %s167 = smul.addr %s166, 3
      %s168 = smul.addr %s167, 4
      %s169 = scalar_lea.vmem %s0, %s168
      %s170 = smul.u32 72, %s14
      %s171 = smul.u32 18, %s14
      %p172 = scmp.lt.s32.totalorder %s171, 35
      %s173 = scalar_select %p172, %s171, 35
      %s174 = smul.addr %s173, 4
      %s175 = scalar_lea.vmem %s3, %s174
      %s176 = smul.u32 18, %s14
      %v178 = vld [vmem:[%s169] sm:$0xff]
      %v179 = vld [vmem:[%s169 + $0x8] sm:$0xf]
      %v180 = vld [vmem:[%s169 + $0xc] sm:$0xff]
      %v181 = vld [vmem:[%s169 + $0x14] sm:$0xf]
      %v182 = vld [vmem:[%s169 + $0x18] sm:$0xff]
      %v183 = vld [vmem:[%s169 + $0x20] sm:$0xf]
      %v184 = vld [vmem:[%s169 + $0x24] sm:$0xff]
      %v185 = vld [vmem:[%s169 + $0x2c] sm:$0xf]
      %v186 = vld [vmem:[%s169 + $0x30] sm:$0xff]
      %v187 = vld [vmem:[%s169 + $0x38] sm:$0xf]
      %v188 = vld [vmem:[%s169 + $0x3c] sm:$0xff]
      %v189 = vld [vmem:[%s169 + $0x44] sm:$0xf]
      %v190 = vld [vmem:[%s169 + $0x48] sm:$0xff]
      %v191 = vld [vmem:[%s169 + $0x50] sm:$0xf]
      %v192 = vld [vmem:[%s169 + $0x54] sm:$0xff]
      %v193 = vld [vmem:[%s169 + $0x5c] sm:$0xf]
      %v194 = vld [vmem:[%s169 + $0x60] sm:$0xff]
      %v195 = vld [vmem:[%s169 + $0x68] sm:$0xf]
      %v196 = vld [vmem:[%s169 + $0x6c] sm:$0xff]
      %v197 = vld [vmem:[%s169 + $0x74] sm:$0xf]
      %v198 = vld [vmem:[%s169 + $0x78] sm:$0xff]
      %v199 = vld [vmem:[%s169 + $0x80] sm:$0xf]
      %v200 = vld [vmem:[%s169 + $0x84] sm:$0xff]
      %v201 = vld [vmem:[%s169 + $0x8c] sm:$0xf]
      %v202 = vld [vmem:[%s169 + $0x90] sm:$0xff]
      %v203 = vld [vmem:[%s169 + $0x98] sm:$0xf]
      %v204 = vld [vmem:[%s169 + $0x9c] sm:$0xff]
      %v205 = vld [vmem:[%s169 + $0xa4] sm:$0xf]
      %v206 = vld [vmem:[%s169 + $0xa8] sm:$0xff]
      %v207 = vld [vmem:[%s169 + $0xb0] sm:$0xf]
      %v208 = vld [vmem:[%s169 + $0xb4] sm:$0xff]
      %v209 = vld [vmem:[%s169 + $0xbc] sm:$0xf]
      %v210 = vld [vmem:[%s169 + $0xc0] sm:$0xff]
      %v211 = vld [vmem:[%s169 + $0xc8] sm:$0xf]
      %v212 = vld [vmem:[%s169 + $0xcc] sm:$0xff]
      %v213 = vld [vmem:[%s169 + $0xd4] sm:$0xf]
      %v214 = vld [vmem:[%s169 + $0xd8] sm:$0xff]
      %v215 = vld [vmem:[%s169 + $0xe0] sm:$0xf]
      %v216 = vld [vmem:[%s169 + $0xe4] sm:$0xff]
      %v217 = vld [vmem:[%s169 + $0xec] sm:$0xf]
      %v218 = vld [vmem:[%s169 + $0xf0] sm:$0xff]
      %v219 = vld [vmem:[%s169 + $0xf8] sm:$0xf]
      %v220 = vld [vmem:[%s169 + $0xfc] sm:$0xff]
      %v221 = vld [vmem:[%s169 + $0x104] sm:$0xf]
      %v222 = vld [vmem:[%s169 + $0x108] sm:$0xff]
      %v223 = vld [vmem:[%s169 + $0x110] sm:$0xf]
      %v224 = vld [vmem:[%s169 + $0x114] sm:$0xff]
      %v225 = vld [vmem:[%s169 + $0x11c] sm:$0xf]
      %v226 = vld [vmem:[%s169 + $0x120] sm:$0xff]
      %v227 = vld [vmem:[%s169 + $0x128] sm:$0xf]
      %v228 = vld [vmem:[%s169 + $0x12c] sm:$0xff]
      %v229 = vld [vmem:[%s169 + $0x134] sm:$0xf]
      %v230 = vld [vmem:[%s169 + $0x138] sm:$0xff]
      %v231 = vld [vmem:[%s169 + $0x140] sm:$0xf]
      %v232 = vld [vmem:[%s169 + $0x144] sm:$0xff]
      %v233 = vld [vmem:[%s169 + $0x14c] sm:$0xf]
      %v234 = vld [vmem:[%s169 + $0x150] sm:$0xff]
      %v235 = vld [vmem:[%s169 + $0x158] sm:$0xf]
      %v236 = vld [vmem:[%s169 + $0x15c] sm:$0xff]
      %v237 = vld [vmem:[%s169 + $0x164] sm:$0xf]
      %v238 = vld [vmem:[%s169 + $0x168] sm:$0xff]
      %v239 = vld [vmem:[%s169 + $0x170] sm:$0xf]
      %v240 = vld [vmem:[%s169 + $0x174] sm:$0xff]
      %v241 = vld [vmem:[%s169 + $0x17c] sm:$0xf]
      %v242 = vld [vmem:[%s169 + $0x180] sm:$0xff]
      %v243 = vld [vmem:[%s169 + $0x188] sm:$0xf]
      %v244 = vld [vmem:[%s169 + $0x18c] sm:$0xff]
      %v245 = vld [vmem:[%s169 + $0x194] sm:$0xf]
      %v246 = vld [vmem:[%s169 + $0x198] sm:$0xff]
      %v247 = vld [vmem:[%s169 + $0x1a0] sm:$0xf]
      %v248 = vld [vmem:[%s169 + $0x1a4] sm:$0xff]
      %v249 = vld [vmem:[%s169 + $0x1ac] sm:$0xf]
      %v250 = vld [vmem:[%s169 + $0x1b0] sm:$0xff]
      %v251 = vld [vmem:[%s169 + $0x1b8] sm:$0xf]
      %v252 = vld [vmem:[%s169 + $0x1bc] sm:$0xff]
      %v253 = vld [vmem:[%s169 + $0x1c4] sm:$0xf]
      %v254 = vld [vmem:[%s169 + $0x1c8] sm:$0xff]
      %v255 = vld [vmem:[%s169 + $0x1d0] sm:$0xf]
      %v256 = vld [vmem:[%s169 + $0x1d4] sm:$0xff]
      %v257 = vld [vmem:[%s169 + $0x1dc] sm:$0xf]
      %v258 = vld [vmem:[%s169 + $0x1e0] sm:$0xff]
      %v259 = vld [vmem:[%s169 + $0x1e8] sm:$0xf]
      %v260 = vld [vmem:[%s169 + $0x1ec] sm:$0xff]
      %v261 = vld [vmem:[%s169 + $0x1f4] sm:$0xf]
      %v262 = vld [vmem:[%s169 + $0x1f8] sm:$0xff]
      %v263 = vld [vmem:[%s169 + $0x200] sm:$0xf]
      %v264 = vld [vmem:[%s169 + $0x204] sm:$0xff]
      %v265 = vld [vmem:[%s169 + $0x20c] sm:$0xf]
      %v266 = vld [vmem:[%s169 + $0x210] sm:$0xff]
      %v267 = vld [vmem:[%s169 + $0x218] sm:$0xf]
      %v268 = vld [vmem:[%s169 + $0x21c] sm:$0xff]
      %v269 = vld [vmem:[%s169 + $0x224] sm:$0xf]
      %v270 = vld [vmem:[%s169 + $0x228] sm:$0xff]
      %v271 = vld [vmem:[%s169 + $0x230] sm:$0xf]
      %v272 = vld [vmem:[%s169 + $0x234] sm:$0xff]
      %v273 = vld [vmem:[%s169 + $0x23c] sm:$0xf]
      %v274 = vld [vmem:[%s169 + $0x240] sm:$0xff]
      %v275 = vld [vmem:[%s169 + $0x248] sm:$0xf]
      %v276 = vld [vmem:[%s169 + $0x24c] sm:$0xff]
      %v277 = vld [vmem:[%s169 + $0x254] sm:$0xf]
      %v278 = vld [vmem:[%s169 + $0x258] sm:$0xff]
      %v279 = vld [vmem:[%s169 + $0x260] sm:$0xf]
      %v280 = vld [vmem:[%s169 + $0x264] sm:$0xff]
      %v281 = vld [vmem:[%s169 + $0x26c] sm:$0xf]
      %v282 = vld [vmem:[%s169 + $0x270] sm:$0xff]
      %v283 = vld [vmem:[%s169 + $0x278] sm:$0xf]
      %v284 = vld [vmem:[%s169 + $0x27c] sm:$0xff]
      %v285 = vld [vmem:[%s169 + $0x284] sm:$0xf]
      %v286 = vld [vmem:[%s169 + $0x288] sm:$0xff]
      %v287 = vld [vmem:[%s169 + $0x290] sm:$0xf]
      %v288 = vld [vmem:[%s169 + $0x294] sm:$0xff]
      %v289 = vld [vmem:[%s169 + $0x29c] sm:$0xf]
      %v290 = vld [vmem:[%s169 + $0x2a0] sm:$0xff]
      %v291 = vld [vmem:[%s169 + $0x2a8] sm:$0xf]
      %v292 = vld [vmem:[%s169 + $0x2ac] sm:$0xff]
      %v293 = vld [vmem:[%s169 + $0x2b4] sm:$0xf]
      %v294 = vld [vmem:[%s169 + $0x2b8] sm:$0xff]
      %v295 = vld [vmem:[%s169 + $0x2c0] sm:$0xf]
      %v296 = vld [vmem:[%s169 + $0x2c4] sm:$0xff]
      %v297 = vld [vmem:[%s169 + $0x2cc] sm:$0xf]
      %v298 = vld [vmem:[%s169 + $0x2d0] sm:$0xff]
      %v299 = vld [vmem:[%s169 + $0x2d8] sm:$0xf]
      %v300 = vld [vmem:[%s169 + $0x2dc] sm:$0xff]
      %v301 = vld [vmem:[%s169 + $0x2e4] sm:$0xf]
      %v302 = vld [vmem:[%s169 + $0x2e8] sm:$0xff]
      %v303 = vld [vmem:[%s169 + $0x2f0] sm:$0xf]
      %v304 = vld [vmem:[%s169 + $0x2f4] sm:$0xff]
      %v305 = vld [vmem:[%s169 + $0x2fc] sm:$0xf]
      %v306 = vld [vmem:[%s169 + $0x300] sm:$0xff]
      %v307 = vld [vmem:[%s169 + $0x308] sm:$0xf]
      %v308 = vld [vmem:[%s169 + $0x30c] sm:$0xff]
      %v309 = vld [vmem:[%s169 + $0x314] sm:$0xf]
      %v310 = vld [vmem:[%s169 + $0x318] sm:$0xff]
      %v311 = vld [vmem:[%s169 + $0x320] sm:$0xf]
      %v312 = vld [vmem:[%s169 + $0x324] sm:$0xff]
      %v313 = vld [vmem:[%s169 + $0x32c] sm:$0xf]
      %v314 = vld [vmem:[%s169 + $0x330] sm:$0xff]
      %v315 = vld [vmem:[%s169 + $0x338] sm:$0xf]
      %v316 = vld [vmem:[%s169 + $0x33c] sm:$0xff]
      %v317 = vld [vmem:[%s169 + $0x344] sm:$0xf]
      %v318 = vld [vmem:[%s169 + $0x348] sm:$0xff]
      %v319 = vld [vmem:[%s169 + $0x350] sm:$0xf]
      %v320 = vld [vmem:[%s169 + $0x354] sm:$0xff]
      %v321 = vld [vmem:[%s169 + $0x35c] sm:$0xf]
      %v322 = vld [vmem:[%s1] sm:$0xf]
      %v323 = vld [vmem:[%s1 + $0x4] sm:$0xf]
      %v324 = vld [vmem:[%s1 + $0x8] sm:$0xf]
      %v325 = vld [vmem:[%s1 + $0xc] sm:$0xf]
      %v326 = vld [vmem:[%s1 + $0x10] sm:$0xf]
      %v327 = vld [vmem:[%s1 + $0x14] sm:$0xf]
      %v328 = vld [vmem:[%s1 + $0x18] sm:$0xf]
      %v329 = vld [vmem:[%s1 + $0x1c] sm:$0xf]
      %v330 = vld [vmem:[%s1 + $0x20] sm:$0xf]
      %v331 = vld [vmem:[%s1 + $0x24] sm:$0xf]
      %v332 = vld [vmem:[%s1 + $0x28] sm:$0xf]
      %v333 = vld [vmem:[%s1 + $0x2c] sm:$0xf]
      %v334 = vld [vmem:[%s1 + $0x30] sm:$0xf]
      %v335 = vld [vmem:[%s1 + $0x34] sm:$0xf]
      %v336 = vld [vmem:[%s1 + $0x38] sm:$0xf]
      %v337 = vld [vmem:[%s1 + $0x3c] sm:$0xf]
      %v338 = vld [vmem:[%s1 + $0x40] sm:$0xf]
      %v339 = vld [vmem:[%s1 + $0x44] sm:$0xf]
      %v340 = vld [vmem:[%s1 + $0x48] sm:$0xf]
      %v341 = vld [vmem:[%s1 + $0x4c] sm:$0xf]
      %v342 = vld [vmem:[%s1 + $0x50] sm:$0xf]
      %v343 = vld [vmem:[%s1 + $0x54] sm:$0xf]
      %v344 = vld [vmem:[%s1 + $0x58] sm:$0xf]
      %v345 = vld [vmem:[%s1 + $0x5c] sm:$0xf]
      %v346 = vld [vmem:[%s1 + $0x60] sm:$0xf]
      %v347 = vld [vmem:[%s1 + $0x64] sm:$0xf]
      %v348 = vld [vmem:[%s1 + $0x68] sm:$0xf]
      %v349 = vld [vmem:[%s1 + $0x6c] sm:$0xf]
      %v350 = vld [vmem:[%s1 + $0x70] sm:$0xf]
      %v351 = vld [vmem:[%s1 + $0x74] sm:$0xf]
      %v352 = vld [vmem:[%s1 + $0x78] sm:$0xf]
      %v353 = vld [vmem:[%s1 + $0x7c] sm:$0xf]
      %v354 = vld [vmem:[%s1 + $0x80] sm:$0xf]
      %v355 = vld [vmem:[%s1 + $0x84] sm:$0xf]
      %v356 = vld [vmem:[%s1 + $0x88] sm:$0xf]
      %v357 = vld [vmem:[%s1 + $0x8c] sm:$0xf]
      %v358 = vld [vmem:[%s2] sm:$0x1]
      %v360 = vlaneseq
      %v361 = vshrl.u32 %v360, 7
      %v362 = vsub.s32 0, %v361
      %v363 = vrot.slane %v358, %v362
      %v509 = vunpack.c.l.b16 %v178
      %v510 = vunpack.c.h.b16 %v178
      %v511 = vunpack.c.l.b16 %v179
      %v512 = vunpack.c.l.b16 %v180
      %v513 = vunpack.c.h.b16 %v180
      %v514 = vunpack.c.l.b16 %v181
      %v515 = vunpack.c.l.b16 %v182
      %v516 = vunpack.c.h.b16 %v182
      %v517 = vunpack.c.l.b16 %v183
      %v518 = vunpack.c.l.b16 %v184
      %v519 = vunpack.c.h.b16 %v184
      %v520 = vunpack.c.l.b16 %v185
      %v521 = vunpack.c.l.b16 %v186
      %v522 = vunpack.c.h.b16 %v186
      %v523 = vunpack.c.l.b16 %v187
      %v524 = vunpack.c.l.b16 %v188
      %v525 = vunpack.c.h.b16 %v188
      %v526 = vunpack.c.l.b16 %v189
      %v527 = vunpack.c.l.b16 %v190
      %v528 = vunpack.c.h.b16 %v190
      %v529 = vunpack.c.l.b16 %v191
      %v530 = vunpack.c.l.b16 %v192
      %v531 = vunpack.c.h.b16 %v192
      %v532 = vunpack.c.l.b16 %v193
      %v533 = vunpack.c.l.b16 %v194
      %v534 = vunpack.c.h.b16 %v194
      %v535 = vunpack.c.l.b16 %v195
      %v536 = vunpack.c.l.b16 %v196
      %v537 = vunpack.c.h.b16 %v196
      %v538 = vunpack.c.l.b16 %v197
      %v539 = vunpack.c.l.b16 %v198
      %v540 = vunpack.c.h.b16 %v198
      %v541 = vunpack.c.l.b16 %v199
      %v542 = vunpack.c.l.b16 %v200
      %v543 = vunpack.c.h.b16 %v200
      %v544 = vunpack.c.l.b16 %v201
      %v545 = vunpack.c.l.b16 %v202
      %v546 = vunpack.c.h.b16 %v202
      %v547 = vunpack.c.l.b16 %v203
      %v548 = vunpack.c.l.b16 %v204
      %v549 = vunpack.c.h.b16 %v204
      %v550 = vunpack.c.l.b16 %v205
      %v551 = vunpack.c.l.b16 %v206
      %v552 = vunpack.c.h.b16 %v206
      %v553 = vunpack.c.l.b16 %v207
      %v554 = vunpack.c.l.b16 %v208
      %v555 = vunpack.c.h.b16 %v208
      %v556 = vunpack.c.l.b16 %v209
      %v557 = vunpack.c.l.b16 %v210
      %v558 = vunpack.c.h.b16 %v210
      %v559 = vunpack.c.l.b16 %v211
      %v560 = vunpack.c.l.b16 %v212
      %v561 = vunpack.c.h.b16 %v212
      %v562 = vunpack.c.l.b16 %v213
      %v563 = vunpack.c.l.b16 %v214
      %v564 = vunpack.c.h.b16 %v214
      %v565 = vunpack.c.l.b16 %v215
      %v566 = vunpack.c.l.b16 %v216
      %v567 = vunpack.c.h.b16 %v216
      %v568 = vunpack.c.l.b16 %v217
      %v569 = vunpack.c.l.b16 %v218
      %v570 = vunpack.c.h.b16 %v218
      %v571 = vunpack.c.l.b16 %v219
      %v572 = vunpack.c.l.b16 %v220
      %v573 = vunpack.c.h.b16 %v220
      %v574 = vunpack.c.l.b16 %v221
      %v575 = vunpack.c.l.b16 %v222
      %v576 = vunpack.c.h.b16 %v222
      %v577 = vunpack.c.l.b16 %v223
      %v578 = vunpack.c.l.b16 %v224
      %v579 = vunpack.c.h.b16 %v224
      %v580 = vunpack.c.l.b16 %v225
      %v581 = vunpack.c.l.b16 %v226
      %v582 = vunpack.c.h.b16 %v226
      %v583 = vunpack.c.l.b16 %v227
      %v584 = vunpack.c.l.b16 %v228
      %v585 = vunpack.c.h.b16 %v228
      %v586 = vunpack.c.l.b16 %v229
      %v587 = vunpack.c.l.b16 %v230
      %v588 = vunpack.c.h.b16 %v230
      %v589 = vunpack.c.l.b16 %v231
      %v590 = vunpack.c.l.b16 %v232
      %v591 = vunpack.c.h.b16 %v232
      %v592 = vunpack.c.l.b16 %v233
      %v593 = vunpack.c.l.b16 %v234
      %v594 = vunpack.c.h.b16 %v234
      %v595 = vunpack.c.l.b16 %v235
      %v596 = vunpack.c.l.b16 %v236
      %v597 = vunpack.c.h.b16 %v236
      %v598 = vunpack.c.l.b16 %v237
      %v599 = vunpack.c.l.b16 %v238
      %v600 = vunpack.c.h.b16 %v238
      %v601 = vunpack.c.l.b16 %v239
      %v602 = vunpack.c.l.b16 %v240
      %v603 = vunpack.c.h.b16 %v240
      %v604 = vunpack.c.l.b16 %v241
      %v605 = vunpack.c.l.b16 %v242
      %v606 = vunpack.c.h.b16 %v242
      %v607 = vunpack.c.l.b16 %v243
      %v608 = vunpack.c.l.b16 %v244
      %v609 = vunpack.c.h.b16 %v244
      %v610 = vunpack.c.l.b16 %v245
      %v611 = vunpack.c.l.b16 %v246
      %v612 = vunpack.c.h.b16 %v246
      %v613 = vunpack.c.l.b16 %v247
      %v614 = vunpack.c.l.b16 %v248
      %v615 = vunpack.c.h.b16 %v248
      %v616 = vunpack.c.l.b16 %v249
      %v617 = vunpack.c.l.b16 %v250
      %v618 = vunpack.c.h.b16 %v250
      %v619 = vunpack.c.l.b16 %v251
      %v620 = vunpack.c.l.b16 %v252
      %v621 = vunpack.c.h.b16 %v252
      %v622 = vunpack.c.l.b16 %v253
      %v623 = vunpack.c.l.b16 %v254
      %v624 = vunpack.c.h.b16 %v254
      %v625 = vunpack.c.l.b16 %v255
      %v626 = vunpack.c.l.b16 %v256
      %v627 = vunpack.c.h.b16 %v256
      %v628 = vunpack.c.l.b16 %v257
      %v629 = vunpack.c.l.b16 %v258
      %v630 = vunpack.c.h.b16 %v258
      %v631 = vunpack.c.l.b16 %v259
      %v632 = vunpack.c.l.b16 %v260
      %v633 = vunpack.c.h.b16 %v260
      %v634 = vunpack.c.l.b16 %v261
      %v635 = vunpack.c.l.b16 %v262
      %v636 = vunpack.c.h.b16 %v262
      %v637 = vunpack.c.l.b16 %v263
      %v638 = vunpack.c.l.b16 %v264
      %v639 = vunpack.c.h.b16 %v264
      %v640 = vunpack.c.l.b16 %v265
      %v641 = vunpack.c.l.b16 %v266
      %v642 = vunpack.c.h.b16 %v266
      %v643 = vunpack.c.l.b16 %v267
      %v644 = vunpack.c.l.b16 %v268
      %v645 = vunpack.c.h.b16 %v268
      %v646 = vunpack.c.l.b16 %v269
      %v647 = vunpack.c.l.b16 %v270
      %v648 = vunpack.c.h.b16 %v270
      %v649 = vunpack.c.l.b16 %v271
      %v650 = vunpack.c.l.b16 %v272
      %v651 = vunpack.c.h.b16 %v272
      %v652 = vunpack.c.l.b16 %v273
      %v653 = vunpack.c.l.b16 %v274
      %v654 = vunpack.c.h.b16 %v274
      %v655 = vunpack.c.l.b16 %v275
      %v656 = vunpack.c.l.b16 %v276
      %v657 = vunpack.c.h.b16 %v276
      %v658 = vunpack.c.l.b16 %v277
      %v659 = vunpack.c.l.b16 %v278
      %v660 = vunpack.c.h.b16 %v278
      %v661 = vunpack.c.l.b16 %v279
      %v662 = vunpack.c.l.b16 %v280
      %v663 = vunpack.c.h.b16 %v280
      %v664 = vunpack.c.l.b16 %v281
      %v665 = vunpack.c.l.b16 %v282
      %v666 = vunpack.c.h.b16 %v282
      %v667 = vunpack.c.l.b16 %v283
      %v668 = vunpack.c.l.b16 %v284
      %v669 = vunpack.c.h.b16 %v284
      %v670 = vunpack.c.l.b16 %v285
      %v671 = vunpack.c.l.b16 %v286
      %v672 = vunpack.c.h.b16 %v286
      %v673 = vunpack.c.l.b16 %v287
      %v674 = vunpack.c.l.b16 %v288
      %v675 = vunpack.c.h.b16 %v288
      %v676 = vunpack.c.l.b16 %v289
      %v677 = vunpack.c.l.b16 %v290
      %v678 = vunpack.c.h.b16 %v290
      %v679 = vunpack.c.l.b16 %v291
      %v680 = vunpack.c.l.b16 %v292
      %v681 = vunpack.c.h.b16 %v292
      %v682 = vunpack.c.l.b16 %v293
      %v683 = vunpack.c.l.b16 %v294
      %v684 = vunpack.c.h.b16 %v294
      %v685 = vunpack.c.l.b16 %v295
      %v686 = vunpack.c.l.b16 %v296
      %v687 = vunpack.c.h.b16 %v296
      %v688 = vunpack.c.l.b16 %v297
      %v689 = vunpack.c.l.b16 %v298
      %v690 = vunpack.c.h.b16 %v298
      %v691 = vunpack.c.l.b16 %v299
      %v692 = vunpack.c.l.b16 %v300
      %v693 = vunpack.c.h.b16 %v300
      %v694 = vunpack.c.l.b16 %v301
      %v695 = vunpack.c.l.b16 %v302
      %v696 = vunpack.c.h.b16 %v302
      %v697 = vunpack.c.l.b16 %v303
      %v698 = vunpack.c.l.b16 %v304
      %v699 = vunpack.c.h.b16 %v304
      %v700 = vunpack.c.l.b16 %v305
      %v701 = vunpack.c.l.b16 %v306
      %v702 = vunpack.c.h.b16 %v306
      %v703 = vunpack.c.l.b16 %v307
      %v704 = vunpack.c.l.b16 %v308
      %v705 = vunpack.c.h.b16 %v308
      %v706 = vunpack.c.l.b16 %v309
      %v707 = vunpack.c.l.b16 %v310
      %v708 = vunpack.c.h.b16 %v310
      %v709 = vunpack.c.l.b16 %v311
      %v710 = vunpack.c.l.b16 %v312
      %v711 = vunpack.c.h.b16 %v312
      %v712 = vunpack.c.l.b16 %v313
      %v713 = vunpack.c.l.b16 %v314
      %v714 = vunpack.c.h.b16 %v314
      %v715 = vunpack.c.l.b16 %v315
      %v716 = vunpack.c.l.b16 %v316
      %v717 = vunpack.c.h.b16 %v316
      %v718 = vunpack.c.l.b16 %v317
      %v719 = vunpack.c.l.b16 %v318
      %v720 = vunpack.c.h.b16 %v318
      %v721 = vunpack.c.l.b16 %v319
      %v722 = vunpack.c.l.b16 %v320
      %v723 = vunpack.c.h.b16 %v320
      %v724 = vunpack.c.l.b16 %v321
      %v725 = vpack.c.b16 %v512, %v509
      %v726 = vpack.c.b16 %v513, %v510
      %v727 = vpack.c.b16 %v514, %v511
      %v728 = vpack.c.b16 %v518, %v515
      %v729 = vpack.c.b16 %v519, %v516
      %v730 = vpack.c.b16 %v520, %v517
      %v731 = vpack.c.b16 %v524, %v521
      %v732 = vpack.c.b16 %v525, %v522
      %v733 = vpack.c.b16 %v526, %v523
      %v734 = vpack.c.b16 %v530, %v527
      %v735 = vpack.c.b16 %v531, %v528
      %v736 = vpack.c.b16 %v532, %v529
      %v737 = vpack.c.b16 %v536, %v533
      %v738 = vpack.c.b16 %v537, %v534
      %v739 = vpack.c.b16 %v538, %v535
      %v740 = vpack.c.b16 %v542, %v539
      %v741 = vpack.c.b16 %v543, %v540
      %v742 = vpack.c.b16 %v544, %v541
      %v743 = vpack.c.b16 %v548, %v545
      %v744 = vpack.c.b16 %v549, %v546
      %v745 = vpack.c.b16 %v550, %v547
      %v746 = vpack.c.b16 %v554, %v551
      %v747 = vpack.c.b16 %v555, %v552
      %v748 = vpack.c.b16 %v556, %v553
      %v749 = vpack.c.b16 %v560, %v557
      %v750 = vpack.c.b16 %v561, %v558
      %v751 = vpack.c.b16 %v562, %v559
      %v752 = vpack.c.b16 %v566, %v563
      %v753 = vpack.c.b16 %v567, %v564
      %v754 = vpack.c.b16 %v568, %v565
      %v755 = vpack.c.b16 %v572, %v569
      %v756 = vpack.c.b16 %v573, %v570
      %v757 = vpack.c.b16 %v574, %v571
      %v758 = vpack.c.b16 %v578, %v575
      %v759 = vpack.c.b16 %v579, %v576
      %v760 = vpack.c.b16 %v580, %v577
      %v761 = vpack.c.b16 %v584, %v581
      %v762 = vpack.c.b16 %v585, %v582
      %v763 = vpack.c.b16 %v586, %v583
      %v764 = vpack.c.b16 %v590, %v587
      %v765 = vpack.c.b16 %v591, %v588
      %v766 = vpack.c.b16 %v592, %v589
      %v767 = vpack.c.b16 %v596, %v593
      %v768 = vpack.c.b16 %v597, %v594
      %v769 = vpack.c.b16 %v598, %v595
      %v770 = vpack.c.b16 %v602, %v599
      %v771 = vpack.c.b16 %v603, %v600
      %v772 = vpack.c.b16 %v604, %v601
      %v773 = vpack.c.b16 %v608, %v605
      %v774 = vpack.c.b16 %v609, %v606
      %v775 = vpack.c.b16 %v610, %v607
      %v776 = vpack.c.b16 %v614, %v611
      %v777 = vpack.c.b16 %v615, %v612
      %v778 = vpack.c.b16 %v616, %v613
      %v779 = vpack.c.b16 %v620, %v617
      %v780 = vpack.c.b16 %v621, %v618
      %v781 = vpack.c.b16 %v622, %v619
      %v782 = vpack.c.b16 %v626, %v623
      %v783 = vpack.c.b16 %v627, %v624
      %v784 = vpack.c.b16 %v628, %v625
      %v785 = vpack.c.b16 %v632, %v629
      %v786 = vpack.c.b16 %v633, %v630
      %v787 = vpack.c.b16 %v634, %v631
      %v788 = vpack.c.b16 %v638, %v635
      %v789 = vpack.c.b16 %v639, %v636
      %v790 = vpack.c.b16 %v640, %v637
      %v791 = vpack.c.b16 %v644, %v641
      %v792 = vpack.c.b16 %v645, %v642
      %v793 = vpack.c.b16 %v646, %v643
      %v794 = vpack.c.b16 %v650, %v647
      %v795 = vpack.c.b16 %v651, %v648
      %v796 = vpack.c.b16 %v652, %v649
      %v797 = vpack.c.b16 %v656, %v653
      %v798 = vpack.c.b16 %v657, %v654
      %v799 = vpack.c.b16 %v658, %v655
      %v800 = vpack.c.b16 %v662, %v659
      %v801 = vpack.c.b16 %v663, %v660
      %v802 = vpack.c.b16 %v664, %v661
      %v803 = vpack.c.b16 %v668, %v665
      %v804 = vpack.c.b16 %v669, %v666
      %v805 = vpack.c.b16 %v670, %v667
      %v806 = vpack.c.b16 %v674, %v671
      %v807 = vpack.c.b16 %v675, %v672
      %v808 = vpack.c.b16 %v676, %v673
      %v809 = vpack.c.b16 %v680, %v677
      %v810 = vpack.c.b16 %v681, %v678
      %v811 = vpack.c.b16 %v682, %v679
      %v812 = vpack.c.b16 %v686, %v683
      %v813 = vpack.c.b16 %v687, %v684
      %v814 = vpack.c.b16 %v688, %v685
      %v815 = vpack.c.b16 %v692, %v689
      %v816 = vpack.c.b16 %v693, %v690
      %v817 = vpack.c.b16 %v694, %v691
      %v818 = vpack.c.b16 %v698, %v695
      %v819 = vpack.c.b16 %v699, %v696
      %v820 = vpack.c.b16 %v700, %v697
      %v821 = vpack.c.b16 %v704, %v701
      %v822 = vpack.c.b16 %v705, %v702
      %v823 = vpack.c.b16 %v706, %v703
      %v824 = vpack.c.b16 %v710, %v707
      %v825 = vpack.c.b16 %v711, %v708
      %v826 = vpack.c.b16 %v712, %v709
      %v827 = vpack.c.b16 %v716, %v713
      %v828 = vpack.c.b16 %v717, %v714
      %v829 = vpack.c.b16 %v718, %v715
      %v830 = vpack.c.b16 %v722, %v719
      %v831 = vpack.c.b16 %v723, %v720
      %v832 = vpack.c.b16 %v724, %v721
      %v941 = vunpack.c.l.b16 %v322
      %v942 = vunpack.c.l.b16 %v323
      %v943 = vunpack.c.l.b16 %v324
      %v944 = vunpack.c.l.b16 %v325
      %v945 = vunpack.c.l.b16 %v326
      %v946 = vunpack.c.l.b16 %v327
      %v947 = vunpack.c.l.b16 %v328
      %v948 = vunpack.c.l.b16 %v329
      %v949 = vunpack.c.l.b16 %v330
      %v950 = vunpack.c.l.b16 %v331
      %v951 = vunpack.c.l.b16 %v332
      %v952 = vunpack.c.l.b16 %v333
      %v953 = vunpack.c.l.b16 %v334
      %v954 = vunpack.c.l.b16 %v335
      %v955 = vunpack.c.l.b16 %v336
      %v956 = vunpack.c.l.b16 %v337
      %v957 = vunpack.c.l.b16 %v338
      %v958 = vunpack.c.l.b16 %v339
      %v959 = vunpack.c.l.b16 %v340
      %v960 = vunpack.c.l.b16 %v341
      %v961 = vunpack.c.l.b16 %v342
      %v962 = vunpack.c.l.b16 %v343
      %v963 = vunpack.c.l.b16 %v344
      %v964 = vunpack.c.l.b16 %v345
      %v965 = vunpack.c.l.b16 %v346
      %v966 = vunpack.c.l.b16 %v347
      %v967 = vunpack.c.l.b16 %v348
      %v968 = vunpack.c.l.b16 %v349
      %v969 = vunpack.c.l.b16 %v350
      %v970 = vunpack.c.l.b16 %v351
      %v971 = vunpack.c.l.b16 %v352
      %v972 = vunpack.c.l.b16 %v353
      %v973 = vunpack.c.l.b16 %v354
      %v974 = vunpack.c.l.b16 %v355
      %v975 = vunpack.c.l.b16 %v356
      %v976 = vunpack.c.l.b16 %v357
      %v977 = vpack.c.b16 %v942, %v941
      %v978 = vpack.c.b16 %v944, %v943
      %v979 = vpack.c.b16 %v946, %v945
      %v980 = vpack.c.b16 %v948, %v947
      %v981 = vpack.c.b16 %v950, %v949
      %v982 = vpack.c.b16 %v952, %v951
      %v983 = vpack.c.b16 %v954, %v953
      %v984 = vpack.c.b16 %v956, %v955
      %v985 = vpack.c.b16 %v958, %v957
      %v986 = vpack.c.b16 %v960, %v959
      %v987 = vpack.c.b16 %v962, %v961
      %v988 = vpack.c.b16 %v964, %v963
      %v989 = vpack.c.b16 %v966, %v965
      %v990 = vpack.c.b16 %v968, %v967
      %v991 = vpack.c.b16 %v970, %v969
      %v992 = vpack.c.b16 %v972, %v971
      %v993 = vpack.c.b16 %v974, %v973
      %v994 = vpack.c.b16 %v976, %v975
      %vm1013 = vcmask 261120
      %v1015 = vsel %vm1013, %v727, 0
      %v1018 = vsel %vm1013, %v730, 0
      %v1021 = vsel %vm1013, %v733, 0
      %v1024 = vsel %vm1013, %v736, 0
      %v1027 = vsel %vm1013, %v739, 0
      %v1030 = vsel %vm1013, %v742, 0
      %v1033 = vsel %vm1013, %v745, 0
      %v1036 = vsel %vm1013, %v748, 0
      %v1039 = vsel %vm1013, %v751, 0
      %v1042 = vsel %vm1013, %v754, 0
      %v1045 = vsel %vm1013, %v757, 0
      %v1048 = vsel %vm1013, %v760, 0
      %v1051 = vsel %vm1013, %v763, 0
      %v1054 = vsel %vm1013, %v766, 0
      %v1057 = vsel %vm1013, %v769, 0
      %v1060 = vsel %vm1013, %v772, 0
      %v1063 = vsel %vm1013, %v775, 0
      %v1066 = vsel %vm1013, %v778, 0
      %v1069 = vsel %vm1013, %v781, 0
      %v1072 = vsel %vm1013, %v784, 0
      %v1075 = vsel %vm1013, %v787, 0
      %v1078 = vsel %vm1013, %v790, 0
      %v1081 = vsel %vm1013, %v793, 0
      %v1084 = vsel %vm1013, %v796, 0
      %v1087 = vsel %vm1013, %v799, 0
      %v1090 = vsel %vm1013, %v802, 0
      %v1093 = vsel %vm1013, %v805, 0
      %v1096 = vsel %vm1013, %v808, 0
      %v1099 = vsel %vm1013, %v811, 0
      %v1102 = vsel %vm1013, %v814, 0
      %v1105 = vsel %vm1013, %v817, 0
      %v1108 = vsel %vm1013, %v820, 0
      %v1111 = vsel %vm1013, %v823, 0
      %v1114 = vsel %vm1013, %v826, 0
      %v1117 = vsel %vm1013, %v829, 0
      %v1120 = vsel %vm1013, %v832, 0
      %1122 = vmatprep.subr.bf16.mxu0 0
      %1123 = vmatpush1.bf16.msra.mxu0 %v977
      %1124 = vmatprep.subr.bf16.mxu0 0
      %1125 = vmatpush1.bf16.msra.mxu0 %v978
      %1126 = vmatprep.subr.bf16.mxu0 0
      %1127 = vmatpush1.bf16.msra.mxu0 %v979
      %1128 = vmatprep.subr.bf16.mxu0 0
      %1129 = vmatpush1.bf16.msra.mxu0 %v980
      %1130 = vmatprep.subr.bf16.mxu0 0
      %1131 = vmatpush1.bf16.msra.mxu0 %v981
      %1132 = vmatprep.subr.bf16.mxu0 0
      %1133 = vmatpush1.bf16.msra.mxu0 %v982
      %1134 = vmatprep.subr.bf16.mxu0 0
      %1135 = vmatpush1.bf16.msra.mxu0 %v983
      %1136 = vmatprep.subr.bf16.mxu0 0
      %1137 = vmatpush1.bf16.msra.mxu0 %v984
      %1138 = vmatprep.subr.bf16.mxu0 0
      %1139 = vmatpush1.bf16.msra.mxu0 %v985
      %1140 = vmatprep.subr.bf16.mxu0 0
      %1141 = vmatpush1.bf16.msra.mxu0 %v986
      %1142 = vmatprep.subr.bf16.mxu0 0
      %1143 = vmatpush1.bf16.msra.mxu0 %v987
      %1144 = vmatprep.subr.bf16.mxu0 0
      %1145 = vmatpush1.bf16.msra.mxu0 %v988
      %1146 = vmatprep.subr.bf16.mxu0 0
      %1147 = vmatpush1.bf16.msra.mxu0 %v989
      %1148 = vmatprep.subr.bf16.mxu0 0
      %1149 = vmatpush1.bf16.msra.mxu0 %v990
      %1150 = vmatprep.subr.bf16.mxu0 0
      %1151 = vmatpush1.bf16.msra.mxu0 %v991
      %1152 = vmatprep.subr.bf16.mxu0 0
      %1153 = vmatpush1.bf16.msra.mxu0 %v992
      %1154 = vmatprep.mubr.bf16.mxu0 %v726
      %1155 = vmatmul.mubr.bf16.gmra.mrb[0].mxu0 %v725
      %v1156 = vpop.f32.mrb[0].mxu0
      %v1157 = vadd.f32 %v363, %v1156
      %v1158 = vpop.f32.mrb[0].mxu0
      %v1159 = vpop.f32.mrb[0].mxu0
      %v1160 = vadd.f32 %v363, %v1159
      %v1161 = vpop.f32.mrb[0].mxu0
      %1162 = vmatprep.mubr.bf16.mxu0 %v729
      %1163 = vmatmul.mubr.bf16.gmra.mrb[0].mxu0 %v728
      %v1164 = vpop.f32.mrb[0].mxu0
      %v1165 = vadd.f32 %v363, %v1164
      %v1166 = vpop.f32.mrb[0].mxu0
      %v1167 = vpop.f32.mrb[0].mxu0
      %v1168 = vadd.f32 %v363, %v1167
      %v1169 = vpop.f32.mrb[0].mxu0
      %1170 = vmatprep.mubr.bf16.mxu0 %v732
      %1171 = vmatmul.mubr.bf16.gmra.mrb[0].mxu0 %v731
      %v1172 = vpop.f32.mrb[0].mxu0
      %v1173 = vadd.f32 %v363, %v1172
      %v1174 = vpop.f32.mrb[0].mxu0
      %v1175 = vpop.f32.mrb[0].mxu0
      %v1176 = vadd.f32 %v363, %v1175
      %v1177 = vpop.f32.mrb[0].mxu0
      %1178 = vmatprep.mubr.bf16.mxu0 %v735
      %1179 = vmatmul.mubr.bf16.gmra.mrb[0].mxu0 %v734
      %v1180 = vpop.f32.mrb[0].mxu0
      %v1181 = vadd.f32 %v363, %v1180
      %v1182 = vpop.f32.mrb[0].mxu0
      %v1183 = vpop.f32.mrb[0].mxu0
      %v1184 = vadd.f32 %v363, %v1183
      %v1185 = vpop.f32.mrb[0].mxu0
      %1186 = vmatprep.mubr.bf16.mxu0 %v738
      %1187 = vmatmul.mubr.bf16.gmra.mrb[0].mxu0 %v737
      %v1188 = vpop.f32.mrb[0].mxu0
      %v1189 = vadd.f32 %v363, %v1188
      %v1190 = vpop.f32.mrb[0].mxu0
      %v1191 = vpop.f32.mrb[0].mxu0
      %v1192 = vadd.f32 %v363, %v1191
      %v1193 = vpop.f32.mrb[0].mxu0
      %1194 = vmatprep.mubr.bf16.mxu0 %v741
      %1195 = vmatmul.mubr.bf16.gmra.mrb[0].mxu0 %v740
      %v1196 = vpop.f32.mrb[0].mxu0
      %v1197 = vadd.f32 %v363, %v1196
      %v1198 = vpop.f32.mrb[0].mxu0
      %v1199 = vpop.f32.mrb[0].mxu0
      %v1200 = vadd.f32 %v363, %v1199
      %v1201 = vpop.f32.mrb[0].mxu0
      %1202 = vmatprep.mubr.bf16.mxu0 %v744
      %1203 = vmatmul.mubr.bf16.gmra.mrb[0].mxu0 %v743
      %v1204 = vpop.f32.mrb[0].mxu0
      %v1205 = vadd.f32 %v363, %v1204
      %v1206 = vpop.f32.mrb[0].mxu0
      %v1207 = vpop.f32.mrb[0].mxu0
      %v1208 = vadd.f32 %v363, %v1207
      %v1209 = vpop.f32.mrb[0].mxu0
      %1210 = vmatprep.mubr.bf16.mxu0 %v747
      %1211 = vmatmul.mubr.bf16.gmra.mrb[0].mxu0 %v746
      %v1212 = vpop.f32.mrb[0].mxu0
      %v1213 = vadd.f32 %v363, %v1212
      %v1214 = vpop.f32.mrb[0].mxu0
      %v1215 = vpop.f32.mrb[0].mxu0
      %v1216 = vadd.f32 %v363, %v1215
      %v1217 = vpop.f32.mrb[0].mxu0
      %1218 = vmatprep.mubr.bf16.mxu0 %v750
      %1219 = vmatmul.mubr.bf16.gmra.mrb[0].mxu0 %v749
      %v1220 = vpop.f32.mrb[0].mxu0
      %v1221 = vadd.f32 %v363, %v1220
      %v1222 = vpop.f32.mrb[0].mxu0
      %v1223 = vpop.f32.mrb[0].mxu0
      %v1224 = vadd.f32 %v363, %v1223
      %v1225 = vpop.f32.mrb[0].mxu0
      %1226 = vmatprep.mubr.bf16.mxu0 %v753
      %1227 = vmatmul.mubr.bf16.gmra.mrb[0].mxu0 %v752
      %v1228 = vpop.f32.mrb[0].mxu0
      %v1229 = vadd.f32 %v363, %v1228
      %v1230 = vpop.f32.mrb[0].mxu0
      %v1231 = vpop.f32.mrb[0].mxu0
      %v1232 = vadd.f32 %v363, %v1231
      %v1233 = vpop.f32.mrb[0].mxu0
      %1234 = vmatprep.mubr.bf16.mxu0 %v756
      %1235 = vmatmul.mubr.bf16.gmra.mrb[0].mxu0 %v755
      %v1236 = vpop.f32.mrb[0].mxu0
      %v1237 = vadd.f32 %v363, %v1236
      %v1238 = vpop.f32.mrb[0].mxu0
      %v1239 = vpop.f32.mrb[0].mxu0
      %v1240 = vadd.f32 %v363, %v1239
      %v1241 = vpop.f32.mrb[0].mxu0
      %1242 = vmatprep.mubr.bf16.mxu0 %v759
      %1243 = vmatmul.mubr.bf16.gmra.mrb[0].mxu0 %v758
      %v1244 = vpop.f32.mrb[0].mxu0
      %v1245 = vadd.f32 %v363, %v1244
      %v1246 = vpop.f32.mrb[0].mxu0
      %v1247 = vpop.f32.mrb[0].mxu0
      %v1248 = vadd.f32 %v363, %v1247
      %v1249 = vpop.f32.mrb[0].mxu0
      %1250 = vmatprep.mubr.bf16.mxu0 %v762
      %1251 = vmatmul.mubr.bf16.gmra.mrb[0].mxu0 %v761
      %v1252 = vpop.f32.mrb[0].mxu0
      %v1253 = vadd.f32 %v363, %v1252
      %v1254 = vpop.f32.mrb[0].mxu0
      %v1255 = vpop.f32.mrb[0].mxu0
      %v1256 = vadd.f32 %v363, %v1255
      %v1257 = vpop.f32.mrb[0].mxu0
      %1258 = vmatprep.mubr.bf16.mxu0 %v765
      %1259 = vmatmul.mubr.bf16.gmra.mrb[0].mxu0 %v764
      %v1260 = vpop.f32.mrb[0].mxu0
      %v1261 = vadd.f32 %v363, %v1260
      %v1262 = vpop.f32.mrb[0].mxu0
      %v1263 = vpop.f32.mrb[0].mxu0
      %v1264 = vadd.f32 %v363, %v1263
      %v1265 = vpop.f32.mrb[0].mxu0
      %1266 = vmatprep.mubr.bf16.mxu0 %v768
      %1267 = vmatmul.mubr.bf16.gmra.mrb[0].mxu0 %v767
      %v1268 = vpop.f32.mrb[0].mxu0
      %v1269 = vadd.f32 %v363, %v1268
      %v1270 = vpop.f32.mrb[0].mxu0
      %v1271 = vpop.f32.mrb[0].mxu0
      %v1272 = vadd.f32 %v363, %v1271
      %v1273 = vpop.f32.mrb[0].mxu0
      %1274 = vmatprep.mubr.bf16.mxu0 %v771
      %1275 = vmatmul.mubr.bf16.gmra.mrb[0].mxu0 %v770
      %v1276 = vpop.f32.mrb[0].mxu0
      %v1277 = vadd.f32 %v363, %v1276
      %v1278 = vpop.f32.mrb[0].mxu0
      %v1279 = vpop.f32.mrb[0].mxu0
      %v1280 = vadd.f32 %v363, %v1279
      %v1281 = vpop.f32.mrb[0].mxu0
      %1282 = vmatprep.mubr.bf16.mxu0 %v774
      %1283 = vmatmul.mubr.bf16.gmra.mrb[0].mxu0 %v773
      %v1284 = vpop.f32.mrb[0].mxu0
      %v1285 = vadd.f32 %v363, %v1284
      %v1286 = vpop.f32.mrb[0].mxu0
      %v1287 = vpop.f32.mrb[0].mxu0
      %v1288 = vadd.f32 %v363, %v1287
      %v1289 = vpop.f32.mrb[0].mxu0
      %1290 = vmatprep.mubr.bf16.mxu0 %v777
      %1291 = vmatmul.mubr.bf16.gmra.mrb[0].mxu0 %v776
      %v1292 = vpop.f32.mrb[0].mxu0
      %v1293 = vadd.f32 %v363, %v1292
      %v1294 = vpop.f32.mrb[0].mxu0
      %v1295 = vpop.f32.mrb[0].mxu0
      %v1296 = vadd.f32 %v363, %v1295
      %v1297 = vpop.f32.mrb[0].mxu0
      %1298 = vmatprep.mubr.bf16.mxu0 %v780
      %1299 = vmatmul.mubr.bf16.gmra.mrb[0].mxu0 %v779
      %v1300 = vpop.f32.mrb[0].mxu0
      %v1301 = vadd.f32 %v363, %v1300
      %v1302 = vpop.f32.mrb[0].mxu0
      %v1303 = vpop.f32.mrb[0].mxu0
      %v1304 = vadd.f32 %v363, %v1303
      %v1305 = vpop.f32.mrb[0].mxu0
      %1306 = vmatprep.mubr.bf16.mxu0 %v783
      %1307 = vmatmul.mubr.bf16.gmra.mrb[0].mxu0 %v782
      %v1308 = vpop.f32.mrb[0].mxu0
      %v1309 = vadd.f32 %v363, %v1308
      %v1310 = vpop.f32.mrb[0].mxu0
      %v1311 = vpop.f32.mrb[0].mxu0
      %v1312 = vadd.f32 %v363, %v1311
      %v1313 = vpop.f32.mrb[0].mxu0
      %1314 = vmatprep.mubr.bf16.mxu0 %v786
      %1315 = vmatmul.mubr.bf16.gmra.mrb[0].mxu0 %v785
      %v1316 = vpop.f32.mrb[0].mxu0
      %v1317 = vadd.f32 %v363, %v1316
      %v1318 = vpop.f32.mrb[0].mxu0
      %v1319 = vpop.f32.mrb[0].mxu0
      %v1320 = vadd.f32 %v363, %v1319
      %v1321 = vpop.f32.mrb[0].mxu0
      %1322 = vmatprep.mubr.bf16.mxu0 %v789
      %1323 = vmatmul.mubr.bf16.gmra.mrb[0].mxu0 %v788
      %v1324 = vpop.f32.mrb[0].mxu0
      %v1325 = vadd.f32 %v363, %v1324
      %v1326 = vpop.f32.mrb[0].mxu0
      %v1327 = vpop.f32.mrb[0].mxu0
      %v1328 = vadd.f32 %v363, %v1327
      %v1329 = vpop.f32.mrb[0].mxu0
      %1330 = vmatprep.mubr.bf16.mxu0 %v792
      %1331 = vmatmul.mubr.bf16.gmra.mrb[0].mxu0 %v791
      %v1332 = vpop.f32.mrb[0].mxu0
      %v1333 = vadd.f32 %v363, %v1332
      %v1334 = vpop.f32.mrb[0].mxu0
      %v1335 = vpop.f32.mrb[0].mxu0
      %v1336 = vadd.f32 %v363, %v1335
      %v1337 = vpop.f32.mrb[0].mxu0
      %1338 = vmatprep.mubr.bf16.mxu0 %v795
      %1339 = vmatmul.mubr.bf16.gmra.mrb[0].mxu0 %v794
      %v1340 = vpop.f32.mrb[0].mxu0
      %v1341 = vadd.f32 %v363, %v1340
      %v1342 = vpop.f32.mrb[0].mxu0
      %v1343 = vpop.f32.mrb[0].mxu0
      %v1344 = vadd.f32 %v363, %v1343
      %v1345 = vpop.f32.mrb[0].mxu0
      %1346 = vmatprep.mubr.bf16.mxu0 %v798
      %1347 = vmatmul.mubr.bf16.gmra.mrb[0].mxu0 %v797
      %v1348 = vpop.f32.mrb[0].mxu0
      %v1349 = vadd.f32 %v363, %v1348
      %v1350 = vpop.f32.mrb[0].mxu0
      %v1351 = vpop.f32.mrb[0].mxu0
      %v1352 = vadd.f32 %v363, %v1351
      %v1353 = vpop.f32.mrb[0].mxu0
      %1354 = vmatprep.mubr.bf16.mxu0 %v801
      %1355 = vmatmul.mubr.bf16.gmra.mrb[0].mxu0 %v800
      %v1356 = vpop.f32.mrb[0].mxu0
      %v1357 = vadd.f32 %v363, %v1356
      %v1358 = vpop.f32.mrb[0].mxu0
      %v1359 = vpop.f32.mrb[0].mxu0
      %v1360 = vadd.f32 %v363, %v1359
      %v1361 = vpop.f32.mrb[0].mxu0
      %1362 = vmatprep.mubr.bf16.mxu0 %v804
      %1363 = vmatmul.mubr.bf16.gmra.mrb[0].mxu0 %v803
      %v1364 = vpop.f32.mrb[0].mxu0
      %v1365 = vadd.f32 %v363, %v1364
      %v1366 = vpop.f32.mrb[0].mxu0
      %v1367 = vpop.f32.mrb[0].mxu0
      %v1368 = vadd.f32 %v363, %v1367
      %v1369 = vpop.f32.mrb[0].mxu0
      %1370 = vmatprep.mubr.bf16.mxu0 %v807
      %1371 = vmatmul.mubr.bf16.gmra.mrb[0].mxu0 %v806
      %v1372 = vpop.f32.mrb[0].mxu0
      %v1373 = vadd.f32 %v363, %v1372
      %v1374 = vpop.f32.mrb[0].mxu0
      %v1375 = vpop.f32.mrb[0].mxu0
      %v1376 = vadd.f32 %v363, %v1375
      %v1377 = vpop.f32.mrb[0].mxu0
      %1378 = vmatprep.mubr.bf16.mxu0 %v810
      %1379 = vmatmul.mubr.bf16.gmra.mrb[0].mxu0 %v809
      %v1380 = vpop.f32.mrb[0].mxu0
      %v1381 = vadd.f32 %v363, %v1380
      %v1382 = vpop.f32.mrb[0].mxu0
      %v1383 = vpop.f32.mrb[0].mxu0
      %v1384 = vadd.f32 %v363, %v1383
      %v1385 = vpop.f32.mrb[0].mxu0
      %1386 = vmatprep.mubr.bf16.mxu0 %v813
      %1387 = vmatmul.mubr.bf16.gmra.mrb[0].mxu0 %v812
      %v1388 = vpop.f32.mrb[0].mxu0
      %v1389 = vadd.f32 %v363, %v1388
      %v1390 = vpop.f32.mrb[0].mxu0
      %v1391 = vpop.f32.mrb[0].mxu0
      %v1392 = vadd.f32 %v363, %v1391
      %v1393 = vpop.f32.mrb[0].mxu0
      %1394 = vmatprep.mubr.bf16.mxu0 %v816
      %1395 = vmatmul.mubr.bf16.gmra.mrb[0].mxu0 %v815
      %v1396 = vpop.f32.mrb[0].mxu0
      %v1397 = vadd.f32 %v363, %v1396
      %v1398 = vpop.f32.mrb[0].mxu0
      %v1399 = vpop.f32.mrb[0].mxu0
      %v1400 = vadd.f32 %v363, %v1399
      %v1401 = vpop.f32.mrb[0].mxu0
      %1402 = vmatprep.mubr.bf16.mxu0 %v819
      %1403 = vmatmul.mubr.bf16.gmra.mrb[0].mxu0 %v818
      %v1404 = vpop.f32.mrb[0].mxu0
      %v1405 = vadd.f32 %v363, %v1404
      %v1406 = vpop.f32.mrb[0].mxu0
      %v1407 = vpop.f32.mrb[0].mxu0
      %v1408 = vadd.f32 %v363, %v1407
      %v1409 = vpop.f32.mrb[0].mxu0
      %1410 = vmatprep.mubr.bf16.mxu0 %v822
      %1411 = vmatmul.mubr.bf16.gmra.mrb[0].mxu0 %v821
      %v1412 = vpop.f32.mrb[0].mxu0
      %v1413 = vadd.f32 %v363, %v1412
      %v1414 = vpop.f32.mrb[0].mxu0
      %v1415 = vpop.f32.mrb[0].mxu0
      %v1416 = vadd.f32 %v363, %v1415
      %v1417 = vpop.f32.mrb[0].mxu0
      %1418 = vmatprep.mubr.bf16.mxu0 %v825
      %1419 = vmatmul.mubr.bf16.gmra.mrb[0].mxu0 %v824
      %v1420 = vpop.f32.mrb[0].mxu0
      %v1421 = vadd.f32 %v363, %v1420
      %v1422 = vpop.f32.mrb[0].mxu0
      %v1423 = vpop.f32.mrb[0].mxu0
      %v1424 = vadd.f32 %v363, %v1423
      %v1425 = vpop.f32.mrb[0].mxu0
      %1426 = vmatprep.mubr.bf16.mxu0 %v828
      %1427 = vmatmul.mubr.bf16.gmra.mrb[0].mxu0 %v827
      %v1428 = vpop.f32.mrb[0].mxu0
      %v1429 = vadd.f32 %v363, %v1428
      %v1430 = vpop.f32.mrb[0].mxu0
      %v1431 = vpop.f32.mrb[0].mxu0
      %v1432 = vadd.f32 %v363, %v1431
      %v1433 = vpop.f32.mrb[0].mxu0
      %1434 = vmatprep.mubr.bf16.mxu0 %v831
      %1435 = vmatmul.mubr.bf16.gmra.mrb[0].mxu0 %v830
      %v1436 = vpop.f32.mrb[0].mxu0
      %v1437 = vadd.f32 %v363, %v1436
      %v1438 = vpop.f32.mrb[0].mxu0
      %v1439 = vpop.f32.mrb[0].mxu0
      %v1440 = vadd.f32 %v363, %v1439
      %v1441 = vpop.f32.mrb[0].mxu0
      %1442 = vdwg.mxu0
      %1443 = vmatprep.subr.bf16.mxu0 0
      %1444 = vmatpush1.bf16.msra.mxu0 %v993
      %1445 = vmatprep.subr.bf16.mxu0 0
      %1446 = vmatpush1.bf16.msra.mxu0 %v994
      %1447 = vmatprep.subr.bf16.mxu0 0
      %1448 = vmatpush1.bf16.msra.mxu0 0
      %1449 = vmatprep.subr.bf16.mxu0 0
      %1450 = vmatpush1.bf16.msra.mxu0 0
      %1451 = vmatprep.subr.bf16.mxu0 0
      %1452 = vmatpush1.bf16.msra.mxu0 0
      %1453 = vmatprep.subr.bf16.mxu0 0
      %1454 = vmatpush1.bf16.msra.mxu0 0
      %1455 = vmatprep.subr.bf16.mxu0 0
      %1456 = vmatpush1.bf16.msra.mxu0 0
      %1457 = vmatprep.subr.bf16.mxu0 0
      %1458 = vmatpush1.bf16.msra.mxu0 0
      %1459 = vmatprep.subr.bf16.mxu0 0
      %1460 = vmatpush1.bf16.msra.mxu0 0
      %1461 = vmatprep.subr.bf16.mxu0 0
      %1462 = vmatpush1.bf16.msra.mxu0 0
      %1463 = vmatprep.subr.bf16.mxu0 0
      %1464 = vmatpush1.bf16.msra.mxu0 0
      %1465 = vmatprep.subr.bf16.mxu0 0
      %1466 = vmatpush1.bf16.msra.mxu0 0
      %1467 = vmatprep.subr.bf16.mxu0 0
      %1468 = vmatpush1.bf16.msra.mxu0 0
      %1469 = vmatprep.subr.bf16.mxu0 0
      %1470 = vmatpush1.bf16.msra.mxu0 0
      %1471 = vmatprep.subr.bf16.mxu0 0
      %1472 = vmatpush1.bf16.msra.mxu0 0
      %1473 = vmatprep.subr.bf16.mxu0 0
      %1474 = vmatpush1.bf16.msra.mxu0 0
      %1475 = vmatprep.mubr.bf16.mxu0 0
      %1476 = vmatmul.mubr.bf16.gmra.mrb[0].mxu0 %v1015
      %v1477 = vpop.f32.mrb[0].mxu0
      %v1478 = vadd.f32 %v1157, %v1477
      %v1479 = vpop.f32.mrb[0].mxu0
      %v1480 = vpop.f32.mrb[0].mxu0
      %v1481 = vadd.f32 %v1160, %v1480
      %v1482 = vpop.f32.mrb[0].mxu0
      %1483 = vmatprep.mubr.bf16.mxu0 0
      %1484 = vmatmul.mubr.bf16.gmra.mrb[0].mxu0 %v1018
      %v1485 = vpop.f32.mrb[0].mxu0
      %v1486 = vadd.f32 %v1165, %v1485
      %v1487 = vpop.f32.mrb[0].mxu0
      %v1488 = vpop.f32.mrb[0].mxu0
      %v1489 = vadd.f32 %v1168, %v1488
      %v1490 = vpop.f32.mrb[0].mxu0
      %1491 = vmatprep.mubr.bf16.mxu0 0
      %1492 = vmatmul.mubr.bf16.gmra.mrb[0].mxu0 %v1021
      %v1493 = vpop.f32.mrb[0].mxu0
      %v1494 = vadd.f32 %v1173, %v1493
      %v1495 = vpop.f32.mrb[0].mxu0
      %v1496 = vpop.f32.mrb[0].mxu0
      %v1497 = vadd.f32 %v1176, %v1496
      %v1498 = vpop.f32.mrb[0].mxu0
      %1499 = vmatprep.mubr.bf16.mxu0 0
      %1500 = vmatmul.mubr.bf16.gmra.mrb[0].mxu0 %v1024
      %v1501 = vpop.f32.mrb[0].mxu0
      %v1502 = vadd.f32 %v1181, %v1501
      %v1503 = vpop.f32.mrb[0].mxu0
      %v1504 = vpop.f32.mrb[0].mxu0
      %v1505 = vadd.f32 %v1184, %v1504
      %v1506 = vpop.f32.mrb[0].mxu0
      %1507 = vmatprep.mubr.bf16.mxu0 0
      %1508 = vmatmul.mubr.bf16.gmra.mrb[0].mxu0 %v1027
      %v1509 = vpop.f32.mrb[0].mxu0
      %v1510 = vadd.f32 %v1189, %v1509
      %v1511 = vpop.f32.mrb[0].mxu0
      %v1512 = vpop.f32.mrb[0].mxu0
      %v1513 = vadd.f32 %v1192, %v1512
      %v1514 = vpop.f32.mrb[0].mxu0
      %1515 = vmatprep.mubr.bf16.mxu0 0
      %1516 = vmatmul.mubr.bf16.gmra.mrb[0].mxu0 %v1030
      %v1517 = vpop.f32.mrb[0].mxu0
      %v1518 = vadd.f32 %v1197, %v1517
      %v1519 = vpop.f32.mrb[0].mxu0
      %v1520 = vpop.f32.mrb[0].mxu0
      %v1521 = vadd.f32 %v1200, %v1520
      %v1522 = vpop.f32.mrb[0].mxu0
      %1523 = vmatprep.mubr.bf16.mxu0 0
      %1524 = vmatmul.mubr.bf16.gmra.mrb[0].mxu0 %v1033
      %v1525 = vpop.f32.mrb[0].mxu0
      %v1526 = vadd.f32 %v1205, %v1525
      %v1527 = vpop.f32.mrb[0].mxu0
      %v1528 = vpop.f32.mrb[0].mxu0
      %v1529 = vadd.f32 %v1208, %v1528
      %v1530 = vpop.f32.mrb[0].mxu0
      %1531 = vmatprep.mubr.bf16.mxu0 0
      %1532 = vmatmul.mubr.bf16.gmra.mrb[0].mxu0 %v1036
      %v1533 = vpop.f32.mrb[0].mxu0
      %v1534 = vadd.f32 %v1213, %v1533
      %v1535 = vpop.f32.mrb[0].mxu0
      %v1536 = vpop.f32.mrb[0].mxu0
      %v1537 = vadd.f32 %v1216, %v1536
      %v1538 = vpop.f32.mrb[0].mxu0
      %1539 = vmatprep.mubr.bf16.mxu0 0
      %1540 = vmatmul.mubr.bf16.gmra.mrb[0].mxu0 %v1039
      %v1541 = vpop.f32.mrb[0].mxu0
      %v1542 = vadd.f32 %v1221, %v1541
      %v1543 = vpop.f32.mrb[0].mxu0
      %v1544 = vpop.f32.mrb[0].mxu0
      %v1545 = vadd.f32 %v1224, %v1544
      %v1546 = vpop.f32.mrb[0].mxu0
      %1547 = vmatprep.mubr.bf16.mxu0 0
      %1548 = vmatmul.mubr.bf16.gmra.mrb[0].mxu0 %v1042
      %v1549 = vpop.f32.mrb[0].mxu0
      %v1550 = vadd.f32 %v1229, %v1549
      %v1551 = vpop.f32.mrb[0].mxu0
      %v1552 = vpop.f32.mrb[0].mxu0
      %v1553 = vadd.f32 %v1232, %v1552
      %v1554 = vpop.f32.mrb[0].mxu0
      %1555 = vmatprep.mubr.bf16.mxu0 0
      %1556 = vmatmul.mubr.bf16.gmra.mrb[0].mxu0 %v1045
      %v1557 = vpop.f32.mrb[0].mxu0
      %v1558 = vadd.f32 %v1237, %v1557
      %v1559 = vpop.f32.mrb[0].mxu0
      %v1560 = vpop.f32.mrb[0].mxu0
      %v1561 = vadd.f32 %v1240, %v1560
      %v1562 = vpop.f32.mrb[0].mxu0
      %1563 = vmatprep.mubr.bf16.mxu0 0
      %1564 = vmatmul.mubr.bf16.gmra.mrb[0].mxu0 %v1048
      %v1565 = vpop.f32.mrb[0].mxu0
      %v1566 = vadd.f32 %v1245, %v1565
      %v1567 = vpop.f32.mrb[0].mxu0
      %v1568 = vpop.f32.mrb[0].mxu0
      %v1569 = vadd.f32 %v1248, %v1568
      %v1570 = vpop.f32.mrb[0].mxu0
      %1571 = vmatprep.mubr.bf16.mxu0 0
      %1572 = vmatmul.mubr.bf16.gmra.mrb[0].mxu0 %v1051
      %v1573 = vpop.f32.mrb[0].mxu0
      %v1574 = vadd.f32 %v1253, %v1573
      %v1575 = vpop.f32.mrb[0].mxu0
      %v1576 = vpop.f32.mrb[0].mxu0
      %v1577 = vadd.f32 %v1256, %v1576
      %v1578 = vpop.f32.mrb[0].mxu0
      %1579 = vmatprep.mubr.bf16.mxu0 0
      %1580 = vmatmul.mubr.bf16.gmra.mrb[0].mxu0 %v1054
      %v1581 = vpop.f32.mrb[0].mxu0
      %v1582 = vadd.f32 %v1261, %v1581
      %v1583 = vpop.f32.mrb[0].mxu0
      %v1584 = vpop.f32.mrb[0].mxu0
      %v1585 = vadd.f32 %v1264, %v1584
      %v1586 = vpop.f32.mrb[0].mxu0
      %1587 = vmatprep.mubr.bf16.mxu0 0
      %1588 = vmatmul.mubr.bf16.gmra.mrb[0].mxu0 %v1057
      %v1589 = vpop.f32.mrb[0].mxu0
      %v1590 = vadd.f32 %v1269, %v1589
      %v1591 = vpop.f32.mrb[0].mxu0
      %v1592 = vpop.f32.mrb[0].mxu0
      %v1593 = vadd.f32 %v1272, %v1592
      %v1594 = vpop.f32.mrb[0].mxu0
      %1595 = vmatprep.mubr.bf16.mxu0 0
      %1596 = vmatmul.mubr.bf16.gmra.mrb[0].mxu0 %v1060
      %v1597 = vpop.f32.mrb[0].mxu0
      %v1598 = vadd.f32 %v1277, %v1597
      %v1599 = vpop.f32.mrb[0].mxu0
      %v1600 = vpop.f32.mrb[0].mxu0
      %v1601 = vadd.f32 %v1280, %v1600
      %v1602 = vpop.f32.mrb[0].mxu0
      %1603 = vmatprep.mubr.bf16.mxu0 0
      %1604 = vmatmul.mubr.bf16.gmra.mrb[0].mxu0 %v1063
      %v1605 = vpop.f32.mrb[0].mxu0
      %v1606 = vadd.f32 %v1285, %v1605
      %v1607 = vpop.f32.mrb[0].mxu0
      %v1608 = vpop.f32.mrb[0].mxu0
      %v1609 = vadd.f32 %v1288, %v1608
      %v1610 = vpop.f32.mrb[0].mxu0
      %1611 = vmatprep.mubr.bf16.mxu0 0
      %1612 = vmatmul.mubr.bf16.gmra.mrb[0].mxu0 %v1066
      %v1613 = vpop.f32.mrb[0].mxu0
      %v1614 = vadd.f32 %v1293, %v1613
      %v1615 = vpop.f32.mrb[0].mxu0
      %v1616 = vpop.f32.mrb[0].mxu0
      %v1617 = vadd.f32 %v1296, %v1616
      %v1618 = vpop.f32.mrb[0].mxu0
      %1619 = vmatprep.mubr.bf16.mxu0 0
      %1620 = vmatmul.mubr.bf16.gmra.mrb[0].mxu0 %v1069
      %v1621 = vpop.f32.mrb[0].mxu0
      %v1622 = vadd.f32 %v1301, %v1621
      %v1623 = vpop.f32.mrb[0].mxu0
      %v1624 = vpop.f32.mrb[0].mxu0
      %v1625 = vadd.f32 %v1304, %v1624
      %v1626 = vpop.f32.mrb[0].mxu0
      %1627 = vmatprep.mubr.bf16.mxu0 0
      %1628 = vmatmul.mubr.bf16.gmra.mrb[0].mxu0 %v1072
      %v1629 = vpop.f32.mrb[0].mxu0
      %v1630 = vadd.f32 %v1309, %v1629
      %v1631 = vpop.f32.mrb[0].mxu0
      %v1632 = vpop.f32.mrb[0].mxu0
      %v1633 = vadd.f32 %v1312, %v1632
      %v1634 = vpop.f32.mrb[0].mxu0
      %1635 = vmatprep.mubr.bf16.mxu0 0
      %1636 = vmatmul.mubr.bf16.gmra.mrb[0].mxu0 %v1075
      %v1637 = vpop.f32.mrb[0].mxu0
      %v1638 = vadd.f32 %v1317, %v1637
      %v1639 = vpop.f32.mrb[0].mxu0
      %v1640 = vpop.f32.mrb[0].mxu0
      %v1641 = vadd.f32 %v1320, %v1640
      %v1642 = vpop.f32.mrb[0].mxu0
      %1643 = vmatprep.mubr.bf16.mxu0 0
      %1644 = vmatmul.mubr.bf16.gmra.mrb[0].mxu0 %v1078
      %v1645 = vpop.f32.mrb[0].mxu0
      %v1646 = vadd.f32 %v1325, %v1645
      %v1647 = vpop.f32.mrb[0].mxu0
      %v1648 = vpop.f32.mrb[0].mxu0
      %v1649 = vadd.f32 %v1328, %v1648
      %v1650 = vpop.f32.mrb[0].mxu0
      %1651 = vmatprep.mubr.bf16.mxu0 0
      %1652 = vmatmul.mubr.bf16.gmra.mrb[0].mxu0 %v1081
      %v1653 = vpop.f32.mrb[0].mxu0
      %v1654 = vadd.f32 %v1333, %v1653
      %v1655 = vpop.f32.mrb[0].mxu0
      %v1656 = vpop.f32.mrb[0].mxu0
      %v1657 = vadd.f32 %v1336, %v1656
      %v1658 = vpop.f32.mrb[0].mxu0
      %1659 = vmatprep.mubr.bf16.mxu0 0
      %1660 = vmatmul.mubr.bf16.gmra.mrb[0].mxu0 %v1084
      %v1661 = vpop.f32.mrb[0].mxu0
      %v1662 = vadd.f32 %v1341, %v1661
      %v1663 = vpop.f32.mrb[0].mxu0
      %v1664 = vpop.f32.mrb[0].mxu0
      %v1665 = vadd.f32 %v1344, %v1664
      %v1666 = vpop.f32.mrb[0].mxu0
      %1667 = vmatprep.mubr.bf16.mxu0 0
      %1668 = vmatmul.mubr.bf16.gmra.mrb[0].mxu0 %v1087
      %v1669 = vpop.f32.mrb[0].mxu0
      %v1670 = vadd.f32 %v1349, %v1669
      %v1671 = vpop.f32.mrb[0].mxu0
      %v1672 = vpop.f32.mrb[0].mxu0
      %v1673 = vadd.f32 %v1352, %v1672
      %v1674 = vpop.f32.mrb[0].mxu0
      %1675 = vmatprep.mubr.bf16.mxu0 0
      %1676 = vmatmul.mubr.bf16.gmra.mrb[0].mxu0 %v1090
      %v1677 = vpop.f32.mrb[0].mxu0
      %v1678 = vadd.f32 %v1357, %v1677
      %v1679 = vpop.f32.mrb[0].mxu0
      %v1680 = vpop.f32.mrb[0].mxu0
      %v1681 = vadd.f32 %v1360, %v1680
      %v1682 = vpop.f32.mrb[0].mxu0
      %1683 = vmatprep.mubr.bf16.mxu0 0
      %1684 = vmatmul.mubr.bf16.gmra.mrb[0].mxu0 %v1093
      %v1685 = vpop.f32.mrb[0].mxu0
      %v1686 = vadd.f32 %v1365, %v1685
      %v1687 = vpop.f32.mrb[0].mxu0
      %v1688 = vpop.f32.mrb[0].mxu0
      %v1689 = vadd.f32 %v1368, %v1688
      %v1690 = vpop.f32.mrb[0].mxu0
      %1691 = vmatprep.mubr.bf16.mxu0 0
      %1692 = vmatmul.mubr.bf16.gmra.mrb[0].mxu0 %v1096
      %v1693 = vpop.f32.mrb[0].mxu0
      %v1694 = vadd.f32 %v1373, %v1693
      %v1695 = vpop.f32.mrb[0].mxu0
      %v1696 = vpop.f32.mrb[0].mxu0
      %v1697 = vadd.f32 %v1376, %v1696
      %v1698 = vpop.f32.mrb[0].mxu0
      %1699 = vmatprep.mubr.bf16.mxu0 0
      %1700 = vmatmul.mubr.bf16.gmra.mrb[0].mxu0 %v1099
      %v1701 = vpop.f32.mrb[0].mxu0
      %v1702 = vadd.f32 %v1381, %v1701
      %v1703 = vpop.f32.mrb[0].mxu0
      %v1704 = vpop.f32.mrb[0].mxu0
      %v1705 = vadd.f32 %v1384, %v1704
      %v1706 = vpop.f32.mrb[0].mxu0
      %1707 = vmatprep.mubr.bf16.mxu0 0
      %1708 = vmatmul.mubr.bf16.gmra.mrb[0].mxu0 %v1102
      %v1709 = vpop.f32.mrb[0].mxu0
      %v1710 = vadd.f32 %v1389, %v1709
      %v1711 = vpop.f32.mrb[0].mxu0
      %v1712 = vpop.f32.mrb[0].mxu0
      %v1713 = vadd.f32 %v1392, %v1712
      %v1714 = vpop.f32.mrb[0].mxu0
      %1715 = vmatprep.mubr.bf16.mxu0 0
      %1716 = vmatmul.mubr.bf16.gmra.mrb[0].mxu0 %v1105
      %v1717 = vpop.f32.mrb[0].mxu0
      %v1718 = vadd.f32 %v1397, %v1717
      %v1719 = vpop.f32.mrb[0].mxu0
      %v1720 = vpop.f32.mrb[0].mxu0
      %v1721 = vadd.f32 %v1400, %v1720
      %v1722 = vpop.f32.mrb[0].mxu0
      %1723 = vmatprep.mubr.bf16.mxu0 0
      %1724 = vmatmul.mubr.bf16.gmra.mrb[0].mxu0 %v1108
      %v1725 = vpop.f32.mrb[0].mxu0
      %v1726 = vadd.f32 %v1405, %v1725
      %v1727 = vpop.f32.mrb[0].mxu0
      %v1728 = vpop.f32.mrb[0].mxu0
      %v1729 = vadd.f32 %v1408, %v1728
      %v1730 = vpop.f32.mrb[0].mxu0
      %1731 = vmatprep.mubr.bf16.mxu0 0
      %1732 = vmatmul.mubr.bf16.gmra.mrb[0].mxu0 %v1111
      %v1733 = vpop.f32.mrb[0].mxu0
      %v1734 = vadd.f32 %v1413, %v1733
      %v1735 = vpop.f32.mrb[0].mxu0
      %v1736 = vpop.f32.mrb[0].mxu0
      %v1737 = vadd.f32 %v1416, %v1736
      %v1738 = vpop.f32.mrb[0].mxu0
      %1739 = vmatprep.mubr.bf16.mxu0 0
      %1740 = vmatmul.mubr.bf16.gmra.mrb[0].mxu0 %v1114
      %v1741 = vpop.f32.mrb[0].mxu0
      %v1742 = vadd.f32 %v1421, %v1741
      %v1743 = vpop.f32.mrb[0].mxu0
      %v1744 = vpop.f32.mrb[0].mxu0
      %v1745 = vadd.f32 %v1424, %v1744
      %v1746 = vpop.f32.mrb[0].mxu0
      %1747 = vmatprep.mubr.bf16.mxu0 0
      %1748 = vmatmul.mubr.bf16.gmra.mrb[0].mxu0 %v1117
      %v1749 = vpop.f32.mrb[0].mxu0
      %v1750 = vadd.f32 %v1429, %v1749
      %v1751 = vpop.f32.mrb[0].mxu0
      %v1752 = vpop.f32.mrb[0].mxu0
      %v1753 = vadd.f32 %v1432, %v1752
      %v1754 = vpop.f32.mrb[0].mxu0
      %1755 = vmatprep.mubr.bf16.mxu0 0
      %1756 = vmatmul.mubr.bf16.gmra.mrb[0].mxu0 %v1120
      %v1757 = vpop.f32.mrb[0].mxu0
      %v1758 = vadd.f32 %v1437, %v1757
      %v1759 = vpop.f32.mrb[0].mxu0
      %v1760 = vpop.f32.mrb[0].mxu0
      %v1761 = vadd.f32 %v1440, %v1760
      %v1762 = vpop.f32.mrb[0].mxu0
      %1763 = vdwg.mxu0
      %v1764 = vmax.f32 %v1478, %v1550
      %v1765 = vmax.f32 %v1481, %v1553
      %v1766 = vmax.f32 %v1486, %v1558
      %v1767 = vmax.f32 %v1489, %v1561
      %v1768 = vmax.f32 %v1494, %v1566
      %v1769 = vmax.f32 %v1497, %v1569
      %v1770 = vmax.f32 %v1502, %v1574
      %v1771 = vmax.f32 %v1505, %v1577
      %v1772 = vmax.f32 %v1510, %v1582
      %v1773 = vmax.f32 %v1513, %v1585
      %v1774 = vmax.f32 %v1518, %v1590
      %v1775 = vmax.f32 %v1521, %v1593
      %v1776 = vmax.f32 %v1526, %v1598
      %v1777 = vmax.f32 %v1529, %v1601
      %v1778 = vmax.f32 %v1534, %v1606
      %v1779 = vmax.f32 %v1537, %v1609
      %v1780 = vmax.f32 %v1542, %v1614
      %v1781 = vmax.f32 %v1545, %v1617
      %v1782 = vmax.f32 %v1622, %v1694
      %v1783 = vmax.f32 %v1625, %v1697
      %v1784 = vmax.f32 %v1630, %v1702
      %v1785 = vmax.f32 %v1633, %v1705
      %v1786 = vmax.f32 %v1638, %v1710
      %v1787 = vmax.f32 %v1641, %v1713
      %v1788 = vmax.f32 %v1646, %v1718
      %v1789 = vmax.f32 %v1649, %v1721
      %v1790 = vmax.f32 %v1654, %v1726
      %v1791 = vmax.f32 %v1657, %v1729
      %v1792 = vmax.f32 %v1662, %v1734
      %v1793 = vmax.f32 %v1665, %v1737
      %v1794 = vmax.f32 %v1670, %v1742
      %v1795 = vmax.f32 %v1673, %v1745
      %v1796 = vmax.f32 %v1678, %v1750
      %v1797 = vmax.f32 %v1681, %v1753
      %v1798 = vmax.f32 %v1686, %v1758
      %v1799 = vmax.f32 %v1689, %v1761
      %v1800 = vmax.f32 %v1764, %v1782
      %v1801 = vmax.f32 %v1765, %v1783
      %v1802 = vmax.f32 %v1766, %v1784
      %v1803 = vmax.f32 %v1767, %v1785
      %v1804 = vmax.f32 %v1768, %v1786
      %v1805 = vmax.f32 %v1769, %v1787
      %v1806 = vmax.f32 %v1770, %v1788
      %v1807 = vmax.f32 %v1771, %v1789
      %v1808 = vmax.f32 %v1772, %v1790
      %v1809 = vmax.f32 %v1773, %v1791
      %v1810 = vmax.f32 %v1774, %v1792
      %v1811 = vmax.f32 %v1775, %v1793
      %v1812 = vmax.f32 %v1776, %v1794
      %v1813 = vmax.f32 %v1777, %v1795
      %v1814 = vmax.f32 %v1778, %v1796
      %v1815 = vmax.f32 %v1779, %v1797
      %v1816 = vmax.f32 %v1780, %v1798
      %v1817 = vmax.f32 %v1781, %v1799
      %v1818 = vmax.f32 %v1800, 0.0
      %v1819 = vmax.f32 %v1801, 0.0
      %v1820 = vmax.f32 %v1802, 0.0
      %v1821 = vmax.f32 %v1803, 0.0
      %v1822 = vmax.f32 %v1804, 0.0
      %v1823 = vmax.f32 %v1805, 0.0
      %v1824 = vmax.f32 %v1806, 0.0
      %v1825 = vmax.f32 %v1807, 0.0
      %v1826 = vmax.f32 %v1808, 0.0
      %v1827 = vmax.f32 %v1809, 0.0
      %v1828 = vmax.f32 %v1810, 0.0
      %v1829 = vmax.f32 %v1811, 0.0
      %v1830 = vmax.f32 %v1812, 0.0
      %v1831 = vmax.f32 %v1813, 0.0
      %v1832 = vmax.f32 %v1814, 0.0
      %v1833 = vmax.f32 %v1815, 0.0
      %v1834 = vmax.f32 %v1816, 0.0
      %v1835 = vmax.f32 %v1817, 0.0
      %v1836 = vpack.c.bf16 %v1819, %v1818
      %v1837 = vpack.c.bf16 %v1821, %v1820
      %v1838 = vpack.c.bf16 %v1823, %v1822
      %v1839 = vpack.c.bf16 %v1825, %v1824
      %v1840 = vpack.c.bf16 %v1827, %v1826
      %v1841 = vpack.c.bf16 %v1829, %v1828
      %v1842 = vpack.c.bf16 %v1831, %v1830
      %v1843 = vpack.c.bf16 %v1833, %v1832
      %v1844 = vpack.c.bf16 %v1835, %v1834
      %v1854 = vunpack.c.l.b16 %v1836
      %v1855 = vunpack.c.h.b16 %v1836
      %v1856 = vunpack.c.l.b16 %v1837
      %v1857 = vunpack.c.h.b16 %v1837
      %v1858 = vunpack.c.l.b16 %v1838
      %v1859 = vunpack.c.h.b16 %v1838
      %v1860 = vunpack.c.l.b16 %v1839
      %v1861 = vunpack.c.h.b16 %v1839
      %v1862 = vunpack.c.l.b16 %v1840
      %v1863 = vunpack.c.h.b16 %v1840
      %v1864 = vunpack.c.l.b16 %v1841
      %v1865 = vunpack.c.h.b16 %v1841
      %v1866 = vunpack.c.l.b16 %v1842
      %v1867 = vunpack.c.h.b16 %v1842
      %v1868 = vunpack.c.l.b16 %v1843
      %v1869 = vunpack.c.h.b16 %v1843
      %v1870 = vunpack.c.l.b16 %v1844
      %v1871 = vunpack.c.h.b16 %v1844
      %v1872 = vpack.c.b16 %v1854, %v1854
      %v1873 = vpack.c.b16 %v1855, %v1855
      %v1874 = vpack.c.b16 %v1856, %v1856
      %v1875 = vpack.c.b16 %v1857, %v1857
      %v1876 = vpack.c.b16 %v1858, %v1858
      %v1877 = vpack.c.b16 %v1859, %v1859
      %v1878 = vpack.c.b16 %v1860, %v1860
      %v1879 = vpack.c.b16 %v1861, %v1861
      %v1880 = vpack.c.b16 %v1862, %v1862
      %v1881 = vpack.c.b16 %v1863, %v1863
      %v1882 = vpack.c.b16 %v1864, %v1864
      %v1883 = vpack.c.b16 %v1865, %v1865
      %v1884 = vpack.c.b16 %v1866, %v1866
      %v1885 = vpack.c.b16 %v1867, %v1867
      %v1886 = vpack.c.b16 %v1868, %v1868
      %v1887 = vpack.c.b16 %v1869, %v1869
      %v1888 = vpack.c.b16 %v1870, %v1870
      %v1889 = vpack.c.b16 %v1871, %v1871
      %vm1908 = vcmask 519168
      %1909 = vst.msk [vmem:[%s175] sm:$0xf] %vm1908, %v1872
      %1910 = vst.msk [vmem:[%s175 + $0x4] sm:$0xf] %vm1908, %v1873
      %1911 = vst.msk [vmem:[%s175 + $0x8] sm:$0xf] %vm1908, %v1874
      %1912 = vst.msk [vmem:[%s175 + $0xc] sm:$0xf] %vm1908, %v1875
      %1913 = vst.msk [vmem:[%s175 + $0x10] sm:$0xf] %vm1908, %v1876
      %1914 = vst.msk [vmem:[%s175 + $0x14] sm:$0xf] %vm1908, %v1877
      %1915 = vst.msk [vmem:[%s175 + $0x18] sm:$0xf] %vm1908, %v1878
      %1916 = vst.msk [vmem:[%s175 + $0x1c] sm:$0xf] %vm1908, %v1879
      %1917 = vst.msk [vmem:[%s175 + $0x20] sm:$0xf] %vm1908, %v1880
      %1918 = vst.msk [vmem:[%s175 + $0x24] sm:$0xf] %vm1908, %v1881
      %1919 = vst.msk [vmem:[%s175 + $0x28] sm:$0xf] %vm1908, %v1882
      %1920 = vst.msk [vmem:[%s175 + $0x2c] sm:$0xf] %vm1908, %v1883
      %1921 = vst.msk [vmem:[%s175 + $0x30] sm:$0xf] %vm1908, %v1884
      %1922 = vst.msk [vmem:[%s175 + $0x34] sm:$0xf] %vm1908, %v1885
      %1923 = vst.msk [vmem:[%s175 + $0x38] sm:$0xf] %vm1908, %v1886
      %1924 = vst.msk [vmem:[%s175 + $0x3c] sm:$0xf] %vm1908, %v1887
      %1925 = vst.msk [vmem:[%s175 + $0x40] sm:$0xf] %vm1908, %v1888
      %1926 = vst.msk [vmem:[%s175 + $0x44] sm:$0xf] %vm1908, %v1889
      %s1927 = smul.u32 18, %s14
      %p1928 = scmp.lt.s32.totalorder %s1927, 35
      %s1929 = scalar_select %p1928, %s1927, 35
      %s1930 = smul.addr %s1929, 4
      %s1931 = scalar_lea.vmem %s3, %s1930
      // Predicated region
      $region33: #{net_forward.4} parent=31 // pred_check
        %p1932 = pneg %p100
      $region34: #{net_forward.4} parent=31 // pred_check_branch
        %1934 = sbr.rel (%p1932) target = $region36
      $region35: #{net_forward.4} parent=31 // pred_region
        %s1935 = smul.u32 18, %s14
      $region36: #{net_forward.4} parent=31 // pred_fallthru
        _
    $region32: #{net_forward.4} parent=5 // pred_fallthru
      _
    %p1936 = scmp.le.s32.totalorder 2, %s9
    // Predicated region
    $region37: #{net_forward.4} parent=5 // pred_check
      %p1937 = pneg %p1936
    $region38: #{net_forward.4} parent=5 // pred_check_branch
      %1939 = sbr.rel (%p1937) target = $region40
    $region39: #{net_forward.4} parent=5 // pred_region
      %s1940 = ssub.s32 %s9, 2
      // Predicated region
      $region41: #{net_forward.4} parent=39 // pred_check
        %p1941 = pneg %p106
      $region42: #{net_forward.4} parent=39 // pred_check_branch
        %1943 = sbr.rel (%p1941) target = $region44
      $region43: #{net_forward.4} parent=39 // pred_region
        %s1944 = smul.u32 18, %s15
        %p1945 = scmp.lt.s32.totalorder %s1944, 35
        %s1946 = scalar_select %p1945, %s1944, 35
        %s1947 = smul.addr %s1946, 4
        %s1948 = scalar_lea.vmem %s3, %s1947
      $region44: #{net_forward.4} parent=39 // pred_fallthru
        _
    $region40: #{net_forward.4} parent=5 // pred_fallthru
      _
  $region6: #{net_forward.4} parent=0 // loop_footer
    %s13 = sadd.s32 1, %s9
  $region7: #{net_forward.4} parent=0 // loop_footer_branch
    %8 = sbr.rel target = $region3
  $region8: #{net_forward.4} parent=0 // loop_exit
    _

// kernel: net_forward.5
$region0: #{net_forward.5}
  #allocation0 [shape = 'u32[]', space=smem, size = 0x4, offset = 0x4, fixed_abs, tag = 'smem constant byte address 0x4 - core index']
  #allocation1 [shape = 'u32[144,128]{1,0:T(1,128)}', space=vmem, size = 0x12000, scoped, tag = 'internal scratch']
  #allocation2 [shape = 'f32[8,128]{1,0:T(8,128)}', space=vmem, size = 0x1000, scoped, tag = 'scratch operand']
  %s0 = inlined_call_operand.vmem [shape: bf16[8,9216], index: 0, kind: input, shape index: {}]
  %s1 = inlined_call_operand.vmem [shape: bf16[9216,128], index: 1, kind: input, shape index: {}]
  %s2 = inlined_call_operand.vmem [shape: f32[1,128], index: 2, kind: input, shape index: {}]
  %s3 = inlined_call_operand.vmem [shape: bf16[128,128], index: 3, kind: input, shape index: {}]
  %s4 = inlined_call_operand.vmem [shape: f32[1,128], index: 4, kind: input, shape index: {}]
  %s5 = inlined_call_operand.vmem [shape: f32[8,128], index: 5, kind: output, shape index: {}]
  %s6 = sld [smem:[#allocation0]]
  $region61: #{net_forward.5} parent=0
    _
  %s8 = ssub.s32 1, %s6
  %s9 = scalar_select 0, %s8, %s6
  loop: start=0, step=1, limit=6
  $region2: #{net_forward.5} parent=0 // loop_pre_header
    _
  $region3: #{net_forward.5} parent=0 // loop_header
    %s11 = sphi 0, %s15
    %p12 = scmp.ge.s32.totalorder %s11, 6
    %s18 = sphi 0, %s30
    %s19 = sphi 0, %s26
    %s20 = sphi 0, %s18
    %s21 = sphi 0, %s19
    %s22 = sphi 0, %s20
    %s23 = sphi 0, %s21
    %s35 = sphi 0, %s37
    %s38 = sphi 0, %s35
    %s39 = sphi 0, %s38
    %s55 = sphi 0, %s39
    %s61 = sphi 0, %s63
    %s64 = sphi 0, %s61
    %s65 = sphi 0, %s64
    %s81 = sphi 0, %s65
    %s85 = sphi 0, %s85
    %s87 = sphi 0, %s85
    %s88 = sphi 0, %s87
    %s102 = sphi 0, %s88
    %s106 = sphi 0, %s106
    %s108 = sphi 0, %s106
    %s109 = sphi 0, %s108
    %s123 = sphi 0, %s109
    %s127 = sphi 0, %s127
    %s129 = sphi 0, %s127
    %s130 = sphi 0, %s129
    %s144 = sphi 0, %s130
    %s150 = sphi 0, %s152
    %s153 = sphi 0, %s150
    %s154 = sphi 0, %s153
    %s170 = sphi 0, %s154
  $region4: #{net_forward.5} parent=0 // loop_header_branch
    %14 = sbr.rel (%p12) target = $region8
  $region5: #{net_forward.5} parent=0 // loop_body
    %s16 = ssub.s32 %s11, 1
    %s17 = ssub.s32 %s11, 2
    %s24 = sadd.s32 1, %s19
    %p25 = scmp.ge.s32.totalorder %s24, 4
    %s26 = scalar_select %p25, 0, %s24
    %s27 = sadd.s32 1, %s18
    %s28 = scalar_select %p25, %s27, %s18
    %p29 = scmp.ge.s32.totalorder %s28, 1
    %s30 = scalar_select %p29, 0, %s28
    %s31 = ssub.s32 %s18, %s30
    %s32 = ssub.s32 %s19, %s26
    %s33 = sor.u32 %s31, %s32
    %p34 = scmp.eq.s32.totalorder %s33, 0
    %s36 = sadd.s32 %s35, 1
    %s37 = scalar_select %p34, %s35, %s36
    %p40 = pneg %p34
    %p41 = scmp.eq.s32.totalorder %s11, 3
    %p42 = por %p40, %p41
    %p43 = scmp.ne.s32.totalorder %s35, %s38
    %p44 = scmp.eq.s32.totalorder %s11, 0
    %p45 = por %p43, %p44
    %p46 = scmp.ne.s32.totalorder %s35, %s38
    %p47 = scmp.eq.s32.totalorder %s16, 3
    %p48 = por %p46, %p47
    %p49 = scmp.ne.s32.totalorder %s38, %s39
    %p50 = scmp.eq.s32.totalorder %s16, 0
    %p51 = por %p49, %p50
    %p52 = scmp.ne.s32.totalorder %s38, %s39
    %p53 = scmp.eq.s32.totalorder %s17, 3
    %p54 = por %p52, %p53
    %p56 = scmp.ne.s32.totalorder %s39, %s55
    %p57 = scmp.eq.s32.totalorder %s17, 0
    %p58 = por %p56, %p57
    %s59 = ssub.s32 %s19, %s26
    %p60 = scmp.eq.s32.totalorder %s59, 0
    %s62 = sadd.s32 %s61, 1
    %s63 = scalar_select %p60, %s61, %s62
    %p66 = pneg %p60
    %p67 = scmp.eq.s32.totalorder %s11, 3
    %p68 = por %p66, %p67
    %p69 = scmp.ne.s32.totalorder %s61, %s64
    %p70 = scmp.eq.s32.totalorder %s11, 0
    %p71 = por %p69, %p70
    %p72 = scmp.ne.s32.totalorder %s61, %s64
    %p73 = scmp.eq.s32.totalorder %s16, 3
    %p74 = por %p72, %p73
    %p75 = scmp.ne.s32.totalorder %s64, %s65
    %p76 = scmp.eq.s32.totalorder %s16, 0
    %p77 = por %p75, %p76
    %p78 = scmp.ne.s32.totalorder %s64, %s65
    %p79 = scmp.eq.s32.totalorder %s17, 3
    %p80 = por %p78, %p79
    %p82 = scmp.ne.s32.totalorder %s65, %s81
    %p83 = scmp.eq.s32.totalorder %s17, 0
    %p84 = por %p82, %p83
    %s86 = sadd.s32 %s85, 1
    %p89 = scmp.eq.s32.totalorder %s11, 3
    %p90 = scmp.ne.s32.totalorder %s85, %s87
    %p91 = scmp.eq.s32.totalorder %s11, 0
    %p92 = por %p90, %p91
    %p93 = scmp.ne.s32.totalorder %s85, %s87
    %p94 = scmp.eq.s32.totalorder %s16, 3
    %p95 = por %p93, %p94
    %p96 = scmp.ne.s32.totalorder %s87, %s88
    %p97 = scmp.eq.s32.totalorder %s16, 0
    %p98 = por %p96, %p97
    %p99 = scmp.ne.s32.totalorder %s87, %s88
    %p100 = scmp.eq.s32.totalorder %s17, 3
    %p101 = por %p99, %p100
    %p103 = scmp.ne.s32.totalorder %s88, %s102
    %p104 = scmp.eq.s32.totalorder %s17, 0
    %p105 = por %p103, %p104
    %s107 = sadd.s32 %s106, 1
    %p110 = scmp.eq.s32.totalorder %s11, 3
    %p111 = scmp.ne.s32.totalorder %s106, %s108
    %p112 = scmp.eq.s32.totalorder %s11, 0
    %p113 = por %p111, %p112
    %p114 = scmp.ne.s32.totalorder %s106, %s108
    %p115 = scmp.eq.s32.totalorder %s16, 3
    %p116 = por %p114, %p115
    %p117 = scmp.ne.s32.totalorder %s108, %s109
    %p118 = scmp.eq.s32.totalorder %s16, 0
    %p119 = por %p117, %p118
    %p120 = scmp.ne.s32.totalorder %s108, %s109
    %p121 = scmp.eq.s32.totalorder %s17, 3
    %p122 = por %p120, %p121
    %p124 = scmp.ne.s32.totalorder %s109, %s123
    %p125 = scmp.eq.s32.totalorder %s17, 0
    %p126 = por %p124, %p125
    %s128 = sadd.s32 %s127, 1
    %p131 = scmp.eq.s32.totalorder %s11, 3
    %p132 = scmp.ne.s32.totalorder %s127, %s129
    %p133 = scmp.eq.s32.totalorder %s11, 0
    %p134 = por %p132, %p133
    %p135 = scmp.ne.s32.totalorder %s127, %s129
    %p136 = scmp.eq.s32.totalorder %s16, 3
    %p137 = por %p135, %p136
    %p138 = scmp.ne.s32.totalorder %s129, %s130
    %p139 = scmp.eq.s32.totalorder %s16, 0
    %p140 = por %p138, %p139
    %p141 = scmp.ne.s32.totalorder %s129, %s130
    %p142 = scmp.eq.s32.totalorder %s17, 3
    %p143 = por %p141, %p142
    %p145 = scmp.ne.s32.totalorder %s130, %s144
    %p146 = scmp.eq.s32.totalorder %s17, 0
    %p147 = por %p145, %p146
    %s148 = ssub.s32 %s18, %s30
    %p149 = scmp.eq.s32.totalorder %s148, 0
    %s151 = sadd.s32 %s150, 1
    %s152 = scalar_select %p149, %s150, %s151
    %p155 = pneg %p149
    %p156 = scmp.eq.s32.totalorder %s11, 3
    %p157 = por %p155, %p156
    %p158 = scmp.ne.s32.totalorder %s150, %s153
    %p159 = scmp.eq.s32.totalorder %s11, 0
    %p160 = por %p158, %p159
    %p161 = scmp.ne.s32.totalorder %s150, %s153
    %p162 = scmp.eq.s32.totalorder %s16, 3
    %p163 = por %p161, %p162
    %p164 = scmp.ne.s32.totalorder %s153, %s154
    %p165 = scmp.eq.s32.totalorder %s16, 0
    %p166 = por %p164, %p165
    %p167 = scmp.ne.s32.totalorder %s153, %s154
    %p168 = scmp.eq.s32.totalorder %s17, 3
    %p169 = por %p167, %p168
    %p171 = scmp.ne.s32.totalorder %s154, %s170
    %p172 = scmp.eq.s32.totalorder %s17, 0
    %p173 = por %p171, %p172
    %p174 = scmp.le.s32.totalorder 1, %s11
    %p175 = scmp.lt.s32.totalorder %s11, 5
    %p176 = pnand %p174, %p175
    %p177 = pneg %p176
    // Predicated region
    $region9: #{net_forward.5} parent=5 // pred_check
      _
    $region10: #{net_forward.5} parent=5 // pred_check_branch
      %179 = sbr.rel (%p176) target = $region12
    $region11: #{net_forward.5} parent=5 // pred_region
      %s180 = ssub.s32 %s11, 1
      // Predicated region
      $region13: #{net_forward.5} parent=11 // pred_check
        %p181 = pneg %p98
      $region14: #{net_forward.5} parent=11 // pred_check_branch
        %183 = sbr.rel (%p181) target = $region16
      $region15: #{net_forward.5} parent=11 // pred_region
        _
      $region16: #{net_forward.5} parent=11 // pred_fallthru
        _
      // Predicated region
      $region17: #{net_forward.5} parent=11 // pred_check
        %p184 = pneg %p119
      $region18: #{net_forward.5} parent=11 // pred_check_branch
        %186 = sbr.rel (%p184) target = $region20
      $region19: #{net_forward.5} parent=11 // pred_region
        _
      $region20: #{net_forward.5} parent=11 // pred_fallthru
        _
      // Predicated region
      $region21: #{net_forward.5} parent=11 // pred_check
        %p187 = pneg %p140
      $region22: #{net_forward.5} parent=11 // pred_check_branch
        %189 = sbr.rel (%p187) target = $region24
      $region23: #{net_forward.5} parent=11 // pred_region
        _
      $region24: #{net_forward.5} parent=11 // pred_fallthru
        _
    $region12: #{net_forward.5} parent=5 // pred_fallthru
      _
    %p190 = scmp.lt.s32.totalorder %s11, 4
    // Predicated region
    $region25: #{net_forward.5} parent=5 // pred_check
      %p191 = pneg %p190
    $region26: #{net_forward.5} parent=5 // pred_check_branch
      %193 = sbr.rel (%p191) target = $region28
    $region27: #{net_forward.5} parent=5 // pred_region
      // Predicated region
      $region29: #{net_forward.5} parent=27 // pred_check
        %p194 = pneg %p45
      $region30: #{net_forward.5} parent=27 // pred_check_branch
        %196 = sbr.rel (%p194) target = $region32
      $region31: #{net_forward.5} parent=27 // pred_region
        %s197 = smul.u32 18, %s19
        %p198 = scmp.lt.s32.totalorder %s18, 0
        %s199 = scalar_select %p198, %s18, 0
        %p200 = scmp.lt.s32.totalorder %s197, 71
        %s201 = scalar_select %p200, %s197, 71
        %s202 = smul.addr %s199, 72
        %s203 = sadd.s32 %s201, %s202
        %s204 = smul.addr %s203, 4
        %s205 = scalar_lea.vmem %s0, %s204
        %s206 = smul.u32 18, %s19
      $region32: #{net_forward.5} parent=27 // pred_fallthru
        _
      // Predicated region
      $region33: #{net_forward.5} parent=27 // pred_check
        %p207 = pneg %p71
      $region34: #{net_forward.5} parent=27 // pred_check_branch
        %209 = sbr.rel (%p207) target = $region36
      $region35: #{net_forward.5} parent=27 // pred_region
        %s210 = smul.u32 288, %s19
        %p211 = scmp.lt.s32.totalorder %s210, 1151
        %s212 = scalar_select %p211, %s210, 1151
        %s213 = smul.addr %s212, 4
        %s214 = scalar_lea.vmem %s1, %s213
        %s215 = smul.u32 288, %s19
      $region36: #{net_forward.5} parent=27 // pred_fallthru
        _
    $region28: #{net_forward.5} parent=5 // pred_fallthru
      _
    %p216 = scmp.le.s32.totalorder 1, %s11
    %p217 = scmp.lt.s32.totalorder %s11, 5
    %p218 = pnand %p216, %p217
    %p219 = pneg %p218
    // Predicated region
    $region37: #{net_forward.5} parent=5 // pred_check
      _
    $region38: #{net_forward.5} parent=5 // pred_check_branch
      %221 = sbr.rel (%p218) target = $region40
    $region39: #{net_forward.5} parent=5 // pred_region
      %s222 = ssub.s32 %s11, 1
      %s223 = smul.u32 18, %s21
      %p224 = scmp.lt.s32.totalorder %s20, 0
      %s225 = scalar_select %p224, %s20, 0
      %p226 = scmp.lt.s32.totalorder %s223, 71
      %s227 = scalar_select %p226, %s223, 71
      %s228 = smul.addr %s225, 72
      %s229 = sadd.s32 %s227, %s228
      %s230 = smul.addr %s229, 4
      %s231 = scalar_lea.vmem %s0, %s230
      %p232 = pneg %p51
      %p233 = pneg %p48
      %s234 = smul.u32 288, %s21
      %p235 = scmp.lt.s32.totalorder %s234, 1151
      %s236 = scalar_select %p235, %s234, 1151
      %s237 = smul.addr %s236, 4
      %s238 = scalar_lea.vmem %s1, %s237
      %p239 = pneg %p77
      %p240 = pneg %p74
      %p241 = pneg %p98
      %p242 = pneg %p95
      %p243 = pneg %p119
      %p244 = pneg %p116
      %p245 = pneg %p140
      %p246 = pneg %p137
      %p247 = pneg %p166
      %p248 = pneg %p163
      %p249 = scmp.lt.s32.totalorder %s20, 0
      %s250 = scalar_select %p249, %s20, 0
      %s251 = smul.addr %s250, 8
      %s252 = scalar_lea.vmem %s5, %s251
      %s253 = smul.u32 18, %s21
      %p254 = scmp.lt.s32.totalorder %s20, 0
      %s255 = scalar_select %p254, %s20, 0
      %p256 = scmp.lt.s32.totalorder %s253, 71
      %s257 = scalar_select %p256, %s253, 71
      %s258 = smul.addr %s255, 72
      %s259 = sadd.s32 %s257, %s258
      %s260 = smul.addr %s259, 4
      %s261 = scalar_lea.vmem %s0, %s260
      %s262 = smul.u32 18, %s21
      %s263 = smul.u32 288, %s21
      %p264 = scmp.lt.s32.totalorder %s263, 1151
      %s265 = scalar_select %p264, %s263, 1151
      %s266 = smul.addr %s265, 4
      %s267 = scalar_lea.vmem %s1, %s266
      %s268 = smul.u32 288, %s21
      %p269 = scmp.lt.s32.totalorder %s20, 0
      %s270 = scalar_select %p269, %s20, 0
      %s271 = smul.addr %s270, 8
      %s272 = scalar_lea.vmem %s5, %s271
      %p274 = scmp.eq.s32.totalorder %s21, 0
      // Predicated region
      $region41: #{net_forward.5} parent=39 // pred_check
        %p275 = pneg %p274
      $region42: #{net_forward.5} parent=39 // pred_check_branch
        %277 = sbr.rel (%p275) target = $region44
      $region43: #{net_forward.5} parent=39 // pred_region
        %278 = vst [vmem:[#allocation2] sm:$0xff] 0.0
      $region44: #{net_forward.5} parent=39 // pred_fallthru
        _
      %v279 = vld [vmem:[#allocation2] sm:$0xff]
      %v280 = vld [vmem:[%s261] sm:$0xff]
      %v281 = vld [vmem:[%s261 + $0x8] sm:$0xff]
      %v282 = vld [vmem:[%s261 + $0x10] sm:$0xff]
      %v283 = vld [vmem:[%s261 + $0x18] sm:$0xff]
      %v284 = vld [vmem:[%s261 + $0x20] sm:$0xff]
      %v285 = vld [vmem:[%s261 + $0x28] sm:$0xff]
      %v286 = vld [vmem:[%s261 + $0x30] sm:$0xff]
      %v287 = vld [vmem:[%s261 + $0x38] sm:$0xff]
      %v288 = vld [vmem:[%s261 + $0x40] sm:$0xff]
      %v289 = vld [vmem:[%s267] sm:$0xf]
      %v290 = vld [vmem:[%s267 + $0x4] sm:$0xf]
      %v291 = vld [vmem:[%s267 + $0x8] sm:$0xf]
      %v292 = vld [vmem:[%s267 + $0xc] sm:$0xf]
      %v293 = vld [vmem:[%s267 + $0x10] sm:$0xf]
      %v294 = vld [vmem:[%s267 + $0x14] sm:$0xf]
      %v295 = vld [vmem:[%s267 + $0x18] sm:$0xf]
      %v296 = vld [vmem:[%s267 + $0x1c] sm:$0xf]
      %v297 = vld [vmem:[%s267 + $0x20] sm:$0xf]
      %v298 = vld [vmem:[%s267 + $0x24] sm:$0xf]
      %v299 = vld [vmem:[%s267 + $0x28] sm:$0xf]
      %v300 = vld [vmem:[%s267 + $0x2c] sm:$0xf]
      %v301 = vld [vmem:[%s267 + $0x30] sm:$0xf]
      %v302 = vld [vmem:[%s267 + $0x34] sm:$0xf]
      %v303 = vld [vmem:[%s267 + $0x38] sm:$0xf]
      %v304 = vld [vmem:[%s267 + $0x3c] sm:$0xf]
      %v305 = vld [vmem:[%s267 + $0x40] sm:$0xf]
      %v306 = vld [vmem:[%s267 + $0x44] sm:$0xf]
      %v307 = vld [vmem:[%s267 + $0x48] sm:$0xf]
      %v308 = vld [vmem:[%s267 + $0x4c] sm:$0xf]
      %v309 = vld [vmem:[%s267 + $0x50] sm:$0xf]
      %v310 = vld [vmem:[%s267 + $0x54] sm:$0xf]
      %v311 = vld [vmem:[%s267 + $0x58] sm:$0xf]
      %v312 = vld [vmem:[%s267 + $0x5c] sm:$0xf]
      %v313 = vld [vmem:[%s267 + $0x60] sm:$0xf]
      %v314 = vld [vmem:[%s267 + $0x64] sm:$0xf]
      %v315 = vld [vmem:[%s267 + $0x68] sm:$0xf]
      %v316 = vld [vmem:[%s267 + $0x6c] sm:$0xf]
      %v317 = vld [vmem:[%s267 + $0x70] sm:$0xf]
      %v318 = vld [vmem:[%s267 + $0x74] sm:$0xf]
      %v319 = vld [vmem:[%s267 + $0x78] sm:$0xf]
      %v320 = vld [vmem:[%s267 + $0x7c] sm:$0xf]
      %v321 = vld [vmem:[%s267 + $0x80] sm:$0xf]
      %v322 = vld [vmem:[%s267 + $0x84] sm:$0xf]
      %v323 = vld [vmem:[%s267 + $0x88] sm:$0xf]
      %v324 = vld [vmem:[%s267 + $0x8c] sm:$0xf]
      %v325 = vld [vmem:[%s267 + $0x90] sm:$0xf]
      %v326 = vld [vmem:[%s267 + $0x94] sm:$0xf]
      %v327 = vld [vmem:[%s267 + $0x98] sm:$0xf]
      %v328 = vld [vmem:[%s267 + $0x9c] sm:$0xf]
      %v329 = vld [vmem:[%s267 + $0xa0] sm:$0xf]
      %v330 = vld [vmem:[%s267 + $0xa4] sm:$0xf]
      %v331 = vld [vmem:[%s267 + $0xa8] sm:$0xf]
      %v332 = vld [vmem:[%s267 + $0xac] sm:$0xf]
      %v333 = vld [vmem:[%s267 + $0xb0] sm:$0xf]
      %v334 = vld [vmem:[%s267 + $0xb4] sm:$0xf]
      %v335 = vld [vmem:[%s267 + $0xb8] sm:$0xf]
      %v336 = vld [vmem:[%s267 + $0xbc] sm:$0xf]
      %v337 = vld [vmem:[%s267 + $0xc0] sm:$0xf]
      %v338 = vld [vmem:[%s267 + $0xc4] sm:$0xf]
      %v339 = vld [vmem:[%s267 + $0xc8] sm:$0xf]
      %v340 = vld [vmem:[%s267 + $0xcc] sm:$0xf]
      %v341 = vld [vmem:[%s267 + $0xd0] sm:$0xf]
      %v342 = vld [vmem:[%s267 + $0xd4] sm:$0xf]
      %v343 = vld [vmem:[%s267 + $0xd8] sm:$0xf]
      %v344 = vld [vmem:[%s267 + $0xdc] sm:$0xf]
      %v345 = vld [vmem:[%s267 + $0xe0] sm:$0xf]
      %v346 = vld [vmem:[%s267 + $0xe4] sm:$0xf]
      %v347 = vld [vmem:[%s267 + $0xe8] sm:$0xf]
      %v348 = vld [vmem:[%s267 + $0xec] sm:$0xf]
      %v349 = vld [vmem:[%s267 + $0xf0] sm:$0xf]
      %v350 = vld [vmem:[%s267 + $0xf4] sm:$0xf]
      %v351 = vld [vmem:[%s267 + $0xf8] sm:$0xf]
      %v352 = vld [vmem:[%s267 + $0xfc] sm:$0xf]
      %v353 = vld [vmem:[%s267 + $0x100] sm:$0xf]
      %v354 = vld [vmem:[%s267 + $0x104] sm:$0xf]
      %v355 = vld [vmem:[%s267 + $0x108] sm:$0xf]
      %v356 = vld [vmem:[%s267 + $0x10c] sm:$0xf]
      %v357 = vld [vmem:[%s267 + $0x110] sm:$0xf]
      %v358 = vld [vmem:[%s267 + $0x114] sm:$0xf]
      %v359 = vld [vmem:[%s267 + $0x118] sm:$0xf]
      %v360 = vld [vmem:[%s267 + $0x11c] sm:$0xf]
      %v361 = vld [vmem:[%s267 + $0x120] sm:$0xf]
      %v362 = vld [vmem:[%s267 + $0x124] sm:$0xf]
      %v363 = vld [vmem:[%s267 + $0x128] sm:$0xf]
      %v364 = vld [vmem:[%s267 + $0x12c] sm:$0xf]
      %v365 = vld [vmem:[%s267 + $0x130] sm:$0xf]
      %v366 = vld [vmem:[%s267 + $0x134] sm:$0xf]
      %v367 = vld [vmem:[%s267 + $0x138] sm:$0xf]
      %v368 = vld [vmem:[%s267 + $0x13c] sm:$0xf]
      %v369 = vld [vmem:[%s267 + $0x140] sm:$0xf]
      %v370 = vld [vmem:[%s267 + $0x144] sm:$0xf]
      %v371 = vld [vmem:[%s267 + $0x148] sm:$0xf]
      %v372 = vld [vmem:[%s267 + $0x14c] sm:$0xf]
      %v373 = vld [vmem:[%s267 + $0x150] sm:$0xf]
      %v374 = vld [vmem:[%s267 + $0x154] sm:$0xf]
      %v375 = vld [vmem:[%s267 + $0x158] sm:$0xf]
      %v376 = vld [vmem:[%s267 + $0x15c] sm:$0xf]
      %v377 = vld [vmem:[%s267 + $0x160] sm:$0xf]
      %v378 = vld [vmem:[%s267 + $0x164] sm:$0xf]
      %v379 = vld [vmem:[%s267 + $0x168] sm:$0xf]
      %v380 = vld [vmem:[%s267 + $0x16c] sm:$0xf]
      %v381 = vld [vmem:[%s267 + $0x170] sm:$0xf]
      %v382 = vld [vmem:[%s267 + $0x174] sm:$0xf]
      %v383 = vld [vmem:[%s267 + $0x178] sm:$0xf]
      %v384 = vld [vmem:[%s267 + $0x17c] sm:$0xf]
      %v385 = vld [vmem:[%s267 + $0x180] sm:$0xf]
      %v386 = vld [vmem:[%s267 + $0x184] sm:$0xf]
      %v387 = vld [vmem:[%s267 + $0x188] sm:$0xf]
      %v388 = vld [vmem:[%s267 + $0x18c] sm:$0xf]
      %v389 = vld [vmem:[%s267 + $0x190] sm:$0xf]
      %v390 = vld [vmem:[%s267 + $0x194] sm:$0xf]
      %v391 = vld [vmem:[%s267 + $0x198] sm:$0xf]
      %v392 = vld [vmem:[%s267 + $0x19c] sm:$0xf]
      %v393 = vld [vmem:[%s267 + $0x1a0] sm:$0xf]
      %v394 = vld [vmem:[%s267 + $0x1a4] sm:$0xf]
      %v395 = vld [vmem:[%s267 + $0x1a8] sm:$0xf]
      %v396 = vld [vmem:[%s267 + $0x1ac] sm:$0xf]
      %v397 = vld [vmem:[%s267 + $0x1b0] sm:$0xf]
      %v398 = vld [vmem:[%s267 + $0x1b4] sm:$0xf]
      %v399 = vld [vmem:[%s267 + $0x1b8] sm:$0xf]
      %v400 = vld [vmem:[%s267 + $0x1bc] sm:$0xf]
      %v401 = vld [vmem:[%s267 + $0x1c0] sm:$0xf]
      %v402 = vld [vmem:[%s267 + $0x1c4] sm:$0xf]
      %v403 = vld [vmem:[%s267 + $0x1c8] sm:$0xf]
      %v404 = vld [vmem:[%s267 + $0x1cc] sm:$0xf]
      %v405 = vld [vmem:[%s267 + $0x1d0] sm:$0xf]
      %v406 = vld [vmem:[%s267 + $0x1d4] sm:$0xf]
      %v407 = vld [vmem:[%s267 + $0x1d8] sm:$0xf]
      %v408 = vld [vmem:[%s267 + $0x1dc] sm:$0xf]
      %v409 = vld [vmem:[%s267 + $0x1e0] sm:$0xf]
      %v410 = vld [vmem:[%s267 + $0x1e4] sm:$0xf]
      %v411 = vld [vmem:[%s267 + $0x1e8] sm:$0xf]
      %v412 = vld [vmem:[%s267 + $0x1ec] sm:$0xf]
      %v413 = vld [vmem:[%s267 + $0x1f0] sm:$0xf]
      %v414 = vld [vmem:[%s267 + $0x1f4] sm:$0xf]
      %v415 = vld [vmem:[%s267 + $0x1f8] sm:$0xf]
      %v416 = vld [vmem:[%s267 + $0x1fc] sm:$0xf]
      %v417 = vld [vmem:[%s267 + $0x200] sm:$0xf]
      %v418 = vld [vmem:[%s267 + $0x204] sm:$0xf]
      %v419 = vld [vmem:[%s267 + $0x208] sm:$0xf]
      %v420 = vld [vmem:[%s267 + $0x20c] sm:$0xf]
      %v421 = vld [vmem:[%s267 + $0x210] sm:$0xf]
      %v422 = vld [vmem:[%s267 + $0x214] sm:$0xf]
      %v423 = vld [vmem:[%s267 + $0x218] sm:$0xf]
      %v424 = vld [vmem:[%s267 + $0x21c] sm:$0xf]
      %v425 = vld [vmem:[%s267 + $0x220] sm:$0xf]
      %v426 = vld [vmem:[%s267 + $0x224] sm:$0xf]
      %v427 = vld [vmem:[%s267 + $0x228] sm:$0xf]
      %v428 = vld [vmem:[%s267 + $0x22c] sm:$0xf]
      %v429 = vld [vmem:[%s267 + $0x230] sm:$0xf]
      %v430 = vld [vmem:[%s267 + $0x234] sm:$0xf]
      %v431 = vld [vmem:[%s267 + $0x238] sm:$0xf]
      %v432 = vld [vmem:[%s267 + $0x23c] sm:$0xf]
      %v433 = vld [vmem:[%s267 + $0x240] sm:$0xf]
      %v434 = vld [vmem:[%s267 + $0x244] sm:$0xf]
      %v435 = vld [vmem:[%s267 + $0x248] sm:$0xf]
      %v436 = vld [vmem:[%s267 + $0x24c] sm:$0xf]
      %v437 = vld [vmem:[%s267 + $0x250] sm:$0xf]
      %v438 = vld [vmem:[%s267 + $0x254] sm:$0xf]
      %v439 = vld [vmem:[%s267 + $0x258] sm:$0xf]
      %v440 = vld [vmem:[%s267 + $0x25c] sm:$0xf]
      %v441 = vld [vmem:[%s267 + $0x260] sm:$0xf]
      %v442 = vld [vmem:[%s267 + $0x264] sm:$0xf]
      %v443 = vld [vmem:[%s267 + $0x268] sm:$0xf]
      %v444 = vld [vmem:[%s267 + $0x26c] sm:$0xf]
      %v445 = vld [vmem:[%s267 + $0x270] sm:$0xf]
      %v446 = vld [vmem:[%s267 + $0x274] sm:$0xf]
      %v447 = vld [vmem:[%s267 + $0x278] sm:$0xf]
      %v448 = vld [vmem:[%s267 + $0x27c] sm:$0xf]
      %v449 = vld [vmem:[%s267 + $0x280] sm:$0xf]
      %v450 = vld [vmem:[%s267 + $0x284] sm:$0xf]
      %v451 = vld [vmem:[%s267 + $0x288] sm:$0xf]
      %v452 = vld [vmem:[%s267 + $0x28c] sm:$0xf]
      %v453 = vld [vmem:[%s267 + $0x290] sm:$0xf]
      %v454 = vld [vmem:[%s267 + $0x294] sm:$0xf]
      %v455 = vld [vmem:[%s267 + $0x298] sm:$0xf]
      %v456 = vld [vmem:[%s267 + $0x29c] sm:$0xf]
      %v457 = vld [vmem:[%s267 + $0x2a0] sm:$0xf]
      %v458 = vld [vmem:[%s267 + $0x2a4] sm:$0xf]
      %v459 = vld [vmem:[%s267 + $0x2a8] sm:$0xf]
      %v460 = vld [vmem:[%s267 + $0x2ac] sm:$0xf]
      %v461 = vld [vmem:[%s267 + $0x2b0] sm:$0xf]
      %v462 = vld [vmem:[%s267 + $0x2b4] sm:$0xf]
      %v463 = vld [vmem:[%s267 + $0x2b8] sm:$0xf]
      %v464 = vld [vmem:[%s267 + $0x2bc] sm:$0xf]
      %v465 = vld [vmem:[%s267 + $0x2c0] sm:$0xf]
      %v466 = vld [vmem:[%s267 + $0x2c4] sm:$0xf]
      %v467 = vld [vmem:[%s267 + $0x2c8] sm:$0xf]
      %v468 = vld [vmem:[%s267 + $0x2cc] sm:$0xf]
      %v469 = vld [vmem:[%s267 + $0x2d0] sm:$0xf]
      %v470 = vld [vmem:[%s267 + $0x2d4] sm:$0xf]
      %v471 = vld [vmem:[%s267 + $0x2d8] sm:$0xf]
      %v472 = vld [vmem:[%s267 + $0x2dc] sm:$0xf]
      %v473 = vld [vmem:[%s267 + $0x2e0] sm:$0xf]
      %v474 = vld [vmem:[%s267 + $0x2e4] sm:$0xf]
      %v475 = vld [vmem:[%s267 + $0x2e8] sm:$0xf]
      %v476 = vld [vmem:[%s267 + $0x2ec] sm:$0xf]
      %v477 = vld [vmem:[%s267 + $0x2f0] sm:$0xf]
      %v478 = vld [vmem:[%s267 + $0x2f4] sm:$0xf]
      %v479 = vld [vmem:[%s267 + $0x2f8] sm:$0xf]
      %v480 = vld [vmem:[%s267 + $0x2fc] sm:$0xf]
      %v481 = vld [vmem:[%s267 + $0x300] sm:$0xf]
      %v482 = vld [vmem:[%s267 + $0x304] sm:$0xf]
      %v483 = vld [vmem:[%s267 + $0x308] sm:$0xf]
      %v484 = vld [vmem:[%s267 + $0x30c] sm:$0xf]
      %v485 = vld [vmem:[%s267 + $0x310] sm:$0xf]
      %v486 = vld [vmem:[%s267 + $0x314] sm:$0xf]
      %v487 = vld [vmem:[%s267 + $0x318] sm:$0xf]
      %v488 = vld [vmem:[%s267 + $0x31c] sm:$0xf]
      %v489 = vld [vmem:[%s267 + $0x320] sm:$0xf]
      %v490 = vld [vmem:[%s267 + $0x324] sm:$0xf]
      %v491 = vld [vmem:[%s267 + $0x328] sm:$0xf]
      %v492 = vld [vmem:[%s267 + $0x32c] sm:$0xf]
      %v493 = vld [vmem:[%s267 + $0x330] sm:$0xf]
      %v494 = vld [vmem:[%s267 + $0x334] sm:$0xf]
      %v495 = vld [vmem:[%s267 + $0x338] sm:$0xf]
      %v496 = vld [vmem:[%s267 + $0x33c] sm:$0xf]
      %v497 = vld [vmem:[%s267 + $0x340] sm:$0xf]
      %v498 = vld [vmem:[%s267 + $0x344] sm:$0xf]
      %v499 = vld [vmem:[%s267 + $0x348] sm:$0xf]
      %v500 = vld [vmem:[%s267 + $0x34c] sm:$0xf]
      %v501 = vld [vmem:[%s267 + $0x350] sm:$0xf]
      %v502 = vld [vmem:[%s267 + $0x354] sm:$0xf]
      %v503 = vld [vmem:[%s267 + $0x358] sm:$0xf]
      %v504 = vld [vmem:[%s267 + $0x35c] sm:$0xf]
      %v505 = vld [vmem:[%s267 + $0x360] sm:$0xf]
      %v506 = vld [vmem:[%s267 + $0x364] sm:$0xf]
      %v507 = vld [vmem:[%s267 + $0x368] sm:$0xf]
      %v508 = vld [vmem:[%s267 + $0x36c] sm:$0xf]
      %v509 = vld [vmem:[%s267 + $0x370] sm:$0xf]
      %v510 = vld [vmem:[%s267 + $0x374] sm:$0xf]
      %v511 = vld [vmem:[%s267 + $0x378] sm:$0xf]
      %v512 = vld [vmem:[%s267 + $0x37c] sm:$0xf]
      %v513 = vld [vmem:[%s267 + $0x380] sm:$0xf]
      %v514 = vld [vmem:[%s267 + $0x384] sm:$0xf]
      %v515 = vld [vmem:[%s267 + $0x388] sm:$0xf]
      %v516 = vld [vmem:[%s267 + $0x38c] sm:$0xf]
      %v517 = vld [vmem:[%s267 + $0x390] sm:$0xf]
      %v518 = vld [vmem:[%s267 + $0x394] sm:$0xf]
      %v519 = vld [vmem:[%s267 + $0x398] sm:$0xf]
      %v520 = vld [vmem:[%s267 + $0x39c] sm:$0xf]
      %v521 = vld [vmem:[%s267 + $0x3a0] sm:$0xf]
      %v522 = vld [vmem:[%s267 + $0x3a4] sm:$0xf]
      %v523 = vld [vmem:[%s267 + $0x3a8] sm:$0xf]
      %v524 = vld [vmem:[%s267 + $0x3ac] sm:$0xf]
      %v525 = vld [vmem:[%s267 + $0x3b0] sm:$0xf]
      %v526 = vld [vmem:[%s267 + $0x3b4] sm:$0xf]
      %v527 = vld [vmem:[%s267 + $0x3b8] sm:$0xf]
      %v528 = vld [vmem:[%s267 + $0x3bc] sm:$0xf]
      %v529 = vld [vmem:[%s267 + $0x3c0] sm:$0xf]
      %v530 = vld [vmem:[%s267 + $0x3c4] sm:$0xf]
      %v531 = vld [vmem:[%s267 + $0x3c8] sm:$0xf]
      %v532 = vld [vmem:[%s267 + $0x3cc] sm:$0xf]
      %v533 = vld [vmem:[%s267 + $0x3d0] sm:$0xf]
      %v534 = vld [vmem:[%s267 + $0x3d4] sm:$0xf]
      %v535 = vld [vmem:[%s267 + $0x3d8] sm:$0xf]
      %v536 = vld [vmem:[%s267 + $0x3dc] sm:$0xf]
      %v537 = vld [vmem:[%s267 + $0x3e0] sm:$0xf]
      %v538 = vld [vmem:[%s267 + $0x3e4] sm:$0xf]
      %v539 = vld [vmem:[%s267 + $0x3e8] sm:$0xf]
      %v540 = vld [vmem:[%s267 + $0x3ec] sm:$0xf]
      %v541 = vld [vmem:[%s267 + $0x3f0] sm:$0xf]
      %v542 = vld [vmem:[%s267 + $0x3f4] sm:$0xf]
      %v543 = vld [vmem:[%s267 + $0x3f8] sm:$0xf]
      %v544 = vld [vmem:[%s267 + $0x3fc] sm:$0xf]
      %v545 = vld [vmem:[%s267 + $0x400] sm:$0xf]
      %v546 = vld [vmem:[%s267 + $0x404] sm:$0xf]
      %v547 = vld [vmem:[%s267 + $0x408] sm:$0xf]
      %v548 = vld [vmem:[%s267 + $0x40c] sm:$0xf]
      %v549 = vld [vmem:[%s267 + $0x410] sm:$0xf]
      %v550 = vld [vmem:[%s267 + $0x414] sm:$0xf]
      %v551 = vld [vmem:[%s267 + $0x418] sm:$0xf]
      %v552 = vld [vmem:[%s267 + $0x41c] sm:$0xf]
      %v553 = vld [vmem:[%s267 + $0x420] sm:$0xf]
      %v554 = vld [vmem:[%s267 + $0x424] sm:$0xf]
      %v555 = vld [vmem:[%s267 + $0x428] sm:$0xf]
      %v556 = vld [vmem:[%s267 + $0x42c] sm:$0xf]
      %v557 = vld [vmem:[%s267 + $0x430] sm:$0xf]
      %v558 = vld [vmem:[%s267 + $0x434] sm:$0xf]
      %v559 = vld [vmem:[%s267 + $0x438] sm:$0xf]
      %v560 = vld [vmem:[%s267 + $0x43c] sm:$0xf]
      %v561 = vld [vmem:[%s267 + $0x440] sm:$0xf]
      %v562 = vld [vmem:[%s267 + $0x444] sm:$0xf]
      %v563 = vld [vmem:[%s267 + $0x448] sm:$0xf]
      %v564 = vld [vmem:[%s267 + $0x44c] sm:$0xf]
      %v565 = vld [vmem:[%s267 + $0x450] sm:$0xf]
      %v566 = vld [vmem:[%s267 + $0x454] sm:$0xf]
      %v567 = vld [vmem:[%s267 + $0x458] sm:$0xf]
      %v568 = vld [vmem:[%s267 + $0x45c] sm:$0xf]
      %v569 = vld [vmem:[%s267 + $0x460] sm:$0xf]
      %v570 = vld [vmem:[%s267 + $0x464] sm:$0xf]
      %v571 = vld [vmem:[%s267 + $0x468] sm:$0xf]
      %v572 = vld [vmem:[%s267 + $0x46c] sm:$0xf]
      %v573 = vld [vmem:[%s267 + $0x470] sm:$0xf]
      %v574 = vld [vmem:[%s267 + $0x474] sm:$0xf]
      %v575 = vld [vmem:[%s267 + $0x478] sm:$0xf]
      %v576 = vld [vmem:[%s267 + $0x47c] sm:$0xf]
      %v586 = vunpack.c.l.b16 %v280
      %v587 = vunpack.c.h.b16 %v280
      %v588 = vunpack.c.l.b16 %v281
      %v589 = vunpack.c.h.b16 %v281
      %v590 = vunpack.c.l.b16 %v282
      %v591 = vunpack.c.h.b16 %v282
      %v592 = vunpack.c.l.b16 %v283
      %v593 = vunpack.c.h.b16 %v283
      %v594 = vunpack.c.l.b16 %v284
      %v595 = vunpack.c.h.b16 %v284
      %v596 = vunpack.c.l.b16 %v285
      %v597 = vunpack.c.h.b16 %v285
      %v598 = vunpack.c.l.b16 %v286
      %v599 = vunpack.c.h.b16 %v286
      %v600 = vunpack.c.l.b16 %v287
      %v601 = vunpack.c.h.b16 %v287
      %v602 = vunpack.c.l.b16 %v288
      %v603 = vunpack.c.h.b16 %v288
      %v604 = vpack.c.b16 %v586, %v586
      %v605 = vpack.c.b16 %v587, %v587
      %v606 = vpack.c.b16 %v588, %v588
      %v607 = vpack.c.b16 %v589, %v589
      %v608 = vpack.c.b16 %v590, %v590
      %v609 = vpack.c.b16 %v591, %v591
      %v610 = vpack.c.b16 %v592, %v592
      %v611 = vpack.c.b16 %v593, %v593
      %v612 = vpack.c.b16 %v594, %v594
      %v613 = vpack.c.b16 %v595, %v595
      %v614 = vpack.c.b16 %v596, %v596
      %v615 = vpack.c.b16 %v597, %v597
      %v616 = vpack.c.b16 %v598, %v598
      %v617 = vpack.c.b16 %v599, %v599
      %v618 = vpack.c.b16 %v600, %v600
      %v619 = vpack.c.b16 %v601, %v601
      %v620 = vpack.c.b16 %v602, %v602
      %v621 = vpack.c.b16 %v603, %v603
      %v928 = vunpack.c.l.b16 %v289
      %v929 = vunpack.c.l.b16 %v290
      %v930 = vunpack.c.l.b16 %v291
      %v931 = vunpack.c.l.b16 %v292
      %v932 = vunpack.c.l.b16 %v293
      %v933 = vunpack.c.l.b16 %v294
      %v934 = vunpack.c.l.b16 %v295
      %v935 = vunpack.c.l.b16 %v296
      %v936 = vunpack.c.l.b16 %v297
      %v937 = vunpack.c.l.b16 %v298
      %v938 = vunpack.c.l.b16 %v299
      %v939 = vunpack.c.l.b16 %v300
      %v940 = vunpack.c.l.b16 %v301
      %v941 = vunpack.c.l.b16 %v302
      %v942 = vunpack.c.l.b16 %v303
      %v943 = vunpack.c.l.b16 %v304
      %v944 = vunpack.c.l.b16 %v305
      %v945 = vunpack.c.l.b16 %v306
      %v946 = vunpack.c.l.b16 %v307
      %v947 = vunpack.c.l.b16 %v308
      %v948 = vunpack.c.l.b16 %v309
      %v949 = vunpack.c.l.b16 %v310
      %v950 = vunpack.c.l.b16 %v311
      %v951 = vunpack.c.l.b16 %v312
      %v952 = vunpack.c.l.b16 %v313
      %v953 = vunpack.c.l.b16 %v314
      %v954 = vunpack.c.l.b16 %v315
      %v955 = vunpack.c.l.b16 %v316
      %v956 = vunpack.c.l.b16 %v317
      %v957 = vunpack.c.l.b16 %v318
      %v958 = vunpack.c.l.b16 %v319
      %v959 = vunpack.c.l.b16 %v320
      %v960 = vunpack.c.l.b16 %v321
      %v961 = vunpack.c.l.b16 %v322
      %v962 = vunpack.c.l.b16 %v323
      %v963 = vunpack.c.l.b16 %v324
      %v964 = vunpack.c.l.b16 %v325
      %v965 = vunpack.c.l.b16 %v326
      %v966 = vunpack.c.l.b16 %v327
      %v967 = vunpack.c.l.b16 %v328
      %v968 = vunpack.c.l.b16 %v329
      %v969 = vunpack.c.l.b16 %v330
      %v970 = vunpack.c.l.b16 %v331
      %v971 = vunpack.c.l.b16 %v332
      %v972 = vunpack.c.l.b16 %v333
      %v973 = vunpack.c.l.b16 %v334
      %v974 = vunpack.c.l.b16 %v335
      %v975 = vunpack.c.l.b16 %v336
      %v976 = vunpack.c.l.b16 %v337
      %v977 = vunpack.c.l.b16 %v338
      %v978 = vunpack.c.l.b16 %v339
      %v979 = vunpack.c.l.b16 %v340
      %v980 = vunpack.c.l.b16 %v341
      %v981 = vunpack.c.l.b16 %v342
      %v982 = vunpack.c.l.b16 %v343
      %v983 = vunpack.c.l.b16 %v344
      %v984 = vunpack.c.l.b16 %v345
      %v985 = vunpack.c.l.b16 %v346
      %v986 = vunpack.c.l.b16 %v347
      %v987 = vunpack.c.l.b16 %v348
      %v988 = vunpack.c.l.b16 %v349
      %v989 = vunpack.c.l.b16 %v350
      %v990 = vunpack.c.l.b16 %v351
      %v991 = vunpack.c.l.b16 %v352
      %v992 = vunpack.c.l.b16 %v353
      %v993 = vunpack.c.l.b16 %v354
      %v994 = vunpack.c.l.b16 %v355
      %v995 = vunpack.c.l.b16 %v356
      %v996 = vunpack.c.l.b16 %v357
      %v997 = vunpack.c.l.b16 %v358
      %v998 = vunpack.c.l.b16 %v359
      %v999 = vunpack.c.l.b16 %v360
      %v1000 = vunpack.c.l.b16 %v361
      %v1001 = vunpack.c.l.b16 %v362
      %v1002 = vunpack.c.l.b16 %v363
      %v1003 = vunpack.c.l.b16 %v364
      %v1004 = vunpack.c.l.b16 %v365
      %v1005 = vunpack.c.l.b16 %v366
      %v1006 = vunpack.c.l.b16 %v367
      %v1007 = vunpack.c.l.b16 %v368
      %v1008 = vunpack.c.l.b16 %v369
      %v1009 = vunpack.c.l.b16 %v370
      %v1010 = vunpack.c.l.b16 %v371
      %v1011 = vunpack.c.l.b16 %v372
      %v1012 = vunpack.c.l.b16 %v373
      %v1013 = vunpack.c.l.b16 %v374
      %v1014 = vunpack.c.l.b16 %v375
      %v1015 = vunpack.c.l.b16 %v376
      %v1016 = vunpack.c.l.b16 %v377
      %v1017 = vunpack.c.l.b16 %v378
      %v1018 = vunpack.c.l.b16 %v379
      %v1019 = vunpack.c.l.b16 %v380
      %v1020 = vunpack.c.l.b16 %v381
      %v1021 = vunpack.c.l.b16 %v382
      %v1022 = vunpack.c.l.b16 %v383
      %v1023 = vunpack.c.l.b16 %v384
      %v1024 = vunpack.c.l.b16 %v385
      %v1025 = vunpack.c.l.b16 %v386
      %v1026 = vunpack.c.l.b16 %v387
      %v1027 = vunpack.c.l.b16 %v388
      %v1028 = vunpack.c.l.b16 %v389
      %v1029 = vunpack.c.l.b16 %v390
      %v1030 = vunpack.c.l.b16 %v391
      %v1031 = vunpack.c.l.b16 %v392
      %v1032 = vunpack.c.l.b16 %v393
      %v1033 = vunpack.c.l.b16 %v394
      %v1034 = vunpack.c.l.b16 %v395
      %v1035 = vunpack.c.l.b16 %v396
      %v1036 = vunpack.c.l.b16 %v397
      %v1037 = vunpack.c.l.b16 %v398
      %v1038 = vunpack.c.l.b16 %v399
      %v1039 = vunpack.c.l.b16 %v400
      %v1040 = vunpack.c.l.b16 %v401
      %v1041 = vunpack.c.l.b16 %v402
      %v1042 = vunpack.c.l.b16 %v403
      %v1043 = vunpack.c.l.b16 %v404
      %v1044 = vunpack.c.l.b16 %v405
      %v1045 = vunpack.c.l.b16 %v406
      %v1046 = vunpack.c.l.b16 %v407
      %v1047 = vunpack.c.l.b16 %v408
      %v1048 = vunpack.c.l.b16 %v409
      %v1049 = vunpack.c.l.b16 %v410
      %v1050 = vunpack.c.l.b16 %v411
      %v1051 = vunpack.c.l.b16 %v412
      %v1052 = vunpack.c.l.b16 %v413
      %v1053 = vunpack.c.l.b16 %v414
      %v1054 = vunpack.c.l.b16 %v415
      %v1055 = vunpack.c.l.b16 %v416
      %v1056 = vunpack.c.l.b16 %v417
      %v1057 = vunpack.c.l.b16 %v418
      %v1058 = vunpack.c.l.b16 %v419
      %v1059 = vunpack.c.l.b16 %v420
      %v1060 = vunpack.c.l.b16 %v421
      %v1061 = vunpack.c.l.b16 %v422
      %v1062 = vunpack.c.l.b16 %v423
      %v1063 = vunpack.c.l.b16 %v424
      %v1064 = vunpack.c.l.b16 %v425
      %v1065 = vunpack.c.l.b16 %v426
      %v1066 = vunpack.c.l.b16 %v427
      %v1067 = vunpack.c.l.b16 %v428
      %v1068 = vunpack.c.l.b16 %v429
      %v1069 = vunpack.c.l.b16 %v430
      %v1070 = vunpack.c.l.b16 %v431
      %v1071 = vunpack.c.l.b16 %v432
      %v1072 = vunpack.c.l.b16 %v433
      %v1073 = vunpack.c.l.b16 %v434
      %v1074 = vunpack.c.l.b16 %v435
      %v1075 = vunpack.c.l.b16 %v436
      %v1076 = vunpack.c.l.b16 %v437
      %v1077 = vunpack.c.l.b16 %v438
      %v1078 = vunpack.c.l.b16 %v439
      %v1079 = vunpack.c.l.b16 %v440
      %v1080 = vunpack.c.l.b16 %v441
      %v1081 = vunpack.c.l.b16 %v442
      %v1082 = vunpack.c.l.b16 %v443
      %v1083 = vunpack.c.l.b16 %v444
      %v1084 = vunpack.c.l.b16 %v445
      %v1085 = vunpack.c.l.b16 %v446
      %v1086 = vunpack.c.l.b16 %v447
      %v1087 = vunpack.c.l.b16 %v448
      %v1088 = vunpack.c.l.b16 %v449
      %v1089 = vunpack.c.l.b16 %v450
      %v1090 = vunpack.c.l.b16 %v451
      %v1091 = vunpack.c.l.b16 %v452
      %v1092 = vunpack.c.l.b16 %v453
      %v1093 = vunpack.c.l.b16 %v454
      %v1094 = vunpack.c.l.b16 %v455
      %v1095 = vunpack.c.l.b16 %v456
      %v1096 = vunpack.c.l.b16 %v457
      %v1097 = vunpack.c.l.b16 %v458
      %v1098 = vunpack.c.l.b16 %v459
      %v1099 = vunpack.c.l.b16 %v460
      %v1100 = vunpack.c.l.b16 %v461
      %v1101 = vunpack.c.l.b16 %v462
      %v1102 = vunpack.c.l.b16 %v463
      %v1103 = vunpack.c.l.b16 %v464
      %v1104 = vunpack.c.l.b16 %v465
      %v1105 = vunpack.c.l.b16 %v466
      %v1106 = vunpack.c.l.b16 %v467
      %v1107 = vunpack.c.l.b16 %v468
      %v1108 = vunpack.c.l.b16 %v469
      %v1109 = vunpack.c.l.b16 %v470
      %v1110 = vunpack.c.l.b16 %v471
      %v1111 = vunpack.c.l.b16 %v472
      %v1112 = vunpack.c.l.b16 %v473
      %v1113 = vunpack.c.l.b16 %v474
      %v1114 = vunpack.c.l.b16 %v475
      %v1115 = vunpack.c.l.b16 %v476
      %v1116 = vunpack.c.l.b16 %v477
      %v1117 = vunpack.c.l.b16 %v478
      %v1118 = vunpack.c.l.b16 %v479
      %v1119 = vunpack.c.l.b16 %v480
      %v1120 = vunpack.c.l.b16 %v481
      %v1121 = vunpack.c.l.b16 %v482
      %v1122 = vunpack.c.l.b16 %v483
      %v1123 = vunpack.c.l.b16 %v484
      %v1124 = vunpack.c.l.b16 %v485
      %v1125 = vunpack.c.l.b16 %v486
      %v1126 = vunpack.c.l.b16 %v487
      %v1127 = vunpack.c.l.b16 %v488
      %v1128 = vunpack.c.l.b16 %v489
      %v1129 = vunpack.c.l.b16 %v490
      %v1130 = vunpack.c.l.b16 %v491
      %v1131 = vunpack.c.l.b16 %v492
      %v1132 = vunpack.c.l.b16 %v493
      %v1133 = vunpack.c.l.b16 %v494
      %v1134 = vunpack.c.l.b16 %v495
      %v1135 = vunpack.c.l.b16 %v496
      %v1136 = vunpack.c.l.b16 %v497
      %v1137 = vunpack.c.l.b16 %v498
      %v1138 = vunpack.c.l.b16 %v499
      %v1139 = vunpack.c.l.b16 %v500
      %v1140 = vunpack.c.l.b16 %v501
      %v1141 = vunpack.c.l.b16 %v502
      %v1142 = vunpack.c.l.b16 %v503
      %v1143 = vunpack.c.l.b16 %v504
      %v1144 = vunpack.c.l.b16 %v505
      %v1145 = vunpack.c.l.b16 %v506
      %v1146 = vunpack.c.l.b16 %v507
      %v1147 = vunpack.c.l.b16 %v508
      %v1148 = vunpack.c.l.b16 %v509
      %v1149 = vunpack.c.l.b16 %v510
      %v1150 = vunpack.c.l.b16 %v511
      %v1151 = vunpack.c.l.b16 %v512
      %v1152 = vunpack.c.l.b16 %v513
      %v1153 = vunpack.c.l.b16 %v514
      %v1154 = vunpack.c.l.b16 %v515
      %v1155 = vunpack.c.l.b16 %v516
      %v1156 = vunpack.c.l.b16 %v517
      %v1157 = vunpack.c.l.b16 %v518
      %v1158 = vunpack.c.l.b16 %v519
      %v1159 = vunpack.c.l.b16 %v520
      %v1160 = vunpack.c.l.b16 %v521
      %v1161 = vunpack.c.l.b16 %v522
      %v1162 = vunpack.c.l.b16 %v523
      %v1163 = vunpack.c.l.b16 %v524
      %v1164 = vunpack.c.l.b16 %v525
      %v1165 = vunpack.c.l.b16 %v526
      %v1166 = vunpack.c.l.b16 %v527
      %v1167 = vunpack.c.l.b16 %v528
      %v1168 = vunpack.c.l.b16 %v529
      %v1169 = vunpack.c.l.b16 %v530
      %v1170 = vunpack.c.l.b16 %v531
      %v1171 = vunpack.c.l.b16 %v532
      %v1172 = vunpack.c.l.b16 %v533
      %v1173 = vunpack.c.l.b16 %v534
      %v1174 = vunpack.c.l.b16 %v535
      %v1175 = vunpack.c.l.b16 %v536
      %v1176 = vunpack.c.l.b16 %v537
      %v1177 = vunpack.c.l.b16 %v538
      %v1178 = vunpack.c.l.b16 %v539
      %v1179 = vunpack.c.l.b16 %v540
      %v1180 = vunpack.c.l.b16 %v541
      %v1181 = vunpack.c.l.b16 %v542
      %v1182 = vunpack.c.l.b16 %v543
      %v1183 = vunpack.c.l.b16 %v544
      %v1184 = vunpack.c.l.b16 %v545
      %v1185 = vunpack.c.l.b16 %v546
      %v1186 = vunpack.c.l.b16 %v547
      %v1187 = vunpack.c.l.b16 %v548
      %v1188 = vunpack.c.l.b16 %v549
      %v1189 = vunpack.c.l.b16 %v550
      %v1190 = vunpack.c.l.b16 %v551
      %v1191 = vunpack.c.l.b16 %v552
      %v1192 = vunpack.c.l.b16 %v553
      %v1193 = vunpack.c.l.b16 %v554
      %v1194 = vunpack.c.l.b16 %v555
      %v1195 = vunpack.c.l.b16 %v556
      %v1196 = vunpack.c.l.b16 %v557
      %v1197 = vunpack.c.l.b16 %v558
      %v1198 = vunpack.c.l.b16 %v559
      %v1199 = vunpack.c.l.b16 %v560
      %v1200 = vunpack.c.l.b16 %v561
      %v1201 = vunpack.c.l.b16 %v562
      %v1202 = vunpack.c.l.b16 %v563
      %v1203 = vunpack.c.l.b16 %v564
      %v1204 = vunpack.c.l.b16 %v565
      %v1205 = vunpack.c.l.b16 %v566
      %v1206 = vunpack.c.l.b16 %v567
      %v1207 = vunpack.c.l.b16 %v568
      %v1208 = vunpack.c.l.b16 %v569
      %v1209 = vunpack.c.l.b16 %v570
      %v1210 = vunpack.c.l.b16 %v571
      %v1211 = vunpack.c.l.b16 %v572
      %v1212 = vunpack.c.l.b16 %v573
      %v1213 = vunpack.c.l.b16 %v574
      %v1214 = vunpack.c.l.b16 %v575
      %v1215 = vunpack.c.l.b16 %v576
      %v1216 = vpack.c.b16 %v929, %v928
      %v1217 = vpack.c.b16 %v931, %v930
      %v1218 = vpack.c.b16 %v933, %v932
      %v1219 = vpack.c.b16 %v935, %v934
      %v1220 = vpack.c.b16 %v937, %v936
      %v1221 = vpack.c.b16 %v939, %v938
      %v1222 = vpack.c.b16 %v941, %v940
      %v1223 = vpack.c.b16 %v943, %v942
      %v1224 = vpack.c.b16 %v945, %v944
      %v1225 = vpack.c.b16 %v947, %v946
      %v1226 = vpack.c.b16 %v949, %v948
      %v1227 = vpack.c.b16 %v951, %v950
      %v1228 = vpack.c.b16 %v953, %v952
      %v1229 = vpack.c.b16 %v955, %v954
      %v1230 = vpack.c.b16 %v957, %v956
      %v1231 = vpack.c.b16 %v959, %v958
      %v1232 = vpack.c.b16 %v961, %v960
      %v1233 = vpack.c.b16 %v963, %v962
      %v1234 = vpack.c.b16 %v965, %v964
      %v1235 = vpack.c.b16 %v967, %v966
      %v1236 = vpack.c.b16 %v969, %v968
      %v1237 = vpack.c.b16 %v971, %v970
      %v1238 = vpack.c.b16 %v973, %v972
      %v1239 = vpack.c.b16 %v975, %v974
      %v1240 = vpack.c.b16 %v977, %v976
      %v1241 = vpack.c.b16 %v979, %v978
      %v1242 = vpack.c.b16 %v981, %v980
      %v1243 = vpack.c.b16 %v983, %v982
      %v1244 = vpack.c.b16 %v985, %v984
      %v1245 = vpack.c.b16 %v987, %v986
      %v1246 = vpack.c.b16 %v989, %v988
      %v1247 = vpack.c.b16 %v991, %v990
      %v1248 = vpack.c.b16 %v993, %v992
      %v1249 = vpack.c.b16 %v995, %v994
      %v1250 = vpack.c.b16 %v997, %v996
      %v1251 = vpack.c.b16 %v999, %v998
      %v1252 = vpack.c.b16 %v1001, %v1000
      %v1253 = vpack.c.b16 %v1003, %v1002
      %v1254 = vpack.c.b16 %v1005, %v1004
      %v1255 = vpack.c.b16 %v1007, %v1006
      %v1256 = vpack.c.b16 %v1009, %v1008
      %v1257 = vpack.c.b16 %v1011, %v1010
      %v1258 = vpack.c.b16 %v1013, %v1012
      %v1259 = vpack.c.b16 %v1015, %v1014
      %v1260 = vpack.c.b16 %v1017, %v1016
      %v1261 = vpack.c.b16 %v1019, %v1018
      %v1262 = vpack.c.b16 %v1021, %v1020
      %v1263 = vpack.c.b16 %v1023, %v1022
      %v1264 = vpack.c.b16 %v1025, %v1024
      %v1265 = vpack.c.b16 %v1027, %v1026
      %v1266 = vpack.c.b16 %v1029, %v1028
      %v1267 = vpack.c.b16 %v1031, %v1030
      %v1268 = vpack.c.b16 %v1033, %v1032
      %v1269 = vpack.c.b16 %v1035, %v1034
      %v1270 = vpack.c.b16 %v1037, %v1036
      %v1271 = vpack.c.b16 %v1039, %v1038
      %v1272 = vpack.c.b16 %v1041, %v1040
      %v1273 = vpack.c.b16 %v1043, %v1042
      %v1274 = vpack.c.b16 %v1045, %v1044
      %v1275 = vpack.c.b16 %v1047, %v1046
      %v1276 = vpack.c.b16 %v1049, %v1048
      %v1277 = vpack.c.b16 %v1051, %v1050
      %v1278 = vpack.c.b16 %v1053, %v1052
      %v1279 = vpack.c.b16 %v1055, %v1054
      %v1280 = vpack.c.b16 %v1057, %v1056
      %v1281 = vpack.c.b16 %v1059, %v1058
      %v1282 = vpack.c.b16 %v1061, %v1060
      %v1283 = vpack.c.b16 %v1063, %v1062
      %v1284 = vpack.c.b16 %v1065, %v1064
      %v1285 = vpack.c.b16 %v1067, %v1066
      %v1286 = vpack.c.b16 %v1069, %v1068
      %v1287 = vpack.c.b16 %v1071, %v1070
      %v1288 = vpack.c.b16 %v1073, %v1072
      %v1289 = vpack.c.b16 %v1075, %v1074
      %v1290 = vpack.c.b16 %v1077, %v1076
      %v1291 = vpack.c.b16 %v1079, %v1078
      %v1292 = vpack.c.b16 %v1081, %v1080
      %v1293 = vpack.c.b16 %v1083, %v1082
      %v1294 = vpack.c.b16 %v1085, %v1084
      %v1295 = vpack.c.b16 %v1087, %v1086
      %v1296 = vpack.c.b16 %v1089, %v1088
      %v1297 = vpack.c.b16 %v1091, %v1090
      %v1298 = vpack.c.b16 %v1093, %v1092
      %v1299 = vpack.c.b16 %v1095, %v1094
      %v1300 = vpack.c.b16 %v1097, %v1096
      %v1301 = vpack.c.b16 %v1099, %v1098
      %v1302 = vpack.c.b16 %v1101, %v1100
      %v1303 = vpack.c.b16 %v1103, %v1102
      %v1304 = vpack.c.b16 %v1105, %v1104
      %v1305 = vpack.c.b16 %v1107, %v1106
      %v1306 = vpack.c.b16 %v1109, %v1108
      %v1307 = vpack.c.b16 %v1111, %v1110
      %v1308 = vpack.c.b16 %v1113, %v1112
      %v1309 = vpack.c.b16 %v1115, %v1114
      %v1310 = vpack.c.b16 %v1117, %v1116
      %v1311 = vpack.c.b16 %v1119, %v1118
      %v1312 = vpack.c.b16 %v1121, %v1120
      %v1313 = vpack.c.b16 %v1123, %v1122
      %v1314 = vpack.c.b16 %v1125, %v1124
      %v1315 = vpack.c.b16 %v1127, %v1126
      %v1316 = vpack.c.b16 %v1129, %v1128
      %v1317 = vpack.c.b16 %v1131, %v1130
      %v1318 = vpack.c.b16 %v1133, %v1132
      %v1319 = vpack.c.b16 %v1135, %v1134
      %v1320 = vpack.c.b16 %v1137, %v1136
      %v1321 = vpack.c.b16 %v1139, %v1138
      %v1322 = vpack.c.b16 %v1141, %v1140
      %v1323 = vpack.c.b16 %v1143, %v1142
      %v1324 = vpack.c.b16 %v1145, %v1144
      %v1325 = vpack.c.b16 %v1147, %v1146
      %v1326 = vpack.c.b16 %v1149, %v1148
      %v1327 = vpack.c.b16 %v1151, %v1150
      %v1328 = vpack.c.b16 %v1153, %v1152
      %v1329 = vpack.c.b16 %v1155, %v1154
      %v1330 = vpack.c.b16 %v1157, %v1156
      %v1331 = vpack.c.b16 %v1159, %v1158
      %v1332 = vpack.c.b16 %v1161, %v1160
      %v1333 = vpack.c.b16 %v1163, %v1162
      %v1334 = vpack.c.b16 %v1165, %v1164
      %v1335 = vpack.c.b16 %v1167, %v1166
      %v1336 = vpack.c.b16 %v1169, %v1168
      %v1337 = vpack.c.b16 %v1171, %v1170
      %v1338 = vpack.c.b16 %v1173, %v1172
      %v1339 = vpack.c.b16 %v1175, %v1174
      %v1340 = vpack.c.b16 %v1177, %v1176
      %v1341 = vpack.c.b16 %v1179, %v1178
      %v1342 = vpack.c.b16 %v1181, %v1180
      %v1343 = vpack.c.b16 %v1183, %v1182
      %v1344 = vpack.c.b16 %v1185, %v1184
      %v1345 = vpack.c.b16 %v1187, %v1186
      %v1346 = vpack.c.b16 %v1189, %v1188
      %v1347 = vpack.c.b16 %v1191, %v1190
      %v1348 = vpack.c.b16 %v1193, %v1192
      %v1349 = vpack.c.b16 %v1195, %v1194
      %v1350 = vpack.c.b16 %v1197, %v1196
      %v1351 = vpack.c.b16 %v1199, %v1198
      %v1352 = vpack.c.b16 %v1201, %v1200
      %v1353 = vpack.c.b16 %v1203, %v1202
      %v1354 = vpack.c.b16 %v1205, %v1204
      %v1355 = vpack.c.b16 %v1207, %v1206
      %v1356 = vpack.c.b16 %v1209, %v1208
      %v1357 = vpack.c.b16 %v1211, %v1210
      %v1358 = vpack.c.b16 %v1213, %v1212
      %v1359 = vpack.c.b16 %v1215, %v1214
      %1504 = vmatprep.subr.bf16.mxu0 0
      %1505 = vmatpush1.bf16.msra.mxu0 %v1216
      %1506 = vmatprep.subr.bf16.mxu0 0
      %1507 = vmatpush1.bf16.msra.mxu0 %v1217
      %1508 = vmatprep.subr.bf16.mxu0 0
      %1509 = vmatpush1.bf16.msra.mxu0 %v1218
      %1510 = vmatprep.subr.bf16.mxu0 0
      %1511 = vmatpush1.bf16.msra.mxu0 %v1219
      %1512 = vmatprep.subr.bf16.mxu0 0
      %1513 = vmatpush1.bf16.msra.mxu0 %v1220
      %1514 = vmatprep.subr.bf16.mxu0 0
      %1515 = vmatpush1.bf16.msra.mxu0 %v1221
      %1516 = vmatprep.subr.bf16.mxu0 0
      %1517 = vmatpush1.bf16.msra.mxu0 %v1222
      %1518 = vmatprep.subr.bf16.mxu0 0
      %1519 = vmatpush1.bf16.msra.mxu0 %v1223
      %1520 = vmatprep.subr.bf16.mxu0 0
      %1521 = vmatpush1.bf16.msra.mxu0 %v1224
      %1522 = vmatprep.subr.bf16.mxu0 0
      %1523 = vmatpush1.bf16.msra.mxu0 %v1225
      %1524 = vmatprep.subr.bf16.mxu0 0
      %1525 = vmatpush1.bf16.msra.mxu0 %v1226
      %1526 = vmatprep.subr.bf16.mxu0 0
      %1527 = vmatpush1.bf16.msra.mxu0 %v1227
      %1528 = vmatprep.subr.bf16.mxu0 0
      %1529 = vmatpush1.bf16.msra.mxu0 %v1228
      %1530 = vmatprep.subr.bf16.mxu0 0
      %1531 = vmatpush1.bf16.msra.mxu0 %v1229
      %1532 = vmatprep.subr.bf16.mxu0 0
      %1533 = vmatpush1.bf16.msra.mxu0 %v1230
      %1534 = vmatprep.subr.bf16.mxu0 0
      %1535 = vmatpush1.bf16.msra.mxu0 %v1231
      %1536 = vmatprep.mubr.bf16.mxu0 %v605
      %1537 = vmatmul.mubr.bf16.gmra.mrb[0].mxu0 %v604
      %v1538 = vpop.f32.mrb[0].mxu0
      %v1539 = vadd.f32 0.0, %v1538
      %v1540 = vpop.f32.mrb[0].mxu0
      %v1541 = vpop.f32.mrb[0].mxu0
      %v1542 = vpop.f32.mrb[0].mxu0
      %1543 = vdwg.mxu0
      %1544 = vmatprep.subr.bf16.mxu0 0
      %1545 = vmatpush1.bf16.msra.mxu0 %v1232
      %1546 = vmatprep.subr.bf16.mxu0 0
      %1547 = vmatpush1.bf16.msra.mxu0 %v1233
      %1548 = vmatprep.subr.bf16.mxu0 0
      %1549 = vmatpush1.bf16.msra.mxu0 %v1234
      %1550 = vmatprep.subr.bf16.mxu0 0
      %1551 = vmatpush1.bf16.msra.mxu0 %v1235
      %1552 = vmatprep.subr.bf16.mxu0 0
      %1553 = vmatpush1.bf16.msra.mxu0 %v1236
      %1554 = vmatprep.subr.bf16.mxu0 0
      %1555 = vmatpush1.bf16.msra.mxu0 %v1237
      %1556 = vmatprep.subr.bf16.mxu0 0
      %1557 = vmatpush1.bf16.msra.mxu0 %v1238
      %1558 = vmatprep.subr.bf16.mxu0 0
      %1559 = vmatpush1.bf16.msra.mxu0 %v1239
      %1560 = vmatprep.subr.bf16.mxu0 0
      %1561 = vmatpush1.bf16.msra.mxu0 %v1240
      %1562 = vmatprep.subr.bf16.mxu0 0
      %1563 = vmatpush1.bf16.msra.mxu0 %v1241
      %1564 = vmatprep.subr.bf16.mxu0 0
      %1565 = vmatpush1.bf16.msra.mxu0 %v1242
      %1566 = vmatprep.subr.bf16.mxu0 0
      %1567 = vmatpush1.bf16.msra.mxu0 %v1243
      %1568 = vmatprep.subr.bf16.mxu0 0
      %1569 = vmatpush1.bf16.msra.mxu0 %v1244
      %1570 = vmatprep.subr.bf16.mxu0 0
      %1571 = vmatpush1.bf16.msra.mxu0 %v1245
      %1572 = vmatprep.subr.bf16.mxu0 0
      %1573 = vmatpush1.bf16.msra.mxu0 %v1246
      %1574 = vmatprep.subr.bf16.mxu0 0
      %1575 = vmatpush1.bf16.msra.mxu0 %v1247
      %1576 = vmatprep.mubr.bf16.mxu0 %v607
      %1577 = vmatmul.mubr.bf16.gmra.mrb[0].mxu0 %v606
      %v1578 = vpop.f32.mrb[0].mxu0
      %v1579 = vadd.f32 %v1539, %v1578
      %v1580 = vpop.f32.mrb[0].mxu0
      %v1581 = vpop.f32.mrb[0].mxu0
      %v1582 = vpop.f32.mrb[0].mxu0
      %1583 = vdwg.mxu0
      %1584 = vmatprep.subr.bf16.mxu0 0
      %1585 = vmatpush1.bf16.msra.mxu0 %v1248
      %1586 = vmatprep.subr.bf16.mxu0 0
      %1587 = vmatpush1.bf16.msra.mxu0 %v1249
      %1588 = vmatprep.subr.bf16.mxu0 0
      %1589 = vmatpush1.bf16.msra.mxu0 %v1250
      %1590 = vmatprep.subr.bf16.mxu0 0
      %1591 = vmatpush1.bf16.msra.mxu0 %v1251
      %1592 = vmatprep.subr.bf16.mxu0 0
      %1593 = vmatpush1.bf16.msra.mxu0 %v1252
      %1594 = vmatprep.subr.bf16.mxu0 0
      %1595 = vmatpush1.bf16.msra.mxu0 %v1253
      %1596 = vmatprep.subr.bf16.mxu0 0
      %1597 = vmatpush1.bf16.msra.mxu0 %v1254
      %1598 = vmatprep.subr.bf16.mxu0 0
      %1599 = vmatpush1.bf16.msra.mxu0 %v1255
      %1600 = vmatprep.subr.bf16.mxu0 0
      %1601 = vmatpush1.bf16.msra.mxu0 %v1256
      %1602 = vmatprep.subr.bf16.mxu0 0
      %1603 = vmatpush1.bf16.msra.mxu0 %v1257
      %1604 = vmatprep.subr.bf16.mxu0 0
      %1605 = vmatpush1.bf16.msra.mxu0 %v1258
      %1606 = vmatprep.subr.bf16.mxu0 0
      %1607 = vmatpush1.bf16.msra.mxu0 %v1259
      %1608 = vmatprep.subr.bf16.mxu0 0
      %1609 = vmatpush1.bf16.msra.mxu0 %v1260
      %1610 = vmatprep.subr.bf16.mxu0 0
      %1611 = vmatpush1.bf16.msra.mxu0 %v1261
      %1612 = vmatprep.subr.bf16.mxu0 0
      %1613 = vmatpush1.bf16.msra.mxu0 %v1262
      %1614 = vmatprep.subr.bf16.mxu0 0
      %1615 = vmatpush1.bf16.msra.mxu0 %v1263
      %1616 = vmatprep.mubr.bf16.mxu0 %v609
      %1617 = vmatmul.mubr.bf16.gmra.mrb[0].mxu0 %v608
      %v1618 = vpop.f32.mrb[0].mxu0
      %v1619 = vadd.f32 %v1579, %v1618
      %v1620 = vpop.f32.mrb[0].mxu0
      %v1621 = vpop.f32.mrb[0].mxu0
      %v1622 = vpop.f32.mrb[0].mxu0
      %1623 = vdwg.mxu0
      %1624 = vmatprep.subr.bf16.mxu0 0
      %1625 = vmatpush1.bf16.msra.mxu0 %v1264
      %1626 = vmatprep.subr.bf16.mxu0 0
      %1627 = vmatpush1.bf16.msra.mxu0 %v1265
      %1628 = vmatprep.subr.bf16.mxu0 0
      %1629 = vmatpush1.bf16.msra.mxu0 %v1266
      %1630 = vmatprep.subr.bf16.mxu0 0
      %1631 = vmatpush1.bf16.msra.mxu0 %v1267
      %1632 = vmatprep.subr.bf16.mxu0 0
      %1633 = vmatpush1.bf16.msra.mxu0 %v1268
      %1634 = vmatprep.subr.bf16.mxu0 0
      %1635 = vmatpush1.bf16.msra.mxu0 %v1269
      %1636 = vmatprep.subr.bf16.mxu0 0
      %1637 = vmatpush1.bf16.msra.mxu0 %v1270
      %1638 = vmatprep.subr.bf16.mxu0 0
      %1639 = vmatpush1.bf16.msra.mxu0 %v1271
      %1640 = vmatprep.subr.bf16.mxu0 0
      %1641 = vmatpush1.bf16.msra.mxu0 %v1272
      %1642 = vmatprep.subr.bf16.mxu0 0
      %1643 = vmatpush1.bf16.msra.mxu0 %v1273
      %1644 = vmatprep.subr.bf16.mxu0 0
      %1645 = vmatpush1.bf16.msra.mxu0 %v1274
      %1646 = vmatprep.subr.bf16.mxu0 0
      %1647 = vmatpush1.bf16.msra.mxu0 %v1275
      %1648 = vmatprep.subr.bf16.mxu0 0
      %1649 = vmatpush1.bf16.msra.mxu0 %v1276
      %1650 = vmatprep.subr.bf16.mxu0 0
      %1651 = vmatpush1.bf16.msra.mxu0 %v1277
      %1652 = vmatprep.subr.bf16.mxu0 0
      %1653 = vmatpush1.bf16.msra.mxu0 %v1278
      %1654 = vmatprep.subr.bf16.mxu0 0
      %1655 = vmatpush1.bf16.msra.mxu0 %v1279
      %1656 = vmatprep.mubr.bf16.mxu0 %v611
      %1657 = vmatmul.mubr.bf16.gmra.mrb[0].mxu0 %v610
      %v1658 = vpop.f32.mrb[0].mxu0
      %v1659 = vadd.f32 %v1619, %v1658
      %v1660 = vpop.f32.mrb[0].mxu0
      %v1661 = vpop.f32.mrb[0].mxu0
      %v1662 = vpop.f32.mrb[0].mxu0
      %1663 = vdwg.mxu0
      %1664 = vmatprep.subr.bf16.mxu0 0
      %1665 = vmatpush1.bf16.msra.mxu0 %v1280
      %1666 = vmatprep.subr.bf16.mxu0 0
      %1667 = vmatpush1.bf16.msra.mxu0 %v1281
      %1668 = vmatprep.subr.bf16.mxu0 0
      %1669 = vmatpush1.bf16.msra.mxu0 %v1282
      %1670 = vmatprep.subr.bf16.mxu0 0
      %1671 = vmatpush1.bf16.msra.mxu0 %v1283
      %1672 = vmatprep.subr.bf16.mxu0 0
      %1673 = vmatpush1.bf16.msra.mxu0 %v1284
      %1674 = vmatprep.subr.bf16.mxu0 0
      %1675 = vmatpush1.bf16.msra.mxu0 %v1285
      %1676 = vmatprep.subr.bf16.mxu0 0
      %1677 = vmatpush1.bf16.msra.mxu0 %v1286
      %1678 = vmatprep.subr.bf16.mxu0 0
      %1679 = vmatpush1.bf16.msra.mxu0 %v1287
      %1680 = vmatprep.subr.bf16.mxu0 0
      %1681 = vmatpush1.bf16.msra.mxu0 %v1288
      %1682 = vmatprep.subr.bf16.mxu0 0
      %1683 = vmatpush1.bf16.msra.mxu0 %v1289
      %1684 = vmatprep.subr.bf16.mxu0 0
      %1685 = vmatpush1.bf16.msra.mxu0 %v1290
      %1686 = vmatprep.subr.bf16.mxu0 0
      %1687 = vmatpush1.bf16.msra.mxu0 %v1291
      %1688 = vmatprep.subr.bf16.mxu0 0
      %1689 = vmatpush1.bf16.msra.mxu0 %v1292
      %1690 = vmatprep.subr.bf16.mxu0 0
      %1691 = vmatpush1.bf16.msra.mxu0 %v1293
      %1692 = vmatprep.subr.bf16.mxu0 0
      %1693 = vmatpush1.bf16.msra.mxu0 %v1294
      %1694 = vmatprep.subr.bf16.mxu0 0
      %1695 = vmatpush1.bf16.msra.mxu0 %v1295
      %1696 = vmatprep.mubr.bf16.mxu0 %v613
      %1697 = vmatmul.mubr.bf16.gmra.mrb[0].mxu0 %v612
      %v1698 = vpop.f32.mrb[0].mxu0
      %v1699 = vadd.f32 %v1659, %v1698
      %v1700 = vpop.f32.mrb[0].mxu0
      %v1701 = vpop.f32.mrb[0].mxu0
      %v1702 = vpop.f32.mrb[0].mxu0
      %1703 = vdwg.mxu0
      %1704 = vmatprep.subr.bf16.mxu0 0
      %1705 = vmatpush1.bf16.msra.mxu0 %v1296
      %1706 = vmatprep.subr.bf16.mxu0 0
      %1707 = vmatpush1.bf16.msra.mxu0 %v1297
      %1708 = vmatprep.subr.bf16.mxu0 0
      %1709 = vmatpush1.bf16.msra.mxu0 %v1298
      %1710 = vmatprep.subr.bf16.mxu0 0
      %1711 = vmatpush1.bf16.msra.mxu0 %v1299
      %1712 = vmatprep.subr.bf16.mxu0 0
      %1713 = vmatpush1.bf16.msra.mxu0 %v1300
      %1714 = vmatprep.subr.bf16.mxu0 0
      %1715 = vmatpush1.bf16.msra.mxu0 %v1301
      %1716 = vmatprep.subr.bf16.mxu0 0
      %1717 = vmatpush1.bf16.msra.mxu0 %v1302
      %1718 = vmatprep.subr.bf16.mxu0 0
      %1719 = vmatpush1.bf16.msra.mxu0 %v1303
      %1720 = vmatprep.subr.bf16.mxu0 0
      %1721 = vmatpush1.bf16.msra.mxu0 %v1304
      %1722 = vmatprep.subr.bf16.mxu0 0
      %1723 = vmatpush1.bf16.msra.mxu0 %v1305
      %1724 = vmatprep.subr.bf16.mxu0 0
      %1725 = vmatpush1.bf16.msra.mxu0 %v1306
      %1726 = vmatprep.subr.bf16.mxu0 0
      %1727 = vmatpush1.bf16.msra.mxu0 %v1307
      %1728 = vmatprep.subr.bf16.mxu0 0
      %1729 = vmatpush1.bf16.msra.mxu0 %v1308
      %1730 = vmatprep.subr.bf16.mxu0 0
      %1731 = vmatpush1.bf16.msra.mxu0 %v1309
      %1732 = vmatprep.subr.bf16.mxu0 0
      %1733 = vmatpush1.bf16.msra.mxu0 %v1310
      %1734 = vmatprep.subr.bf16.mxu0 0
      %1735 = vmatpush1.bf16.msra.mxu0 %v1311
      %1736 = vmatprep.mubr.bf16.mxu0 %v615
      %1737 = vmatmul.mubr.bf16.gmra.mrb[0].mxu0 %v614
      %v1738 = vpop.f32.mrb[0].mxu0
      %v1739 = vadd.f32 %v1699, %v1738
      %v1740 = vpop.f32.mrb[0].mxu0
      %v1741 = vpop.f32.mrb[0].mxu0
      %v1742 = vpop.f32.mrb[0].mxu0
      %1743 = vdwg.mxu0
      %1744 = vmatprep.subr.bf16.mxu0 0
      %1745 = vmatpush1.bf16.msra.mxu0 %v1312
      %1746 = vmatprep.subr.bf16.mxu0 0
      %1747 = vmatpush1.bf16.msra.mxu0 %v1313
      %1748 = vmatprep.subr.bf16.mxu0 0
      %1749 = vmatpush1.bf16.msra.mxu0 %v1314
      %1750 = vmatprep.subr.bf16.mxu0 0
      %1751 = vmatpush1.bf16.msra.mxu0 %v1315
      %1752 = vmatprep.subr.bf16.mxu0 0
      %1753 = vmatpush1.bf16.msra.mxu0 %v1316
      %1754 = vmatprep.subr.bf16.mxu0 0
      %1755 = vmatpush1.bf16.msra.mxu0 %v1317
      %1756 = vmatprep.subr.bf16.mxu0 0
      %1757 = vmatpush1.bf16.msra.mxu0 %v1318
      %1758 = vmatprep.subr.bf16.mxu0 0
      %1759 = vmatpush1.bf16.msra.mxu0 %v1319
      %1760 = vmatprep.subr.bf16.mxu0 0
      %1761 = vmatpush1.bf16.msra.mxu0 %v1320
      %1762 = vmatprep.subr.bf16.mxu0 0
      %1763 = vmatpush1.bf16.msra.mxu0 %v1321
      %1764 = vmatprep.subr.bf16.mxu0 0
      %1765 = vmatpush1.bf16.msra.mxu0 %v1322
      %1766 = vmatprep.subr.bf16.mxu0 0
      %1767 = vmatpush1.bf16.msra.mxu0 %v1323
      %1768 = vmatprep.subr.bf16.mxu0 0
      %1769 = vmatpush1.bf16.msra.mxu0 %v1324
      %1770 = vmatprep.subr.bf16.mxu0 0
      %1771 = vmatpush1.bf16.msra.mxu0 %v1325
      %1772 = vmatprep.subr.bf16.mxu0 0
      %1773 = vmatpush1.bf16.msra.mxu0 %v1326
      %1774 = vmatprep.subr.bf16.mxu0 0
      %1775 = vmatpush1.bf16.msra.mxu0 %v1327
      %1776 = vmatprep.mubr.bf16.mxu0 %v617
      %1777 = vmatmul.mubr.bf16.gmra.mrb[0].mxu0 %v616
      %v1778 = vpop.f32.mrb[0].mxu0
      %v1779 = vadd.f32 %v1739, %v1778
      %v1780 = vpop.f32.mrb[0].mxu0
      %v1781 = vpop.f32.mrb[0].mxu0
      %v1782 = vpop.f32.mrb[0].mxu0
      %1783 = vdwg.mxu0
      %1784 = vmatprep.subr.bf16.mxu0 0
      %1785 = vmatpush1.bf16.msra.mxu0 %v1328
      %1786 = vmatprep.subr.bf16.mxu0 0
      %1787 = vmatpush1.bf16.msra.mxu0 %v1329
      %1788 = vmatprep.subr.bf16.mxu0 0
      %1789 = vmatpush1.bf16.msra.mxu0 %v1330
      %1790 = vmatprep.subr.bf16.mxu0 0
      %1791 = vmatpush1.bf16.msra.mxu0 %v1331
      %1792 = vmatprep.subr.bf16.mxu0 0
      %1793 = vmatpush1.bf16.msra.mxu0 %v1332
      %1794 = vmatprep.subr.bf16.mxu0 0
      %1795 = vmatpush1.bf16.msra.mxu0 %v1333
      %1796 = vmatprep.subr.bf16.mxu0 0
      %1797 = vmatpush1.bf16.msra.mxu0 %v1334
      %1798 = vmatprep.subr.bf16.mxu0 0
      %1799 = vmatpush1.bf16.msra.mxu0 %v1335
      %1800 = vmatprep.subr.bf16.mxu0 0
      %1801 = vmatpush1.bf16.msra.mxu0 %v1336
      %1802 = vmatprep.subr.bf16.mxu0 0
      %1803 = vmatpush1.bf16.msra.mxu0 %v1337
      %1804 = vmatprep.subr.bf16.mxu0 0
      %1805 = vmatpush1.bf16.msra.mxu0 %v1338
      %1806 = vmatprep.subr.bf16.mxu0 0
      %1807 = vmatpush1.bf16.msra.mxu0 %v1339
      %1808 = vmatprep.subr.bf16.mxu0 0
      %1809 = vmatpush1.bf16.msra.mxu0 %v1340
      %1810 = vmatprep.subr.bf16.mxu0 0
      %1811 = vmatpush1.bf16.msra.mxu0 %v1341
      %1812 = vmatprep.subr.bf16.mxu0 0
      %1813 = vmatpush1.bf16.msra.mxu0 %v1342
      %1814 = vmatprep.subr.bf16.mxu0 0
      %1815 = vmatpush1.bf16.msra.mxu0 %v1343
      %1816 = vmatprep.mubr.bf16.mxu0 %v619
      %1817 = vmatmul.mubr.bf16.gmra.mrb[0].mxu0 %v618
      %v1818 = vpop.f32.mrb[0].mxu0
      %v1819 = vadd.f32 %v1779, %v1818
      %v1820 = vpop.f32.mrb[0].mxu0
      %v1821 = vpop.f32.mrb[0].mxu0
      %v1822 = vpop.f32.mrb[0].mxu0
      %1823 = vdwg.mxu0
      %1824 = vmatprep.subr.bf16.mxu0 0
      %1825 = vmatpush1.bf16.msra.mxu0 %v1344
      %1826 = vmatprep.subr.bf16.mxu0 0
      %1827 = vmatpush1.bf16.msra.mxu0 %v1345
      %1828 = vmatprep.subr.bf16.mxu0 0
      %1829 = vmatpush1.bf16.msra.mxu0 %v1346
      %1830 = vmatprep.subr.bf16.mxu0 0
      %1831 = vmatpush1.bf16.msra.mxu0 %v1347
      %1832 = vmatprep.subr.bf16.mxu0 0
      %1833 = vmatpush1.bf16.msra.mxu0 %v1348
      %1834 = vmatprep.subr.bf16.mxu0 0
      %1835 = vmatpush1.bf16.msra.mxu0 %v1349
      %1836 = vmatprep.subr.bf16.mxu0 0
      %1837 = vmatpush1.bf16.msra.mxu0 %v1350
      %1838 = vmatprep.subr.bf16.mxu0 0
      %1839 = vmatpush1.bf16.msra.mxu0 %v1351
      %1840 = vmatprep.subr.bf16.mxu0 0
      %1841 = vmatpush1.bf16.msra.mxu0 %v1352
      %1842 = vmatprep.subr.bf16.mxu0 0
      %1843 = vmatpush1.bf16.msra.mxu0 %v1353
      %1844 = vmatprep.subr.bf16.mxu0 0
      %1845 = vmatpush1.bf16.msra.mxu0 %v1354
      %1846 = vmatprep.subr.bf16.mxu0 0
      %1847 = vmatpush1.bf16.msra.mxu0 %v1355
      %1848 = vmatprep.subr.bf16.mxu0 0
      %1849 = vmatpush1.bf16.msra.mxu0 %v1356
      %1850 = vmatprep.subr.bf16.mxu0 0
      %1851 = vmatpush1.bf16.msra.mxu0 %v1357
      %1852 = vmatprep.subr.bf16.mxu0 0
      %1853 = vmatpush1.bf16.msra.mxu0 %v1358
      %1854 = vmatprep.subr.bf16.mxu0 0
      %1855 = vmatpush1.bf16.msra.mxu0 %v1359
      %1856 = vmatprep.mubr.bf16.mxu0 %v621
      %1857 = vmatmul.mubr.bf16.gmra.mrb[0].mxu0 %v620
      %v1858 = vpop.f32.mrb[0].mxu0
      %v1859 = vadd.f32 %v1819, %v1858
      %v1860 = vpop.f32.mrb[0].mxu0
      %v1861 = vpop.f32.mrb[0].mxu0
      %v1862 = vpop.f32.mrb[0].mxu0
      %1863 = vdwg.mxu0
      %v1864 = vadd.f32 %v279, %v1859
      %1865 = vst [vmem:[#allocation2] sm:$0xff] %v1864
      %p1866 = scmp.eq.s32.totalorder %s21, 3
      // Predicated region
      $region45: #{net_forward.5} parent=39 // pred_check
        %p1867 = pneg %p1866
      $region46: #{net_forward.5} parent=39 // pred_check_branch
        %1869 = sbr.rel (%p1867) target = $region48
      $region47: #{net_forward.5} parent=39 // pred_region
        %v1870 = vld [vmem:[#allocation2] sm:$0xff]
        %v1871 = vld [vmem:[%s2] sm:$0x1]
        %v1873 = vlaneseq
        %v1874 = vshrl.u32 %v1873, 7
        %v1875 = vsub.s32 0, %v1874
        %v1876 = vrot.slane %v1871, %v1875
        %v1878 = vadd.f32 %v1870, %v1876
        %v1879 = vmax.f32 %v1878, 0.0
        %v1880 = vpack.c.bf16 %v1879, %v1879
        %v1881 = vld [vmem:[%s3] sm:$0xf]
        %v1882 = vld [vmem:[%s3 + $0x4] sm:$0xf]
        %v1883 = vld [vmem:[%s3 + $0x8] sm:$0xf]
        %v1884 = vld [vmem:[%s3 + $0xc] sm:$0xf]
        %v1885 = vld [vmem:[%s3 + $0x10] sm:$0xf]
        %v1886 = vld [vmem:[%s3 + $0x14] sm:$0xf]
        %v1887 = vld [vmem:[%s3 + $0x18] sm:$0xf]
        %v1888 = vld [vmem:[%s3 + $0x1c] sm:$0xf]
        %v1889 = vld [vmem:[%s3 + $0x20] sm:$0xf]
        %v1890 = vld [vmem:[%s3 + $0x24] sm:$0xf]
        %v1891 = vld [vmem:[%s3 + $0x28] sm:$0xf]
        %v1892 = vld [vmem:[%s3 + $0x2c] sm:$0xf]
        %v1893 = vld [vmem:[%s3 + $0x30] sm:$0xf]
        %v1894 = vld [vmem:[%s3 + $0x34] sm:$0xf]
        %v1895 = vld [vmem:[%s3 + $0x38] sm:$0xf]
        %v1896 = vld [vmem:[%s3 + $0x3c] sm:$0xf]
        %v1897 = vld [vmem:[%s4] sm:$0x1]
        %v1899 = vlaneseq
        %v1900 = vshrl.u32 %v1899, 7
        %v1901 = vsub.s32 0, %v1900
        %v1902 = vrot.slane %v1897, %v1901
        %v1920 = vunpack.c.l.b16 %v1881
        %v1921 = vunpack.c.l.b16 %v1882
        %v1922 = vunpack.c.l.b16 %v1883
        %v1923 = vunpack.c.l.b16 %v1884
        %v1924 = vunpack.c.l.b16 %v1885
        %v1925 = vunpack.c.l.b16 %v1886
        %v1926 = vunpack.c.l.b16 %v1887
        %v1927 = vunpack.c.l.b16 %v1888
        %v1928 = vunpack.c.l.b16 %v1889
        %v1929 = vunpack.c.l.b16 %v1890
        %v1930 = vunpack.c.l.b16 %v1891
        %v1931 = vunpack.c.l.b16 %v1892
        %v1932 = vunpack.c.l.b16 %v1893
        %v1933 = vunpack.c.l.b16 %v1894
        %v1934 = vunpack.c.l.b16 %v1895
        %v1935 = vunpack.c.l.b16 %v1896
        %v1936 = vpack.c.b16 %v1921, %v1920
        %v1937 = vpack.c.b16 %v1923, %v1922
        %v1938 = vpack.c.b16 %v1925, %v1924
        %v1939 = vpack.c.b16 %v1927, %v1926
        %v1940 = vpack.c.b16 %v1929, %v1928
        %v1941 = vpack.c.b16 %v1931, %v1930
        %v1942 = vpack.c.b16 %v1933, %v1932
        %v1943 = vpack.c.b16 %v1935, %v1934
        %1952 = vmatprep.subr.bf16.mxu0 0
        %1953 = vmatpush1.bf16.msra.mxu0 %v1936
        %1954 = vmatprep.subr.bf16.mxu0 0
        %1955 = vmatpush1.bf16.msra.mxu0 %v1937
        %1956 = vmatprep.subr.bf16.mxu0 0
        %1957 = vmatpush1.bf16.msra.mxu0 %v1938
        %1958 = vmatprep.subr.bf16.mxu0 0
        %1959 = vmatpush1.bf16.msra.mxu0 %v1939
        %1960 = vmatprep.subr.bf16.mxu0 0
        %1961 = vmatpush1.bf16.msra.mxu0 %v1940
        %1962 = vmatprep.subr.bf16.mxu0 0
        %1963 = vmatpush1.bf16.msra.mxu0 %v1941
        %1964 = vmatprep.subr.bf16.mxu0 0
        %1965 = vmatpush1.bf16.msra.mxu0 %v1942
        %1966 = vmatprep.subr.bf16.mxu0 0
        %1967 = vmatpush1.bf16.msra.mxu0 %v1943
        %1968 = vmatprep.subr.bf16.mxu0 0
        %1969 = vmatpush1.bf16.msra.mxu0 0
        %1970 = vmatprep.subr.bf16.mxu0 0
        %1971 = vmatpush1.bf16.msra.mxu0 0
        %1972 = vmatprep.subr.bf16.mxu0 0
        %1973 = vmatpush1.bf16.msra.mxu0 0
        %1974 = vmatprep.subr.bf16.mxu0 0
        %1975 = vmatpush1.bf16.msra.mxu0 0
        %1976 = vmatprep.subr.bf16.mxu0 0
        %1977 = vmatpush1.bf16.msra.mxu0 0
        %1978 = vmatprep.subr.bf16.mxu0 0
        %1979 = vmatpush1.bf16.msra.mxu0 0
        %1980 = vmatprep.subr.bf16.mxu0 0
        %1981 = vmatpush1.bf16.msra.mxu0 0
        %1982 = vmatprep.subr.bf16.mxu0 0
        %1983 = vmatpush1.bf16.msra.mxu0 0
        %1984 = vmatprep.mubr.bf16.mxu0 0
        %1985 = vmatmul.mubr.bf16.gmra.mrb[0].mxu0 %v1880
        %v1986 = vpop.f32.mrb[0].mxu0
        %v1987 = vadd.f32 %v1902, %v1986
        %v1988 = vpop.f32.mrb[0].mxu0
        %v1989 = vpop.f32.mrb[0].mxu0
        %v1990 = vpop.f32.mrb[0].mxu0
        %1991 = vdwg.mxu0
        %1992 = vst [vmem:[%s272] sm:$0xff] %v1987
      $region48: #{net_forward.5} parent=39 // pred_fallthru
        _
      %p1993 = scmp.lt.s32.totalorder %s20, 0
      %s1994 = scalar_select %p1993, %s20, 0
      %s1995 = smul.addr %s1994, 8
      %s1996 = scalar_lea.vmem %s5, %s1995
      // Predicated region
      $region49: #{net_forward.5} parent=39 // pred_check
        %p1997 = pneg %p163
      $region50: #{net_forward.5} parent=39 // pred_check_branch
        %1999 = sbr.rel (%p1997) target = $region52
      $region51: #{net_forward.5} parent=39 // pred_region
        _
      $region52: #{net_forward.5} parent=39 // pred_fallthru
        _
      // Predicated region
      $region53: #{net_forward.5} parent=39 // pred_check
        %p2000 = pneg %p163
      $region54: #{net_forward.5} parent=39 // pred_check_branch
        %2002 = sbr.rel (%p2000) target = $region56
      $region55: #{net_forward.5} parent=39 // pred_region
        %p2003 = scmp.lt.s32.totalorder %s20, 0
        %s2004 = scalar_select %p2003, %s20, 0
        %s2005 = smul.addr %s2004, 8
        %s2006 = scalar_lea.vmem %s5, %s2005
      $region56: #{net_forward.5} parent=39 // pred_fallthru
        _
    $region40: #{net_forward.5} parent=5 // pred_fallthru
      _
    %p2007 = scmp.le.s32.totalorder 2, %s11
    // Predicated region
    $region57: #{net_forward.5} parent=5 // pred_check
      %p2008 = pneg %p2007
    $region58: #{net_forward.5} parent=5 // pred_check_branch
      %2010 = sbr.rel (%p2008) target = $region60
    $region59: #{net_forward.5} parent=5 // pred_region
      %s2011 = ssub.s32 %s11, 2
    $region60: #{net_forward.5} parent=5 // pred_fallthru
      _
  $region6: #{net_forward.5} parent=0 // loop_footer
    %s15 = sadd.s32 1, %s11
  $region7: #{net_forward.5} parent=0 // loop_footer_branch
    %10 = sbr.rel target = $region3
  $region8: #{net_forward.5} parent=0 // loop_exit
    _

</llo_original>
